<compile_context>
chip_gen: v6e
topology: v6e:2x2x1
jax: 0.10.0
libtpu: 0.0.40
codegen_flags: <defaults>
</compile_context>

<pallas_src>
import functools

import jax
import jax.numpy as jnp
from jax.experimental import pallas as pl
from jax.experimental.pallas import tpu as pltpu

EPS = 1e-5


# ----------------------------------------------------------------------------
# Conv3d 3x3x3 (padding=1, bias) + fused InstanceNorm statistics
# channels-last, tap-streamed matmul kernel (no HBM padding, no HBM im2col)
# ----------------------------------------------------------------------------
def _conv3x3_stats_kernel(x_ref, w_ref, b_ref, o_ref, sum_ref, sq_ref,
                          acc_ref, pad_ref):
    # x_ref  : (1, 1, W, D, Cin)      input plane at row h = hh + i - 1 (clamped)
    # w_ref  : (1, 9*Cin, Cout) bf16  taps (kw, kd, ci) for kh == i
    # b_ref  : (1, Cout) f32
    # o_ref  : (1, 1, W, D, Cout) f32 conv + bias output row
    # sum_ref: (1, 1, Cout) f32       per-(b, c) running sum   (InstanceNorm)
    # sq_ref : (1, 1, Cout) f32       per-(b, c) running sumsq (InstanceNorm)
    # acc_ref: (W*D, Cout) f32        accumulator over the kh reduction axis
    # pad_ref: (W+2, D+2, Cin) bf16   zero-bordered plane scratch
    hh = pl.program_id(1)
    i = pl.program_id(2)
    n_h = pl.num_programs(1)

    _, _, W, D, Cout = o_ref.shape
    Cin = x_ref.shape[-1]

    # Zero the padded-plane border + the per-batch stats accumulators once per
    # batch image (hh==0, i==0 runs first for every bb, so megacore-safe).
    @pl.when(jnp.logical_and(hh == 0, i == 0))
    def _init_once_per_image():
        pad_ref[...] = jnp.zeros_like(pad_ref)
        sum_ref[...] = jnp.zeros_like(sum_ref)
        sq_ref[...] = jnp.zeros_like(sq_ref)

    @pl.when(i == 0)
    def _init_acc():
        acc_ref[...] = jnp.zeros_like(acc_ref)

    h_in = hh + i - 1
    valid = jnp.logical_and(h_in >= 0, h_in < n_h)

    @pl.when(valid)
    def _accumulate():
        # Write the interior of the zero-bordered plane (borders stay zero).
        pad_ref[1:W + 1, 1:D + 1, :] = x_ref[0, 0].astype(jnp.bfloat16)
        # In-VMEM im2col for this kh tap: (W*D, 9*Cin) -- never hits HBM.
        taps = [pad_ref[j:j + W, k:k + D, :]
                for j in range(3) for k in range(3)]
        a = jnp.concatenate(taps, axis=-1).reshape(W * D, 9 * Cin)
        acc_ref[...] += jnp.dot(a, w_ref[0], preferred_element_type=jnp.float32)

    @pl.when(i == pl.num_programs(2) - 1)
    def _finalize():
        out = acc_ref[...] + b_ref[...]                    # bias fused in epilogue
        o_ref[0, 0] = out.reshape(W, D, Cout).astype(o_ref.dtype)
        # Fused InstanceNorm statistics while the row is still in VMEM.
        sum_ref[0] += jnp.sum(out, axis=0, keepdims=True)
        sq_ref[0] += jnp.sum(out * out, axis=0, keepdims=True)


def conv3d_3x3_in_stats(xcl, w, b):
    """xcl: (B, H, W, D, Cin) channels-last (f32 or bf16);
       w: (Cout, Cin, 3, 3, 3); b: (Cout,).
       Returns (conv+bias output f32, per-(b,c) sum, per-(b,c) sumsq)."""
    B, H, W, D, Cin = xcl.shape
    Cout = w.shape[0]

    # (Cout, Cin, kh, kw, kd) -> (kh, kw*kd*Cin, Cout) matching in-kernel tap order
    wt = jnp.transpose(w, (2, 3, 4, 1, 0)).reshape(3, 9 * Cin, Cout).astype(jnp.bfloat16)
    bias = b.reshape(1, Cout).astype(jnp.float32)

    in_bytes = jnp.dtype(xcl.dtype).itemsize
    need = (2 * W * D * Cin * in_bytes          # input plane (double-buffered)
            + 2 * 9 * Cin * Cout * 2            # weight tap block
            + 2 * Cout * 4                      # bias
            + 2 * W * D * Cout * 4              # output row block
            + 4 * Cout * 4                      # stats blocks
            + W * D * Cout * 4                  # accumulator scratch
            + (W + 2) * (D + 2) * Cin * 2       # padded-plane scratch
            + W * D * 9 * Cin * 2               # in-VMEM im2col temp
            + (8 << 20))                        # headroom
    vmem_limit = int(min(max(need, 16 << 20), 48 << 20))

    def x_index(bb, hh, i):
        h = jnp.minimum(jnp.maximum(hh + i - 1, 0), H - 1)   # clamp; kernel skips
        return (bb, h, 0, 0, 0)

    return pl.pallas_call(
        _conv3x3_stats_kernel,
        out_shape=(jax.ShapeDtypeStruct((B, H, W, D, Cout), jnp.float32),
                   jax.ShapeDtypeStruct((B, 1, Cout), jnp.float32),
                   jax.ShapeDtypeStruct((B, 1, Cout), jnp.float32)),
        grid=(B, H, 3),
        in_specs=[
            pl.BlockSpec((1, 1, W, D, Cin), x_index),
            pl.BlockSpec((1, 9 * Cin, Cout), lambda bb, hh, i: (i, 0, 0)),
            pl.BlockSpec((1, Cout), lambda bb, hh, i: (0, 0)),
        ],
        out_specs=(pl.BlockSpec((1, 1, W, D, Cout), lambda bb, hh, i: (bb, hh, 0, 0, 0)),
                   pl.BlockSpec((1, 1, Cout), lambda bb, hh, i: (bb, 0, 0)),
                   pl.BlockSpec((1, 1, Cout), lambda bb, hh, i: (bb, 0, 0))),
        scratch_shapes=[pltpu.VMEM((W * D, Cout), jnp.float32),
                        pltpu.VMEM((W + 2, D + 2, Cin), jnp.bfloat16)],
        compiler_params=pltpu.CompilerParams(
            dimension_semantics=("parallel", "arbitrary", "arbitrary"),
            vmem_limit_bytes=vmem_limit),
    )(xcl, wt, bias)


# ----------------------------------------------------------------------------
# InstanceNorm3d (affine=False, eps=1e-5) + ReLU apply kernel
# (uses the sums/sumsqs fused into the conv kernel; outputs bf16 when feeding
#  the next conv, f32 for the block output)
# ----------------------------------------------------------------------------
def _in_apply_relu_kernel(y_ref, sum_ref, sq_ref, o_ref, *, inv_n):
    mean = sum_ref[0] * inv_n                               # (1, C)
    var = jnp.maximum(sq_ref[0] * inv_n - mean * mean, 0.0)  # biased var (PyTorch)
    rstd = jax.lax.rsqrt(var + EPS)
    y = (y_ref[0] - mean) * rstd
    o_ref[0] = jnp.maximum(y, 0.0).astype(o_ref.dtype)


def _pick_row_tile(s, max_rows=2048):
    if s <= max_rows:
        return s
    for t in range(max_rows - max_rows % 8, 7, -8):
        if s % t == 0:
            return t
    return s


def instance_norm_relu_apply(ycl, ssum, ssq, out_dtype):
    """Per-(batch, channel) normalization over all spatial positions + ReLU."""
    B, H, W, D, C = ycl.shape
    S = H * W * D
    y3 = ycl.reshape(B, S, C)
    TS = _pick_row_tile(S)
    nt = S // TS

    out = pl.pallas_call(
        functools.partial(_in_apply_relu_kernel, inv_n=1.0 / S),
        out_shape=jax.ShapeDtypeStruct((B, S, C), out_dtype),
        grid=(B, nt),
        in_specs=[pl.BlockSpec((1, TS, C), lambda b, r: (b, r, 0)),
                  pl.BlockSpec((1, 1, C), lambda b, r: (b, 0, 0)),
                  pl.BlockSpec((1, 1, C), lambda b, r: (b, 0, 0))],
        out_specs=pl.BlockSpec((1, TS, C), lambda b, r: (b, r, 0)),
        compiler_params=pltpu.CompilerParams(
            dimension_semantics=("parallel", "parallel")),
    )(y3, ssum, ssq)
    return out.reshape(B, H, W, D, C)


# ----------------------------------------------------------------------------
# doubelconv_block forward
# ----------------------------------------------------------------------------
def doubleconv_forward(params, x):
    """x: (B, C_in, D1, D2, D3) in PyTorch NCDHW layout."""
    xcl = jnp.transpose(x, (0, 2, 3, 4, 1))                 # one transpose in
    y1, s1, q1 = conv3d_3x3_in_stats(xcl, params["w1"], params["b1"])
    h1 = instance_norm_relu_apply(y1, s1, q1, jnp.bfloat16)  # bf16 feed to conv2
    y2, s2, q2 = conv3d_3x3_in_stats(h1, params["w2"], params["b2"])
    y = instance_norm_relu_apply(y2, s2, q2, jnp.float32)
    return jnp.transpose(y, (0, 4, 1, 2, 3))                 # one transpose out


# ----------------------------------------------------------------------------
# Pure-JAX reference (same bf16 matmul inputs / f32 accumulation as the kernel)
# ----------------------------------------------------------------------------
def reference_forward(params, x):
    def conv(z, w, b):
        y = jax.lax.conv_general_dilated(
            z.astype(jnp.bfloat16), w.astype(jnp.bfloat16),
            window_strides=(1, 1, 1), padding=((1, 1), (1, 1), (1, 1)),
            dimension_numbers=("NCDHW", "OIDHW", "NCDHW"),
            preferred_element_type=jnp.float32)
        return y + b.reshape(1, -1, 1, 1, 1)

    def inorm_relu(y):
        mean = jnp.mean(y, axis=(2, 3, 4), keepdims=True)
        var = jnp.mean(jnp.square(y - mean), axis=(2, 3, 4), keepdims=True)
        return jnp.maximum((y - mean) * jax.lax.rsqrt(var + EPS), 0.0)

    y = inorm_relu(conv(x, params["w1"], params["b1"]))
    y = inorm_relu(conv(y, params["w2"], params["b2"]))
    return y


# ----------------------------------------------------------------------------
if __name__ == "__main__":
    B, ch_in, ch_out, S = 2, 4, 32, 16
    key = jax.random.PRNGKey(0)
    kw1, kw2, kb1, kb2, kx = jax.random.split(key, 5)
    params = {
        "w1": jax.random.normal(kw1, (ch_out, ch_in, 3, 3, 3), jnp.float32)
              * (2.0 / (ch_in * 27)) ** 0.5,
        "b1": 0.1 * jax.random.normal(kb1, (ch_out,), jnp.float32),
        "w2": jax.random.normal(kw2, (ch_out, ch_out, 3, 3, 3), jnp.float32)
              * (2.0 / (ch_out * 27)) ** 0.5,
        "b2": 0.1 * jax.random.normal(kb2, (ch_out,), jnp.float32),
    }
    x = jax.random.normal(kx, (B, ch_in, S, S, S), jnp.float32)

    fwd = jax.jit(doubleconv_forward)
    out = jax.block_until_ready(fwd(params, x))

    assert out.shape == (B, ch_out, S, S, S), out.shape
    assert bool(jnp.all(jnp.isfinite(out)))
    assert bool(jnp.all(out >= 0.0))                        # ReLU epilogue

    ref = jax.jit(reference_forward)(params, x)
    max_err = float(jnp.max(jnp.abs(out - ref)))
    mean_err = float(jnp.mean(jnp.abs(out - ref)))
    assert max_err < 1e-1 and mean_err < 1e-2, (max_err, mean_err)
    print("KERNEL_OK")
</pallas_src>

<mosaic_0001>
module attributes {stable_mosaic.version = 11 : i64} {
  func.func @_conv3x3_stats_kernel(%arg0: i32, %arg1: i32, %arg2: i32, %arg3: memref<1x1x16x16x4xf32, #tpu.memory_space<vmem>>, %arg4: memref<1x36x32xbf16, #tpu.memory_space<vmem>>, %arg5: memref<1x32xf32, #tpu.memory_space<vmem>>, %arg6: memref<1x1x16x16x32xf32, #tpu.memory_space<vmem>>, %arg7: memref<1x1x32xf32, #tpu.memory_space<vmem>>, %arg8: memref<1x1x32xf32, #tpu.memory_space<vmem>>, %arg9: memref<256x32xf32, #tpu.memory_space<vmem>>, %arg10: memref<18x18x4xbf16, #tpu.memory_space<vmem>>) attributes {dimension_semantics = [#tpu.dimension_semantics<parallel>, #tpu.dimension_semantics<arbitrary>, #tpu.dimension_semantics<arbitrary>], iteration_bounds = array<i64: 2, 16, 3>, scalar_prefetch = 0 : i64, scratch_operands = 2 : i64, tpu.core_type = #tpu.core_type<tc>, window_params = [{transform_indices = @transform_0, window_bounds = array<i64: 1, 1, 16, 16, 4>}, {transform_indices = @transform_1, window_bounds = array<i64: 1, 36, 32>}, {pipeline_mode = #tpu.pipeline_mode<synchronous>, transform_indices = @transform_2, window_bounds = array<i64: 1, 32>}, {transform_indices = @transform_3, window_bounds = array<i64: 1, 1, 16, 16, 32>}, {transform_indices = @transform_4, window_bounds = array<i64: 1, 1, 32>}, {transform_indices = @transform_5, window_bounds = array<i64: 1, 1, 32>}]} {
    %c0_i32 = arith.constant 0 : i32
    %0 = arith.cmpi eq, %arg1, %c0_i32 : i32
    %c0_i32_0 = arith.constant 0 : i32
    %1 = arith.cmpi eq, %arg2, %c0_i32_0 : i32
    %2 = arith.andi %0, %1 : i1
    %3 = arith.extui %2 : i1 to i32
    %c0_i32_1 = arith.constant 0 : i32
    %4 = arith.cmpi ne, %3, %c0_i32_1 : i32
    scf.if %4 {
      %cst = arith.constant 0.000000e+00 : bf16
      %18 = vector.broadcast %cst : bf16 to vector<18x18x4xbf16>
      %c0 = arith.constant 0 : index
      %c0_7 = arith.constant 0 : index
      %c0_8 = arith.constant 0 : index
      %19 = vector.load %arg10[%c0, %c0_7, %c0_8] : memref<18x18x4xbf16, #tpu.memory_space<vmem>>, vector<18x18x4xbf16>
      tpu.vector_store %arg10[%c0, %c0_7, %c0_8], %18 {strides = array<i32>} : memref<18x18x4xbf16, #tpu.memory_space<vmem>>, vector<18x18x4xbf16>,
      %cst_9 = arith.constant 0.000000e+00 : f32
      %20 = vector.broadcast %cst_9 : f32 to vector<1x1x32xf32>
      %c0_10 = arith.constant 0 : index
      %c0_11 = arith.constant 0 : index
      %c0_12 = arith.constant 0 : index
      %21 = vector.load %arg7[%c0_10, %c0_11, %c0_12] : memref<1x1x32xf32, #tpu.memory_space<vmem>>, vector<1x1x32xf32>
      tpu.vector_store %arg7[%c0_10, %c0_11, %c0_12], %20 {strides = array<i32>} : memref<1x1x32xf32, #tpu.memory_space<vmem>>, vector<1x1x32xf32>,
      %cst_13 = arith.constant 0.000000e+00 : f32
      %22 = vector.broadcast %cst_13 : f32 to vector<1x1x32xf32>
      %c0_14 = arith.constant 0 : index
      %c0_15 = arith.constant 0 : index
      %c0_16 = arith.constant 0 : index
      %23 = vector.load %arg8[%c0_14, %c0_15, %c0_16] : memref<1x1x32xf32, #tpu.memory_space<vmem>>, vector<1x1x32xf32>
      tpu.vector_store %arg8[%c0_14, %c0_15, %c0_16], %22 {strides = array<i32>} : memref<1x1x32xf32, #tpu.memory_space<vmem>>, vector<1x1x32xf32>,
    } else {
    }
    %c0_i32_2 = arith.constant 0 : i32
    %5 = arith.cmpi eq, %arg2, %c0_i32_2 : i32
    %6 = arith.extui %5 : i1 to i32
    %c0_i32_3 = arith.constant 0 : i32
    %7 = arith.cmpi ne, %6, %c0_i32_3 : i32
    scf.if %7 {
      %cst = arith.constant 0.000000e+00 : f32
      %18 = vector.broadcast %cst : f32 to vector<256x32xf32>
      %c0 = arith.constant 0 : index
      %c0_7 = arith.constant 0 : index
      %19 = vector.load %arg9[%c0, %c0_7] : memref<256x32xf32, #tpu.memory_space<vmem>>, vector<256x32xf32>
      tpu.vector_store %arg9[%c0, %c0_7], %18 {strides = array<i32>} : memref<256x32xf32, #tpu.memory_space<vmem>>, vector<256x32xf32>,
    } else {
    }
    %8 = arith.addi %arg1, %arg2 : i32
    %c1_i32 = arith.constant 1 : i32
    %9 = arith.subi %8, %c1_i32 : i32
    %c0_i32_4 = arith.constant 0 : i32
    %10 = arith.cmpi sge, %9, %c0_i32_4 : i32
    %c16_i32 = arith.constant 16 : i32
    %11 = arith.cmpi slt, %9, %c16_i32 : i32
    %12 = arith.andi %10, %11 : i1
    %13 = arith.extui %12 : i1 to i32
    %c0_i32_5 = arith.constant 0 : i32
    %14 = arith.cmpi ne, %13, %c0_i32_5 : i32
    scf.if %14 {
      %c0 = arith.constant 0 : index
      %c0_7 = arith.constant 0 : index
      %c0_8 = arith.constant 0 : index
      %c0_9 = arith.constant 0 : index
      %c0_10 = arith.constant 0 : index
      %18 = vector.load %arg3[%c0, %c0_7, %c0_8, %c0_9, %c0_10] : memref<1x1x16x16x4xf32, #tpu.memory_space<vmem>>, vector<1x1x16x16x4xf32>
      %19 = vector.shape_cast %18 : vector<1x1x16x16x4xf32> to vector<16x16x4xf32>
      %20 = arith.truncf %19 : vector<16x16x4xf32> to vector<16x16x4xbf16>
      %c1 = arith.constant 1 : index
      %c1_11 = arith.constant 1 : index
      %c0_12 = arith.constant 0 : index
      %21 = vector.load %arg10[%c1, %c1_11, %c0_12] : memref<18x18x4xbf16, #tpu.memory_space<vmem>>, vector<16x16x4xbf16>
      tpu.vector_store %arg10[%c1, %c1_11, %c0_12], %20 {strides = array<i32>} : memref<18x18x4xbf16, #tpu.memory_space<vmem>>, vector<16x16x4xbf16>,
      %c0_13 = arith.constant 0 : index
      %c0_14 = arith.constant 0 : index
      %c0_15 = arith.constant 0 : index
      %22 = vector.load %arg10[%c0_13, %c0_14, %c0_15] : memref<18x18x4xbf16, #tpu.memory_space<vmem>>, vector<16x16x4xbf16>
      %c0_16 = arith.constant 0 : index
      %c1_17 = arith.constant 1 : index
      %c0_18 = arith.constant 0 : index
      %23 = vector.load %arg10[%c0_16, %c1_17, %c0_18] : memref<18x18x4xbf16, #tpu.memory_space<vmem>>, vector<16x16x4xbf16>
      %c0_19 = arith.constant 0 : index
      %c2 = arith.constant 2 : index
      %c0_20 = arith.constant 0 : index
      %24 = vector.load %arg10[%c0_19, %c2, %c0_20] : memref<18x18x4xbf16, #tpu.memory_space<vmem>>, vector<16x16x4xbf16>
      %c1_21 = arith.constant 1 : index
      %c0_22 = arith.constant 0 : index
      %c0_23 = arith.constant 0 : index
      %25 = vector.load %arg10[%c1_21, %c0_22, %c0_23] : memref<18x18x4xbf16, #tpu.memory_space<vmem>>, vector<16x16x4xbf16>
      %c1_24 = arith.constant 1 : index
      %c1_25 = arith.constant 1 : index
      %c0_26 = arith.constant 0 : index
      %26 = vector.load %arg10[%c1_24, %c1_25, %c0_26] : memref<18x18x4xbf16, #tpu.memory_space<vmem>>, vector<16x16x4xbf16>
      %c1_27 = arith.constant 1 : index
      %c2_28 = arith.constant 2 : index
      %c0_29 = arith.constant 0 : index
      %27 = vector.load %arg10[%c1_27, %c2_28, %c0_29] : memref<18x18x4xbf16, #tpu.memory_space<vmem>>, vector<16x16x4xbf16>
      %c2_30 = arith.constant 2 : index
      %c0_31 = arith.constant 0 : index
      %c0_32 = arith.constant 0 : index
      %28 = vector.load %arg10[%c2_30, %c0_31, %c0_32] : memref<18x18x4xbf16, #tpu.memory_space<vmem>>, vector<16x16x4xbf16>
      %c2_33 = arith.constant 2 : index
      %c1_34 = arith.constant 1 : index
      %c0_35 = arith.constant 0 : index
      %29 = vector.load %arg10[%c2_33, %c1_34, %c0_35] : memref<18x18x4xbf16, #tpu.memory_space<vmem>>, vector<16x16x4xbf16>
      %c2_36 = arith.constant 2 : index
      %c2_37 = arith.constant 2 : index
      %c0_38 = arith.constant 0 : index
      %30 = vector.load %arg10[%c2_36, %c2_37, %c0_38] : memref<18x18x4xbf16, #tpu.memory_space<vmem>>, vector<16x16x4xbf16>
      %31 = tpu.concatenate %22, %23, %24, %25, %26, %27, %28, %29, %30 in 2 : vector<16x16x4xbf16>, vector<16x16x4xbf16>, vector<16x16x4xbf16>, vector<16x16x4xbf16>, vector<16x16x4xbf16>, vector<16x16x4xbf16>, vector<16x16x4xbf16>, vector<16x16x4xbf16>, vector<16x16x4xbf16> -> vector<16x16x36xbf16>
      %32 = vector.shape_cast %31 : vector<16x16x36xbf16> to vector<256x36xbf16>
      %c0_39 = arith.constant 0 : index
      %c0_40 = arith.constant 0 : index
      %33 = vector.load %arg9[%c0_39, %c0_40] : memref<256x32xf32, #tpu.memory_space<vmem>>, vector<256x32xf32>
      %c0_41 = arith.constant 0 : index
      %c0_42 = arith.constant 0 : index
      %c0_43 = arith.constant 0 : index
      %34 = vector.load %arg4[%c0_41, %c0_42, %c0_43] : memref<1x36x32xbf16, #tpu.memory_space<vmem>>, vector<1x36x32xbf16>
      %35 = vector.shape_cast %34 : vector<1x36x32xbf16> to vector<36x32xbf16>
      %cst = arith.constant dense<0.000000e+00> : vector<256x32xf32>
      %36 = tpu.matmul %32, %35, %cst {dimension_numbers = #tpu.dot_dimension_numbers<[1], [0], [0], [1], [0, 0, 1, 1], [], []>} : vector<256x36xbf16>, vector<36x32xbf16>, vector<256x32xf32> -> vector<256x32xf32>
      %37 = arith.addf %33, %36 : vector<256x32xf32>
      %c0_44 = arith.constant 0 : index
      %c0_45 = arith.constant 0 : index
      %38 = vector.load %arg9[%c0_44, %c0_45] : memref<256x32xf32, #tpu.memory_space<vmem>>, vector<256x32xf32>
      tpu.vector_store %arg9[%c0_44, %c0_45], %37 {strides = array<i32>} : memref<256x32xf32, #tpu.memory_space<vmem>>, vector<256x32xf32>,
    } else {
    }
    %c2_i32 = arith.constant 2 : i32
    %15 = arith.cmpi eq, %arg2, %c2_i32 : i32
    %16 = arith.extui %15 : i1 to i32
    %c0_i32_6 = arith.constant 0 : i32
    %17 = arith.cmpi ne, %16, %c0_i32_6 : i32
    scf.if %17 {
      %c0 = arith.constant 0 : index
      %c0_7 = arith.constant 0 : index
      %18 = vector.load %arg9[%c0, %c0_7] : memref<256x32xf32, #tpu.memory_space<vmem>>, vector<256x32xf32>
      %c0_8 = arith.constant 0 : index
      %c0_9 = arith.constant 0 : index
      %19 = vector.load %arg5[%c0_8, %c0_9] : memref<1x32xf32, #tpu.memory_space<vmem>>, vector<1x32xf32>
      %20 = vector.broadcast %19 : vector<1x32xf32> to vector<256x32xf32>
      %21 = arith.addf %18, %20 : vector<256x32xf32>
      %22 = vector.shape_cast %21 : vector<256x32xf32> to vector<16x16x32xf32>
      %c0_10 = arith.constant 0 : index
      %c0_11 = arith.constant 0 : index
      %c0_12 = arith.constant 0 : index
      %c0_13 = arith.constant 0 : index
      %c0_14 = arith.constant 0 : index
      %23 = vector.load %arg6[%c0_10, %c0_11, %c0_12, %c0_13, %c0_14] : memref<1x1x16x16x32xf32, #tpu.memory_space<vmem>>, vector<1x1x16x16x32xf32>
      %24 = vector.shape_cast %23 : vector<1x1x16x16x32xf32> to vector<16x16x32xf32>
      %25 = vector.shape_cast %22 : vector<16x16x32xf32> to vector<1x1x16x16x32xf32>
      tpu.vector_store %arg6[%c0_10, %c0_11, %c0_12, %c0_13, %c0_14], %25 {strides = array<i32>} : memref<1x1x16x16x32xf32, #tpu.memory_space<vmem>>, vector<1x1x16x16x32xf32>,
      %c0_15 = arith.constant 0 : index
      %c0_16 = arith.constant 0 : index
      %c0_17 = arith.constant 0 : index
      %26 = vector.load %arg7[%c0_15, %c0_16, %c0_17] : memref<1x1x32xf32, #tpu.memory_space<vmem>>, vector<1x1x32xf32>
      %27 = vector.shape_cast %26 : vector<1x1x32xf32> to vector<1x32xf32>
      %cst = arith.constant dense<0.000000e+00> : vector<32xf32>
      %28 = vector.multi_reduction <add>, %21, %cst [0] : vector<256x32xf32> to vector<32xf32>
      %29 = vector.shape_cast %28 : vector<32xf32> to vector<1x32xf32>
      %30 = arith.addf %27, %29 : vector<1x32xf32>
      %c0_18 = arith.constant 0 : index
      %c0_19 = arith.constant 0 : index
      %c0_20 = arith.constant 0 : index
      %31 = vector.load %arg7[%c0_18, %c0_19, %c0_20] : memref<1x1x32xf32, #tpu.memory_space<vmem>>, vector<1x1x32xf32>
      %32 = vector.shape_cast %31 : vector<1x1x32xf32> to vector<1x32xf32>
      %33 = vector.shape_cast %30 : vector<1x32xf32> to vector<1x1x32xf32>
      tpu.vector_store %arg7[%c0_18, %c0_19, %c0_20], %33 {strides = array<i32>} : memref<1x1x32xf32, #tpu.memory_space<vmem>>, vector<1x1x32xf32>,
      %c0_21 = arith.constant 0 : index
      %c0_22 = arith.constant 0 : index
      %c0_23 = arith.constant 0 : index
      %34 = vector.load %arg8[%c0_21, %c0_22, %c0_23] : memref<1x1x32xf32, #tpu.memory_space<vmem>>, vector<1x1x32xf32>
      %35 = vector.shape_cast %34 : vector<1x1x32xf32> to vector<1x32xf32>
      %36 = arith.mulf %21, %21 : vector<256x32xf32>
      %cst_24 = arith.constant dense<0.000000e+00> : vector<32xf32>
      %37 = vector.multi_reduction <add>, %36, %cst_24 [0] : vector<256x32xf32> to vector<32xf32>
      %38 = vector.shape_cast %37 : vector<32xf32> to vector<1x32xf32>
      %39 = arith.addf %35, %38 : vector<1x32xf32>
      %c0_25 = arith.constant 0 : index
      %c0_26 = arith.constant 0 : index
      %c0_27 = arith.constant 0 : index
      %40 = vector.load %arg8[%c0_25, %c0_26, %c0_27] : memref<1x1x32xf32, #tpu.memory_space<vmem>>, vector<1x1x32xf32>
      %41 = vector.shape_cast %40 : vector<1x1x32xf32> to vector<1x32xf32>
      %42 = vector.shape_cast %39 : vector<1x32xf32> to vector<1x1x32xf32>
      tpu.vector_store %arg8[%c0_25, %c0_26, %c0_27], %42 {strides = array<i32>} : memref<1x1x32xf32, #tpu.memory_space<vmem>>, vector<1x1x32xf32>,
    } else {
    }
    return
  }
  func.func @transform_0(%arg0: i32, %arg1: i32, %arg2: i32) -> (i32, i32, i32, i32, i32) {
    %0 = arith.addi %arg1, %arg2 : i32
    %c1_i32 = arith.constant 1 : i32
    %1 = arith.subi %0, %c1_i32 : i32
    %c0_i32 = arith.constant 0 : i32
    %2 = arith.maxsi %1, %c0_i32 : i32
    %c15_i32 = arith.constant 15 : i32
    %3 = arith.minsi %2, %c15_i32 : i32
    %c0_i32_0 = arith.constant 0 : i32
    %c0_i32_1 = arith.constant 0 : i32
    %c0_i32_2 = arith.constant 0 : i32
    %c0_i32_3 = arith.constant 0 : i32
    return %arg0, %3, %c0_i32_0, %c0_i32_1, %c0_i32_2 : i32, i32, i32, i32, i32
  }
  func.func @transform_1(%arg0: i32, %arg1: i32, %arg2: i32) -> (i32, i32, i32) {
    %c0_i32 = arith.constant 0 : i32
    %c0_i32_0 = arith.constant 0 : i32
    %c0_i32_1 = arith.constant 0 : i32
    return %arg2, %c0_i32, %c0_i32_0 : i32, i32, i32
  }
  func.func @transform_2(%arg0: i32, %arg1: i32, %arg2: i32) -> (i32, i32) {
    %c0_i32 = arith.constant 0 : i32
    %c0_i32_0 = arith.constant 0 : i32
    %c0_i32_1 = arith.constant 0 : i32
    return %c0_i32, %c0_i32_0 : i32, i32
  }
  func.func @transform_3(%arg0: i32, %arg1: i32, %arg2: i32) -> (i32, i32, i32, i32, i32) {
    %c0_i32 = arith.constant 0 : i32
    %c0_i32_0 = arith.constant 0 : i32
    %c0_i32_1 = arith.constant 0 : i32
    %c0_i32_2 = arith.constant 0 : i32
    return %arg0, %arg1, %c0_i32, %c0_i32_0, %c0_i32_1 : i32, i32, i32, i32, i32
  }
  func.func @transform_4(%arg0: i32, %arg1: i32, %arg2: i32) -> (i32, i32, i32) {
    %c0_i32 = arith.constant 0 : i32
    %c0_i32_0 = arith.constant 0 : i32
    %c0_i32_1 = arith.constant 0 : i32
    return %arg0, %c0_i32, %c0_i32_0 : i32, i32, i32
  }
  func.func @transform_5(%arg0: i32, %arg1: i32, %arg2: i32) -> (i32, i32, i32) {
    %c0_i32 = arith.constant 0 : i32
    %c0_i32_0 = arith.constant 0 : i32
    %c0_i32_1 = arith.constant 0 : i32
    return %arg0, %c0_i32, %c0_i32_0 : i32, i32, i32
  }
}

module attributes {stable_mosaic.version = 11 : i64} {
  func.func @_in_apply_relu_kernel(%arg0: i32, %arg1: i32, %arg2: memref<1x2048x32xf32, #tpu.memory_space<vmem>>, %arg3: memref<1x1x32xf32, #tpu.memory_space<vmem>>, %arg4: memref<1x1x32xf32, #tpu.memory_space<vmem>>, %arg5: memref<1x2048x32xbf16, #tpu.memory_space<vmem>>) attributes {dimension_semantics = [#tpu.dimension_semantics<parallel>, #tpu.dimension_semantics<parallel>], iteration_bounds = array<i64: 2, 2>, scalar_prefetch = 0 : i64, scratch_operands = 0 : i64, tpu.core_type = #tpu.core_type<tc>, window_params = [{transform_indices = @transform_0, window_bounds = array<i64: 1, 2048, 32>}, {transform_indices = @transform_1, window_bounds = array<i64: 1, 1, 32>}, {transform_indices = @transform_2, window_bounds = array<i64: 1, 1, 32>}, {transform_indices = @transform_3, window_bounds = array<i64: 1, 2048, 32>}]} {
    %c0 = arith.constant 0 : index
    %c0_0 = arith.constant 0 : index
    %c0_1 = arith.constant 0 : index
    %0 = vector.load %arg3[%c0, %c0_0, %c0_1] : memref<1x1x32xf32, #tpu.memory_space<vmem>>, vector<1x1x32xf32>
    %1 = vector.shape_cast %0 : vector<1x1x32xf32> to vector<1x32xf32>
    %cst = arith.constant 2.44140625E-4 : f32
    %2 = vector.broadcast %cst : f32 to vector<1x32xf32>
    %3 = arith.mulf %1, %2 : vector<1x32xf32>
    %c0_2 = arith.constant 0 : index
    %c0_3 = arith.constant 0 : index
    %c0_4 = arith.constant 0 : index
    %4 = vector.load %arg4[%c0_2, %c0_3, %c0_4] : memref<1x1x32xf32, #tpu.memory_space<vmem>>, vector<1x1x32xf32>
    %5 = vector.shape_cast %4 : vector<1x1x32xf32> to vector<1x32xf32>
    %cst_5 = arith.constant 2.44140625E-4 : f32
    %6 = vector.broadcast %cst_5 : f32 to vector<1x32xf32>
    %7 = arith.mulf %5, %6 : vector<1x32xf32>
    %8 = arith.mulf %3, %3 : vector<1x32xf32>
    %9 = arith.subf %7, %8 : vector<1x32xf32>
    %cst_6 = arith.constant 0.000000e+00 : f32
    %10 = vector.broadcast %cst_6 : f32 to vector<1x32xf32>
    %11 = arith.maximumf %9, %10 : vector<1x32xf32>
    %cst_7 = arith.constant 9.99999974E-6 : f32
    %12 = vector.broadcast %cst_7 : f32 to vector<1x32xf32>
    %13 = arith.addf %11, %12 : vector<1x32xf32>
    %14 = math.rsqrt %13 : vector<1x32xf32>
    %c0_8 = arith.constant 0 : index
    %c0_9 = arith.constant 0 : index
    %c0_10 = arith.constant 0 : index
    %15 = vector.load %arg2[%c0_8, %c0_9, %c0_10] : memref<1x2048x32xf32, #tpu.memory_space<vmem>>, vector<1x2048x32xf32>
    %16 = vector.shape_cast %15 : vector<1x2048x32xf32> to vector<2048x32xf32>
    %17 = vector.broadcast %3 : vector<1x32xf32> to vector<2048x32xf32>
    %18 = arith.subf %16, %17 : vector<2048x32xf32>
    %19 = vector.broadcast %14 : vector<1x32xf32> to vector<2048x32xf32>
    %20 = arith.mulf %18, %19 : vector<2048x32xf32>
    %cst_11 = arith.constant 0.000000e+00 : f32
    %21 = vector.broadcast %cst_11 : f32 to vector<2048x32xf32>
    %22 = arith.maximumf %20, %21 : vector<2048x32xf32>
    %23 = arith.truncf %22 : vector<2048x32xf32> to vector<2048x32xbf16>
    %c0_12 = arith.constant 0 : index
    %c0_13 = arith.constant 0 : index
    %c0_14 = arith.constant 0 : index
    %24 = vector.load %arg5[%c0_12, %c0_13, %c0_14] : memref<1x2048x32xbf16, #tpu.memory_space<vmem>>, vector<1x2048x32xbf16>
    %25 = vector.shape_cast %24 : vector<1x2048x32xbf16> to vector<2048x32xbf16>
    %26 = vector.shape_cast %23 : vector<2048x32xbf16> to vector<1x2048x32xbf16>
    tpu.vector_store %arg5[%c0_12, %c0_13, %c0_14], %26 {strides = array<i32>} : memref<1x2048x32xbf16, #tpu.memory_space<vmem>>, vector<1x2048x32xbf16>,
    return
  }
  func.func @transform_0(%arg0: i32, %arg1: i32) -> (i32, i32, i32) {
    %c0_i32 = arith.constant 0 : i32
    %c0_i32_0 = arith.constant 0 : i32
    return %arg0, %arg1, %c0_i32 : i32, i32, i32
  }
  func.func @transform_1(%arg0: i32, %arg1: i32) -> (i32, i32, i32) {
    %c0_i32 = arith.constant 0 : i32
    %c0_i32_0 = arith.constant 0 : i32
    %c0_i32_1 = arith.constant 0 : i32
    return %arg0, %c0_i32, %c0_i32_0 : i32, i32, i32
  }
  func.func @transform_2(%arg0: i32, %arg1: i32) -> (i32, i32, i32) {
    %c0_i32 = arith.constant 0 : i32
    %c0_i32_0 = arith.constant 0 : i32
    %c0_i32_1 = arith.constant 0 : i32
    return %arg0, %c0_i32, %c0_i32_0 : i32, i32, i32
  }
  func.func @transform_3(%arg0: i32, %arg1: i32) -> (i32, i32, i32) {
    %c0_i32 = arith.constant 0 : i32
    %c0_i32_0 = arith.constant 0 : i32
    return %arg0, %arg1, %c0_i32 : i32, i32, i32
  }
}

module attributes {stable_mosaic.version = 11 : i64} {
  func.func @_conv3x3_stats_kernel(%arg0: i32, %arg1: i32, %arg2: i32, %arg3: memref<1x1x16x16x32xbf16, #tpu.memory_space<vmem>>, %arg4: memref<1x288x32xbf16, #tpu.memory_space<vmem>>, %arg5: memref<1x32xf32, #tpu.memory_space<vmem>>, %arg6: memref<1x1x16x16x32xf32, #tpu.memory_space<vmem>>, %arg7: memref<1x1x32xf32, #tpu.memory_space<vmem>>, %arg8: memref<1x1x32xf32, #tpu.memory_space<vmem>>, %arg9: memref<256x32xf32, #tpu.memory_space<vmem>>, %arg10: memref<18x18x32xbf16, #tpu.memory_space<vmem>>) attributes {dimension_semantics = [#tpu.dimension_semantics<parallel>, #tpu.dimension_semantics<arbitrary>, #tpu.dimension_semantics<arbitrary>], iteration_bounds = array<i64: 2, 16, 3>, scalar_prefetch = 0 : i64, scratch_operands = 2 : i64, tpu.core_type = #tpu.core_type<tc>, window_params = [{transform_indices = @transform_0, window_bounds = array<i64: 1, 1, 16, 16, 32>}, {transform_indices = @transform_1, window_bounds = array<i64: 1, 288, 32>}, {pipeline_mode = #tpu.pipeline_mode<synchronous>, transform_indices = @transform_2, window_bounds = array<i64: 1, 32>}, {transform_indices = @transform_3, window_bounds = array<i64: 1, 1, 16, 16, 32>}, {transform_indices = @transform_4, window_bounds = array<i64: 1, 1, 32>}, {transform_indices = @transform_5, window_bounds = array<i64: 1, 1, 32>}]} {
    %c0_i32 = arith.constant 0 : i32
    %0 = arith.cmpi eq, %arg1, %c0_i32 : i32
    %c0_i32_0 = arith.constant 0 : i32
    %1 = arith.cmpi eq, %arg2, %c0_i32_0 : i32
    %2 = arith.andi %0, %1 : i1
    %3 = arith.extui %2 : i1 to i32
    %c0_i32_1 = arith.constant 0 : i32
    %4 = arith.cmpi ne, %3, %c0_i32_1 : i32
    scf.if %4 {
      %cst = arith.constant 0.000000e+00 : bf16
      %18 = vector.broadcast %cst : bf16 to vector<18x18x32xbf16>
      %c0 = arith.constant 0 : index
      %c0_7 = arith.constant 0 : index
      %c0_8 = arith.constant 0 : index
      %19 = vector.load %arg10[%c0, %c0_7, %c0_8] : memref<18x18x32xbf16, #tpu.memory_space<vmem>>, vector<18x18x32xbf16>
      tpu.vector_store %arg10[%c0, %c0_7, %c0_8], %18 {strides = array<i32>} : memref<18x18x32xbf16, #tpu.memory_space<vmem>>, vector<18x18x32xbf16>,
      %cst_9 = arith.constant 0.000000e+00 : f32
      %20 = vector.broadcast %cst_9 : f32 to vector<1x1x32xf32>
      %c0_10 = arith.constant 0 : index
      %c0_11 = arith.constant 0 : index
      %c0_12 = arith.constant 0 : index
      %21 = vector.load %arg7[%c0_10, %c0_11, %c0_12] : memref<1x1x32xf32, #tpu.memory_space<vmem>>, vector<1x1x32xf32>
      tpu.vector_store %arg7[%c0_10, %c0_11, %c0_12], %20 {strides = array<i32>} : memref<1x1x32xf32, #tpu.memory_space<vmem>>, vector<1x1x32xf32>,
      %cst_13 = arith.constant 0.000000e+00 : f32
      %22 = vector.broadcast %cst_13 : f32 to vector<1x1x32xf32>
      %c0_14 = arith.constant 0 : index
      %c0_15 = arith.constant 0 : index
      %c0_16 = arith.constant 0 : index
      %23 = vector.load %arg8[%c0_14, %c0_15, %c0_16] : memref<1x1x32xf32, #tpu.memory_space<vmem>>, vector<1x1x32xf32>
      tpu.vector_store %arg8[%c0_14, %c0_15, %c0_16], %22 {strides = array<i32>} : memref<1x1x32xf32, #tpu.memory_space<vmem>>, vector<1x1x32xf32>,
    } else {
    }
    %c0_i32_2 = arith.constant 0 : i32
    %5 = arith.cmpi eq, %arg2, %c0_i32_2 : i32
    %6 = arith.extui %5 : i1 to i32
    %c0_i32_3 = arith.constant 0 : i32
    %7 = arith.cmpi ne, %6, %c0_i32_3 : i32
    scf.if %7 {
      %cst = arith.constant 0.000000e+00 : f32
      %18 = vector.broadcast %cst : f32 to vector<256x32xf32>
      %c0 = arith.constant 0 : index
      %c0_7 = arith.constant 0 : index
      %19 = vector.load %arg9[%c0, %c0_7] : memref<256x32xf32, #tpu.memory_space<vmem>>, vector<256x32xf32>
      tpu.vector_store %arg9[%c0, %c0_7], %18 {strides = array<i32>} : memref<256x32xf32, #tpu.memory_space<vmem>>, vector<256x32xf32>,
    } else {
    }
    %8 = arith.addi %arg1, %arg2 : i32
    %c1_i32 = arith.constant 1 : i32
    %9 = arith.subi %8, %c1_i32 : i32
    %c0_i32_4 = arith.constant 0 : i32
    %10 = arith.cmpi sge, %9, %c0_i32_4 : i32
    %c16_i32 = arith.constant 16 : i32
    %11 = arith.cmpi slt, %9, %c16_i32 : i32
    %12 = arith.andi %10, %11 : i1
    %13 = arith.extui %12 : i1 to i32
    %c0_i32_5 = arith.constant 0 : i32
    %14 = arith.cmpi ne, %13, %c0_i32_5 : i32
    scf.if %14 {
      %c0 = arith.constant 0 : index
      %c0_7 = arith.constant 0 : index
      %c0_8 = arith.constant 0 : index
      %c0_9 = arith.constant 0 : index
      %c0_10 = arith.constant 0 : index
      %18 = vector.load %arg3[%c0, %c0_7, %c0_8, %c0_9, %c0_10] : memref<1x1x16x16x32xbf16, #tpu.memory_space<vmem>>, vector<1x1x16x16x32xbf16>
      %19 = vector.shape_cast %18 : vector<1x1x16x16x32xbf16> to vector<16x16x32xbf16>
      %c1 = arith.constant 1 : index
      %c1_11 = arith.constant 1 : index
      %c0_12 = arith.constant 0 : index
      %20 = vector.load %arg10[%c1, %c1_11, %c0_12] : memref<18x18x32xbf16, #tpu.memory_space<vmem>>, vector<16x16x32xbf16>
      tpu.vector_store %arg10[%c1, %c1_11, %c0_12], %19 {strides = array<i32>} : memref<18x18x32xbf16, #tpu.memory_space<vmem>>, vector<16x16x32xbf16>,
      %c0_13 = arith.constant 0 : index
      %c0_14 = arith.constant 0 : index
      %c0_15 = arith.constant 0 : index
      %21 = vector.load %arg10[%c0_13, %c0_14, %c0_15] : memref<18x18x32xbf16, #tpu.memory_space<vmem>>, vector<16x16x32xbf16>
      %c0_16 = arith.constant 0 : index
      %c1_17 = arith.constant 1 : index
      %c0_18 = arith.constant 0 : index
      %22 = vector.load %arg10[%c0_16, %c1_17, %c0_18] : memref<18x18x32xbf16, #tpu.memory_space<vmem>>, vector<16x16x32xbf16>
      %c0_19 = arith.constant 0 : index
      %c2 = arith.constant 2 : index
      %c0_20 = arith.constant 0 : index
      %23 = vector.load %arg10[%c0_19, %c2, %c0_20] : memref<18x18x32xbf16, #tpu.memory_space<vmem>>, vector<16x16x32xbf16>
      %c1_21 = arith.constant 1 : index
      %c0_22 = arith.constant 0 : index
      %c0_23 = arith.constant 0 : index
      %24 = vector.load %arg10[%c1_21, %c0_22, %c0_23] : memref<18x18x32xbf16, #tpu.memory_space<vmem>>, vector<16x16x32xbf16>
      %c1_24 = arith.constant 1 : index
      %c1_25 = arith.constant 1 : index
      %c0_26 = arith.constant 0 : index
      %25 = vector.load %arg10[%c1_24, %c1_25, %c0_26] : memref<18x18x32xbf16, #tpu.memory_space<vmem>>, vector<16x16x32xbf16>
      %c1_27 = arith.constant 1 : index
      %c2_28 = arith.constant 2 : index
      %c0_29 = arith.constant 0 : index
      %26 = vector.load %arg10[%c1_27, %c2_28, %c0_29] : memref<18x18x32xbf16, #tpu.memory_space<vmem>>, vector<16x16x32xbf16>
      %c2_30 = arith.constant 2 : index
      %c0_31 = arith.constant 0 : index
      %c0_32 = arith.constant 0 : index
      %27 = vector.load %arg10[%c2_30, %c0_31, %c0_32] : memref<18x18x32xbf16, #tpu.memory_space<vmem>>, vector<16x16x32xbf16>
      %c2_33 = arith.constant 2 : index
      %c1_34 = arith.constant 1 : index
      %c0_35 = arith.constant 0 : index
      %28 = vector.load %arg10[%c2_33, %c1_34, %c0_35] : memref<18x18x32xbf16, #tpu.memory_space<vmem>>, vector<16x16x32xbf16>
      %c2_36 = arith.constant 2 : index
      %c2_37 = arith.constant 2 : index
      %c0_38 = arith.constant 0 : index
      %29 = vector.load %arg10[%c2_36, %c2_37, %c0_38] : memref<18x18x32xbf16, #tpu.memory_space<vmem>>, vector<16x16x32xbf16>
      %30 = tpu.concatenate %21, %22, %23, %24, %25, %26, %27, %28, %29 in 2 : vector<16x16x32xbf16>, vector<16x16x32xbf16>, vector<16x16x32xbf16>, vector<16x16x32xbf16>, vector<16x16x32xbf16>, vector<16x16x32xbf16>, vector<16x16x32xbf16>, vector<16x16x32xbf16>, vector<16x16x32xbf16> -> vector<16x16x288xbf16>
      %31 = vector.shape_cast %30 : vector<16x16x288xbf16> to vector<256x288xbf16>
      %c0_39 = arith.constant 0 : index
      %c0_40 = arith.constant 0 : index
      %32 = vector.load %arg9[%c0_39, %c0_40] : memref<256x32xf32, #tpu.memory_space<vmem>>, vector<256x32xf32>
      %c0_41 = arith.constant 0 : index
      %c0_42 = arith.constant 0 : index
      %c0_43 = arith.constant 0 : index
      %33 = vector.load %arg4[%c0_41, %c0_42, %c0_43] : memref<1x288x32xbf16, #tpu.memory_space<vmem>>, vector<1x288x32xbf16>
      %34 = vector.shape_cast %33 : vector<1x288x32xbf16> to vector<288x32xbf16>
      %cst = arith.constant dense<0.000000e+00> : vector<256x32xf32>
      %35 = tpu.matmul %31, %34, %cst {dimension_numbers = #tpu.dot_dimension_numbers<[1], [0], [0], [1], [0, 0, 1, 1], [], []>} : vector<256x288xbf16>, vector<288x32xbf16>, vector<256x32xf32> -> vector<256x32xf32>
      %36 = arith.addf %32, %35 : vector<256x32xf32>
      %c0_44 = arith.constant 0 : index
      %c0_45 = arith.constant 0 : index
      %37 = vector.load %arg9[%c0_44, %c0_45] : memref<256x32xf32, #tpu.memory_space<vmem>>, vector<256x32xf32>
      tpu.vector_store %arg9[%c0_44, %c0_45], %36 {strides = array<i32>} : memref<256x32xf32, #tpu.memory_space<vmem>>, vector<256x32xf32>,
    } else {
    }
    %c2_i32 = arith.constant 2 : i32
    %15 = arith.cmpi eq, %arg2, %c2_i32 : i32
    %16 = arith.extui %15 : i1 to i32
    %c0_i32_6 = arith.constant 0 : i32
    %17 = arith.cmpi ne, %16, %c0_i32_6 : i32
    scf.if %17 {
      %c0 = arith.constant 0 : index
      %c0_7 = arith.constant 0 : index
      %18 = vector.load %arg9[%c0, %c0_7] : memref<256x32xf32, #tpu.memory_space<vmem>>, vector<256x32xf32>
      %c0_8 = arith.constant 0 : index
      %c0_9 = arith.constant 0 : index
      %19 = vector.load %arg5[%c0_8, %c0_9] : memref<1x32xf32, #tpu.memory_space<vmem>>, vector<1x32xf32>
      %20 = vector.broadcast %19 : vector<1x32xf32> to vector<256x32xf32>
      %21 = arith.addf %18, %20 : vector<256x32xf32>
      %22 = vector.shape_cast %21 : vector<256x32xf32> to vector<16x16x32xf32>
      %c0_10 = arith.constant 0 : index
      %c0_11 = arith.constant 0 : index
      %c0_12 = arith.constant 0 : index
      %c0_13 = arith.constant 0 : index
      %c0_14 = arith.constant 0 : index
      %23 = vector.load %arg6[%c0_10, %c0_11, %c0_12, %c0_13, %c0_14] : memref<1x1x16x16x32xf32, #tpu.memory_space<vmem>>, vector<1x1x16x16x32xf32>
      %24 = vector.shape_cast %23 : vector<1x1x16x16x32xf32> to vector<16x16x32xf32>
      %25 = vector.shape_cast %22 : vector<16x16x32xf32> to vector<1x1x16x16x32xf32>
      tpu.vector_store %arg6[%c0_10, %c0_11, %c0_12, %c0_13, %c0_14], %25 {strides = array<i32>} : memref<1x1x16x16x32xf32, #tpu.memory_space<vmem>>, vector<1x1x16x16x32xf32>,
      %c0_15 = arith.constant 0 : index
      %c0_16 = arith.constant 0 : index
      %c0_17 = arith.constant 0 : index
      %26 = vector.load %arg7[%c0_15, %c0_16, %c0_17] : memref<1x1x32xf32, #tpu.memory_space<vmem>>, vector<1x1x32xf32>
      %27 = vector.shape_cast %26 : vector<1x1x32xf32> to vector<1x32xf32>
      %cst = arith.constant dense<0.000000e+00> : vector<32xf32>
      %28 = vector.multi_reduction <add>, %21, %cst [0] : vector<256x32xf32> to vector<32xf32>
      %29 = vector.shape_cast %28 : vector<32xf32> to vector<1x32xf32>
      %30 = arith.addf %27, %29 : vector<1x32xf32>
      %c0_18 = arith.constant 0 : index
      %c0_19 = arith.constant 0 : index
      %c0_20 = arith.constant 0 : index
      %31 = vector.load %arg7[%c0_18, %c0_19, %c0_20] : memref<1x1x32xf32, #tpu.memory_space<vmem>>, vector<1x1x32xf32>
      %32 = vector.shape_cast %31 : vector<1x1x32xf32> to vector<1x32xf32>
      %33 = vector.shape_cast %30 : vector<1x32xf32> to vector<1x1x32xf32>
      tpu.vector_store %arg7[%c0_18, %c0_19, %c0_20], %33 {strides = array<i32>} : memref<1x1x32xf32, #tpu.memory_space<vmem>>, vector<1x1x32xf32>,
      %c0_21 = arith.constant 0 : index
      %c0_22 = arith.constant 0 : index
      %c0_23 = arith.constant 0 : index
      %34 = vector.load %arg8[%c0_21, %c0_22, %c0_23] : memref<1x1x32xf32, #tpu.memory_space<vmem>>, vector<1x1x32xf32>
      %35 = vector.shape_cast %34 : vector<1x1x32xf32> to vector<1x32xf32>
      %36 = arith.mulf %21, %21 : vector<256x32xf32>
      %cst_24 = arith.constant dense<0.000000e+00> : vector<32xf32>
      %37 = vector.multi_reduction <add>, %36, %cst_24 [0] : vector<256x32xf32> to vector<32xf32>
      %38 = vector.shape_cast %37 : vector<32xf32> to vector<1x32xf32>
      %39 = arith.addf %35, %38 : vector<1x32xf32>
      %c0_25 = arith.constant 0 : index
      %c0_26 = arith.constant 0 : index
      %c0_27 = arith.constant 0 : index
      %40 = vector.load %arg8[%c0_25, %c0_26, %c0_27] : memref<1x1x32xf32, #tpu.memory_space<vmem>>, vector<1x1x32xf32>
      %41 = vector.shape_cast %40 : vector<1x1x32xf32> to vector<1x32xf32>
      %42 = vector.shape_cast %39 : vector<1x32xf32> to vector<1x1x32xf32>
      tpu.vector_store %arg8[%c0_25, %c0_26, %c0_27], %42 {strides = array<i32>} : memref<1x1x32xf32, #tpu.memory_space<vmem>>, vector<1x1x32xf32>,
    } else {
    }
    return
  }
  func.func @transform_0(%arg0: i32, %arg1: i32, %arg2: i32) -> (i32, i32, i32, i32, i32) {
    %0 = arith.addi %arg1, %arg2 : i32
    %c1_i32 = arith.constant 1 : i32
    %1 = arith.subi %0, %c1_i32 : i32
    %c0_i32 = arith.constant 0 : i32
    %2 = arith.maxsi %1, %c0_i32 : i32
    %c15_i32 = arith.constant 15 : i32
    %3 = arith.minsi %2, %c15_i32 : i32
    %c0_i32_0 = arith.constant 0 : i32
    %c0_i32_1 = arith.constant 0 : i32
    %c0_i32_2 = arith.constant 0 : i32
    %c0_i32_3 = arith.constant 0 : i32
    return %arg0, %3, %c0_i32_0, %c0_i32_1, %c0_i32_2 : i32, i32, i32, i32, i32
  }
  func.func @transform_1(%arg0: i32, %arg1: i32, %arg2: i32) -> (i32, i32, i32) {
    %c0_i32 = arith.constant 0 : i32
    %c0_i32_0 = arith.constant 0 : i32
    %c0_i32_1 = arith.constant 0 : i32
    return %arg2, %c0_i32, %c0_i32_0 : i32, i32, i32
  }
  func.func @transform_2(%arg0: i32, %arg1: i32, %arg2: i32) -> (i32, i32) {
    %c0_i32 = arith.constant 0 : i32
    %c0_i32_0 = arith.constant 0 : i32
    %c0_i32_1 = arith.constant 0 : i32
    return %c0_i32, %c0_i32_0 : i32, i32
  }
  func.func @transform_3(%arg0: i32, %arg1: i32, %arg2: i32) -> (i32, i32, i32, i32, i32) {
    %c0_i32 = arith.constant 0 : i32
    %c0_i32_0 = arith.constant 0 : i32
    %c0_i32_1 = arith.constant 0 : i32
    %c0_i32_2 = arith.constant 0 : i32
    return %arg0, %arg1, %c0_i32, %c0_i32_0, %c0_i32_1 : i32, i32, i32, i32, i32
  }
  func.func @transform_4(%arg0: i32, %arg1: i32, %arg2: i32) -> (i32, i32, i32) {
    %c0_i32 = arith.constant 0 : i32
    %c0_i32_0 = arith.constant 0 : i32
    %c0_i32_1 = arith.constant 0 : i32
    return %arg0, %c0_i32, %c0_i32_0 : i32, i32, i32
  }
  func.func @transform_5(%arg0: i32, %arg1: i32, %arg2: i32) -> (i32, i32, i32) {
    %c0_i32 = arith.constant 0 : i32
    %c0_i32_0 = arith.constant 0 : i32
    %c0_i32_1 = arith.constant 0 : i32
    return %arg0, %c0_i32, %c0_i32_0 : i32, i32, i32
  }
}

module attributes {stable_mosaic.version = 11 : i64} {
  func.func @_in_apply_relu_kernel(%arg0: i32, %arg1: i32, %arg2: memref<1x2048x32xf32, #tpu.memory_space<vmem>>, %arg3: memref<1x1x32xf32, #tpu.memory_space<vmem>>, %arg4: memref<1x1x32xf32, #tpu.memory_space<vmem>>, %arg5: memref<1x2048x32xf32, #tpu.memory_space<vmem>>) attributes {dimension_semantics = [#tpu.dimension_semantics<parallel>, #tpu.dimension_semantics<parallel>], iteration_bounds = array<i64: 2, 2>, scalar_prefetch = 0 : i64, scratch_operands = 0 : i64, tpu.core_type = #tpu.core_type<tc>, window_params = [{transform_indices = @transform_0, window_bounds = array<i64: 1, 2048, 32>}, {transform_indices = @transform_1, window_bounds = array<i64: 1, 1, 32>}, {transform_indices = @transform_2, window_bounds = array<i64: 1, 1, 32>}, {transform_indices = @transform_3, window_bounds = array<i64: 1, 2048, 32>}]} {
    %c0 = arith.constant 0 : index
    %c0_0 = arith.constant 0 : index
    %c0_1 = arith.constant 0 : index
    %0 = vector.load %arg3[%c0, %c0_0, %c0_1] : memref<1x1x32xf32, #tpu.memory_space<vmem>>, vector<1x1x32xf32>
    %1 = vector.shape_cast %0 : vector<1x1x32xf32> to vector<1x32xf32>
    %cst = arith.constant 2.44140625E-4 : f32
    %2 = vector.broadcast %cst : f32 to vector<1x32xf32>
    %3 = arith.mulf %1, %2 : vector<1x32xf32>
    %c0_2 = arith.constant 0 : index
    %c0_3 = arith.constant 0 : index
    %c0_4 = arith.constant 0 : index
    %4 = vector.load %arg4[%c0_2, %c0_3, %c0_4] : memref<1x1x32xf32, #tpu.memory_space<vmem>>, vector<1x1x32xf32>
    %5 = vector.shape_cast %4 : vector<1x1x32xf32> to vector<1x32xf32>
    %cst_5 = arith.constant 2.44140625E-4 : f32
    %6 = vector.broadcast %cst_5 : f32 to vector<1x32xf32>
    %7 = arith.mulf %5, %6 : vector<1x32xf32>
    %8 = arith.mulf %3, %3 : vector<1x32xf32>
    %9 = arith.subf %7, %8 : vector<1x32xf32>
    %cst_6 = arith.constant 0.000000e+00 : f32
    %10 = vector.broadcast %cst_6 : f32 to vector<1x32xf32>
    %11 = arith.maximumf %9, %10 : vector<1x32xf32>
    %cst_7 = arith.constant 9.99999974E-6 : f32
    %12 = vector.broadcast %cst_7 : f32 to vector<1x32xf32>
    %13 = arith.addf %11, %12 : vector<1x32xf32>
    %14 = math.rsqrt %13 : vector<1x32xf32>
    %c0_8 = arith.constant 0 : index
    %c0_9 = arith.constant 0 : index
    %c0_10 = arith.constant 0 : index
    %15 = vector.load %arg2[%c0_8, %c0_9, %c0_10] : memref<1x2048x32xf32, #tpu.memory_space<vmem>>, vector<1x2048x32xf32>
    %16 = vector.shape_cast %15 : vector<1x2048x32xf32> to vector<2048x32xf32>
    %17 = vector.broadcast %3 : vector<1x32xf32> to vector<2048x32xf32>
    %18 = arith.subf %16, %17 : vector<2048x32xf32>
    %19 = vector.broadcast %14 : vector<1x32xf32> to vector<2048x32xf32>
    %20 = arith.mulf %18, %19 : vector<2048x32xf32>
    %cst_11 = arith.constant 0.000000e+00 : f32
    %21 = vector.broadcast %cst_11 : f32 to vector<2048x32xf32>
    %22 = arith.maximumf %20, %21 : vector<2048x32xf32>
    %c0_12 = arith.constant 0 : index
    %c0_13 = arith.constant 0 : index
    %c0_14 = arith.constant 0 : index
    %23 = vector.load %arg5[%c0_12, %c0_13, %c0_14] : memref<1x2048x32xf32, #tpu.memory_space<vmem>>, vector<1x2048x32xf32>
    %24 = vector.shape_cast %23 : vector<1x2048x32xf32> to vector<2048x32xf32>
    %25 = vector.shape_cast %22 : vector<2048x32xf32> to vector<1x2048x32xf32>
    tpu.vector_store %arg5[%c0_12, %c0_13, %c0_14], %25 {strides = array<i32>} : memref<1x2048x32xf32, #tpu.memory_space<vmem>>, vector<1x2048x32xf32>,
    return
  }
  func.func @transform_0(%arg0: i32, %arg1: i32) -> (i32, i32, i32) {
    %c0_i32 = arith.constant 0 : i32
    %c0_i32_0 = arith.constant 0 : i32
    return %arg0, %arg1, %c0_i32 : i32, i32, i32
  }
  func.func @transform_1(%arg0: i32, %arg1: i32) -> (i32, i32, i32) {
    %c0_i32 = arith.constant 0 : i32
    %c0_i32_0 = arith.constant 0 : i32
    %c0_i32_1 = arith.constant 0 : i32
    return %arg0, %c0_i32, %c0_i32_0 : i32, i32, i32
  }
  func.func @transform_2(%arg0: i32, %arg1: i32) -> (i32, i32, i32) {
    %c0_i32 = arith.constant 0 : i32
    %c0_i32_0 = arith.constant 0 : i32
    %c0_i32_1 = arith.constant 0 : i32
    return %arg0, %c0_i32, %c0_i32_0 : i32, i32, i32
  }
  func.func @transform_3(%arg0: i32, %arg1: i32) -> (i32, i32, i32) {
    %c0_i32 = arith.constant 0 : i32
    %c0_i32_0 = arith.constant 0 : i32
    return %arg0, %arg1, %c0_i32 : i32, i32, i32
  }
}

</mosaic_0001>

<llo_original>
// kernel: doubleconv_forward.5
$region0: #{doubleconv_forward.5}
  #allocation0 [shape = 'u32[]', space=smem, size = 0x4, offset = 0x4, fixed_abs, tag = 'smem constant byte address 0x4 - core index']
  #allocation1 [shape = 'u32[144,128]{1,0:T(1,128)}', space=vmem, size = 0x12000, scoped, tag = 'internal scratch']
  %s0 = inlined_call_operand.vmem [shape: f32[2,4096,32], index: 0, kind: input, shape index: {}]
  %s1 = inlined_call_operand.vmem [shape: f32[2,1,32], index: 1, kind: input, shape index: {}]
  %s2 = inlined_call_operand.vmem [shape: f32[2,1,32], index: 2, kind: input, shape index: {}]
  %s3 = inlined_call_operand.vmem [shape: bf16[2,4096,32], index: 3, kind: output, shape index: {}]
  %s4 = sld [smem:[#allocation0]]
  $region45: #{doubleconv_forward.5} parent=0
    _
  %s6 = ssub.s32 1, %s4
  %s7 = scalar_select 0, %s6, %s4
  loop: start=0, step=1, limit=6
  $region2: #{doubleconv_forward.5} parent=0 // loop_pre_header
    _
  $region3: #{doubleconv_forward.5} parent=0 // loop_header
    %s9 = sphi 0, %s13
    %p10 = scmp.ge.s32.totalorder %s9, 6
    %s16 = sphi 0, %s28
    %s17 = sphi 0, %s24
    %s18 = sphi 0, %s16
    %s19 = sphi 0, %s17
    %s20 = sphi 0, %s18
    %s21 = sphi 0, %s19
    %s33 = sphi 0, %s35
    %s36 = sphi 0, %s33
    %s37 = sphi 0, %s36
    %s53 = sphi 0, %s37
    %s59 = sphi 0, %s61
    %s62 = sphi 0, %s59
    %s63 = sphi 0, %s62
    %s79 = sphi 0, %s63
    %s85 = sphi 0, %s87
    %s88 = sphi 0, %s85
    %s89 = sphi 0, %s88
    %s105 = sphi 0, %s89
    %s113 = sphi 0, %s115
    %s116 = sphi 0, %s113
    %s117 = sphi 0, %s116
    %s133 = sphi 0, %s117
  $region4: #{doubleconv_forward.5} parent=0 // loop_header_branch
    %12 = sbr.rel (%p10) target = $region8
  $region5: #{doubleconv_forward.5} parent=0 // loop_body
    %s14 = ssub.s32 %s9, 1
    %s15 = ssub.s32 %s9, 2
    %s22 = sadd.s32 1, %s17
    %p23 = scmp.ge.s32.totalorder %s22, 2
    %s24 = scalar_select %p23, 0, %s22
    %s25 = sadd.s32 1, %s16
    %s26 = scalar_select %p23, %s25, %s16
    %p27 = scmp.ge.s32.totalorder %s26, 2
    %s28 = scalar_select %p27, 0, %s26
    %s29 = ssub.s32 %s16, %s28
    %s30 = ssub.s32 %s17, %s24
    %s31 = sor.u32 %s29, %s30
    %p32 = scmp.eq.s32.totalorder %s31, 0
    %s34 = sadd.s32 %s33, 1
    %s35 = scalar_select %p32, %s33, %s34
    %p38 = pneg %p32
    %p39 = scmp.eq.s32.totalorder %s9, 3
    %p40 = por %p38, %p39
    %p41 = scmp.ne.s32.totalorder %s33, %s36
    %p42 = scmp.eq.s32.totalorder %s9, 0
    %p43 = por %p41, %p42
    %p44 = scmp.ne.s32.totalorder %s33, %s36
    %p45 = scmp.eq.s32.totalorder %s14, 3
    %p46 = por %p44, %p45
    %p47 = scmp.ne.s32.totalorder %s36, %s37
    %p48 = scmp.eq.s32.totalorder %s14, 0
    %p49 = por %p47, %p48
    %p50 = scmp.ne.s32.totalorder %s36, %s37
    %p51 = scmp.eq.s32.totalorder %s15, 3
    %p52 = por %p50, %p51
    %p54 = scmp.ne.s32.totalorder %s37, %s53
    %p55 = scmp.eq.s32.totalorder %s15, 0
    %p56 = por %p54, %p55
    %s57 = ssub.s32 %s16, %s28
    %p58 = scmp.eq.s32.totalorder %s57, 0
    %s60 = sadd.s32 %s59, 1
    %s61 = scalar_select %p58, %s59, %s60
    %p64 = pneg %p58
    %p65 = scmp.eq.s32.totalorder %s9, 3
    %p66 = por %p64, %p65
    %p67 = scmp.ne.s32.totalorder %s59, %s62
    %p68 = scmp.eq.s32.totalorder %s9, 0
    %p69 = por %p67, %p68
    %p70 = scmp.ne.s32.totalorder %s59, %s62
    %p71 = scmp.eq.s32.totalorder %s14, 3
    %p72 = por %p70, %p71
    %p73 = scmp.ne.s32.totalorder %s62, %s63
    %p74 = scmp.eq.s32.totalorder %s14, 0
    %p75 = por %p73, %p74
    %p76 = scmp.ne.s32.totalorder %s62, %s63
    %p77 = scmp.eq.s32.totalorder %s15, 3
    %p78 = por %p76, %p77
    %p80 = scmp.ne.s32.totalorder %s63, %s79
    %p81 = scmp.eq.s32.totalorder %s15, 0
    %p82 = por %p80, %p81
    %s83 = ssub.s32 %s16, %s28
    %p84 = scmp.eq.s32.totalorder %s83, 0
    %s86 = sadd.s32 %s85, 1
    %s87 = scalar_select %p84, %s85, %s86
    %p90 = pneg %p84
    %p91 = scmp.eq.s32.totalorder %s9, 3
    %p92 = por %p90, %p91
    %p93 = scmp.ne.s32.totalorder %s85, %s88
    %p94 = scmp.eq.s32.totalorder %s9, 0
    %p95 = por %p93, %p94
    %p96 = scmp.ne.s32.totalorder %s85, %s88
    %p97 = scmp.eq.s32.totalorder %s14, 3
    %p98 = por %p96, %p97
    %p99 = scmp.ne.s32.totalorder %s88, %s89
    %p100 = scmp.eq.s32.totalorder %s14, 0
    %p101 = por %p99, %p100
    %p102 = scmp.ne.s32.totalorder %s88, %s89
    %p103 = scmp.eq.s32.totalorder %s15, 3
    %p104 = por %p102, %p103
    %p106 = scmp.ne.s32.totalorder %s89, %s105
    %p107 = scmp.eq.s32.totalorder %s15, 0
    %p108 = por %p106, %p107
    %s109 = ssub.s32 %s16, %s28
    %s110 = ssub.s32 %s17, %s24
    %s111 = sor.u32 %s109, %s110
    %p112 = scmp.eq.s32.totalorder %s111, 0
    %s114 = sadd.s32 %s113, 1
    %s115 = scalar_select %p112, %s113, %s114
    %p118 = pneg %p112
    %p119 = scmp.eq.s32.totalorder %s9, 3
    %p120 = por %p118, %p119
    %p121 = scmp.ne.s32.totalorder %s113, %s116
    %p122 = scmp.eq.s32.totalorder %s9, 0
    %p123 = por %p121, %p122
    %p124 = scmp.ne.s32.totalorder %s113, %s116
    %p125 = scmp.eq.s32.totalorder %s14, 3
    %p126 = por %p124, %p125
    %p127 = scmp.ne.s32.totalorder %s116, %s117
    %p128 = scmp.eq.s32.totalorder %s14, 0
    %p129 = por %p127, %p128
    %p130 = scmp.ne.s32.totalorder %s116, %s117
    %p131 = scmp.eq.s32.totalorder %s15, 3
    %p132 = por %p130, %p131
    %p134 = scmp.ne.s32.totalorder %s117, %s133
    %p135 = scmp.eq.s32.totalorder %s15, 0
    %p136 = por %p134, %p135
    %p137 = scmp.le.s32.totalorder 1, %s9
    %p138 = scmp.lt.s32.totalorder %s9, 5
    %p139 = pnand %p137, %p138
    %p140 = pneg %p139
    // Predicated region
    $region9: #{doubleconv_forward.5} parent=5 // pred_check
      _
    $region10: #{doubleconv_forward.5} parent=5 // pred_check_branch
      %142 = sbr.rel (%p139) target = $region12
    $region11: #{doubleconv_forward.5} parent=5 // pred_region
      %s143 = ssub.s32 %s9, 1
    $region12: #{doubleconv_forward.5} parent=5 // pred_fallthru
      _
    %p144 = scmp.lt.s32.totalorder %s9, 4
    // Predicated region
    $region13: #{doubleconv_forward.5} parent=5 // pred_check
      %p145 = pneg %p144
    $region14: #{doubleconv_forward.5} parent=5 // pred_check_branch
      %147 = sbr.rel (%p145) target = $region16
    $region15: #{doubleconv_forward.5} parent=5 // pred_region
      // Predicated region
      $region17: #{doubleconv_forward.5} parent=15 // pred_check
        %p148 = pneg %p43
      $region18: #{doubleconv_forward.5} parent=15 // pred_check_branch
        %150 = sbr.rel (%p148) target = $region20
      $region19: #{doubleconv_forward.5} parent=15 // pred_region
        %s151 = smul.u32 256, %s17
        %p152 = scmp.lt.s32.totalorder %s16, 1
        %s153 = scalar_select %p152, %s16, 1
        %p154 = scmp.lt.s32.totalorder %s151, 511
        %s155 = scalar_select %p154, %s151, 511
        %s156 = smul.addr %s153, 512
        %s157 = sadd.s32 %s155, %s156
        %s158 = smul.addr %s157, 8
        %s159 = scalar_lea.vmem %s0, %s158
        %s160 = smul.u32 256, %s17
      $region20: #{doubleconv_forward.5} parent=15 // pred_fallthru
        _
      // Predicated region
      $region21: #{doubleconv_forward.5} parent=15 // pred_check
        %p161 = pneg %p69
      $region22: #{doubleconv_forward.5} parent=15 // pred_check_branch
        %163 = sbr.rel (%p161) target = $region24
      $region23: #{doubleconv_forward.5} parent=15 // pred_region
        %p164 = scmp.lt.s32.totalorder %s16, 1
        %s165 = scalar_select %p164, %s16, 1
        %s166 = scalar_lea.vmem %s1, %s165
      $region24: #{doubleconv_forward.5} parent=15 // pred_fallthru
        _
      // Predicated region
      $region25: #{doubleconv_forward.5} parent=15 // pred_check
        %p167 = pneg %p95
      $region26: #{doubleconv_forward.5} parent=15 // pred_check_branch
        %169 = sbr.rel (%p167) target = $region28
      $region27: #{doubleconv_forward.5} parent=15 // pred_region
        %p170 = scmp.lt.s32.totalorder %s16, 1
        %s171 = scalar_select %p170, %s16, 1
        %s172 = scalar_lea.vmem %s2, %s171
      $region28: #{doubleconv_forward.5} parent=15 // pred_fallthru
        _
    $region16: #{doubleconv_forward.5} parent=5 // pred_fallthru
      _
    %p173 = scmp.le.s32.totalorder 1, %s9
    %p174 = scmp.lt.s32.totalorder %s9, 5
    %p175 = pnand %p173, %p174
    %p176 = pneg %p175
    // Predicated region
    $region29: #{doubleconv_forward.5} parent=5 // pred_check
      _
    $region30: #{doubleconv_forward.5} parent=5 // pred_check_branch
      %178 = sbr.rel (%p175) target = $region32
    $region31: #{doubleconv_forward.5} parent=5 // pred_region
      %s179 = ssub.s32 %s9, 1
      %s180 = smul.u32 256, %s19
      %p181 = scmp.lt.s32.totalorder %s18, 1
      %s182 = scalar_select %p181, %s18, 1
      %p183 = scmp.lt.s32.totalorder %s180, 511
      %s184 = scalar_select %p183, %s180, 511
      %s185 = smul.addr %s182, 512
      %s186 = sadd.s32 %s184, %s185
      %s187 = smul.addr %s186, 8
      %s188 = scalar_lea.vmem %s0, %s187
      %p189 = pneg %p49
      %p190 = pneg %p46
      %p191 = scmp.lt.s32.totalorder %s18, 1
      %s192 = scalar_select %p191, %s18, 1
      %s193 = scalar_lea.vmem %s1, %s192
      %p194 = pneg %p75
      %p195 = pneg %p72
      %p196 = scmp.lt.s32.totalorder %s18, 1
      %s197 = scalar_select %p196, %s18, 1
      %s198 = scalar_lea.vmem %s2, %s197
      %p199 = pneg %p101
      %p200 = pneg %p98
      %p201 = pneg %p129
      %p202 = pneg %p126
      %s203 = smul.u32 256, %s19
      %p204 = scmp.lt.s32.totalorder %s18, 1
      %s205 = scalar_select %p204, %s18, 1
      %p206 = scmp.lt.s32.totalorder %s203, 511
      %s207 = scalar_select %p206, %s203, 511
      %s208 = smul.addr %s205, 512
      %s209 = sadd.s32 %s207, %s208
      %s210 = smul.addr %s209, 4
      %s211 = scalar_lea.vmem %s3, %s210
      %s212 = smul.u32 256, %s19
      %p213 = scmp.lt.s32.totalorder %s18, 1
      %s214 = scalar_select %p213, %s18, 1
      %p215 = scmp.lt.s32.totalorder %s212, 511
      %s216 = scalar_select %p215, %s212, 511
      %s217 = smul.addr %s214, 512
      %s218 = sadd.s32 %s216, %s217
      %s219 = smul.addr %s218, 8
      %s220 = scalar_lea.vmem %s0, %s219
      %s221 = smul.u32 256, %s19
      %p222 = scmp.lt.s32.totalorder %s18, 1
      %s223 = scalar_select %p222, %s18, 1
      %s224 = scalar_lea.vmem %s1, %s223
      %p225 = scmp.lt.s32.totalorder %s18, 1
      %s226 = scalar_select %p225, %s18, 1
      %s227 = scalar_lea.vmem %s2, %s226
      %s228 = smul.u32 256, %s19
      %p229 = scmp.lt.s32.totalorder %s18, 1
      %s230 = scalar_select %p229, %s18, 1
      %p231 = scmp.lt.s32.totalorder %s228, 511
      %s232 = scalar_select %p231, %s228, 511
      %s233 = smul.addr %s230, 512
      %s234 = sadd.s32 %s232, %s233
      %s235 = smul.addr %s234, 4
      %s236 = scalar_lea.vmem %s3, %s235
      %s237 = smul.u32 256, %s19
      %v238 = vld [vmem:[%s224] sm:$0x1]
      %v239 = vmul.f32 %v238, 0.00024414063
      %v240 = vld [vmem:[%s227] sm:$0x1]
      %v241 = vmul.f32 %v240, 0.00024414063
      %v242 = vmul.f32 %v239, %v239
      %v243 = vsub.f32 %v241, %v242
      %v244 = vmax.f32 %v243, 0.0
      %v245 = vadd.f32 %v244, 1e-05
      %v246 = vrsqrt.pop %v245
      %v247 = vld [vmem:[%s220] sm:$0xff]
      %v248 = vld [vmem:[%s220 + $0x8] sm:$0xff]
      %v249 = vld [vmem:[%s220 + $0x10] sm:$0xff]
      %v250 = vld [vmem:[%s220 + $0x18] sm:$0xff]
      %v251 = vld [vmem:[%s220 + $0x20] sm:$0xff]
      %v252 = vld [vmem:[%s220 + $0x28] sm:$0xff]
      %v253 = vld [vmem:[%s220 + $0x30] sm:$0xff]
      %v254 = vld [vmem:[%s220 + $0x38] sm:$0xff]
      %v255 = vld [vmem:[%s220 + $0x40] sm:$0xff]
      %v256 = vld [vmem:[%s220 + $0x48] sm:$0xff]
      %v257 = vld [vmem:[%s220 + $0x50] sm:$0xff]
      %v258 = vld [vmem:[%s220 + $0x58] sm:$0xff]
      %v259 = vld [vmem:[%s220 + $0x60] sm:$0xff]
      %v260 = vld [vmem:[%s220 + $0x68] sm:$0xff]
      %v261 = vld [vmem:[%s220 + $0x70] sm:$0xff]
      %v262 = vld [vmem:[%s220 + $0x78] sm:$0xff]
      %v263 = vld [vmem:[%s220 + $0x80] sm:$0xff]
      %v264 = vld [vmem:[%s220 + $0x88] sm:$0xff]
      %v265 = vld [vmem:[%s220 + $0x90] sm:$0xff]
      %v266 = vld [vmem:[%s220 + $0x98] sm:$0xff]
      %v267 = vld [vmem:[%s220 + $0xa0] sm:$0xff]
      %v268 = vld [vmem:[%s220 + $0xa8] sm:$0xff]
      %v269 = vld [vmem:[%s220 + $0xb0] sm:$0xff]
      %v270 = vld [vmem:[%s220 + $0xb8] sm:$0xff]
      %v271 = vld [vmem:[%s220 + $0xc0] sm:$0xff]
      %v272 = vld [vmem:[%s220 + $0xc8] sm:$0xff]
      %v273 = vld [vmem:[%s220 + $0xd0] sm:$0xff]
      %v274 = vld [vmem:[%s220 + $0xd8] sm:$0xff]
      %v275 = vld [vmem:[%s220 + $0xe0] sm:$0xff]
      %v276 = vld [vmem:[%s220 + $0xe8] sm:$0xff]
      %v277 = vld [vmem:[%s220 + $0xf0] sm:$0xff]
      %v278 = vld [vmem:[%s220 + $0xf8] sm:$0xff]
      %v279 = vld [vmem:[%s220 + $0x100] sm:$0xff]
      %v280 = vld [vmem:[%s220 + $0x108] sm:$0xff]
      %v281 = vld [vmem:[%s220 + $0x110] sm:$0xff]
      %v282 = vld [vmem:[%s220 + $0x118] sm:$0xff]
      %v283 = vld [vmem:[%s220 + $0x120] sm:$0xff]
      %v284 = vld [vmem:[%s220 + $0x128] sm:$0xff]
      %v285 = vld [vmem:[%s220 + $0x130] sm:$0xff]
      %v286 = vld [vmem:[%s220 + $0x138] sm:$0xff]
      %v287 = vld [vmem:[%s220 + $0x140] sm:$0xff]
      %v288 = vld [vmem:[%s220 + $0x148] sm:$0xff]
      %v289 = vld [vmem:[%s220 + $0x150] sm:$0xff]
      %v290 = vld [vmem:[%s220 + $0x158] sm:$0xff]
      %v291 = vld [vmem:[%s220 + $0x160] sm:$0xff]
      %v292 = vld [vmem:[%s220 + $0x168] sm:$0xff]
      %v293 = vld [vmem:[%s220 + $0x170] sm:$0xff]
      %v294 = vld [vmem:[%s220 + $0x178] sm:$0xff]
      %v295 = vld [vmem:[%s220 + $0x180] sm:$0xff]
      %v296 = vld [vmem:[%s220 + $0x188] sm:$0xff]
      %v297 = vld [vmem:[%s220 + $0x190] sm:$0xff]
      %v298 = vld [vmem:[%s220 + $0x198] sm:$0xff]
      %v299 = vld [vmem:[%s220 + $0x1a0] sm:$0xff]
      %v300 = vld [vmem:[%s220 + $0x1a8] sm:$0xff]
      %v301 = vld [vmem:[%s220 + $0x1b0] sm:$0xff]
      %v302 = vld [vmem:[%s220 + $0x1b8] sm:$0xff]
      %v303 = vld [vmem:[%s220 + $0x1c0] sm:$0xff]
      %v304 = vld [vmem:[%s220 + $0x1c8] sm:$0xff]
      %v305 = vld [vmem:[%s220 + $0x1d0] sm:$0xff]
      %v306 = vld [vmem:[%s220 + $0x1d8] sm:$0xff]
      %v307 = vld [vmem:[%s220 + $0x1e0] sm:$0xff]
      %v308 = vld [vmem:[%s220 + $0x1e8] sm:$0xff]
      %v309 = vld [vmem:[%s220 + $0x1f0] sm:$0xff]
      %v310 = vld [vmem:[%s220 + $0x1f8] sm:$0xff]
      %v311 = vld [vmem:[%s220 + $0x200] sm:$0xff]
      %v312 = vld [vmem:[%s220 + $0x208] sm:$0xff]
      %v313 = vld [vmem:[%s220 + $0x210] sm:$0xff]
      %v314 = vld [vmem:[%s220 + $0x218] sm:$0xff]
      %v315 = vld [vmem:[%s220 + $0x220] sm:$0xff]
      %v316 = vld [vmem:[%s220 + $0x228] sm:$0xff]
      %v317 = vld [vmem:[%s220 + $0x230] sm:$0xff]
      %v318 = vld [vmem:[%s220 + $0x238] sm:$0xff]
      %v319 = vld [vmem:[%s220 + $0x240] sm:$0xff]
      %v320 = vld [vmem:[%s220 + $0x248] sm:$0xff]
      %v321 = vld [vmem:[%s220 + $0x250] sm:$0xff]
      %v322 = vld [vmem:[%s220 + $0x258] sm:$0xff]
      %v323 = vld [vmem:[%s220 + $0x260] sm:$0xff]
      %v324 = vld [vmem:[%s220 + $0x268] sm:$0xff]
      %v325 = vld [vmem:[%s220 + $0x270] sm:$0xff]
      %v326 = vld [vmem:[%s220 + $0x278] sm:$0xff]
      %v327 = vld [vmem:[%s220 + $0x280] sm:$0xff]
      %v328 = vld [vmem:[%s220 + $0x288] sm:$0xff]
      %v329 = vld [vmem:[%s220 + $0x290] sm:$0xff]
      %v330 = vld [vmem:[%s220 + $0x298] sm:$0xff]
      %v331 = vld [vmem:[%s220 + $0x2a0] sm:$0xff]
      %v332 = vld [vmem:[%s220 + $0x2a8] sm:$0xff]
      %v333 = vld [vmem:[%s220 + $0x2b0] sm:$0xff]
      %v334 = vld [vmem:[%s220 + $0x2b8] sm:$0xff]
      %v335 = vld [vmem:[%s220 + $0x2c0] sm:$0xff]
      %v336 = vld [vmem:[%s220 + $0x2c8] sm:$0xff]
      %v337 = vld [vmem:[%s220 + $0x2d0] sm:$0xff]
      %v338 = vld [vmem:[%s220 + $0x2d8] sm:$0xff]
      %v339 = vld [vmem:[%s220 + $0x2e0] sm:$0xff]
      %v340 = vld [vmem:[%s220 + $0x2e8] sm:$0xff]
      %v341 = vld [vmem:[%s220 + $0x2f0] sm:$0xff]
      %v342 = vld [vmem:[%s220 + $0x2f8] sm:$0xff]
      %v343 = vld [vmem:[%s220 + $0x300] sm:$0xff]
      %v344 = vld [vmem:[%s220 + $0x308] sm:$0xff]
      %v345 = vld [vmem:[%s220 + $0x310] sm:$0xff]
      %v346 = vld [vmem:[%s220 + $0x318] sm:$0xff]
      %v347 = vld [vmem:[%s220 + $0x320] sm:$0xff]
      %v348 = vld [vmem:[%s220 + $0x328] sm:$0xff]
      %v349 = vld [vmem:[%s220 + $0x330] sm:$0xff]
      %v350 = vld [vmem:[%s220 + $0x338] sm:$0xff]
      %v351 = vld [vmem:[%s220 + $0x340] sm:$0xff]
      %v352 = vld [vmem:[%s220 + $0x348] sm:$0xff]
      %v353 = vld [vmem:[%s220 + $0x350] sm:$0xff]
      %v354 = vld [vmem:[%s220 + $0x358] sm:$0xff]
      %v355 = vld [vmem:[%s220 + $0x360] sm:$0xff]
      %v356 = vld [vmem:[%s220 + $0x368] sm:$0xff]
      %v357 = vld [vmem:[%s220 + $0x370] sm:$0xff]
      %v358 = vld [vmem:[%s220 + $0x378] sm:$0xff]
      %v359 = vld [vmem:[%s220 + $0x380] sm:$0xff]
      %v360 = vld [vmem:[%s220 + $0x388] sm:$0xff]
      %v361 = vld [vmem:[%s220 + $0x390] sm:$0xff]
      %v362 = vld [vmem:[%s220 + $0x398] sm:$0xff]
      %v363 = vld [vmem:[%s220 + $0x3a0] sm:$0xff]
      %v364 = vld [vmem:[%s220 + $0x3a8] sm:$0xff]
      %v365 = vld [vmem:[%s220 + $0x3b0] sm:$0xff]
      %v366 = vld [vmem:[%s220 + $0x3b8] sm:$0xff]
      %v367 = vld [vmem:[%s220 + $0x3c0] sm:$0xff]
      %v368 = vld [vmem:[%s220 + $0x3c8] sm:$0xff]
      %v369 = vld [vmem:[%s220 + $0x3d0] sm:$0xff]
      %v370 = vld [vmem:[%s220 + $0x3d8] sm:$0xff]
      %v371 = vld [vmem:[%s220 + $0x3e0] sm:$0xff]
      %v372 = vld [vmem:[%s220 + $0x3e8] sm:$0xff]
      %v373 = vld [vmem:[%s220 + $0x3f0] sm:$0xff]
      %v374 = vld [vmem:[%s220 + $0x3f8] sm:$0xff]
      %v375 = vld [vmem:[%s220 + $0x400] sm:$0xff]
      %v376 = vld [vmem:[%s220 + $0x408] sm:$0xff]
      %v377 = vld [vmem:[%s220 + $0x410] sm:$0xff]
      %v378 = vld [vmem:[%s220 + $0x418] sm:$0xff]
      %v379 = vld [vmem:[%s220 + $0x420] sm:$0xff]
      %v380 = vld [vmem:[%s220 + $0x428] sm:$0xff]
      %v381 = vld [vmem:[%s220 + $0x430] sm:$0xff]
      %v382 = vld [vmem:[%s220 + $0x438] sm:$0xff]
      %v383 = vld [vmem:[%s220 + $0x440] sm:$0xff]
      %v384 = vld [vmem:[%s220 + $0x448] sm:$0xff]
      %v385 = vld [vmem:[%s220 + $0x450] sm:$0xff]
      %v386 = vld [vmem:[%s220 + $0x458] sm:$0xff]
      %v387 = vld [vmem:[%s220 + $0x460] sm:$0xff]
      %v388 = vld [vmem:[%s220 + $0x468] sm:$0xff]
      %v389 = vld [vmem:[%s220 + $0x470] sm:$0xff]
      %v390 = vld [vmem:[%s220 + $0x478] sm:$0xff]
      %v391 = vld [vmem:[%s220 + $0x480] sm:$0xff]
      %v392 = vld [vmem:[%s220 + $0x488] sm:$0xff]
      %v393 = vld [vmem:[%s220 + $0x490] sm:$0xff]
      %v394 = vld [vmem:[%s220 + $0x498] sm:$0xff]
      %v395 = vld [vmem:[%s220 + $0x4a0] sm:$0xff]
      %v396 = vld [vmem:[%s220 + $0x4a8] sm:$0xff]
      %v397 = vld [vmem:[%s220 + $0x4b0] sm:$0xff]
      %v398 = vld [vmem:[%s220 + $0x4b8] sm:$0xff]
      %v399 = vld [vmem:[%s220 + $0x4c0] sm:$0xff]
      %v400 = vld [vmem:[%s220 + $0x4c8] sm:$0xff]
      %v401 = vld [vmem:[%s220 + $0x4d0] sm:$0xff]
      %v402 = vld [vmem:[%s220 + $0x4d8] sm:$0xff]
      %v403 = vld [vmem:[%s220 + $0x4e0] sm:$0xff]
      %v404 = vld [vmem:[%s220 + $0x4e8] sm:$0xff]
      %v405 = vld [vmem:[%s220 + $0x4f0] sm:$0xff]
      %v406 = vld [vmem:[%s220 + $0x4f8] sm:$0xff]
      %v407 = vld [vmem:[%s220 + $0x500] sm:$0xff]
      %v408 = vld [vmem:[%s220 + $0x508] sm:$0xff]
      %v409 = vld [vmem:[%s220 + $0x510] sm:$0xff]
      %v410 = vld [vmem:[%s220 + $0x518] sm:$0xff]
      %v411 = vld [vmem:[%s220 + $0x520] sm:$0xff]
      %v412 = vld [vmem:[%s220 + $0x528] sm:$0xff]
      %v413 = vld [vmem:[%s220 + $0x530] sm:$0xff]
      %v414 = vld [vmem:[%s220 + $0x538] sm:$0xff]
      %v415 = vld [vmem:[%s220 + $0x540] sm:$0xff]
      %v416 = vld [vmem:[%s220 + $0x548] sm:$0xff]
      %v417 = vld [vmem:[%s220 + $0x550] sm:$0xff]
      %v418 = vld [vmem:[%s220 + $0x558] sm:$0xff]
      %v419 = vld [vmem:[%s220 + $0x560] sm:$0xff]
      %v420 = vld [vmem:[%s220 + $0x568] sm:$0xff]
      %v421 = vld [vmem:[%s220 + $0x570] sm:$0xff]
      %v422 = vld [vmem:[%s220 + $0x578] sm:$0xff]
      %v423 = vld [vmem:[%s220 + $0x580] sm:$0xff]
      %v424 = vld [vmem:[%s220 + $0x588] sm:$0xff]
      %v425 = vld [vmem:[%s220 + $0x590] sm:$0xff]
      %v426 = vld [vmem:[%s220 + $0x598] sm:$0xff]
      %v427 = vld [vmem:[%s220 + $0x5a0] sm:$0xff]
      %v428 = vld [vmem:[%s220 + $0x5a8] sm:$0xff]
      %v429 = vld [vmem:[%s220 + $0x5b0] sm:$0xff]
      %v430 = vld [vmem:[%s220 + $0x5b8] sm:$0xff]
      %v431 = vld [vmem:[%s220 + $0x5c0] sm:$0xff]
      %v432 = vld [vmem:[%s220 + $0x5c8] sm:$0xff]
      %v433 = vld [vmem:[%s220 + $0x5d0] sm:$0xff]
      %v434 = vld [vmem:[%s220 + $0x5d8] sm:$0xff]
      %v435 = vld [vmem:[%s220 + $0x5e0] sm:$0xff]
      %v436 = vld [vmem:[%s220 + $0x5e8] sm:$0xff]
      %v437 = vld [vmem:[%s220 + $0x5f0] sm:$0xff]
      %v438 = vld [vmem:[%s220 + $0x5f8] sm:$0xff]
      %v439 = vld [vmem:[%s220 + $0x600] sm:$0xff]
      %v440 = vld [vmem:[%s220 + $0x608] sm:$0xff]
      %v441 = vld [vmem:[%s220 + $0x610] sm:$0xff]
      %v442 = vld [vmem:[%s220 + $0x618] sm:$0xff]
      %v443 = vld [vmem:[%s220 + $0x620] sm:$0xff]
      %v444 = vld [vmem:[%s220 + $0x628] sm:$0xff]
      %v445 = vld [vmem:[%s220 + $0x630] sm:$0xff]
      %v446 = vld [vmem:[%s220 + $0x638] sm:$0xff]
      %v447 = vld [vmem:[%s220 + $0x640] sm:$0xff]
      %v448 = vld [vmem:[%s220 + $0x648] sm:$0xff]
      %v449 = vld [vmem:[%s220 + $0x650] sm:$0xff]
      %v450 = vld [vmem:[%s220 + $0x658] sm:$0xff]
      %v451 = vld [vmem:[%s220 + $0x660] sm:$0xff]
      %v452 = vld [vmem:[%s220 + $0x668] sm:$0xff]
      %v453 = vld [vmem:[%s220 + $0x670] sm:$0xff]
      %v454 = vld [vmem:[%s220 + $0x678] sm:$0xff]
      %v455 = vld [vmem:[%s220 + $0x680] sm:$0xff]
      %v456 = vld [vmem:[%s220 + $0x688] sm:$0xff]
      %v457 = vld [vmem:[%s220 + $0x690] sm:$0xff]
      %v458 = vld [vmem:[%s220 + $0x698] sm:$0xff]
      %v459 = vld [vmem:[%s220 + $0x6a0] sm:$0xff]
      %v460 = vld [vmem:[%s220 + $0x6a8] sm:$0xff]
      %v461 = vld [vmem:[%s220 + $0x6b0] sm:$0xff]
      %v462 = vld [vmem:[%s220 + $0x6b8] sm:$0xff]
      %v463 = vld [vmem:[%s220 + $0x6c0] sm:$0xff]
      %v464 = vld [vmem:[%s220 + $0x6c8] sm:$0xff]
      %v465 = vld [vmem:[%s220 + $0x6d0] sm:$0xff]
      %v466 = vld [vmem:[%s220 + $0x6d8] sm:$0xff]
      %v467 = vld [vmem:[%s220 + $0x6e0] sm:$0xff]
      %v468 = vld [vmem:[%s220 + $0x6e8] sm:$0xff]
      %v469 = vld [vmem:[%s220 + $0x6f0] sm:$0xff]
      %v470 = vld [vmem:[%s220 + $0x6f8] sm:$0xff]
      %v471 = vld [vmem:[%s220 + $0x700] sm:$0xff]
      %v472 = vld [vmem:[%s220 + $0x708] sm:$0xff]
      %v473 = vld [vmem:[%s220 + $0x710] sm:$0xff]
      %v474 = vld [vmem:[%s220 + $0x718] sm:$0xff]
      %v475 = vld [vmem:[%s220 + $0x720] sm:$0xff]
      %v476 = vld [vmem:[%s220 + $0x728] sm:$0xff]
      %v477 = vld [vmem:[%s220 + $0x730] sm:$0xff]
      %v478 = vld [vmem:[%s220 + $0x738] sm:$0xff]
      %v479 = vld [vmem:[%s220 + $0x740] sm:$0xff]
      %v480 = vld [vmem:[%s220 + $0x748] sm:$0xff]
      %v481 = vld [vmem:[%s220 + $0x750] sm:$0xff]
      %v482 = vld [vmem:[%s220 + $0x758] sm:$0xff]
      %v483 = vld [vmem:[%s220 + $0x760] sm:$0xff]
      %v484 = vld [vmem:[%s220 + $0x768] sm:$0xff]
      %v485 = vld [vmem:[%s220 + $0x770] sm:$0xff]
      %v486 = vld [vmem:[%s220 + $0x778] sm:$0xff]
      %v487 = vld [vmem:[%s220 + $0x780] sm:$0xff]
      %v488 = vld [vmem:[%s220 + $0x788] sm:$0xff]
      %v489 = vld [vmem:[%s220 + $0x790] sm:$0xff]
      %v490 = vld [vmem:[%s220 + $0x798] sm:$0xff]
      %v491 = vld [vmem:[%s220 + $0x7a0] sm:$0xff]
      %v492 = vld [vmem:[%s220 + $0x7a8] sm:$0xff]
      %v493 = vld [vmem:[%s220 + $0x7b0] sm:$0xff]
      %v494 = vld [vmem:[%s220 + $0x7b8] sm:$0xff]
      %v495 = vld [vmem:[%s220 + $0x7c0] sm:$0xff]
      %v496 = vld [vmem:[%s220 + $0x7c8] sm:$0xff]
      %v497 = vld [vmem:[%s220 + $0x7d0] sm:$0xff]
      %v498 = vld [vmem:[%s220 + $0x7d8] sm:$0xff]
      %v499 = vld [vmem:[%s220 + $0x7e0] sm:$0xff]
      %v500 = vld [vmem:[%s220 + $0x7e8] sm:$0xff]
      %v501 = vld [vmem:[%s220 + $0x7f0] sm:$0xff]
      %v502 = vld [vmem:[%s220 + $0x7f8] sm:$0xff]
      %v504 = vlaneseq
      %v505 = vshrl.u32 %v504, 7
      %v506 = vsub.s32 0, %v505
      %v507 = vrot.slane %v239, %v506
      %v509 = vsub.f32 %v247, %v507
      %v510 = vsub.f32 %v248, %v507
      %v511 = vsub.f32 %v249, %v507
      %v512 = vsub.f32 %v250, %v507
      %v513 = vsub.f32 %v251, %v507
      %v514 = vsub.f32 %v252, %v507
      %v515 = vsub.f32 %v253, %v507
      %v516 = vsub.f32 %v254, %v507
      %v517 = vsub.f32 %v255, %v507
      %v518 = vsub.f32 %v256, %v507
      %v519 = vsub.f32 %v257, %v507
      %v520 = vsub.f32 %v258, %v507
      %v521 = vsub.f32 %v259, %v507
      %v522 = vsub.f32 %v260, %v507
      %v523 = vsub.f32 %v261, %v507
      %v524 = vsub.f32 %v262, %v507
      %v525 = vsub.f32 %v263, %v507
      %v526 = vsub.f32 %v264, %v507
      %v527 = vsub.f32 %v265, %v507
      %v528 = vsub.f32 %v266, %v507
      %v529 = vsub.f32 %v267, %v507
      %v530 = vsub.f32 %v268, %v507
      %v531 = vsub.f32 %v269, %v507
      %v532 = vsub.f32 %v270, %v507
      %v533 = vsub.f32 %v271, %v507
      %v534 = vsub.f32 %v272, %v507
      %v535 = vsub.f32 %v273, %v507
      %v536 = vsub.f32 %v274, %v507
      %v537 = vsub.f32 %v275, %v507
      %v538 = vsub.f32 %v276, %v507
      %v539 = vsub.f32 %v277, %v507
      %v540 = vsub.f32 %v278, %v507
      %v541 = vsub.f32 %v279, %v507
      %v542 = vsub.f32 %v280, %v507
      %v543 = vsub.f32 %v281, %v507
      %v544 = vsub.f32 %v282, %v507
      %v545 = vsub.f32 %v283, %v507
      %v546 = vsub.f32 %v284, %v507
      %v547 = vsub.f32 %v285, %v507
      %v548 = vsub.f32 %v286, %v507
      %v549 = vsub.f32 %v287, %v507
      %v550 = vsub.f32 %v288, %v507
      %v551 = vsub.f32 %v289, %v507
      %v552 = vsub.f32 %v290, %v507
      %v553 = vsub.f32 %v291, %v507
      %v554 = vsub.f32 %v292, %v507
      %v555 = vsub.f32 %v293, %v507
      %v556 = vsub.f32 %v294, %v507
      %v557 = vsub.f32 %v295, %v507
      %v558 = vsub.f32 %v296, %v507
      %v559 = vsub.f32 %v297, %v507
      %v560 = vsub.f32 %v298, %v507
      %v561 = vsub.f32 %v299, %v507
      %v562 = vsub.f32 %v300, %v507
      %v563 = vsub.f32 %v301, %v507
      %v564 = vsub.f32 %v302, %v507
      %v565 = vsub.f32 %v303, %v507
      %v566 = vsub.f32 %v304, %v507
      %v567 = vsub.f32 %v305, %v507
      %v568 = vsub.f32 %v306, %v507
      %v569 = vsub.f32 %v307, %v507
      %v570 = vsub.f32 %v308, %v507
      %v571 = vsub.f32 %v309, %v507
      %v572 = vsub.f32 %v310, %v507
      %v573 = vsub.f32 %v311, %v507
      %v574 = vsub.f32 %v312, %v507
      %v575 = vsub.f32 %v313, %v507
      %v576 = vsub.f32 %v314, %v507
      %v577 = vsub.f32 %v315, %v507
      %v578 = vsub.f32 %v316, %v507
      %v579 = vsub.f32 %v317, %v507
      %v580 = vsub.f32 %v318, %v507
      %v581 = vsub.f32 %v319, %v507
      %v582 = vsub.f32 %v320, %v507
      %v583 = vsub.f32 %v321, %v507
      %v584 = vsub.f32 %v322, %v507
      %v585 = vsub.f32 %v323, %v507
      %v586 = vsub.f32 %v324, %v507
      %v587 = vsub.f32 %v325, %v507
      %v588 = vsub.f32 %v326, %v507
      %v589 = vsub.f32 %v327, %v507
      %v590 = vsub.f32 %v328, %v507
      %v591 = vsub.f32 %v329, %v507
      %v592 = vsub.f32 %v330, %v507
      %v593 = vsub.f32 %v331, %v507
      %v594 = vsub.f32 %v332, %v507
      %v595 = vsub.f32 %v333, %v507
      %v596 = vsub.f32 %v334, %v507
      %v597 = vsub.f32 %v335, %v507
      %v598 = vsub.f32 %v336, %v507
      %v599 = vsub.f32 %v337, %v507
      %v600 = vsub.f32 %v338, %v507
      %v601 = vsub.f32 %v339, %v507
      %v602 = vsub.f32 %v340, %v507
      %v603 = vsub.f32 %v341, %v507
      %v604 = vsub.f32 %v342, %v507
      %v605 = vsub.f32 %v343, %v507
      %v606 = vsub.f32 %v344, %v507
      %v607 = vsub.f32 %v345, %v507
      %v608 = vsub.f32 %v346, %v507
      %v609 = vsub.f32 %v347, %v507
      %v610 = vsub.f32 %v348, %v507
      %v611 = vsub.f32 %v349, %v507
      %v612 = vsub.f32 %v350, %v507
      %v613 = vsub.f32 %v351, %v507
      %v614 = vsub.f32 %v352, %v507
      %v615 = vsub.f32 %v353, %v507
      %v616 = vsub.f32 %v354, %v507
      %v617 = vsub.f32 %v355, %v507
      %v618 = vsub.f32 %v356, %v507
      %v619 = vsub.f32 %v357, %v507
      %v620 = vsub.f32 %v358, %v507
      %v621 = vsub.f32 %v359, %v507
      %v622 = vsub.f32 %v360, %v507
      %v623 = vsub.f32 %v361, %v507
      %v624 = vsub.f32 %v362, %v507
      %v625 = vsub.f32 %v363, %v507
      %v626 = vsub.f32 %v364, %v507
      %v627 = vsub.f32 %v365, %v507
      %v628 = vsub.f32 %v366, %v507
      %v629 = vsub.f32 %v367, %v507
      %v630 = vsub.f32 %v368, %v507
      %v631 = vsub.f32 %v369, %v507
      %v632 = vsub.f32 %v370, %v507
      %v633 = vsub.f32 %v371, %v507
      %v634 = vsub.f32 %v372, %v507
      %v635 = vsub.f32 %v373, %v507
      %v636 = vsub.f32 %v374, %v507
      %v637 = vsub.f32 %v375, %v507
      %v638 = vsub.f32 %v376, %v507
      %v639 = vsub.f32 %v377, %v507
      %v640 = vsub.f32 %v378, %v507
      %v641 = vsub.f32 %v379, %v507
      %v642 = vsub.f32 %v380, %v507
      %v643 = vsub.f32 %v381, %v507
      %v644 = vsub.f32 %v382, %v507
      %v645 = vsub.f32 %v383, %v507
      %v646 = vsub.f32 %v384, %v507
      %v647 = vsub.f32 %v385, %v507
      %v648 = vsub.f32 %v386, %v507
      %v649 = vsub.f32 %v387, %v507
      %v650 = vsub.f32 %v388, %v507
      %v651 = vsub.f32 %v389, %v507
      %v652 = vsub.f32 %v390, %v507
      %v653 = vsub.f32 %v391, %v507
      %v654 = vsub.f32 %v392, %v507
      %v655 = vsub.f32 %v393, %v507
      %v656 = vsub.f32 %v394, %v507
      %v657 = vsub.f32 %v395, %v507
      %v658 = vsub.f32 %v396, %v507
      %v659 = vsub.f32 %v397, %v507
      %v660 = vsub.f32 %v398, %v507
      %v661 = vsub.f32 %v399, %v507
      %v662 = vsub.f32 %v400, %v507
      %v663 = vsub.f32 %v401, %v507
      %v664 = vsub.f32 %v402, %v507
      %v665 = vsub.f32 %v403, %v507
      %v666 = vsub.f32 %v404, %v507
      %v667 = vsub.f32 %v405, %v507
      %v668 = vsub.f32 %v406, %v507
      %v669 = vsub.f32 %v407, %v507
      %v670 = vsub.f32 %v408, %v507
      %v671 = vsub.f32 %v409, %v507
      %v672 = vsub.f32 %v410, %v507
      %v673 = vsub.f32 %v411, %v507
      %v674 = vsub.f32 %v412, %v507
      %v675 = vsub.f32 %v413, %v507
      %v676 = vsub.f32 %v414, %v507
      %v677 = vsub.f32 %v415, %v507
      %v678 = vsub.f32 %v416, %v507
      %v679 = vsub.f32 %v417, %v507
      %v680 = vsub.f32 %v418, %v507
      %v681 = vsub.f32 %v419, %v507
      %v682 = vsub.f32 %v420, %v507
      %v683 = vsub.f32 %v421, %v507
      %v684 = vsub.f32 %v422, %v507
      %v685 = vsub.f32 %v423, %v507
      %v686 = vsub.f32 %v424, %v507
      %v687 = vsub.f32 %v425, %v507
      %v688 = vsub.f32 %v426, %v507
      %v689 = vsub.f32 %v427, %v507
      %v690 = vsub.f32 %v428, %v507
      %v691 = vsub.f32 %v429, %v507
      %v692 = vsub.f32 %v430, %v507
      %v693 = vsub.f32 %v431, %v507
      %v694 = vsub.f32 %v432, %v507
      %v695 = vsub.f32 %v433, %v507
      %v696 = vsub.f32 %v434, %v507
      %v697 = vsub.f32 %v435, %v507
      %v698 = vsub.f32 %v436, %v507
      %v699 = vsub.f32 %v437, %v507
      %v700 = vsub.f32 %v438, %v507
      %v701 = vsub.f32 %v439, %v507
      %v702 = vsub.f32 %v440, %v507
      %v703 = vsub.f32 %v441, %v507
      %v704 = vsub.f32 %v442, %v507
      %v705 = vsub.f32 %v443, %v507
      %v706 = vsub.f32 %v444, %v507
      %v707 = vsub.f32 %v445, %v507
      %v708 = vsub.f32 %v446, %v507
      %v709 = vsub.f32 %v447, %v507
      %v710 = vsub.f32 %v448, %v507
      %v711 = vsub.f32 %v449, %v507
      %v712 = vsub.f32 %v450, %v507
      %v713 = vsub.f32 %v451, %v507
      %v714 = vsub.f32 %v452, %v507
      %v715 = vsub.f32 %v453, %v507
      %v716 = vsub.f32 %v454, %v507
      %v717 = vsub.f32 %v455, %v507
      %v718 = vsub.f32 %v456, %v507
      %v719 = vsub.f32 %v457, %v507
      %v720 = vsub.f32 %v458, %v507
      %v721 = vsub.f32 %v459, %v507
      %v722 = vsub.f32 %v460, %v507
      %v723 = vsub.f32 %v461, %v507
      %v724 = vsub.f32 %v462, %v507
      %v725 = vsub.f32 %v463, %v507
      %v726 = vsub.f32 %v464, %v507
      %v727 = vsub.f32 %v465, %v507
      %v728 = vsub.f32 %v466, %v507
      %v729 = vsub.f32 %v467, %v507
      %v730 = vsub.f32 %v468, %v507
      %v731 = vsub.f32 %v469, %v507
      %v732 = vsub.f32 %v470, %v507
      %v733 = vsub.f32 %v471, %v507
      %v734 = vsub.f32 %v472, %v507
      %v735 = vsub.f32 %v473, %v507
      %v736 = vsub.f32 %v474, %v507
      %v737 = vsub.f32 %v475, %v507
      %v738 = vsub.f32 %v476, %v507
      %v739 = vsub.f32 %v477, %v507
      %v740 = vsub.f32 %v478, %v507
      %v741 = vsub.f32 %v479, %v507
      %v742 = vsub.f32 %v480, %v507
      %v743 = vsub.f32 %v481, %v507
      %v744 = vsub.f32 %v482, %v507
      %v745 = vsub.f32 %v483, %v507
      %v746 = vsub.f32 %v484, %v507
      %v747 = vsub.f32 %v485, %v507
      %v748 = vsub.f32 %v486, %v507
      %v749 = vsub.f32 %v487, %v507
      %v750 = vsub.f32 %v488, %v507
      %v751 = vsub.f32 %v489, %v507
      %v752 = vsub.f32 %v490, %v507
      %v753 = vsub.f32 %v491, %v507
      %v754 = vsub.f32 %v492, %v507
      %v755 = vsub.f32 %v493, %v507
      %v756 = vsub.f32 %v494, %v507
      %v757 = vsub.f32 %v495, %v507
      %v758 = vsub.f32 %v496, %v507
      %v759 = vsub.f32 %v497, %v507
      %v760 = vsub.f32 %v498, %v507
      %v761 = vsub.f32 %v499, %v507
      %v762 = vsub.f32 %v500, %v507
      %v763 = vsub.f32 %v501, %v507
      %v764 = vsub.f32 %v502, %v507
      %v766 = vlaneseq
      %v767 = vshrl.u32 %v766, 7
      %v768 = vsub.s32 0, %v767
      %v769 = vrot.slane %v246, %v768
      %v771 = vmul.f32 %v509, %v769
      %v772 = vmul.f32 %v510, %v769
      %v773 = vmul.f32 %v511, %v769
      %v774 = vmul.f32 %v512, %v769
      %v775 = vmul.f32 %v513, %v769
      %v776 = vmul.f32 %v514, %v769
      %v777 = vmul.f32 %v515, %v769
      %v778 = vmul.f32 %v516, %v769
      %v779 = vmul.f32 %v517, %v769
      %v780 = vmul.f32 %v518, %v769
      %v781 = vmul.f32 %v519, %v769
      %v782 = vmul.f32 %v520, %v769
      %v783 = vmul.f32 %v521, %v769
      %v784 = vmul.f32 %v522, %v769
      %v785 = vmul.f32 %v523, %v769
      %v786 = vmul.f32 %v524, %v769
      %v787 = vmul.f32 %v525, %v769
      %v788 = vmul.f32 %v526, %v769
      %v789 = vmul.f32 %v527, %v769
      %v790 = vmul.f32 %v528, %v769
      %v791 = vmul.f32 %v529, %v769
      %v792 = vmul.f32 %v530, %v769
      %v793 = vmul.f32 %v531, %v769
      %v794 = vmul.f32 %v532, %v769
      %v795 = vmul.f32 %v533, %v769
      %v796 = vmul.f32 %v534, %v769
      %v797 = vmul.f32 %v535, %v769
      %v798 = vmul.f32 %v536, %v769
      %v799 = vmul.f32 %v537, %v769
      %v800 = vmul.f32 %v538, %v769
      %v801 = vmul.f32 %v539, %v769
      %v802 = vmul.f32 %v540, %v769
      %v803 = vmul.f32 %v541, %v769
      %v804 = vmul.f32 %v542, %v769
      %v805 = vmul.f32 %v543, %v769
      %v806 = vmul.f32 %v544, %v769
      %v807 = vmul.f32 %v545, %v769
      %v808 = vmul.f32 %v546, %v769
      %v809 = vmul.f32 %v547, %v769
      %v810 = vmul.f32 %v548, %v769
      %v811 = vmul.f32 %v549, %v769
      %v812 = vmul.f32 %v550, %v769
      %v813 = vmul.f32 %v551, %v769
      %v814 = vmul.f32 %v552, %v769
      %v815 = vmul.f32 %v553, %v769
      %v816 = vmul.f32 %v554, %v769
      %v817 = vmul.f32 %v555, %v769
      %v818 = vmul.f32 %v556, %v769
      %v819 = vmul.f32 %v557, %v769
      %v820 = vmul.f32 %v558, %v769
      %v821 = vmul.f32 %v559, %v769
      %v822 = vmul.f32 %v560, %v769
      %v823 = vmul.f32 %v561, %v769
      %v824 = vmul.f32 %v562, %v769
      %v825 = vmul.f32 %v563, %v769
      %v826 = vmul.f32 %v564, %v769
      %v827 = vmul.f32 %v565, %v769
      %v828 = vmul.f32 %v566, %v769
      %v829 = vmul.f32 %v567, %v769
      %v830 = vmul.f32 %v568, %v769
      %v831 = vmul.f32 %v569, %v769
      %v832 = vmul.f32 %v570, %v769
      %v833 = vmul.f32 %v571, %v769
      %v834 = vmul.f32 %v572, %v769
      %v835 = vmul.f32 %v573, %v769
      %v836 = vmul.f32 %v574, %v769
      %v837 = vmul.f32 %v575, %v769
      %v838 = vmul.f32 %v576, %v769
      %v839 = vmul.f32 %v577, %v769
      %v840 = vmul.f32 %v578, %v769
      %v841 = vmul.f32 %v579, %v769
      %v842 = vmul.f32 %v580, %v769
      %v843 = vmul.f32 %v581, %v769
      %v844 = vmul.f32 %v582, %v769
      %v845 = vmul.f32 %v583, %v769
      %v846 = vmul.f32 %v584, %v769
      %v847 = vmul.f32 %v585, %v769
      %v848 = vmul.f32 %v586, %v769
      %v849 = vmul.f32 %v587, %v769
      %v850 = vmul.f32 %v588, %v769
      %v851 = vmul.f32 %v589, %v769
      %v852 = vmul.f32 %v590, %v769
      %v853 = vmul.f32 %v591, %v769
      %v854 = vmul.f32 %v592, %v769
      %v855 = vmul.f32 %v593, %v769
      %v856 = vmul.f32 %v594, %v769
      %v857 = vmul.f32 %v595, %v769
      %v858 = vmul.f32 %v596, %v769
      %v859 = vmul.f32 %v597, %v769
      %v860 = vmul.f32 %v598, %v769
      %v861 = vmul.f32 %v599, %v769
      %v862 = vmul.f32 %v600, %v769
      %v863 = vmul.f32 %v601, %v769
      %v864 = vmul.f32 %v602, %v769
      %v865 = vmul.f32 %v603, %v769
      %v866 = vmul.f32 %v604, %v769
      %v867 = vmul.f32 %v605, %v769
      %v868 = vmul.f32 %v606, %v769
      %v869 = vmul.f32 %v607, %v769
      %v870 = vmul.f32 %v608, %v769
      %v871 = vmul.f32 %v609, %v769
      %v872 = vmul.f32 %v610, %v769
      %v873 = vmul.f32 %v611, %v769
      %v874 = vmul.f32 %v612, %v769
      %v875 = vmul.f32 %v613, %v769
      %v876 = vmul.f32 %v614, %v769
      %v877 = vmul.f32 %v615, %v769
      %v878 = vmul.f32 %v616, %v769
      %v879 = vmul.f32 %v617, %v769
      %v880 = vmul.f32 %v618, %v769
      %v881 = vmul.f32 %v619, %v769
      %v882 = vmul.f32 %v620, %v769
      %v883 = vmul.f32 %v621, %v769
      %v884 = vmul.f32 %v622, %v769
      %v885 = vmul.f32 %v623, %v769
      %v886 = vmul.f32 %v624, %v769
      %v887 = vmul.f32 %v625, %v769
      %v888 = vmul.f32 %v626, %v769
      %v889 = vmul.f32 %v627, %v769
      %v890 = vmul.f32 %v628, %v769
      %v891 = vmul.f32 %v629, %v769
      %v892 = vmul.f32 %v630, %v769
      %v893 = vmul.f32 %v631, %v769
      %v894 = vmul.f32 %v632, %v769
      %v895 = vmul.f32 %v633, %v769
      %v896 = vmul.f32 %v634, %v769
      %v897 = vmul.f32 %v635, %v769
      %v898 = vmul.f32 %v636, %v769
      %v899 = vmul.f32 %v637, %v769
      %v900 = vmul.f32 %v638, %v769
      %v901 = vmul.f32 %v639, %v769
      %v902 = vmul.f32 %v640, %v769
      %v903 = vmul.f32 %v641, %v769
      %v904 = vmul.f32 %v642, %v769
      %v905 = vmul.f32 %v643, %v769
      %v906 = vmul.f32 %v644, %v769
      %v907 = vmul.f32 %v645, %v769
      %v908 = vmul.f32 %v646, %v769
      %v909 = vmul.f32 %v647, %v769
      %v910 = vmul.f32 %v648, %v769
      %v911 = vmul.f32 %v649, %v769
      %v912 = vmul.f32 %v650, %v769
      %v913 = vmul.f32 %v651, %v769
      %v914 = vmul.f32 %v652, %v769
      %v915 = vmul.f32 %v653, %v769
      %v916 = vmul.f32 %v654, %v769
      %v917 = vmul.f32 %v655, %v769
      %v918 = vmul.f32 %v656, %v769
      %v919 = vmul.f32 %v657, %v769
      %v920 = vmul.f32 %v658, %v769
      %v921 = vmul.f32 %v659, %v769
      %v922 = vmul.f32 %v660, %v769
      %v923 = vmul.f32 %v661, %v769
      %v924 = vmul.f32 %v662, %v769
      %v925 = vmul.f32 %v663, %v769
      %v926 = vmul.f32 %v664, %v769
      %v927 = vmul.f32 %v665, %v769
      %v928 = vmul.f32 %v666, %v769
      %v929 = vmul.f32 %v667, %v769
      %v930 = vmul.f32 %v668, %v769
      %v931 = vmul.f32 %v669, %v769
      %v932 = vmul.f32 %v670, %v769
      %v933 = vmul.f32 %v671, %v769
      %v934 = vmul.f32 %v672, %v769
      %v935 = vmul.f32 %v673, %v769
      %v936 = vmul.f32 %v674, %v769
      %v937 = vmul.f32 %v675, %v769
      %v938 = vmul.f32 %v676, %v769
      %v939 = vmul.f32 %v677, %v769
      %v940 = vmul.f32 %v678, %v769
      %v941 = vmul.f32 %v679, %v769
      %v942 = vmul.f32 %v680, %v769
      %v943 = vmul.f32 %v681, %v769
      %v944 = vmul.f32 %v682, %v769
      %v945 = vmul.f32 %v683, %v769
      %v946 = vmul.f32 %v684, %v769
      %v947 = vmul.f32 %v685, %v769
      %v948 = vmul.f32 %v686, %v769
      %v949 = vmul.f32 %v687, %v769
      %v950 = vmul.f32 %v688, %v769
      %v951 = vmul.f32 %v689, %v769
      %v952 = vmul.f32 %v690, %v769
      %v953 = vmul.f32 %v691, %v769
      %v954 = vmul.f32 %v692, %v769
      %v955 = vmul.f32 %v693, %v769
      %v956 = vmul.f32 %v694, %v769
      %v957 = vmul.f32 %v695, %v769
      %v958 = vmul.f32 %v696, %v769
      %v959 = vmul.f32 %v697, %v769
      %v960 = vmul.f32 %v698, %v769
      %v961 = vmul.f32 %v699, %v769
      %v962 = vmul.f32 %v700, %v769
      %v963 = vmul.f32 %v701, %v769
      %v964 = vmul.f32 %v702, %v769
      %v965 = vmul.f32 %v703, %v769
      %v966 = vmul.f32 %v704, %v769
      %v967 = vmul.f32 %v705, %v769
      %v968 = vmul.f32 %v706, %v769
      %v969 = vmul.f32 %v707, %v769
      %v970 = vmul.f32 %v708, %v769
      %v971 = vmul.f32 %v709, %v769
      %v972 = vmul.f32 %v710, %v769
      %v973 = vmul.f32 %v711, %v769
      %v974 = vmul.f32 %v712, %v769
      %v975 = vmul.f32 %v713, %v769
      %v976 = vmul.f32 %v714, %v769
      %v977 = vmul.f32 %v715, %v769
      %v978 = vmul.f32 %v716, %v769
      %v979 = vmul.f32 %v717, %v769
      %v980 = vmul.f32 %v718, %v769
      %v981 = vmul.f32 %v719, %v769
      %v982 = vmul.f32 %v720, %v769
      %v983 = vmul.f32 %v721, %v769
      %v984 = vmul.f32 %v722, %v769
      %v985 = vmul.f32 %v723, %v769
      %v986 = vmul.f32 %v724, %v769
      %v987 = vmul.f32 %v725, %v769
      %v988 = vmul.f32 %v726, %v769
      %v989 = vmul.f32 %v727, %v769
      %v990 = vmul.f32 %v728, %v769
      %v991 = vmul.f32 %v729, %v769
      %v992 = vmul.f32 %v730, %v769
      %v993 = vmul.f32 %v731, %v769
      %v994 = vmul.f32 %v732, %v769
      %v995 = vmul.f32 %v733, %v769
      %v996 = vmul.f32 %v734, %v769
      %v997 = vmul.f32 %v735, %v769
      %v998 = vmul.f32 %v736, %v769
      %v999 = vmul.f32 %v737, %v769
      %v1000 = vmul.f32 %v738, %v769
      %v1001 = vmul.f32 %v739, %v769
      %v1002 = vmul.f32 %v740, %v769
      %v1003 = vmul.f32 %v741, %v769
      %v1004 = vmul.f32 %v742, %v769
      %v1005 = vmul.f32 %v743, %v769
      %v1006 = vmul.f32 %v744, %v769
      %v1007 = vmul.f32 %v745, %v769
      %v1008 = vmul.f32 %v746, %v769
      %v1009 = vmul.f32 %v747, %v769
      %v1010 = vmul.f32 %v748, %v769
      %v1011 = vmul.f32 %v749, %v769
      %v1012 = vmul.f32 %v750, %v769
      %v1013 = vmul.f32 %v751, %v769
      %v1014 = vmul.f32 %v752, %v769
      %v1015 = vmul.f32 %v753, %v769
      %v1016 = vmul.f32 %v754, %v769
      %v1017 = vmul.f32 %v755, %v769
      %v1018 = vmul.f32 %v756, %v769
      %v1019 = vmul.f32 %v757, %v769
      %v1020 = vmul.f32 %v758, %v769
      %v1021 = vmul.f32 %v759, %v769
      %v1022 = vmul.f32 %v760, %v769
      %v1023 = vmul.f32 %v761, %v769
      %v1024 = vmul.f32 %v762, %v769
      %v1025 = vmul.f32 %v763, %v769
      %v1026 = vmul.f32 %v764, %v769
      %v1027 = vmax.f32 %v771, 0.0
      %v1028 = vmax.f32 %v772, 0.0
      %v1029 = vmax.f32 %v773, 0.0
      %v1030 = vmax.f32 %v774, 0.0
      %v1031 = vmax.f32 %v775, 0.0
      %v1032 = vmax.f32 %v776, 0.0
      %v1033 = vmax.f32 %v777, 0.0
      %v1034 = vmax.f32 %v778, 0.0
      %v1035 = vmax.f32 %v779, 0.0
      %v1036 = vmax.f32 %v780, 0.0
      %v1037 = vmax.f32 %v781, 0.0
      %v1038 = vmax.f32 %v782, 0.0
      %v1039 = vmax.f32 %v783, 0.0
      %v1040 = vmax.f32 %v784, 0.0
      %v1041 = vmax.f32 %v785, 0.0
      %v1042 = vmax.f32 %v786, 0.0
      %v1043 = vmax.f32 %v787, 0.0
      %v1044 = vmax.f32 %v788, 0.0
      %v1045 = vmax.f32 %v789, 0.0
      %v1046 = vmax.f32 %v790, 0.0
      %v1047 = vmax.f32 %v791, 0.0
      %v1048 = vmax.f32 %v792, 0.0
      %v1049 = vmax.f32 %v793, 0.0
      %v1050 = vmax.f32 %v794, 0.0
      %v1051 = vmax.f32 %v795, 0.0
      %v1052 = vmax.f32 %v796, 0.0
      %v1053 = vmax.f32 %v797, 0.0
      %v1054 = vmax.f32 %v798, 0.0
      %v1055 = vmax.f32 %v799, 0.0
      %v1056 = vmax.f32 %v800, 0.0
      %v1057 = vmax.f32 %v801, 0.0
      %v1058 = vmax.f32 %v802, 0.0
      %v1059 = vmax.f32 %v803, 0.0
      %v1060 = vmax.f32 %v804, 0.0
      %v1061 = vmax.f32 %v805, 0.0
      %v1062 = vmax.f32 %v806, 0.0
      %v1063 = vmax.f32 %v807, 0.0
      %v1064 = vmax.f32 %v808, 0.0
      %v1065 = vmax.f32 %v809, 0.0
      %v1066 = vmax.f32 %v810, 0.0
      %v1067 = vmax.f32 %v811, 0.0
      %v1068 = vmax.f32 %v812, 0.0
      %v1069 = vmax.f32 %v813, 0.0
      %v1070 = vmax.f32 %v814, 0.0
      %v1071 = vmax.f32 %v815, 0.0
      %v1072 = vmax.f32 %v816, 0.0
      %v1073 = vmax.f32 %v817, 0.0
      %v1074 = vmax.f32 %v818, 0.0
      %v1075 = vmax.f32 %v819, 0.0
      %v1076 = vmax.f32 %v820, 0.0
      %v1077 = vmax.f32 %v821, 0.0
      %v1078 = vmax.f32 %v822, 0.0
      %v1079 = vmax.f32 %v823, 0.0
      %v1080 = vmax.f32 %v824, 0.0
      %v1081 = vmax.f32 %v825, 0.0
      %v1082 = vmax.f32 %v826, 0.0
      %v1083 = vmax.f32 %v827, 0.0
      %v1084 = vmax.f32 %v828, 0.0
      %v1085 = vmax.f32 %v829, 0.0
      %v1086 = vmax.f32 %v830, 0.0
      %v1087 = vmax.f32 %v831, 0.0
      %v1088 = vmax.f32 %v832, 0.0
      %v1089 = vmax.f32 %v833, 0.0
      %v1090 = vmax.f32 %v834, 0.0
      %v1091 = vmax.f32 %v835, 0.0
      %v1092 = vmax.f32 %v836, 0.0
      %v1093 = vmax.f32 %v837, 0.0
      %v1094 = vmax.f32 %v838, 0.0
      %v1095 = vmax.f32 %v839, 0.0
      %v1096 = vmax.f32 %v840, 0.0
      %v1097 = vmax.f32 %v841, 0.0
      %v1098 = vmax.f32 %v842, 0.0
      %v1099 = vmax.f32 %v843, 0.0
      %v1100 = vmax.f32 %v844, 0.0
      %v1101 = vmax.f32 %v845, 0.0
      %v1102 = vmax.f32 %v846, 0.0
      %v1103 = vmax.f32 %v847, 0.0
      %v1104 = vmax.f32 %v848, 0.0
      %v1105 = vmax.f32 %v849, 0.0
      %v1106 = vmax.f32 %v850, 0.0
      %v1107 = vmax.f32 %v851, 0.0
      %v1108 = vmax.f32 %v852, 0.0
      %v1109 = vmax.f32 %v853, 0.0
      %v1110 = vmax.f32 %v854, 0.0
      %v1111 = vmax.f32 %v855, 0.0
      %v1112 = vmax.f32 %v856, 0.0
      %v1113 = vmax.f32 %v857, 0.0
      %v1114 = vmax.f32 %v858, 0.0
      %v1115 = vmax.f32 %v859, 0.0
      %v1116 = vmax.f32 %v860, 0.0
      %v1117 = vmax.f32 %v861, 0.0
      %v1118 = vmax.f32 %v862, 0.0
      %v1119 = vmax.f32 %v863, 0.0
      %v1120 = vmax.f32 %v864, 0.0
      %v1121 = vmax.f32 %v865, 0.0
      %v1122 = vmax.f32 %v866, 0.0
      %v1123 = vmax.f32 %v867, 0.0
      %v1124 = vmax.f32 %v868, 0.0
      %v1125 = vmax.f32 %v869, 0.0
      %v1126 = vmax.f32 %v870, 0.0
      %v1127 = vmax.f32 %v871, 0.0
      %v1128 = vmax.f32 %v872, 0.0
      %v1129 = vmax.f32 %v873, 0.0
      %v1130 = vmax.f32 %v874, 0.0
      %v1131 = vmax.f32 %v875, 0.0
      %v1132 = vmax.f32 %v876, 0.0
      %v1133 = vmax.f32 %v877, 0.0
      %v1134 = vmax.f32 %v878, 0.0
      %v1135 = vmax.f32 %v879, 0.0
      %v1136 = vmax.f32 %v880, 0.0
      %v1137 = vmax.f32 %v881, 0.0
      %v1138 = vmax.f32 %v882, 0.0
      %v1139 = vmax.f32 %v883, 0.0
      %v1140 = vmax.f32 %v884, 0.0
      %v1141 = vmax.f32 %v885, 0.0
      %v1142 = vmax.f32 %v886, 0.0
      %v1143 = vmax.f32 %v887, 0.0
      %v1144 = vmax.f32 %v888, 0.0
      %v1145 = vmax.f32 %v889, 0.0
      %v1146 = vmax.f32 %v890, 0.0
      %v1147 = vmax.f32 %v891, 0.0
      %v1148 = vmax.f32 %v892, 0.0
      %v1149 = vmax.f32 %v893, 0.0
      %v1150 = vmax.f32 %v894, 0.0
      %v1151 = vmax.f32 %v895, 0.0
      %v1152 = vmax.f32 %v896, 0.0
      %v1153 = vmax.f32 %v897, 0.0
      %v1154 = vmax.f32 %v898, 0.0
      %v1155 = vmax.f32 %v899, 0.0
      %v1156 = vmax.f32 %v900, 0.0
      %v1157 = vmax.f32 %v901, 0.0
      %v1158 = vmax.f32 %v902, 0.0
      %v1159 = vmax.f32 %v903, 0.0
      %v1160 = vmax.f32 %v904, 0.0
      %v1161 = vmax.f32 %v905, 0.0
      %v1162 = vmax.f32 %v906, 0.0
      %v1163 = vmax.f32 %v907, 0.0
      %v1164 = vmax.f32 %v908, 0.0
      %v1165 = vmax.f32 %v909, 0.0
      %v1166 = vmax.f32 %v910, 0.0
      %v1167 = vmax.f32 %v911, 0.0
      %v1168 = vmax.f32 %v912, 0.0
      %v1169 = vmax.f32 %v913, 0.0
      %v1170 = vmax.f32 %v914, 0.0
      %v1171 = vmax.f32 %v915, 0.0
      %v1172 = vmax.f32 %v916, 0.0
      %v1173 = vmax.f32 %v917, 0.0
      %v1174 = vmax.f32 %v918, 0.0
      %v1175 = vmax.f32 %v919, 0.0
      %v1176 = vmax.f32 %v920, 0.0
      %v1177 = vmax.f32 %v921, 0.0
      %v1178 = vmax.f32 %v922, 0.0
      %v1179 = vmax.f32 %v923, 0.0
      %v1180 = vmax.f32 %v924, 0.0
      %v1181 = vmax.f32 %v925, 0.0
      %v1182 = vmax.f32 %v926, 0.0
      %v1183 = vmax.f32 %v927, 0.0
      %v1184 = vmax.f32 %v928, 0.0
      %v1185 = vmax.f32 %v929, 0.0
      %v1186 = vmax.f32 %v930, 0.0
      %v1187 = vmax.f32 %v931, 0.0
      %v1188 = vmax.f32 %v932, 0.0
      %v1189 = vmax.f32 %v933, 0.0
      %v1190 = vmax.f32 %v934, 0.0
      %v1191 = vmax.f32 %v935, 0.0
      %v1192 = vmax.f32 %v936, 0.0
      %v1193 = vmax.f32 %v937, 0.0
      %v1194 = vmax.f32 %v938, 0.0
      %v1195 = vmax.f32 %v939, 0.0
      %v1196 = vmax.f32 %v940, 0.0
      %v1197 = vmax.f32 %v941, 0.0
      %v1198 = vmax.f32 %v942, 0.0
      %v1199 = vmax.f32 %v943, 0.0
      %v1200 = vmax.f32 %v944, 0.0
      %v1201 = vmax.f32 %v945, 0.0
      %v1202 = vmax.f32 %v946, 0.0
      %v1203 = vmax.f32 %v947, 0.0
      %v1204 = vmax.f32 %v948, 0.0
      %v1205 = vmax.f32 %v949, 0.0
      %v1206 = vmax.f32 %v950, 0.0
      %v1207 = vmax.f32 %v951, 0.0
      %v1208 = vmax.f32 %v952, 0.0
      %v1209 = vmax.f32 %v953, 0.0
      %v1210 = vmax.f32 %v954, 0.0
      %v1211 = vmax.f32 %v955, 0.0
      %v1212 = vmax.f32 %v956, 0.0
      %v1213 = vmax.f32 %v957, 0.0
      %v1214 = vmax.f32 %v958, 0.0
      %v1215 = vmax.f32 %v959, 0.0
      %v1216 = vmax.f32 %v960, 0.0
      %v1217 = vmax.f32 %v961, 0.0
      %v1218 = vmax.f32 %v962, 0.0
      %v1219 = vmax.f32 %v963, 0.0
      %v1220 = vmax.f32 %v964, 0.0
      %v1221 = vmax.f32 %v965, 0.0
      %v1222 = vmax.f32 %v966, 0.0
      %v1223 = vmax.f32 %v967, 0.0
      %v1224 = vmax.f32 %v968, 0.0
      %v1225 = vmax.f32 %v969, 0.0
      %v1226 = vmax.f32 %v970, 0.0
      %v1227 = vmax.f32 %v971, 0.0
      %v1228 = vmax.f32 %v972, 0.0
      %v1229 = vmax.f32 %v973, 0.0
      %v1230 = vmax.f32 %v974, 0.0
      %v1231 = vmax.f32 %v975, 0.0
      %v1232 = vmax.f32 %v976, 0.0
      %v1233 = vmax.f32 %v977, 0.0
      %v1234 = vmax.f32 %v978, 0.0
      %v1235 = vmax.f32 %v979, 0.0
      %v1236 = vmax.f32 %v980, 0.0
      %v1237 = vmax.f32 %v981, 0.0
      %v1238 = vmax.f32 %v982, 0.0
      %v1239 = vmax.f32 %v983, 0.0
      %v1240 = vmax.f32 %v984, 0.0
      %v1241 = vmax.f32 %v985, 0.0
      %v1242 = vmax.f32 %v986, 0.0
      %v1243 = vmax.f32 %v987, 0.0
      %v1244 = vmax.f32 %v988, 0.0
      %v1245 = vmax.f32 %v989, 0.0
      %v1246 = vmax.f32 %v990, 0.0
      %v1247 = vmax.f32 %v991, 0.0
      %v1248 = vmax.f32 %v992, 0.0
      %v1249 = vmax.f32 %v993, 0.0
      %v1250 = vmax.f32 %v994, 0.0
      %v1251 = vmax.f32 %v995, 0.0
      %v1252 = vmax.f32 %v996, 0.0
      %v1253 = vmax.f32 %v997, 0.0
      %v1254 = vmax.f32 %v998, 0.0
      %v1255 = vmax.f32 %v999, 0.0
      %v1256 = vmax.f32 %v1000, 0.0
      %v1257 = vmax.f32 %v1001, 0.0
      %v1258 = vmax.f32 %v1002, 0.0
      %v1259 = vmax.f32 %v1003, 0.0
      %v1260 = vmax.f32 %v1004, 0.0
      %v1261 = vmax.f32 %v1005, 0.0
      %v1262 = vmax.f32 %v1006, 0.0
      %v1263 = vmax.f32 %v1007, 0.0
      %v1264 = vmax.f32 %v1008, 0.0
      %v1265 = vmax.f32 %v1009, 0.0
      %v1266 = vmax.f32 %v1010, 0.0
      %v1267 = vmax.f32 %v1011, 0.0
      %v1268 = vmax.f32 %v1012, 0.0
      %v1269 = vmax.f32 %v1013, 0.0
      %v1270 = vmax.f32 %v1014, 0.0
      %v1271 = vmax.f32 %v1015, 0.0
      %v1272 = vmax.f32 %v1016, 0.0
      %v1273 = vmax.f32 %v1017, 0.0
      %v1274 = vmax.f32 %v1018, 0.0
      %v1275 = vmax.f32 %v1019, 0.0
      %v1276 = vmax.f32 %v1020, 0.0
      %v1277 = vmax.f32 %v1021, 0.0
      %v1278 = vmax.f32 %v1022, 0.0
      %v1279 = vmax.f32 %v1023, 0.0
      %v1280 = vmax.f32 %v1024, 0.0
      %v1281 = vmax.f32 %v1025, 0.0
      %v1282 = vmax.f32 %v1026, 0.0
      %v1283 = vpack.c.bf16 %v1028, %v1027
      %v1284 = vpack.c.bf16 %v1030, %v1029
      %v1285 = vpack.c.bf16 %v1032, %v1031
      %v1286 = vpack.c.bf16 %v1034, %v1033
      %v1287 = vpack.c.bf16 %v1036, %v1035
      %v1288 = vpack.c.bf16 %v1038, %v1037
      %v1289 = vpack.c.bf16 %v1040, %v1039
      %v1290 = vpack.c.bf16 %v1042, %v1041
      %v1291 = vpack.c.bf16 %v1044, %v1043
      %v1292 = vpack.c.bf16 %v1046, %v1045
      %v1293 = vpack.c.bf16 %v1048, %v1047
      %v1294 = vpack.c.bf16 %v1050, %v1049
      %v1295 = vpack.c.bf16 %v1052, %v1051
      %v1296 = vpack.c.bf16 %v1054, %v1053
      %v1297 = vpack.c.bf16 %v1056, %v1055
      %v1298 = vpack.c.bf16 %v1058, %v1057
      %v1299 = vpack.c.bf16 %v1060, %v1059
      %v1300 = vpack.c.bf16 %v1062, %v1061
      %v1301 = vpack.c.bf16 %v1064, %v1063
      %v1302 = vpack.c.bf16 %v1066, %v1065
      %v1303 = vpack.c.bf16 %v1068, %v1067
      %v1304 = vpack.c.bf16 %v1070, %v1069
      %v1305 = vpack.c.bf16 %v1072, %v1071
      %v1306 = vpack.c.bf16 %v1074, %v1073
      %v1307 = vpack.c.bf16 %v1076, %v1075
      %v1308 = vpack.c.bf16 %v1078, %v1077
      %v1309 = vpack.c.bf16 %v1080, %v1079
      %v1310 = vpack.c.bf16 %v1082, %v1081
      %v1311 = vpack.c.bf16 %v1084, %v1083
      %v1312 = vpack.c.bf16 %v1086, %v1085
      %v1313 = vpack.c.bf16 %v1088, %v1087
      %v1314 = vpack.c.bf16 %v1090, %v1089
      %v1315 = vpack.c.bf16 %v1092, %v1091
      %v1316 = vpack.c.bf16 %v1094, %v1093
      %v1317 = vpack.c.bf16 %v1096, %v1095
      %v1318 = vpack.c.bf16 %v1098, %v1097
      %v1319 = vpack.c.bf16 %v1100, %v1099
      %v1320 = vpack.c.bf16 %v1102, %v1101
      %v1321 = vpack.c.bf16 %v1104, %v1103
      %v1322 = vpack.c.bf16 %v1106, %v1105
      %v1323 = vpack.c.bf16 %v1108, %v1107
      %v1324 = vpack.c.bf16 %v1110, %v1109
      %v1325 = vpack.c.bf16 %v1112, %v1111
      %v1326 = vpack.c.bf16 %v1114, %v1113
      %v1327 = vpack.c.bf16 %v1116, %v1115
      %v1328 = vpack.c.bf16 %v1118, %v1117
      %v1329 = vpack.c.bf16 %v1120, %v1119
      %v1330 = vpack.c.bf16 %v1122, %v1121
      %v1331 = vpack.c.bf16 %v1124, %v1123
      %v1332 = vpack.c.bf16 %v1126, %v1125
      %v1333 = vpack.c.bf16 %v1128, %v1127
      %v1334 = vpack.c.bf16 %v1130, %v1129
      %v1335 = vpack.c.bf16 %v1132, %v1131
      %v1336 = vpack.c.bf16 %v1134, %v1133
      %v1337 = vpack.c.bf16 %v1136, %v1135
      %v1338 = vpack.c.bf16 %v1138, %v1137
      %v1339 = vpack.c.bf16 %v1140, %v1139
      %v1340 = vpack.c.bf16 %v1142, %v1141
      %v1341 = vpack.c.bf16 %v1144, %v1143
      %v1342 = vpack.c.bf16 %v1146, %v1145
      %v1343 = vpack.c.bf16 %v1148, %v1147
      %v1344 = vpack.c.bf16 %v1150, %v1149
      %v1345 = vpack.c.bf16 %v1152, %v1151
      %v1346 = vpack.c.bf16 %v1154, %v1153
      %v1347 = vpack.c.bf16 %v1156, %v1155
      %v1348 = vpack.c.bf16 %v1158, %v1157
      %v1349 = vpack.c.bf16 %v1160, %v1159
      %v1350 = vpack.c.bf16 %v1162, %v1161
      %v1351 = vpack.c.bf16 %v1164, %v1163
      %v1352 = vpack.c.bf16 %v1166, %v1165
      %v1353 = vpack.c.bf16 %v1168, %v1167
      %v1354 = vpack.c.bf16 %v1170, %v1169
      %v1355 = vpack.c.bf16 %v1172, %v1171
      %v1356 = vpack.c.bf16 %v1174, %v1173
      %v1357 = vpack.c.bf16 %v1176, %v1175
      %v1358 = vpack.c.bf16 %v1178, %v1177
      %v1359 = vpack.c.bf16 %v1180, %v1179
      %v1360 = vpack.c.bf16 %v1182, %v1181
      %v1361 = vpack.c.bf16 %v1184, %v1183
      %v1362 = vpack.c.bf16 %v1186, %v1185
      %v1363 = vpack.c.bf16 %v1188, %v1187
      %v1364 = vpack.c.bf16 %v1190, %v1189
      %v1365 = vpack.c.bf16 %v1192, %v1191
      %v1366 = vpack.c.bf16 %v1194, %v1193
      %v1367 = vpack.c.bf16 %v1196, %v1195
      %v1368 = vpack.c.bf16 %v1198, %v1197
      %v1369 = vpack.c.bf16 %v1200, %v1199
      %v1370 = vpack.c.bf16 %v1202, %v1201
      %v1371 = vpack.c.bf16 %v1204, %v1203
      %v1372 = vpack.c.bf16 %v1206, %v1205
      %v1373 = vpack.c.bf16 %v1208, %v1207
      %v1374 = vpack.c.bf16 %v1210, %v1209
      %v1375 = vpack.c.bf16 %v1212, %v1211
      %v1376 = vpack.c.bf16 %v1214, %v1213
      %v1377 = vpack.c.bf16 %v1216, %v1215
      %v1378 = vpack.c.bf16 %v1218, %v1217
      %v1379 = vpack.c.bf16 %v1220, %v1219
      %v1380 = vpack.c.bf16 %v1222, %v1221
      %v1381 = vpack.c.bf16 %v1224, %v1223
      %v1382 = vpack.c.bf16 %v1226, %v1225
      %v1383 = vpack.c.bf16 %v1228, %v1227
      %v1384 = vpack.c.bf16 %v1230, %v1229
      %v1385 = vpack.c.bf16 %v1232, %v1231
      %v1386 = vpack.c.bf16 %v1234, %v1233
      %v1387 = vpack.c.bf16 %v1236, %v1235
      %v1388 = vpack.c.bf16 %v1238, %v1237
      %v1389 = vpack.c.bf16 %v1240, %v1239
      %v1390 = vpack.c.bf16 %v1242, %v1241
      %v1391 = vpack.c.bf16 %v1244, %v1243
      %v1392 = vpack.c.bf16 %v1246, %v1245
      %v1393 = vpack.c.bf16 %v1248, %v1247
      %v1394 = vpack.c.bf16 %v1250, %v1249
      %v1395 = vpack.c.bf16 %v1252, %v1251
      %v1396 = vpack.c.bf16 %v1254, %v1253
      %v1397 = vpack.c.bf16 %v1256, %v1255
      %v1398 = vpack.c.bf16 %v1258, %v1257
      %v1399 = vpack.c.bf16 %v1260, %v1259
      %v1400 = vpack.c.bf16 %v1262, %v1261
      %v1401 = vpack.c.bf16 %v1264, %v1263
      %v1402 = vpack.c.bf16 %v1266, %v1265
      %v1403 = vpack.c.bf16 %v1268, %v1267
      %v1404 = vpack.c.bf16 %v1270, %v1269
      %v1405 = vpack.c.bf16 %v1272, %v1271
      %v1406 = vpack.c.bf16 %v1274, %v1273
      %v1407 = vpack.c.bf16 %v1276, %v1275
      %v1408 = vpack.c.bf16 %v1278, %v1277
      %v1409 = vpack.c.bf16 %v1280, %v1279
      %v1410 = vpack.c.bf16 %v1282, %v1281
      %v1539 = vunpack.c.l.b16 %v1283
      %v1540 = vunpack.c.h.b16 %v1283
      %v1541 = vunpack.c.l.b16 %v1284
      %v1542 = vunpack.c.h.b16 %v1284
      %v1543 = vunpack.c.l.b16 %v1285
      %v1544 = vunpack.c.h.b16 %v1285
      %v1545 = vunpack.c.l.b16 %v1286
      %v1546 = vunpack.c.h.b16 %v1286
      %v1547 = vunpack.c.l.b16 %v1287
      %v1548 = vunpack.c.h.b16 %v1287
      %v1549 = vunpack.c.l.b16 %v1288
      %v1550 = vunpack.c.h.b16 %v1288
      %v1551 = vunpack.c.l.b16 %v1289
      %v1552 = vunpack.c.h.b16 %v1289
      %v1553 = vunpack.c.l.b16 %v1290
      %v1554 = vunpack.c.h.b16 %v1290
      %v1555 = vunpack.c.l.b16 %v1291
      %v1556 = vunpack.c.h.b16 %v1291
      %v1557 = vunpack.c.l.b16 %v1292
      %v1558 = vunpack.c.h.b16 %v1292
      %v1559 = vunpack.c.l.b16 %v1293
      %v1560 = vunpack.c.h.b16 %v1293
      %v1561 = vunpack.c.l.b16 %v1294
      %v1562 = vunpack.c.h.b16 %v1294
      %v1563 = vunpack.c.l.b16 %v1295
      %v1564 = vunpack.c.h.b16 %v1295
      %v1565 = vunpack.c.l.b16 %v1296
      %v1566 = vunpack.c.h.b16 %v1296
      %v1567 = vunpack.c.l.b16 %v1297
      %v1568 = vunpack.c.h.b16 %v1297
      %v1569 = vunpack.c.l.b16 %v1298
      %v1570 = vunpack.c.h.b16 %v1298
      %v1571 = vunpack.c.l.b16 %v1299
      %v1572 = vunpack.c.h.b16 %v1299
      %v1573 = vunpack.c.l.b16 %v1300
      %v1574 = vunpack.c.h.b16 %v1300
      %v1575 = vunpack.c.l.b16 %v1301
      %v1576 = vunpack.c.h.b16 %v1301
      %v1577 = vunpack.c.l.b16 %v1302
      %v1578 = vunpack.c.h.b16 %v1302
      %v1579 = vunpack.c.l.b16 %v1303
      %v1580 = vunpack.c.h.b16 %v1303
      %v1581 = vunpack.c.l.b16 %v1304
      %v1582 = vunpack.c.h.b16 %v1304
      %v1583 = vunpack.c.l.b16 %v1305
      %v1584 = vunpack.c.h.b16 %v1305
      %v1585 = vunpack.c.l.b16 %v1306
      %v1586 = vunpack.c.h.b16 %v1306
      %v1587 = vunpack.c.l.b16 %v1307
      %v1588 = vunpack.c.h.b16 %v1307
      %v1589 = vunpack.c.l.b16 %v1308
      %v1590 = vunpack.c.h.b16 %v1308
      %v1591 = vunpack.c.l.b16 %v1309
      %v1592 = vunpack.c.h.b16 %v1309
      %v1593 = vunpack.c.l.b16 %v1310
      %v1594 = vunpack.c.h.b16 %v1310
      %v1595 = vunpack.c.l.b16 %v1311
      %v1596 = vunpack.c.h.b16 %v1311
      %v1597 = vunpack.c.l.b16 %v1312
      %v1598 = vunpack.c.h.b16 %v1312
      %v1599 = vunpack.c.l.b16 %v1313
      %v1600 = vunpack.c.h.b16 %v1313
      %v1601 = vunpack.c.l.b16 %v1314
      %v1602 = vunpack.c.h.b16 %v1314
      %v1603 = vunpack.c.l.b16 %v1315
      %v1604 = vunpack.c.h.b16 %v1315
      %v1605 = vunpack.c.l.b16 %v1316
      %v1606 = vunpack.c.h.b16 %v1316
      %v1607 = vunpack.c.l.b16 %v1317
      %v1608 = vunpack.c.h.b16 %v1317
      %v1609 = vunpack.c.l.b16 %v1318
      %v1610 = vunpack.c.h.b16 %v1318
      %v1611 = vunpack.c.l.b16 %v1319
      %v1612 = vunpack.c.h.b16 %v1319
      %v1613 = vunpack.c.l.b16 %v1320
      %v1614 = vunpack.c.h.b16 %v1320
      %v1615 = vunpack.c.l.b16 %v1321
      %v1616 = vunpack.c.h.b16 %v1321
      %v1617 = vunpack.c.l.b16 %v1322
      %v1618 = vunpack.c.h.b16 %v1322
      %v1619 = vunpack.c.l.b16 %v1323
      %v1620 = vunpack.c.h.b16 %v1323
      %v1621 = vunpack.c.l.b16 %v1324
      %v1622 = vunpack.c.h.b16 %v1324
      %v1623 = vunpack.c.l.b16 %v1325
      %v1624 = vunpack.c.h.b16 %v1325
      %v1625 = vunpack.c.l.b16 %v1326
      %v1626 = vunpack.c.h.b16 %v1326
      %v1627 = vunpack.c.l.b16 %v1327
      %v1628 = vunpack.c.h.b16 %v1327
      %v1629 = vunpack.c.l.b16 %v1328
      %v1630 = vunpack.c.h.b16 %v1328
      %v1631 = vunpack.c.l.b16 %v1329
      %v1632 = vunpack.c.h.b16 %v1329
      %v1633 = vunpack.c.l.b16 %v1330
      %v1634 = vunpack.c.h.b16 %v1330
      %v1635 = vunpack.c.l.b16 %v1331
      %v1636 = vunpack.c.h.b16 %v1331
      %v1637 = vunpack.c.l.b16 %v1332
      %v1638 = vunpack.c.h.b16 %v1332
      %v1639 = vunpack.c.l.b16 %v1333
      %v1640 = vunpack.c.h.b16 %v1333
      %v1641 = vunpack.c.l.b16 %v1334
      %v1642 = vunpack.c.h.b16 %v1334
      %v1643 = vunpack.c.l.b16 %v1335
      %v1644 = vunpack.c.h.b16 %v1335
      %v1645 = vunpack.c.l.b16 %v1336
      %v1646 = vunpack.c.h.b16 %v1336
      %v1647 = vunpack.c.l.b16 %v1337
      %v1648 = vunpack.c.h.b16 %v1337
      %v1649 = vunpack.c.l.b16 %v1338
      %v1650 = vunpack.c.h.b16 %v1338
      %v1651 = vunpack.c.l.b16 %v1339
      %v1652 = vunpack.c.h.b16 %v1339
      %v1653 = vunpack.c.l.b16 %v1340
      %v1654 = vunpack.c.h.b16 %v1340
      %v1655 = vunpack.c.l.b16 %v1341
      %v1656 = vunpack.c.h.b16 %v1341
      %v1657 = vunpack.c.l.b16 %v1342
      %v1658 = vunpack.c.h.b16 %v1342
      %v1659 = vunpack.c.l.b16 %v1343
      %v1660 = vunpack.c.h.b16 %v1343
      %v1661 = vunpack.c.l.b16 %v1344
      %v1662 = vunpack.c.h.b16 %v1344
      %v1663 = vunpack.c.l.b16 %v1345
      %v1664 = vunpack.c.h.b16 %v1345
      %v1665 = vunpack.c.l.b16 %v1346
      %v1666 = vunpack.c.h.b16 %v1346
      %v1667 = vunpack.c.l.b16 %v1347
      %v1668 = vunpack.c.h.b16 %v1347
      %v1669 = vunpack.c.l.b16 %v1348
      %v1670 = vunpack.c.h.b16 %v1348
      %v1671 = vunpack.c.l.b16 %v1349
      %v1672 = vunpack.c.h.b16 %v1349
      %v1673 = vunpack.c.l.b16 %v1350
      %v1674 = vunpack.c.h.b16 %v1350
      %v1675 = vunpack.c.l.b16 %v1351
      %v1676 = vunpack.c.h.b16 %v1351
      %v1677 = vunpack.c.l.b16 %v1352
      %v1678 = vunpack.c.h.b16 %v1352
      %v1679 = vunpack.c.l.b16 %v1353
      %v1680 = vunpack.c.h.b16 %v1353
      %v1681 = vunpack.c.l.b16 %v1354
      %v1682 = vunpack.c.h.b16 %v1354
      %v1683 = vunpack.c.l.b16 %v1355
      %v1684 = vunpack.c.h.b16 %v1355
      %v1685 = vunpack.c.l.b16 %v1356
      %v1686 = vunpack.c.h.b16 %v1356
      %v1687 = vunpack.c.l.b16 %v1357
      %v1688 = vunpack.c.h.b16 %v1357
      %v1689 = vunpack.c.l.b16 %v1358
      %v1690 = vunpack.c.h.b16 %v1358
      %v1691 = vunpack.c.l.b16 %v1359
      %v1692 = vunpack.c.h.b16 %v1359
      %v1693 = vunpack.c.l.b16 %v1360
      %v1694 = vunpack.c.h.b16 %v1360
      %v1695 = vunpack.c.l.b16 %v1361
      %v1696 = vunpack.c.h.b16 %v1361
      %v1697 = vunpack.c.l.b16 %v1362
      %v1698 = vunpack.c.h.b16 %v1362
      %v1699 = vunpack.c.l.b16 %v1363
      %v1700 = vunpack.c.h.b16 %v1363
      %v1701 = vunpack.c.l.b16 %v1364
      %v1702 = vunpack.c.h.b16 %v1364
      %v1703 = vunpack.c.l.b16 %v1365
      %v1704 = vunpack.c.h.b16 %v1365
      %v1705 = vunpack.c.l.b16 %v1366
      %v1706 = vunpack.c.h.b16 %v1366
      %v1707 = vunpack.c.l.b16 %v1367
      %v1708 = vunpack.c.h.b16 %v1367
      %v1709 = vunpack.c.l.b16 %v1368
      %v1710 = vunpack.c.h.b16 %v1368
      %v1711 = vunpack.c.l.b16 %v1369
      %v1712 = vunpack.c.h.b16 %v1369
      %v1713 = vunpack.c.l.b16 %v1370
      %v1714 = vunpack.c.h.b16 %v1370
      %v1715 = vunpack.c.l.b16 %v1371
      %v1716 = vunpack.c.h.b16 %v1371
      %v1717 = vunpack.c.l.b16 %v1372
      %v1718 = vunpack.c.h.b16 %v1372
      %v1719 = vunpack.c.l.b16 %v1373
      %v1720 = vunpack.c.h.b16 %v1373
      %v1721 = vunpack.c.l.b16 %v1374
      %v1722 = vunpack.c.h.b16 %v1374
      %v1723 = vunpack.c.l.b16 %v1375
      %v1724 = vunpack.c.h.b16 %v1375
      %v1725 = vunpack.c.l.b16 %v1376
      %v1726 = vunpack.c.h.b16 %v1376
      %v1727 = vunpack.c.l.b16 %v1377
      %v1728 = vunpack.c.h.b16 %v1377
      %v1729 = vunpack.c.l.b16 %v1378
      %v1730 = vunpack.c.h.b16 %v1378
      %v1731 = vunpack.c.l.b16 %v1379
      %v1732 = vunpack.c.h.b16 %v1379
      %v1733 = vunpack.c.l.b16 %v1380
      %v1734 = vunpack.c.h.b16 %v1380
      %v1735 = vunpack.c.l.b16 %v1381
      %v1736 = vunpack.c.h.b16 %v1381
      %v1737 = vunpack.c.l.b16 %v1382
      %v1738 = vunpack.c.h.b16 %v1382
      %v1739 = vunpack.c.l.b16 %v1383
      %v1740 = vunpack.c.h.b16 %v1383
      %v1741 = vunpack.c.l.b16 %v1384
      %v1742 = vunpack.c.h.b16 %v1384
      %v1743 = vunpack.c.l.b16 %v1385
      %v1744 = vunpack.c.h.b16 %v1385
      %v1745 = vunpack.c.l.b16 %v1386
      %v1746 = vunpack.c.h.b16 %v1386
      %v1747 = vunpack.c.l.b16 %v1387
      %v1748 = vunpack.c.h.b16 %v1387
      %v1749 = vunpack.c.l.b16 %v1388
      %v1750 = vunpack.c.h.b16 %v1388
      %v1751 = vunpack.c.l.b16 %v1389
      %v1752 = vunpack.c.h.b16 %v1389
      %v1753 = vunpack.c.l.b16 %v1390
      %v1754 = vunpack.c.h.b16 %v1390
      %v1755 = vunpack.c.l.b16 %v1391
      %v1756 = vunpack.c.h.b16 %v1391
      %v1757 = vunpack.c.l.b16 %v1392
      %v1758 = vunpack.c.h.b16 %v1392
      %v1759 = vunpack.c.l.b16 %v1393
      %v1760 = vunpack.c.h.b16 %v1393
      %v1761 = vunpack.c.l.b16 %v1394
      %v1762 = vunpack.c.h.b16 %v1394
      %v1763 = vunpack.c.l.b16 %v1395
      %v1764 = vunpack.c.h.b16 %v1395
      %v1765 = vunpack.c.l.b16 %v1396
      %v1766 = vunpack.c.h.b16 %v1396
      %v1767 = vunpack.c.l.b16 %v1397
      %v1768 = vunpack.c.h.b16 %v1397
      %v1769 = vunpack.c.l.b16 %v1398
      %v1770 = vunpack.c.h.b16 %v1398
      %v1771 = vunpack.c.l.b16 %v1399
      %v1772 = vunpack.c.h.b16 %v1399
      %v1773 = vunpack.c.l.b16 %v1400
      %v1774 = vunpack.c.h.b16 %v1400
      %v1775 = vunpack.c.l.b16 %v1401
      %v1776 = vunpack.c.h.b16 %v1401
      %v1777 = vunpack.c.l.b16 %v1402
      %v1778 = vunpack.c.h.b16 %v1402
      %v1779 = vunpack.c.l.b16 %v1403
      %v1780 = vunpack.c.h.b16 %v1403
      %v1781 = vunpack.c.l.b16 %v1404
      %v1782 = vunpack.c.h.b16 %v1404
      %v1783 = vunpack.c.l.b16 %v1405
      %v1784 = vunpack.c.h.b16 %v1405
      %v1785 = vunpack.c.l.b16 %v1406
      %v1786 = vunpack.c.h.b16 %v1406
      %v1787 = vunpack.c.l.b16 %v1407
      %v1788 = vunpack.c.h.b16 %v1407
      %v1789 = vunpack.c.l.b16 %v1408
      %v1790 = vunpack.c.h.b16 %v1408
      %v1791 = vunpack.c.l.b16 %v1409
      %v1792 = vunpack.c.h.b16 %v1409
      %v1793 = vunpack.c.l.b16 %v1410
      %v1794 = vunpack.c.h.b16 %v1410
      %v1795 = vpack.c.b16 %v1539, %v1539
      %v1796 = vpack.c.b16 %v1540, %v1540
      %v1797 = vpack.c.b16 %v1541, %v1541
      %v1798 = vpack.c.b16 %v1542, %v1542
      %v1799 = vpack.c.b16 %v1543, %v1543
      %v1800 = vpack.c.b16 %v1544, %v1544
      %v1801 = vpack.c.b16 %v1545, %v1545
      %v1802 = vpack.c.b16 %v1546, %v1546
      %v1803 = vpack.c.b16 %v1547, %v1547
      %v1804 = vpack.c.b16 %v1548, %v1548
      %v1805 = vpack.c.b16 %v1549, %v1549
      %v1806 = vpack.c.b16 %v1550, %v1550
      %v1807 = vpack.c.b16 %v1551, %v1551
      %v1808 = vpack.c.b16 %v1552, %v1552
      %v1809 = vpack.c.b16 %v1553, %v1553
      %v1810 = vpack.c.b16 %v1554, %v1554
      %v1811 = vpack.c.b16 %v1555, %v1555
      %v1812 = vpack.c.b16 %v1556, %v1556
      %v1813 = vpack.c.b16 %v1557, %v1557
      %v1814 = vpack.c.b16 %v1558, %v1558
      %v1815 = vpack.c.b16 %v1559, %v1559
      %v1816 = vpack.c.b16 %v1560, %v1560
      %v1817 = vpack.c.b16 %v1561, %v1561
      %v1818 = vpack.c.b16 %v1562, %v1562
      %v1819 = vpack.c.b16 %v1563, %v1563
      %v1820 = vpack.c.b16 %v1564, %v1564
      %v1821 = vpack.c.b16 %v1565, %v1565
      %v1822 = vpack.c.b16 %v1566, %v1566
      %v1823 = vpack.c.b16 %v1567, %v1567
      %v1824 = vpack.c.b16 %v1568, %v1568
      %v1825 = vpack.c.b16 %v1569, %v1569
      %v1826 = vpack.c.b16 %v1570, %v1570
      %v1827 = vpack.c.b16 %v1571, %v1571
      %v1828 = vpack.c.b16 %v1572, %v1572
      %v1829 = vpack.c.b16 %v1573, %v1573
      %v1830 = vpack.c.b16 %v1574, %v1574
      %v1831 = vpack.c.b16 %v1575, %v1575
      %v1832 = vpack.c.b16 %v1576, %v1576
      %v1833 = vpack.c.b16 %v1577, %v1577
      %v1834 = vpack.c.b16 %v1578, %v1578
      %v1835 = vpack.c.b16 %v1579, %v1579
      %v1836 = vpack.c.b16 %v1580, %v1580
      %v1837 = vpack.c.b16 %v1581, %v1581
      %v1838 = vpack.c.b16 %v1582, %v1582
      %v1839 = vpack.c.b16 %v1583, %v1583
      %v1840 = vpack.c.b16 %v1584, %v1584
      %v1841 = vpack.c.b16 %v1585, %v1585
      %v1842 = vpack.c.b16 %v1586, %v1586
      %v1843 = vpack.c.b16 %v1587, %v1587
      %v1844 = vpack.c.b16 %v1588, %v1588
      %v1845 = vpack.c.b16 %v1589, %v1589
      %v1846 = vpack.c.b16 %v1590, %v1590
      %v1847 = vpack.c.b16 %v1591, %v1591
      %v1848 = vpack.c.b16 %v1592, %v1592
      %v1849 = vpack.c.b16 %v1593, %v1593
      %v1850 = vpack.c.b16 %v1594, %v1594
      %v1851 = vpack.c.b16 %v1595, %v1595
      %v1852 = vpack.c.b16 %v1596, %v1596
      %v1853 = vpack.c.b16 %v1597, %v1597
      %v1854 = vpack.c.b16 %v1598, %v1598
      %v1855 = vpack.c.b16 %v1599, %v1599
      %v1856 = vpack.c.b16 %v1600, %v1600
      %v1857 = vpack.c.b16 %v1601, %v1601
      %v1858 = vpack.c.b16 %v1602, %v1602
      %v1859 = vpack.c.b16 %v1603, %v1603
      %v1860 = vpack.c.b16 %v1604, %v1604
      %v1861 = vpack.c.b16 %v1605, %v1605
      %v1862 = vpack.c.b16 %v1606, %v1606
      %v1863 = vpack.c.b16 %v1607, %v1607
      %v1864 = vpack.c.b16 %v1608, %v1608
      %v1865 = vpack.c.b16 %v1609, %v1609
      %v1866 = vpack.c.b16 %v1610, %v1610
      %v1867 = vpack.c.b16 %v1611, %v1611
      %v1868 = vpack.c.b16 %v1612, %v1612
      %v1869 = vpack.c.b16 %v1613, %v1613
      %v1870 = vpack.c.b16 %v1614, %v1614
      %v1871 = vpack.c.b16 %v1615, %v1615
      %v1872 = vpack.c.b16 %v1616, %v1616
      %v1873 = vpack.c.b16 %v1617, %v1617
      %v1874 = vpack.c.b16 %v1618, %v1618
      %v1875 = vpack.c.b16 %v1619, %v1619
      %v1876 = vpack.c.b16 %v1620, %v1620
      %v1877 = vpack.c.b16 %v1621, %v1621
      %v1878 = vpack.c.b16 %v1622, %v1622
      %v1879 = vpack.c.b16 %v1623, %v1623
      %v1880 = vpack.c.b16 %v1624, %v1624
      %v1881 = vpack.c.b16 %v1625, %v1625
      %v1882 = vpack.c.b16 %v1626, %v1626
      %v1883 = vpack.c.b16 %v1627, %v1627
      %v1884 = vpack.c.b16 %v1628, %v1628
      %v1885 = vpack.c.b16 %v1629, %v1629
      %v1886 = vpack.c.b16 %v1630, %v1630
      %v1887 = vpack.c.b16 %v1631, %v1631
      %v1888 = vpack.c.b16 %v1632, %v1632
      %v1889 = vpack.c.b16 %v1633, %v1633
      %v1890 = vpack.c.b16 %v1634, %v1634
      %v1891 = vpack.c.b16 %v1635, %v1635
      %v1892 = vpack.c.b16 %v1636, %v1636
      %v1893 = vpack.c.b16 %v1637, %v1637
      %v1894 = vpack.c.b16 %v1638, %v1638
      %v1895 = vpack.c.b16 %v1639, %v1639
      %v1896 = vpack.c.b16 %v1640, %v1640
      %v1897 = vpack.c.b16 %v1641, %v1641
      %v1898 = vpack.c.b16 %v1642, %v1642
      %v1899 = vpack.c.b16 %v1643, %v1643
      %v1900 = vpack.c.b16 %v1644, %v1644
      %v1901 = vpack.c.b16 %v1645, %v1645
      %v1902 = vpack.c.b16 %v1646, %v1646
      %v1903 = vpack.c.b16 %v1647, %v1647
      %v1904 = vpack.c.b16 %v1648, %v1648
      %v1905 = vpack.c.b16 %v1649, %v1649
      %v1906 = vpack.c.b16 %v1650, %v1650
      %v1907 = vpack.c.b16 %v1651, %v1651
      %v1908 = vpack.c.b16 %v1652, %v1652
      %v1909 = vpack.c.b16 %v1653, %v1653
      %v1910 = vpack.c.b16 %v1654, %v1654
      %v1911 = vpack.c.b16 %v1655, %v1655
      %v1912 = vpack.c.b16 %v1656, %v1656
      %v1913 = vpack.c.b16 %v1657, %v1657
      %v1914 = vpack.c.b16 %v1658, %v1658
      %v1915 = vpack.c.b16 %v1659, %v1659
      %v1916 = vpack.c.b16 %v1660, %v1660
      %v1917 = vpack.c.b16 %v1661, %v1661
      %v1918 = vpack.c.b16 %v1662, %v1662
      %v1919 = vpack.c.b16 %v1663, %v1663
      %v1920 = vpack.c.b16 %v1664, %v1664
      %v1921 = vpack.c.b16 %v1665, %v1665
      %v1922 = vpack.c.b16 %v1666, %v1666
      %v1923 = vpack.c.b16 %v1667, %v1667
      %v1924 = vpack.c.b16 %v1668, %v1668
      %v1925 = vpack.c.b16 %v1669, %v1669
      %v1926 = vpack.c.b16 %v1670, %v1670
      %v1927 = vpack.c.b16 %v1671, %v1671
      %v1928 = vpack.c.b16 %v1672, %v1672
      %v1929 = vpack.c.b16 %v1673, %v1673
      %v1930 = vpack.c.b16 %v1674, %v1674
      %v1931 = vpack.c.b16 %v1675, %v1675
      %v1932 = vpack.c.b16 %v1676, %v1676
      %v1933 = vpack.c.b16 %v1677, %v1677
      %v1934 = vpack.c.b16 %v1678, %v1678
      %v1935 = vpack.c.b16 %v1679, %v1679
      %v1936 = vpack.c.b16 %v1680, %v1680
      %v1937 = vpack.c.b16 %v1681, %v1681
      %v1938 = vpack.c.b16 %v1682, %v1682
      %v1939 = vpack.c.b16 %v1683, %v1683
      %v1940 = vpack.c.b16 %v1684, %v1684
      %v1941 = vpack.c.b16 %v1685, %v1685
      %v1942 = vpack.c.b16 %v1686, %v1686
      %v1943 = vpack.c.b16 %v1687, %v1687
      %v1944 = vpack.c.b16 %v1688, %v1688
      %v1945 = vpack.c.b16 %v1689, %v1689
      %v1946 = vpack.c.b16 %v1690, %v1690
      %v1947 = vpack.c.b16 %v1691, %v1691
      %v1948 = vpack.c.b16 %v1692, %v1692
      %v1949 = vpack.c.b16 %v1693, %v1693
      %v1950 = vpack.c.b16 %v1694, %v1694
      %v1951 = vpack.c.b16 %v1695, %v1695
      %v1952 = vpack.c.b16 %v1696, %v1696
      %v1953 = vpack.c.b16 %v1697, %v1697
      %v1954 = vpack.c.b16 %v1698, %v1698
      %v1955 = vpack.c.b16 %v1699, %v1699
      %v1956 = vpack.c.b16 %v1700, %v1700
      %v1957 = vpack.c.b16 %v1701, %v1701
      %v1958 = vpack.c.b16 %v1702, %v1702
      %v1959 = vpack.c.b16 %v1703, %v1703
      %v1960 = vpack.c.b16 %v1704, %v1704
      %v1961 = vpack.c.b16 %v1705, %v1705
      %v1962 = vpack.c.b16 %v1706, %v1706
      %v1963 = vpack.c.b16 %v1707, %v1707
      %v1964 = vpack.c.b16 %v1708, %v1708
      %v1965 = vpack.c.b16 %v1709, %v1709
      %v1966 = vpack.c.b16 %v1710, %v1710
      %v1967 = vpack.c.b16 %v1711, %v1711
      %v1968 = vpack.c.b16 %v1712, %v1712
      %v1969 = vpack.c.b16 %v1713, %v1713
      %v1970 = vpack.c.b16 %v1714, %v1714
      %v1971 = vpack.c.b16 %v1715, %v1715
      %v1972 = vpack.c.b16 %v1716, %v1716
      %v1973 = vpack.c.b16 %v1717, %v1717
      %v1974 = vpack.c.b16 %v1718, %v1718
      %v1975 = vpack.c.b16 %v1719, %v1719
      %v1976 = vpack.c.b16 %v1720, %v1720
      %v1977 = vpack.c.b16 %v1721, %v1721
      %v1978 = vpack.c.b16 %v1722, %v1722
      %v1979 = vpack.c.b16 %v1723, %v1723
      %v1980 = vpack.c.b16 %v1724, %v1724
      %v1981 = vpack.c.b16 %v1725, %v1725
      %v1982 = vpack.c.b16 %v1726, %v1726
      %v1983 = vpack.c.b16 %v1727, %v1727
      %v1984 = vpack.c.b16 %v1728, %v1728
      %v1985 = vpack.c.b16 %v1729, %v1729
      %v1986 = vpack.c.b16 %v1730, %v1730
      %v1987 = vpack.c.b16 %v1731, %v1731
      %v1988 = vpack.c.b16 %v1732, %v1732
      %v1989 = vpack.c.b16 %v1733, %v1733
      %v1990 = vpack.c.b16 %v1734, %v1734
      %v1991 = vpack.c.b16 %v1735, %v1735
      %v1992 = vpack.c.b16 %v1736, %v1736
      %v1993 = vpack.c.b16 %v1737, %v1737
      %v1994 = vpack.c.b16 %v1738, %v1738
      %v1995 = vpack.c.b16 %v1739, %v1739
      %v1996 = vpack.c.b16 %v1740, %v1740
      %v1997 = vpack.c.b16 %v1741, %v1741
      %v1998 = vpack.c.b16 %v1742, %v1742
      %v1999 = vpack.c.b16 %v1743, %v1743
      %v2000 = vpack.c.b16 %v1744, %v1744
      %v2001 = vpack.c.b16 %v1745, %v1745
      %v2002 = vpack.c.b16 %v1746, %v1746
      %v2003 = vpack.c.b16 %v1747, %v1747
      %v2004 = vpack.c.b16 %v1748, %v1748
      %v2005 = vpack.c.b16 %v1749, %v1749
      %v2006 = vpack.c.b16 %v1750, %v1750
      %v2007 = vpack.c.b16 %v1751, %v1751
      %v2008 = vpack.c.b16 %v1752, %v1752
      %v2009 = vpack.c.b16 %v1753, %v1753
      %v2010 = vpack.c.b16 %v1754, %v1754
      %v2011 = vpack.c.b16 %v1755, %v1755
      %v2012 = vpack.c.b16 %v1756, %v1756
      %v2013 = vpack.c.b16 %v1757, %v1757
      %v2014 = vpack.c.b16 %v1758, %v1758
      %v2015 = vpack.c.b16 %v1759, %v1759
      %v2016 = vpack.c.b16 %v1760, %v1760
      %v2017 = vpack.c.b16 %v1761, %v1761
      %v2018 = vpack.c.b16 %v1762, %v1762
      %v2019 = vpack.c.b16 %v1763, %v1763
      %v2020 = vpack.c.b16 %v1764, %v1764
      %v2021 = vpack.c.b16 %v1765, %v1765
      %v2022 = vpack.c.b16 %v1766, %v1766
      %v2023 = vpack.c.b16 %v1767, %v1767
      %v2024 = vpack.c.b16 %v1768, %v1768
      %v2025 = vpack.c.b16 %v1769, %v1769
      %v2026 = vpack.c.b16 %v1770, %v1770
      %v2027 = vpack.c.b16 %v1771, %v1771
      %v2028 = vpack.c.b16 %v1772, %v1772
      %v2029 = vpack.c.b16 %v1773, %v1773
      %v2030 = vpack.c.b16 %v1774, %v1774
      %v2031 = vpack.c.b16 %v1775, %v1775
      %v2032 = vpack.c.b16 %v1776, %v1776
      %v2033 = vpack.c.b16 %v1777, %v1777
      %v2034 = vpack.c.b16 %v1778, %v1778
      %v2035 = vpack.c.b16 %v1779, %v1779
      %v2036 = vpack.c.b16 %v1780, %v1780
      %v2037 = vpack.c.b16 %v1781, %v1781
      %v2038 = vpack.c.b16 %v1782, %v1782
      %v2039 = vpack.c.b16 %v1783, %v1783
      %v2040 = vpack.c.b16 %v1784, %v1784
      %v2041 = vpack.c.b16 %v1785, %v1785
      %v2042 = vpack.c.b16 %v1786, %v1786
      %v2043 = vpack.c.b16 %v1787, %v1787
      %v2044 = vpack.c.b16 %v1788, %v1788
      %v2045 = vpack.c.b16 %v1789, %v1789
      %v2046 = vpack.c.b16 %v1790, %v1790
      %v2047 = vpack.c.b16 %v1791, %v1791
      %v2048 = vpack.c.b16 %v1792, %v1792
      %v2049 = vpack.c.b16 %v1793, %v1793
      %v2050 = vpack.c.b16 %v1794, %v1794
      %vm2307 = vcmask 257024
      %2308 = vst.msk [vmem:[%s236] sm:$0xf] %vm2307, %v1795
      %2309 = vst.msk [vmem:[%s236 + $0x4] sm:$0xf] %vm2307, %v1796
      %2310 = vst.msk [vmem:[%s236 + $0x8] sm:$0xf] %vm2307, %v1797
      %2311 = vst.msk [vmem:[%s236 + $0xc] sm:$0xf] %vm2307, %v1798
      %2312 = vst.msk [vmem:[%s236 + $0x10] sm:$0xf] %vm2307, %v1799
      %2313 = vst.msk [vmem:[%s236 + $0x14] sm:$0xf] %vm2307, %v1800
      %2314 = vst.msk [vmem:[%s236 + $0x18] sm:$0xf] %vm2307, %v1801
      %2315 = vst.msk [vmem:[%s236 + $0x1c] sm:$0xf] %vm2307, %v1802
      %2316 = vst.msk [vmem:[%s236 + $0x20] sm:$0xf] %vm2307, %v1803
      %2317 = vst.msk [vmem:[%s236 + $0x24] sm:$0xf] %vm2307, %v1804
      %2318 = vst.msk [vmem:[%s236 + $0x28] sm:$0xf] %vm2307, %v1805
      %2319 = vst.msk [vmem:[%s236 + $0x2c] sm:$0xf] %vm2307, %v1806
      %2320 = vst.msk [vmem:[%s236 + $0x30] sm:$0xf] %vm2307, %v1807
      %2321 = vst.msk [vmem:[%s236 + $0x34] sm:$0xf] %vm2307, %v1808
      %2322 = vst.msk [vmem:[%s236 + $0x38] sm:$0xf] %vm2307, %v1809
      %2323 = vst.msk [vmem:[%s236 + $0x3c] sm:$0xf] %vm2307, %v1810
      %2324 = vst.msk [vmem:[%s236 + $0x40] sm:$0xf] %vm2307, %v1811
      %2325 = vst.msk [vmem:[%s236 + $0x44] sm:$0xf] %vm2307, %v1812
      %2326 = vst.msk [vmem:[%s236 + $0x48] sm:$0xf] %vm2307, %v1813
      %2327 = vst.msk [vmem:[%s236 + $0x4c] sm:$0xf] %vm2307, %v1814
      %2328 = vst.msk [vmem:[%s236 + $0x50] sm:$0xf] %vm2307, %v1815
      %2329 = vst.msk [vmem:[%s236 + $0x54] sm:$0xf] %vm2307, %v1816
      %2330 = vst.msk [vmem:[%s236 + $0x58] sm:$0xf] %vm2307, %v1817
      %2331 = vst.msk [vmem:[%s236 + $0x5c] sm:$0xf] %vm2307, %v1818
      %2332 = vst.msk [vmem:[%s236 + $0x60] sm:$0xf] %vm2307, %v1819
      %2333 = vst.msk [vmem:[%s236 + $0x64] sm:$0xf] %vm2307, %v1820
      %2334 = vst.msk [vmem:[%s236 + $0x68] sm:$0xf] %vm2307, %v1821
      %2335 = vst.msk [vmem:[%s236 + $0x6c] sm:$0xf] %vm2307, %v1822
      %2336 = vst.msk [vmem:[%s236 + $0x70] sm:$0xf] %vm2307, %v1823
      %2337 = vst.msk [vmem:[%s236 + $0x74] sm:$0xf] %vm2307, %v1824
      %2338 = vst.msk [vmem:[%s236 + $0x78] sm:$0xf] %vm2307, %v1825
      %2339 = vst.msk [vmem:[%s236 + $0x7c] sm:$0xf] %vm2307, %v1826
      %2340 = vst.msk [vmem:[%s236 + $0x80] sm:$0xf] %vm2307, %v1827
      %2341 = vst.msk [vmem:[%s236 + $0x84] sm:$0xf] %vm2307, %v1828
      %2342 = vst.msk [vmem:[%s236 + $0x88] sm:$0xf] %vm2307, %v1829
      %2343 = vst.msk [vmem:[%s236 + $0x8c] sm:$0xf] %vm2307, %v1830
      %2344 = vst.msk [vmem:[%s236 + $0x90] sm:$0xf] %vm2307, %v1831
      %2345 = vst.msk [vmem:[%s236 + $0x94] sm:$0xf] %vm2307, %v1832
      %2346 = vst.msk [vmem:[%s236 + $0x98] sm:$0xf] %vm2307, %v1833
      %2347 = vst.msk [vmem:[%s236 + $0x9c] sm:$0xf] %vm2307, %v1834
      %2348 = vst.msk [vmem:[%s236 + $0xa0] sm:$0xf] %vm2307, %v1835
      %2349 = vst.msk [vmem:[%s236 + $0xa4] sm:$0xf] %vm2307, %v1836
      %2350 = vst.msk [vmem:[%s236 + $0xa8] sm:$0xf] %vm2307, %v1837
      %2351 = vst.msk [vmem:[%s236 + $0xac] sm:$0xf] %vm2307, %v1838
      %2352 = vst.msk [vmem:[%s236 + $0xb0] sm:$0xf] %vm2307, %v1839
      %2353 = vst.msk [vmem:[%s236 + $0xb4] sm:$0xf] %vm2307, %v1840
      %2354 = vst.msk [vmem:[%s236 + $0xb8] sm:$0xf] %vm2307, %v1841
      %2355 = vst.msk [vmem:[%s236 + $0xbc] sm:$0xf] %vm2307, %v1842
      %2356 = vst.msk [vmem:[%s236 + $0xc0] sm:$0xf] %vm2307, %v1843
      %2357 = vst.msk [vmem:[%s236 + $0xc4] sm:$0xf] %vm2307, %v1844
      %2358 = vst.msk [vmem:[%s236 + $0xc8] sm:$0xf] %vm2307, %v1845
      %2359 = vst.msk [vmem:[%s236 + $0xcc] sm:$0xf] %vm2307, %v1846
      %2360 = vst.msk [vmem:[%s236 + $0xd0] sm:$0xf] %vm2307, %v1847
      %2361 = vst.msk [vmem:[%s236 + $0xd4] sm:$0xf] %vm2307, %v1848
      %2362 = vst.msk [vmem:[%s236 + $0xd8] sm:$0xf] %vm2307, %v1849
      %2363 = vst.msk [vmem:[%s236 + $0xdc] sm:$0xf] %vm2307, %v1850
      %2364 = vst.msk [vmem:[%s236 + $0xe0] sm:$0xf] %vm2307, %v1851
      %2365 = vst.msk [vmem:[%s236 + $0xe4] sm:$0xf] %vm2307, %v1852
      %2366 = vst.msk [vmem:[%s236 + $0xe8] sm:$0xf] %vm2307, %v1853
      %2367 = vst.msk [vmem:[%s236 + $0xec] sm:$0xf] %vm2307, %v1854
      %2368 = vst.msk [vmem:[%s236 + $0xf0] sm:$0xf] %vm2307, %v1855
      %2369 = vst.msk [vmem:[%s236 + $0xf4] sm:$0xf] %vm2307, %v1856
      %2370 = vst.msk [vmem:[%s236 + $0xf8] sm:$0xf] %vm2307, %v1857
      %2371 = vst.msk [vmem:[%s236 + $0xfc] sm:$0xf] %vm2307, %v1858
      %2372 = vst.msk [vmem:[%s236 + $0x100] sm:$0xf] %vm2307, %v1859
      %2373 = vst.msk [vmem:[%s236 + $0x104] sm:$0xf] %vm2307, %v1860
      %2374 = vst.msk [vmem:[%s236 + $0x108] sm:$0xf] %vm2307, %v1861
      %2375 = vst.msk [vmem:[%s236 + $0x10c] sm:$0xf] %vm2307, %v1862
      %2376 = vst.msk [vmem:[%s236 + $0x110] sm:$0xf] %vm2307, %v1863
      %2377 = vst.msk [vmem:[%s236 + $0x114] sm:$0xf] %vm2307, %v1864
      %2378 = vst.msk [vmem:[%s236 + $0x118] sm:$0xf] %vm2307, %v1865
      %2379 = vst.msk [vmem:[%s236 + $0x11c] sm:$0xf] %vm2307, %v1866
      %2380 = vst.msk [vmem:[%s236 + $0x120] sm:$0xf] %vm2307, %v1867
      %2381 = vst.msk [vmem:[%s236 + $0x124] sm:$0xf] %vm2307, %v1868
      %2382 = vst.msk [vmem:[%s236 + $0x128] sm:$0xf] %vm2307, %v1869
      %2383 = vst.msk [vmem:[%s236 + $0x12c] sm:$0xf] %vm2307, %v1870
      %2384 = vst.msk [vmem:[%s236 + $0x130] sm:$0xf] %vm2307, %v1871
      %2385 = vst.msk [vmem:[%s236 + $0x134] sm:$0xf] %vm2307, %v1872
      %2386 = vst.msk [vmem:[%s236 + $0x138] sm:$0xf] %vm2307, %v1873
      %2387 = vst.msk [vmem:[%s236 + $0x13c] sm:$0xf] %vm2307, %v1874
      %2388 = vst.msk [vmem:[%s236 + $0x140] sm:$0xf] %vm2307, %v1875
      %2389 = vst.msk [vmem:[%s236 + $0x144] sm:$0xf] %vm2307, %v1876
      %2390 = vst.msk [vmem:[%s236 + $0x148] sm:$0xf] %vm2307, %v1877
      %2391 = vst.msk [vmem:[%s236 + $0x14c] sm:$0xf] %vm2307, %v1878
      %2392 = vst.msk [vmem:[%s236 + $0x150] sm:$0xf] %vm2307, %v1879
      %2393 = vst.msk [vmem:[%s236 + $0x154] sm:$0xf] %vm2307, %v1880
      %2394 = vst.msk [vmem:[%s236 + $0x158] sm:$0xf] %vm2307, %v1881
      %2395 = vst.msk [vmem:[%s236 + $0x15c] sm:$0xf] %vm2307, %v1882
      %2396 = vst.msk [vmem:[%s236 + $0x160] sm:$0xf] %vm2307, %v1883
      %2397 = vst.msk [vmem:[%s236 + $0x164] sm:$0xf] %vm2307, %v1884
      %2398 = vst.msk [vmem:[%s236 + $0x168] sm:$0xf] %vm2307, %v1885
      %2399 = vst.msk [vmem:[%s236 + $0x16c] sm:$0xf] %vm2307, %v1886
      %2400 = vst.msk [vmem:[%s236 + $0x170] sm:$0xf] %vm2307, %v1887
      %2401 = vst.msk [vmem:[%s236 + $0x174] sm:$0xf] %vm2307, %v1888
      %2402 = vst.msk [vmem:[%s236 + $0x178] sm:$0xf] %vm2307, %v1889
      %2403 = vst.msk [vmem:[%s236 + $0x17c] sm:$0xf] %vm2307, %v1890
      %2404 = vst.msk [vmem:[%s236 + $0x180] sm:$0xf] %vm2307, %v1891
      %2405 = vst.msk [vmem:[%s236 + $0x184] sm:$0xf] %vm2307, %v1892
      %2406 = vst.msk [vmem:[%s236 + $0x188] sm:$0xf] %vm2307, %v1893
      %2407 = vst.msk [vmem:[%s236 + $0x18c] sm:$0xf] %vm2307, %v1894
      %2408 = vst.msk [vmem:[%s236 + $0x190] sm:$0xf] %vm2307, %v1895
      %2409 = vst.msk [vmem:[%s236 + $0x194] sm:$0xf] %vm2307, %v1896
      %2410 = vst.msk [vmem:[%s236 + $0x198] sm:$0xf] %vm2307, %v1897
      %2411 = vst.msk [vmem:[%s236 + $0x19c] sm:$0xf] %vm2307, %v1898
      %2412 = vst.msk [vmem:[%s236 + $0x1a0] sm:$0xf] %vm2307, %v1899
      %2413 = vst.msk [vmem:[%s236 + $0x1a4] sm:$0xf] %vm2307, %v1900
      %2414 = vst.msk [vmem:[%s236 + $0x1a8] sm:$0xf] %vm2307, %v1901
      %2415 = vst.msk [vmem:[%s236 + $0x1ac] sm:$0xf] %vm2307, %v1902
      %2416 = vst.msk [vmem:[%s236 + $0x1b0] sm:$0xf] %vm2307, %v1903
      %2417 = vst.msk [vmem:[%s236 + $0x1b4] sm:$0xf] %vm2307, %v1904
      %2418 = vst.msk [vmem:[%s236 + $0x1b8] sm:$0xf] %vm2307, %v1905
      %2419 = vst.msk [vmem:[%s236 + $0x1bc] sm:$0xf] %vm2307, %v1906
      %2420 = vst.msk [vmem:[%s236 + $0x1c0] sm:$0xf] %vm2307, %v1907
      %2421 = vst.msk [vmem:[%s236 + $0x1c4] sm:$0xf] %vm2307, %v1908
      %2422 = vst.msk [vmem:[%s236 + $0x1c8] sm:$0xf] %vm2307, %v1909
      %2423 = vst.msk [vmem:[%s236 + $0x1cc] sm:$0xf] %vm2307, %v1910
      %2424 = vst.msk [vmem:[%s236 + $0x1d0] sm:$0xf] %vm2307, %v1911
      %2425 = vst.msk [vmem:[%s236 + $0x1d4] sm:$0xf] %vm2307, %v1912
      %2426 = vst.msk [vmem:[%s236 + $0x1d8] sm:$0xf] %vm2307, %v1913
      %2427 = vst.msk [vmem:[%s236 + $0x1dc] sm:$0xf] %vm2307, %v1914
      %2428 = vst.msk [vmem:[%s236 + $0x1e0] sm:$0xf] %vm2307, %v1915
      %2429 = vst.msk [vmem:[%s236 + $0x1e4] sm:$0xf] %vm2307, %v1916
      %2430 = vst.msk [vmem:[%s236 + $0x1e8] sm:$0xf] %vm2307, %v1917
      %2431 = vst.msk [vmem:[%s236 + $0x1ec] sm:$0xf] %vm2307, %v1918
      %2432 = vst.msk [vmem:[%s236 + $0x1f0] sm:$0xf] %vm2307, %v1919
      %2433 = vst.msk [vmem:[%s236 + $0x1f4] sm:$0xf] %vm2307, %v1920
      %2434 = vst.msk [vmem:[%s236 + $0x1f8] sm:$0xf] %vm2307, %v1921
      %2435 = vst.msk [vmem:[%s236 + $0x1fc] sm:$0xf] %vm2307, %v1922
      %2436 = vst.msk [vmem:[%s236 + $0x200] sm:$0xf] %vm2307, %v1923
      %2437 = vst.msk [vmem:[%s236 + $0x204] sm:$0xf] %vm2307, %v1924
      %2438 = vst.msk [vmem:[%s236 + $0x208] sm:$0xf] %vm2307, %v1925
      %2439 = vst.msk [vmem:[%s236 + $0x20c] sm:$0xf] %vm2307, %v1926
      %2440 = vst.msk [vmem:[%s236 + $0x210] sm:$0xf] %vm2307, %v1927
      %2441 = vst.msk [vmem:[%s236 + $0x214] sm:$0xf] %vm2307, %v1928
      %2442 = vst.msk [vmem:[%s236 + $0x218] sm:$0xf] %vm2307, %v1929
      %2443 = vst.msk [vmem:[%s236 + $0x21c] sm:$0xf] %vm2307, %v1930
      %2444 = vst.msk [vmem:[%s236 + $0x220] sm:$0xf] %vm2307, %v1931
      %2445 = vst.msk [vmem:[%s236 + $0x224] sm:$0xf] %vm2307, %v1932
      %2446 = vst.msk [vmem:[%s236 + $0x228] sm:$0xf] %vm2307, %v1933
      %2447 = vst.msk [vmem:[%s236 + $0x22c] sm:$0xf] %vm2307, %v1934
      %2448 = vst.msk [vmem:[%s236 + $0x230] sm:$0xf] %vm2307, %v1935
      %2449 = vst.msk [vmem:[%s236 + $0x234] sm:$0xf] %vm2307, %v1936
      %2450 = vst.msk [vmem:[%s236 + $0x238] sm:$0xf] %vm2307, %v1937
      %2451 = vst.msk [vmem:[%s236 + $0x23c] sm:$0xf] %vm2307, %v1938
      %2452 = vst.msk [vmem:[%s236 + $0x240] sm:$0xf] %vm2307, %v1939
      %2453 = vst.msk [vmem:[%s236 + $0x244] sm:$0xf] %vm2307, %v1940
      %2454 = vst.msk [vmem:[%s236 + $0x248] sm:$0xf] %vm2307, %v1941
      %2455 = vst.msk [vmem:[%s236 + $0x24c] sm:$0xf] %vm2307, %v1942
      %2456 = vst.msk [vmem:[%s236 + $0x250] sm:$0xf] %vm2307, %v1943
      %2457 = vst.msk [vmem:[%s236 + $0x254] sm:$0xf] %vm2307, %v1944
      %2458 = vst.msk [vmem:[%s236 + $0x258] sm:$0xf] %vm2307, %v1945
      %2459 = vst.msk [vmem:[%s236 + $0x25c] sm:$0xf] %vm2307, %v1946
      %2460 = vst.msk [vmem:[%s236 + $0x260] sm:$0xf] %vm2307, %v1947
      %2461 = vst.msk [vmem:[%s236 + $0x264] sm:$0xf] %vm2307, %v1948
      %2462 = vst.msk [vmem:[%s236 + $0x268] sm:$0xf] %vm2307, %v1949
      %2463 = vst.msk [vmem:[%s236 + $0x26c] sm:$0xf] %vm2307, %v1950
      %2464 = vst.msk [vmem:[%s236 + $0x270] sm:$0xf] %vm2307, %v1951
      %2465 = vst.msk [vmem:[%s236 + $0x274] sm:$0xf] %vm2307, %v1952
      %2466 = vst.msk [vmem:[%s236 + $0x278] sm:$0xf] %vm2307, %v1953
      %2467 = vst.msk [vmem:[%s236 + $0x27c] sm:$0xf] %vm2307, %v1954
      %2468 = vst.msk [vmem:[%s236 + $0x280] sm:$0xf] %vm2307, %v1955
      %2469 = vst.msk [vmem:[%s236 + $0x284] sm:$0xf] %vm2307, %v1956
      %2470 = vst.msk [vmem:[%s236 + $0x288] sm:$0xf] %vm2307, %v1957
      %2471 = vst.msk [vmem:[%s236 + $0x28c] sm:$0xf] %vm2307, %v1958
      %2472 = vst.msk [vmem:[%s236 + $0x290] sm:$0xf] %vm2307, %v1959
      %2473 = vst.msk [vmem:[%s236 + $0x294] sm:$0xf] %vm2307, %v1960
      %2474 = vst.msk [vmem:[%s236 + $0x298] sm:$0xf] %vm2307, %v1961
      %2475 = vst.msk [vmem:[%s236 + $0x29c] sm:$0xf] %vm2307, %v1962
      %2476 = vst.msk [vmem:[%s236 + $0x2a0] sm:$0xf] %vm2307, %v1963
      %2477 = vst.msk [vmem:[%s236 + $0x2a4] sm:$0xf] %vm2307, %v1964
      %2478 = vst.msk [vmem:[%s236 + $0x2a8] sm:$0xf] %vm2307, %v1965
      %2479 = vst.msk [vmem:[%s236 + $0x2ac] sm:$0xf] %vm2307, %v1966
      %2480 = vst.msk [vmem:[%s236 + $0x2b0] sm:$0xf] %vm2307, %v1967
      %2481 = vst.msk [vmem:[%s236 + $0x2b4] sm:$0xf] %vm2307, %v1968
      %2482 = vst.msk [vmem:[%s236 + $0x2b8] sm:$0xf] %vm2307, %v1969
      %2483 = vst.msk [vmem:[%s236 + $0x2bc] sm:$0xf] %vm2307, %v1970
      %2484 = vst.msk [vmem:[%s236 + $0x2c0] sm:$0xf] %vm2307, %v1971
      %2485 = vst.msk [vmem:[%s236 + $0x2c4] sm:$0xf] %vm2307, %v1972
      %2486 = vst.msk [vmem:[%s236 + $0x2c8] sm:$0xf] %vm2307, %v1973
      %2487 = vst.msk [vmem:[%s236 + $0x2cc] sm:$0xf] %vm2307, %v1974
      %2488 = vst.msk [vmem:[%s236 + $0x2d0] sm:$0xf] %vm2307, %v1975
      %2489 = vst.msk [vmem:[%s236 + $0x2d4] sm:$0xf] %vm2307, %v1976
      %2490 = vst.msk [vmem:[%s236 + $0x2d8] sm:$0xf] %vm2307, %v1977
      %2491 = vst.msk [vmem:[%s236 + $0x2dc] sm:$0xf] %vm2307, %v1978
      %2492 = vst.msk [vmem:[%s236 + $0x2e0] sm:$0xf] %vm2307, %v1979
      %2493 = vst.msk [vmem:[%s236 + $0x2e4] sm:$0xf] %vm2307, %v1980
      %2494 = vst.msk [vmem:[%s236 + $0x2e8] sm:$0xf] %vm2307, %v1981
      %2495 = vst.msk [vmem:[%s236 + $0x2ec] sm:$0xf] %vm2307, %v1982
      %2496 = vst.msk [vmem:[%s236 + $0x2f0] sm:$0xf] %vm2307, %v1983
      %2497 = vst.msk [vmem:[%s236 + $0x2f4] sm:$0xf] %vm2307, %v1984
      %2498 = vst.msk [vmem:[%s236 + $0x2f8] sm:$0xf] %vm2307, %v1985
      %2499 = vst.msk [vmem:[%s236 + $0x2fc] sm:$0xf] %vm2307, %v1986
      %2500 = vst.msk [vmem:[%s236 + $0x300] sm:$0xf] %vm2307, %v1987
      %2501 = vst.msk [vmem:[%s236 + $0x304] sm:$0xf] %vm2307, %v1988
      %2502 = vst.msk [vmem:[%s236 + $0x308] sm:$0xf] %vm2307, %v1989
      %2503 = vst.msk [vmem:[%s236 + $0x30c] sm:$0xf] %vm2307, %v1990
      %2504 = vst.msk [vmem:[%s236 + $0x310] sm:$0xf] %vm2307, %v1991
      %2505 = vst.msk [vmem:[%s236 + $0x314] sm:$0xf] %vm2307, %v1992
      %2506 = vst.msk [vmem:[%s236 + $0x318] sm:$0xf] %vm2307, %v1993
      %2507 = vst.msk [vmem:[%s236 + $0x31c] sm:$0xf] %vm2307, %v1994
      %2508 = vst.msk [vmem:[%s236 + $0x320] sm:$0xf] %vm2307, %v1995
      %2509 = vst.msk [vmem:[%s236 + $0x324] sm:$0xf] %vm2307, %v1996
      %2510 = vst.msk [vmem:[%s236 + $0x328] sm:$0xf] %vm2307, %v1997
      %2511 = vst.msk [vmem:[%s236 + $0x32c] sm:$0xf] %vm2307, %v1998
      %2512 = vst.msk [vmem:[%s236 + $0x330] sm:$0xf] %vm2307, %v1999
      %2513 = vst.msk [vmem:[%s236 + $0x334] sm:$0xf] %vm2307, %v2000
      %2514 = vst.msk [vmem:[%s236 + $0x338] sm:$0xf] %vm2307, %v2001
      %2515 = vst.msk [vmem:[%s236 + $0x33c] sm:$0xf] %vm2307, %v2002
      %2516 = vst.msk [vmem:[%s236 + $0x340] sm:$0xf] %vm2307, %v2003
      %2517 = vst.msk [vmem:[%s236 + $0x344] sm:$0xf] %vm2307, %v2004
      %2518 = vst.msk [vmem:[%s236 + $0x348] sm:$0xf] %vm2307, %v2005
      %2519 = vst.msk [vmem:[%s236 + $0x34c] sm:$0xf] %vm2307, %v2006
      %2520 = vst.msk [vmem:[%s236 + $0x350] sm:$0xf] %vm2307, %v2007
      %2521 = vst.msk [vmem:[%s236 + $0x354] sm:$0xf] %vm2307, %v2008
      %2522 = vst.msk [vmem:[%s236 + $0x358] sm:$0xf] %vm2307, %v2009
      %2523 = vst.msk [vmem:[%s236 + $0x35c] sm:$0xf] %vm2307, %v2010
      %2524 = vst.msk [vmem:[%s236 + $0x360] sm:$0xf] %vm2307, %v2011
      %2525 = vst.msk [vmem:[%s236 + $0x364] sm:$0xf] %vm2307, %v2012
      %2526 = vst.msk [vmem:[%s236 + $0x368] sm:$0xf] %vm2307, %v2013
      %2527 = vst.msk [vmem:[%s236 + $0x36c] sm:$0xf] %vm2307, %v2014
      %2528 = vst.msk [vmem:[%s236 + $0x370] sm:$0xf] %vm2307, %v2015
      %2529 = vst.msk [vmem:[%s236 + $0x374] sm:$0xf] %vm2307, %v2016
      %2530 = vst.msk [vmem:[%s236 + $0x378] sm:$0xf] %vm2307, %v2017
      %2531 = vst.msk [vmem:[%s236 + $0x37c] sm:$0xf] %vm2307, %v2018
      %2532 = vst.msk [vmem:[%s236 + $0x380] sm:$0xf] %vm2307, %v2019
      %2533 = vst.msk [vmem:[%s236 + $0x384] sm:$0xf] %vm2307, %v2020
      %2534 = vst.msk [vmem:[%s236 + $0x388] sm:$0xf] %vm2307, %v2021
      %2535 = vst.msk [vmem:[%s236 + $0x38c] sm:$0xf] %vm2307, %v2022
      %2536 = vst.msk [vmem:[%s236 + $0x390] sm:$0xf] %vm2307, %v2023
      %2537 = vst.msk [vmem:[%s236 + $0x394] sm:$0xf] %vm2307, %v2024
      %2538 = vst.msk [vmem:[%s236 + $0x398] sm:$0xf] %vm2307, %v2025
      %2539 = vst.msk [vmem:[%s236 + $0x39c] sm:$0xf] %vm2307, %v2026
      %2540 = vst.msk [vmem:[%s236 + $0x3a0] sm:$0xf] %vm2307, %v2027
      %2541 = vst.msk [vmem:[%s236 + $0x3a4] sm:$0xf] %vm2307, %v2028
      %2542 = vst.msk [vmem:[%s236 + $0x3a8] sm:$0xf] %vm2307, %v2029
      %2543 = vst.msk [vmem:[%s236 + $0x3ac] sm:$0xf] %vm2307, %v2030
      %2544 = vst.msk [vmem:[%s236 + $0x3b0] sm:$0xf] %vm2307, %v2031
      %2545 = vst.msk [vmem:[%s236 + $0x3b4] sm:$0xf] %vm2307, %v2032
      %2546 = vst.msk [vmem:[%s236 + $0x3b8] sm:$0xf] %vm2307, %v2033
      %2547 = vst.msk [vmem:[%s236 + $0x3bc] sm:$0xf] %vm2307, %v2034
      %2548 = vst.msk [vmem:[%s236 + $0x3c0] sm:$0xf] %vm2307, %v2035
      %2549 = vst.msk [vmem:[%s236 + $0x3c4] sm:$0xf] %vm2307, %v2036
      %2550 = vst.msk [vmem:[%s236 + $0x3c8] sm:$0xf] %vm2307, %v2037
      %2551 = vst.msk [vmem:[%s236 + $0x3cc] sm:$0xf] %vm2307, %v2038
      %2552 = vst.msk [vmem:[%s236 + $0x3d0] sm:$0xf] %vm2307, %v2039
      %2553 = vst.msk [vmem:[%s236 + $0x3d4] sm:$0xf] %vm2307, %v2040
      %2554 = vst.msk [vmem:[%s236 + $0x3d8] sm:$0xf] %vm2307, %v2041
      %2555 = vst.msk [vmem:[%s236 + $0x3dc] sm:$0xf] %vm2307, %v2042
      %2556 = vst.msk [vmem:[%s236 + $0x3e0] sm:$0xf] %vm2307, %v2043
      %2557 = vst.msk [vmem:[%s236 + $0x3e4] sm:$0xf] %vm2307, %v2044
      %2558 = vst.msk [vmem:[%s236 + $0x3e8] sm:$0xf] %vm2307, %v2045
      %2559 = vst.msk [vmem:[%s236 + $0x3ec] sm:$0xf] %vm2307, %v2046
      %2560 = vst.msk [vmem:[%s236 + $0x3f0] sm:$0xf] %vm2307, %v2047
      %2561 = vst.msk [vmem:[%s236 + $0x3f4] sm:$0xf] %vm2307, %v2048
      %2562 = vst.msk [vmem:[%s236 + $0x3f8] sm:$0xf] %vm2307, %v2049
      %2563 = vst.msk [vmem:[%s236 + $0x3fc] sm:$0xf] %vm2307, %v2050
      %s2564 = smul.u32 256, %s19
      %p2565 = scmp.lt.s32.totalorder %s18, 1
      %s2566 = scalar_select %p2565, %s18, 1
      %p2567 = scmp.lt.s32.totalorder %s2564, 511
      %s2568 = scalar_select %p2567, %s2564, 511
      %s2569 = smul.addr %s2566, 512
      %s2570 = sadd.s32 %s2568, %s2569
      %s2571 = smul.addr %s2570, 4
      %s2572 = scalar_lea.vmem %s3, %s2571
      // Predicated region
      $region33: #{doubleconv_forward.5} parent=31 // pred_check
        %p2573 = pneg %p126
      $region34: #{doubleconv_forward.5} parent=31 // pred_check_branch
        %2575 = sbr.rel (%p2573) target = $region36
      $region35: #{doubleconv_forward.5} parent=31 // pred_region
        %s2576 = smul.u32 256, %s19
      $region36: #{doubleconv_forward.5} parent=31 // pred_fallthru
        _
    $region32: #{doubleconv_forward.5} parent=5 // pred_fallthru
      _
    %p2577 = scmp.le.s32.totalorder 2, %s9
    // Predicated region
    $region37: #{doubleconv_forward.5} parent=5 // pred_check
      %p2578 = pneg %p2577
    $region38: #{doubleconv_forward.5} parent=5 // pred_check_branch
      %2580 = sbr.rel (%p2578) target = $region40
    $region39: #{doubleconv_forward.5} parent=5 // pred_region
      %s2581 = ssub.s32 %s9, 2
      // Predicated region
      $region41: #{doubleconv_forward.5} parent=39 // pred_check
        %p2582 = pneg %p132
      $region42: #{doubleconv_forward.5} parent=39 // pred_check_branch
        %2584 = sbr.rel (%p2582) target = $region44
      $region43: #{doubleconv_forward.5} parent=39 // pred_region
        %s2585 = smul.u32 256, %s21
        %p2586 = scmp.lt.s32.totalorder %s20, 1
        %s2587 = scalar_select %p2586, %s20, 1
        %p2588 = scmp.lt.s32.totalorder %s2585, 511
        %s2589 = scalar_select %p2588, %s2585, 511
        %s2590 = smul.addr %s2587, 512
        %s2591 = sadd.s32 %s2589, %s2590
        %s2592 = smul.addr %s2591, 4
        %s2593 = scalar_lea.vmem %s3, %s2592
      $region44: #{doubleconv_forward.5} parent=39 // pred_fallthru
        _
    $region40: #{doubleconv_forward.5} parent=5 // pred_fallthru
      _
  $region6: #{doubleconv_forward.5} parent=0 // loop_footer
    %s13 = sadd.s32 1, %s9
  $region7: #{doubleconv_forward.5} parent=0 // loop_footer_branch
    %8 = sbr.rel target = $region3
  $region8: #{doubleconv_forward.5} parent=0 // loop_exit
    _

// kernel: doubleconv_forward.4
$region0: #{doubleconv_forward.4}
  #allocation0 [shape = 'u32[]', space=smem, size = 0x4, offset = 0x4, fixed_abs, tag = 'smem constant byte address 0x4 - core index']
  #allocation1 [shape = 'u32[144,128]{1,0:T(1,128)}', space=vmem, size = 0x12000, scoped, tag = 'internal scratch']
  #allocation2 [shape = 'f32[256,32]{1,0:T(8,128)}', space=vmem, size = 0x20000, scoped, tag = 'scratch operand']
  #allocation3 [shape = 'bf16[18,18,4]{2,1,0:T(8,128)(2,1)}', space=vmem, size = 0x1b000, scoped, tag = 'scratch operand']
  %s0 = inlined_call_operand.vmem [shape: f32[2,16,16,16,4], index: 0, kind: input, shape index: {}]
  %s1 = inlined_call_operand.vmem [shape: bf16[3,36,32], index: 1, kind: input, shape index: {}]
  %s2 = inlined_call_operand.vmem [shape: f32[1,32], index: 2, kind: input, shape index: {}]
  %s3 = inlined_call_operand.vmem [shape: f32[2,16,16,16,32], index: 3, kind: output, shape index: {0}]
  %s4 = inlined_call_operand.vmem [shape: f32[2,1,32], index: 4, kind: output, shape index: {1}]
  %s5 = inlined_call_operand.vmem [shape: f32[2,1,32], index: 5, kind: output, shape index: {2}]
  %6 = xla_tuple %s3, %s4, %s5
  %s7 = sld [smem:[#allocation0]]
  $region77: #{doubleconv_forward.4} parent=0
    _
  %s9 = ssub.s32 1, %s7
  %s10 = scalar_select 0, %s9, %s7
  loop: start=0, step=1, limit=98
  $region2: #{doubleconv_forward.4} parent=0 // loop_pre_header
    _
  $region3: #{doubleconv_forward.4} parent=0 // loop_header
    %s12 = sphi 0, %s16
    %p13 = scmp.ge.s32.totalorder %s12, 98
    %s19 = sphi 0, %s38
    %s20 = sphi 0, %s34
    %s21 = sphi 0, %s30
    %s22 = sphi 0, %s19
    %s23 = sphi 0, %s20
    %s24 = sphi 0, %s21
    %s25 = sphi 0, %s22
    %s26 = sphi 0, %s23
    %s27 = sphi 0, %s24
    %s55 = sphi 0, %s57
    %s58 = sphi 0, %s55
    %s59 = sphi 0, %s58
    %s75 = sphi 0, %s59
    %s81 = sphi 0, %s83
    %s84 = sphi 0, %s81
    %s85 = sphi 0, %s84
    %s101 = sphi 0, %s85
    %s105 = sphi 0, %s105
    %s107 = sphi 0, %s105
    %s108 = sphi 0, %s107
    %s122 = sphi 0, %s108
    %s130 = sphi 0, %s132
    %s133 = sphi 0, %s130
    %s134 = sphi 0, %s133
    %s150 = sphi 0, %s134
    %s156 = sphi 0, %s158
    %s159 = sphi 0, %s156
    %s160 = sphi 0, %s159
    %s176 = sphi 0, %s160
    %s182 = sphi 0, %s184
    %s185 = sphi 0, %s182
    %s186 = sphi 0, %s185
    %s202 = sphi 0, %s186
  $region4: #{doubleconv_forward.4} parent=0 // loop_header_branch
    %15 = sbr.rel (%p13) target = $region8
  $region5: #{doubleconv_forward.4} parent=0 // loop_body
    %s17 = ssub.s32 %s12, 1
    %s18 = ssub.s32 %s12, 2
    %s28 = sadd.s32 1, %s21
    %p29 = scmp.ge.s32.totalorder %s28, 3
    %s30 = scalar_select %p29, 0, %s28
    %s31 = sadd.s32 1, %s20
    %s32 = scalar_select %p29, %s31, %s20
    %p33 = scmp.ge.s32.totalorder %s32, 16
    %s34 = scalar_select %p33, 0, %s32
    %s35 = sadd.s32 1, %s19
    %s36 = scalar_select %p33, %s35, %s19
    %p37 = scmp.ge.s32.totalorder %s36, 2
    %s38 = scalar_select %p37, 0, %s36
    %s39 = sadd.s32 %s20, %s21
    %s40 = ssub.s32 %s39, 1
    %p41 = scmp.gt.s32.totalorder %s40, 0
    %s42 = scalar_select %p41, %s40, 0
    %p43 = scmp.lt.s32.totalorder %s42, 15
    %s44 = scalar_select %p43, %s42, 15
    %s45 = sadd.s32 %s34, %s30
    %s46 = ssub.s32 %s45, 1
    %p47 = scmp.gt.s32.totalorder %s46, 0
    %s48 = scalar_select %p47, %s46, 0
    %p49 = scmp.lt.s32.totalorder %s48, 15
    %s50 = scalar_select %p49, %s48, 15
    %s51 = ssub.s32 %s19, %s38
    %s52 = ssub.s32 %s44, %s50
    %s53 = sor.u32 %s51, %s52
    %p54 = scmp.eq.s32.totalorder %s53, 0
    %s56 = sadd.s32 %s55, 1
    %s57 = scalar_select %p54, %s55, %s56
    %p60 = pneg %p54
    %p61 = scmp.eq.s32.totalorder %s12, 95
    %p62 = por %p60, %p61
    %p63 = scmp.ne.s32.totalorder %s55, %s58
    %p64 = scmp.eq.s32.totalorder %s12, 0
    %p65 = por %p63, %p64
    %p66 = scmp.ne.s32.totalorder %s55, %s58
    %p67 = scmp.eq.s32.totalorder %s17, 95
    %p68 = por %p66, %p67
    %p69 = scmp.ne.s32.totalorder %s58, %s59
    %p70 = scmp.eq.s32.totalorder %s17, 0
    %p71 = por %p69, %p70
    %p72 = scmp.ne.s32.totalorder %s58, %s59
    %p73 = scmp.eq.s32.totalorder %s18, 95
    %p74 = por %p72, %p73
    %p76 = scmp.ne.s32.totalorder %s59, %s75
    %p77 = scmp.eq.s32.totalorder %s18, 0
    %p78 = por %p76, %p77
    %s79 = ssub.s32 %s21, %s30
    %p80 = scmp.eq.s32.totalorder %s79, 0
    %s82 = sadd.s32 %s81, 1
    %s83 = scalar_select %p80, %s81, %s82
    %p86 = pneg %p80
    %p87 = scmp.eq.s32.totalorder %s12, 95
    %p88 = por %p86, %p87
    %p89 = scmp.ne.s32.totalorder %s81, %s84
    %p90 = scmp.eq.s32.totalorder %s12, 0
    %p91 = por %p89, %p90
    %p92 = scmp.ne.s32.totalorder %s81, %s84
    %p93 = scmp.eq.s32.totalorder %s17, 95
    %p94 = por %p92, %p93
    %p95 = scmp.ne.s32.totalorder %s84, %s85
    %p96 = scmp.eq.s32.totalorder %s17, 0
    %p97 = por %p95, %p96
    %p98 = scmp.ne.s32.totalorder %s84, %s85
    %p99 = scmp.eq.s32.totalorder %s18, 95
    %p100 = por %p98, %p99
    %p102 = scmp.ne.s32.totalorder %s85, %s101
    %p103 = scmp.eq.s32.totalorder %s18, 0
    %p104 = por %p102, %p103
    %s106 = sadd.s32 %s105, 1
    %p109 = scmp.eq.s32.totalorder %s12, 95
    %p110 = scmp.ne.s32.totalorder %s105, %s107
    %p111 = scmp.eq.s32.totalorder %s12, 0
    %p112 = por %p110, %p111
    %p113 = scmp.ne.s32.totalorder %s105, %s107
    %p114 = scmp.eq.s32.totalorder %s17, 95
    %p115 = por %p113, %p114
    %p116 = scmp.ne.s32.totalorder %s107, %s108
    %p117 = scmp.eq.s32.totalorder %s17, 0
    %p118 = por %p116, %p117
    %p119 = scmp.ne.s32.totalorder %s107, %s108
    %p120 = scmp.eq.s32.totalorder %s18, 95
    %p121 = por %p119, %p120
    %p123 = scmp.ne.s32.totalorder %s108, %s122
    %p124 = scmp.eq.s32.totalorder %s18, 0
    %p125 = por %p123, %p124
    %s126 = ssub.s32 %s19, %s38
    %s127 = ssub.s32 %s20, %s34
    %s128 = sor.u32 %s126, %s127
    %p129 = scmp.eq.s32.totalorder %s128, 0
    %s131 = sadd.s32 %s130, 1
    %s132 = scalar_select %p129, %s130, %s131
    %p135 = pneg %p129
    %p136 = scmp.eq.s32.totalorder %s12, 95
    %p137 = por %p135, %p136
    %p138 = scmp.ne.s32.totalorder %s130, %s133
    %p139 = scmp.eq.s32.totalorder %s12, 0
    %p140 = por %p138, %p139
    %p141 = scmp.ne.s32.totalorder %s130, %s133
    %p142 = scmp.eq.s32.totalorder %s17, 95
    %p143 = por %p141, %p142
    %p144 = scmp.ne.s32.totalorder %s133, %s134
    %p145 = scmp.eq.s32.totalorder %s17, 0
    %p146 = por %p144, %p145
    %p147 = scmp.ne.s32.totalorder %s133, %s134
    %p148 = scmp.eq.s32.totalorder %s18, 95
    %p149 = por %p147, %p148
    %p151 = scmp.ne.s32.totalorder %s134, %s150
    %p152 = scmp.eq.s32.totalorder %s18, 0
    %p153 = por %p151, %p152
    %s154 = ssub.s32 %s19, %s38
    %p155 = scmp.eq.s32.totalorder %s154, 0
    %s157 = sadd.s32 %s156, 1
    %s158 = scalar_select %p155, %s156, %s157
    %p161 = pneg %p155
    %p162 = scmp.eq.s32.totalorder %s12, 95
    %p163 = por %p161, %p162
    %p164 = scmp.ne.s32.totalorder %s156, %s159
    %p165 = scmp.eq.s32.totalorder %s12, 0
    %p166 = por %p164, %p165
    %p167 = scmp.ne.s32.totalorder %s156, %s159
    %p168 = scmp.eq.s32.totalorder %s17, 95
    %p169 = por %p167, %p168
    %p170 = scmp.ne.s32.totalorder %s159, %s160
    %p171 = scmp.eq.s32.totalorder %s17, 0
    %p172 = por %p170, %p171
    %p173 = scmp.ne.s32.totalorder %s159, %s160
    %p174 = scmp.eq.s32.totalorder %s18, 95
    %p175 = por %p173, %p174
    %p177 = scmp.ne.s32.totalorder %s160, %s176
    %p178 = scmp.eq.s32.totalorder %s18, 0
    %p179 = por %p177, %p178
    %s180 = ssub.s32 %s19, %s38
    %p181 = scmp.eq.s32.totalorder %s180, 0
    %s183 = sadd.s32 %s182, 1
    %s184 = scalar_select %p181, %s182, %s183
    %p187 = pneg %p181
    %p188 = scmp.eq.s32.totalorder %s12, 95
    %p189 = por %p187, %p188
    %p190 = scmp.ne.s32.totalorder %s182, %s185
    %p191 = scmp.eq.s32.totalorder %s12, 0
    %p192 = por %p190, %p191
    %p193 = scmp.ne.s32.totalorder %s182, %s185
    %p194 = scmp.eq.s32.totalorder %s17, 95
    %p195 = por %p193, %p194
    %p196 = scmp.ne.s32.totalorder %s185, %s186
    %p197 = scmp.eq.s32.totalorder %s17, 0
    %p198 = por %p196, %p197
    %p199 = scmp.ne.s32.totalorder %s185, %s186
    %p200 = scmp.eq.s32.totalorder %s18, 95
    %p201 = por %p199, %p200
    %p203 = scmp.ne.s32.totalorder %s186, %s202
    %p204 = scmp.eq.s32.totalorder %s18, 0
    %p205 = por %p203, %p204
    %p206 = scmp.le.s32.totalorder 1, %s12
    %p207 = scmp.lt.s32.totalorder %s12, 97
    %p208 = pnand %p206, %p207
    %p209 = pneg %p208
    // Predicated region
    $region9: #{doubleconv_forward.4} parent=5 // pred_check
      _
    $region10: #{doubleconv_forward.4} parent=5 // pred_check_branch
      %211 = sbr.rel (%p208) target = $region12
    $region11: #{doubleconv_forward.4} parent=5 // pred_region
      %s212 = ssub.s32 %s12, 1
      // Predicated region
      $region13: #{doubleconv_forward.4} parent=11 // pred_check
        %p213 = pneg %p118
      $region14: #{doubleconv_forward.4} parent=11 // pred_check_branch
        %215 = sbr.rel (%p213) target = $region16
      $region15: #{doubleconv_forward.4} parent=11 // pred_region
        _
      $region16: #{doubleconv_forward.4} parent=11 // pred_fallthru
        _
    $region12: #{doubleconv_forward.4} parent=5 // pred_fallthru
      _
    %p216 = scmp.lt.s32.totalorder %s12, 96
    // Predicated region
    $region17: #{doubleconv_forward.4} parent=5 // pred_check
      %p217 = pneg %p216
    $region18: #{doubleconv_forward.4} parent=5 // pred_check_branch
      %219 = sbr.rel (%p217) target = $region20
    $region19: #{doubleconv_forward.4} parent=5 // pred_region
      // Predicated region
      $region21: #{doubleconv_forward.4} parent=19 // pred_check
        %p220 = pneg %p65
      $region22: #{doubleconv_forward.4} parent=19 // pred_check_branch
        %222 = sbr.rel (%p220) target = $region24
      $region23: #{doubleconv_forward.4} parent=19 // pred_region
        %s223 = sadd.s32 %s20, %s21
        %s224 = ssub.s32 %s223, 1
        %p225 = scmp.gt.s32.totalorder %s224, 0
        %s226 = scalar_select %p225, %s224, 0
        %p227 = scmp.lt.s32.totalorder %s226, 15
        %s228 = scalar_select %p227, %s226, 15
        %p229 = scmp.lt.s32.totalorder %s19, 1
        %s230 = scalar_select %p229, %s19, 1
        %p231 = scmp.lt.s32.totalorder %s228, 15
        %s232 = scalar_select %p231, %s228, 15
        %s233 = smul.addr %s232, 32
        %s234 = smul.addr %s230, 512
        %s235 = sadd.s32 %s233, %s234
        %s236 = smul.addr %s235, 8
        %s237 = scalar_lea.vmem %s0, %s236
        %s238 = sadd.s32 %s20, %s21
        %s239 = ssub.s32 %s238, 1
        %p240 = scmp.gt.s32.totalorder %s239, 0
        %s241 = scalar_select %p240, %s239, 0
        %p242 = scmp.lt.s32.totalorder %s241, 15
        %s243 = scalar_select %p242, %s241, 15
      $region24: #{doubleconv_forward.4} parent=19 // pred_fallthru
        _
      // Predicated region
      $region25: #{doubleconv_forward.4} parent=19 // pred_check
        %p244 = pneg %p91
      $region26: #{doubleconv_forward.4} parent=19 // pred_check_branch
        %246 = sbr.rel (%p244) target = $region28
      $region27: #{doubleconv_forward.4} parent=19 // pred_region
        %p247 = scmp.lt.s32.totalorder %s21, 2
        %s248 = scalar_select %p247, %s21, 2
        %s249 = smul.addr %s248, 5
        %s250 = smul.addr %s249, 4
        %s251 = scalar_lea.vmem %s1, %s250
      $region28: #{doubleconv_forward.4} parent=19 // pred_fallthru
        _
    $region20: #{doubleconv_forward.4} parent=5 // pred_fallthru
      _
    %p252 = scmp.le.s32.totalorder 1, %s12
    %p253 = scmp.lt.s32.totalorder %s12, 97
    %p254 = pnand %p252, %p253
    %p255 = pneg %p254
    // Predicated region
    $region29: #{doubleconv_forward.4} parent=5 // pred_check
      _
    $region30: #{doubleconv_forward.4} parent=5 // pred_check_branch
      %257 = sbr.rel (%p254) target = $region32
    $region31: #{doubleconv_forward.4} parent=5 // pred_region
      %s258 = ssub.s32 %s12, 1
      %s259 = sadd.s32 %s23, %s24
      %s260 = ssub.s32 %s259, 1
      %p261 = scmp.gt.s32.totalorder %s260, 0
      %s262 = scalar_select %p261, %s260, 0
      %p263 = scmp.lt.s32.totalorder %s262, 15
      %s264 = scalar_select %p263, %s262, 15
      %p265 = scmp.lt.s32.totalorder %s22, 1
      %s266 = scalar_select %p265, %s22, 1
      %p267 = scmp.lt.s32.totalorder %s264, 15
      %s268 = scalar_select %p267, %s264, 15
      %s269 = smul.addr %s268, 32
      %s270 = smul.addr %s266, 512
      %s271 = sadd.s32 %s269, %s270
      %s272 = smul.addr %s271, 8
      %s273 = scalar_lea.vmem %s0, %s272
      %p274 = pneg %p71
      %p275 = pneg %p68
      %p276 = scmp.lt.s32.totalorder %s24, 2
      %s277 = scalar_select %p276, %s24, 2
      %s278 = smul.addr %s277, 5
      %s279 = smul.addr %s278, 4
      %s280 = scalar_lea.vmem %s1, %s279
      %p281 = pneg %p97
      %p282 = pneg %p94
      %p283 = pneg %p118
      %p284 = pneg %p115
      %p285 = pneg %p146
      %p286 = pneg %p143
      %p287 = scmp.lt.s32.totalorder %s22, 1
      %s288 = scalar_select %p287, %s22, 1
      %p289 = scmp.lt.s32.totalorder %s23, 15
      %s290 = scalar_select %p289, %s23, 15
      %s291 = smul.addr %s290, 32
      %s292 = smul.addr %s288, 512
      %s293 = sadd.s32 %s291, %s292
      %s294 = smul.addr %s293, 8
      %s295 = scalar_lea.vmem %s3, %s294
      %p296 = pneg %p172
      %p297 = pneg %p169
      %p298 = scmp.lt.s32.totalorder %s22, 1
      %s299 = scalar_select %p298, %s22, 1
      %s300 = scalar_lea.vmem %s4, %s299
      %p301 = pneg %p198
      %p302 = pneg %p195
      %p303 = scmp.lt.s32.totalorder %s22, 1
      %s304 = scalar_select %p303, %s22, 1
      %s305 = scalar_lea.vmem %s5, %s304
      %s306 = sadd.s32 %s23, %s24
      %s307 = ssub.s32 %s306, 1
      %p308 = scmp.gt.s32.totalorder %s307, 0
      %s309 = scalar_select %p308, %s307, 0
      %p310 = scmp.lt.s32.totalorder %s309, 15
      %s311 = scalar_select %p310, %s309, 15
      %p312 = scmp.lt.s32.totalorder %s22, 1
      %s313 = scalar_select %p312, %s22, 1
      %p314 = scmp.lt.s32.totalorder %s311, 15
      %s315 = scalar_select %p314, %s311, 15
      %s316 = smul.addr %s315, 32
      %s317 = smul.addr %s313, 512
      %s318 = sadd.s32 %s316, %s317
      %s319 = smul.addr %s318, 8
      %s320 = scalar_lea.vmem %s0, %s319
      %s321 = sadd.s32 %s23, %s24
      %s322 = ssub.s32 %s321, 1
      %p323 = scmp.gt.s32.totalorder %s322, 0
      %s324 = scalar_select %p323, %s322, 0
      %p325 = scmp.lt.s32.totalorder %s324, 15
      %s326 = scalar_select %p325, %s324, 15
      %p327 = scmp.lt.s32.totalorder %s24, 2
      %s328 = scalar_select %p327, %s24, 2
      %s329 = smul.addr %s328, 5
      %s330 = smul.addr %s329, 4
      %s331 = scalar_lea.vmem %s1, %s330
      %p332 = scmp.lt.s32.totalorder %s22, 1
      %s333 = scalar_select %p332, %s22, 1
      %p334 = scmp.lt.s32.totalorder %s23, 15
      %s335 = scalar_select %p334, %s23, 15
      %s336 = smul.addr %s335, 32
      %s337 = smul.addr %s333, 512
      %s338 = sadd.s32 %s336, %s337
      %s339 = smul.addr %s338, 8
      %s340 = scalar_lea.vmem %s3, %s339
      %p341 = scmp.lt.s32.totalorder %s22, 1
      %s342 = scalar_select %p341, %s22, 1
      %s343 = scalar_lea.vmem %s4, %s342
      %p344 = scmp.lt.s32.totalorder %s22, 1
      %s345 = scalar_select %p344, %s22, 1
      %s346 = scalar_lea.vmem %s5, %s345
      %p348 = scmp.eq.s32.totalorder %s23, 0
      %p349 = scmp.eq.s32.totalorder %s24, 0
      %p350 = pnand %p348, %p349
      %p351 = pneg %p350
      // Predicated region
      $region33: #{doubleconv_forward.4} parent=31 // pred_check
        _
      $region34: #{doubleconv_forward.4} parent=31 // pred_check_branch
        %353 = sbr.rel (%p350) target = $region36
      $region35: #{doubleconv_forward.4} parent=31 // pred_region
        %vm354 = vcmask 27648
        %355 = vst.msk [vmem:[#allocation3] sm:$0xf] %vm354, 0
        %356 = vst.msk [vmem:[#allocation3 + $0x4] sm:$0xf] %vm354, 0
        %vm357 = vcmask 24576
        %358 = vst.msk [vmem:[#allocation3 + $0x8] sm:$0x1] %vm357, 0
        %359 = vst.msk [vmem:[#allocation3 + $0xc] sm:$0xf] %vm354, 0
        %360 = vst.msk [vmem:[#allocation3 + $0x10] sm:$0xf] %vm354, 0
        %361 = vst.msk [vmem:[#allocation3 + $0x14] sm:$0x1] %vm357, 0
        %362 = vst.msk [vmem:[#allocation3 + $0x18] sm:$0xf] %vm354, 0
        %363 = vst.msk [vmem:[#allocation3 + $0x1c] sm:$0xf] %vm354, 0
        %364 = vst.msk [vmem:[#allocation3 + $0x20] sm:$0x1] %vm357, 0
        %365 = vst.msk [vmem:[#allocation3 + $0x24] sm:$0xf] %vm354, 0
        %366 = vst.msk [vmem:[#allocation3 + $0x28] sm:$0xf] %vm354, 0
        %367 = vst.msk [vmem:[#allocation3 + $0x2c] sm:$0x1] %vm357, 0
        %368 = vst.msk [vmem:[#allocation3 + $0x30] sm:$0xf] %vm354, 0
        %369 = vst.msk [vmem:[#allocation3 + $0x34] sm:$0xf] %vm354, 0
        %370 = vst.msk [vmem:[#allocation3 + $0x38] sm:$0x1] %vm357, 0
        %371 = vst.msk [vmem:[#allocation3 + $0x3c] sm:$0xf] %vm354, 0
        %372 = vst.msk [vmem:[#allocation3 + $0x40] sm:$0xf] %vm354, 0
        %373 = vst.msk [vmem:[#allocation3 + $0x44] sm:$0x1] %vm357, 0
        %374 = vst.msk [vmem:[#allocation3 + $0x48] sm:$0xf] %vm354, 0
        %375 = vst.msk [vmem:[#allocation3 + $0x4c] sm:$0xf] %vm354, 0
        %376 = vst.msk [vmem:[#allocation3 + $0x50] sm:$0x1] %vm357, 0
        %377 = vst.msk [vmem:[#allocation3 + $0x54] sm:$0xf] %vm354, 0
        %378 = vst.msk [vmem:[#allocation3 + $0x58] sm:$0xf] %vm354, 0
        %379 = vst.msk [vmem:[#allocation3 + $0x5c] sm:$0x1] %vm357, 0
        %380 = vst.msk [vmem:[#allocation3 + $0x60] sm:$0xf] %vm354, 0
        %381 = vst.msk [vmem:[#allocation3 + $0x64] sm:$0xf] %vm354, 0
        %382 = vst.msk [vmem:[#allocation3 + $0x68] sm:$0x1] %vm357, 0
        %383 = vst.msk [vmem:[#allocation3 + $0x6c] sm:$0xf] %vm354, 0
        %384 = vst.msk [vmem:[#allocation3 + $0x70] sm:$0xf] %vm354, 0
        %385 = vst.msk [vmem:[#allocation3 + $0x74] sm:$0x1] %vm357, 0
        %386 = vst.msk [vmem:[#allocation3 + $0x78] sm:$0xf] %vm354, 0
        %387 = vst.msk [vmem:[#allocation3 + $0x7c] sm:$0xf] %vm354, 0
        %388 = vst.msk [vmem:[#allocation3 + $0x80] sm:$0x1] %vm357, 0
        %389 = vst.msk [vmem:[#allocation3 + $0x84] sm:$0xf] %vm354, 0
        %390 = vst.msk [vmem:[#allocation3 + $0x88] sm:$0xf] %vm354, 0
        %391 = vst.msk [vmem:[#allocation3 + $0x8c] sm:$0x1] %vm357, 0
        %392 = vst.msk [vmem:[#allocation3 + $0x90] sm:$0xf] %vm354, 0
        %393 = vst.msk [vmem:[#allocation3 + $0x94] sm:$0xf] %vm354, 0
        %394 = vst.msk [vmem:[#allocation3 + $0x98] sm:$0x1] %vm357, 0
        %395 = vst.msk [vmem:[#allocation3 + $0x9c] sm:$0xf] %vm354, 0
        %396 = vst.msk [vmem:[#allocation3 + $0xa0] sm:$0xf] %vm354, 0
        %397 = vst.msk [vmem:[#allocation3 + $0xa4] sm:$0x1] %vm357, 0
        %398 = vst.msk [vmem:[#allocation3 + $0xa8] sm:$0xf] %vm354, 0
        %399 = vst.msk [vmem:[#allocation3 + $0xac] sm:$0xf] %vm354, 0
        %400 = vst.msk [vmem:[#allocation3 + $0xb0] sm:$0x1] %vm357, 0
        %401 = vst.msk [vmem:[#allocation3 + $0xb4] sm:$0xf] %vm354, 0
        %402 = vst.msk [vmem:[#allocation3 + $0xb8] sm:$0xf] %vm354, 0
        %403 = vst.msk [vmem:[#allocation3 + $0xbc] sm:$0x1] %vm357, 0
        %404 = vst.msk [vmem:[#allocation3 + $0xc0] sm:$0xf] %vm354, 0
        %405 = vst.msk [vmem:[#allocation3 + $0xc4] sm:$0xf] %vm354, 0
        %406 = vst.msk [vmem:[#allocation3 + $0xc8] sm:$0x1] %vm357, 0
        %407 = vst.msk [vmem:[#allocation3 + $0xcc] sm:$0xf] %vm354, 0
        %408 = vst.msk [vmem:[#allocation3 + $0xd0] sm:$0xf] %vm354, 0
        %409 = vst.msk [vmem:[#allocation3 + $0xd4] sm:$0x1] %vm357, 0
        %vm410 = vcmask 253952
        %411 = vst.msk [vmem:[%s343] sm:$0x1] %vm410, 0.0
        %412 = vst.msk [vmem:[%s346] sm:$0x1] %vm410, 0.0
      $region36: #{doubleconv_forward.4} parent=31 // pred_fallthru
        _
      // Predicated region
      $region37: #{doubleconv_forward.4} parent=31 // pred_check
        %p413 = pneg %p349
      $region38: #{doubleconv_forward.4} parent=31 // pred_check_branch
        %415 = sbr.rel (%p413) target = $region40
      $region39: #{doubleconv_forward.4} parent=31 // pred_region
        %vm416 = vcmask 261120
        %417 = vst.msk [vmem:[#allocation2] sm:$0xff] %vm416, 0.0
        %418 = vst.msk [vmem:[#allocation2 + $0x8] sm:$0xff] %vm416, 0.0
        %419 = vst.msk [vmem:[#allocation2 + $0x10] sm:$0xff] %vm416, 0.0
        %420 = vst.msk [vmem:[#allocation2 + $0x18] sm:$0xff] %vm416, 0.0
        %421 = vst.msk [vmem:[#allocation2 + $0x20] sm:$0xff] %vm416, 0.0
        %422 = vst.msk [vmem:[#allocation2 + $0x28] sm:$0xff] %vm416, 0.0
        %423 = vst.msk [vmem:[#allocation2 + $0x30] sm:$0xff] %vm416, 0.0
        %424 = vst.msk [vmem:[#allocation2 + $0x38] sm:$0xff] %vm416, 0.0
        %425 = vst.msk [vmem:[#allocation2 + $0x40] sm:$0xff] %vm416, 0.0
        %426 = vst.msk [vmem:[#allocation2 + $0x48] sm:$0xff] %vm416, 0.0
        %427 = vst.msk [vmem:[#allocation2 + $0x50] sm:$0xff] %vm416, 0.0
        %428 = vst.msk [vmem:[#allocation2 + $0x58] sm:$0xff] %vm416, 0.0
        %429 = vst.msk [vmem:[#allocation2 + $0x60] sm:$0xff] %vm416, 0.0
        %430 = vst.msk [vmem:[#allocation2 + $0x68] sm:$0xff] %vm416, 0.0
        %431 = vst.msk [vmem:[#allocation2 + $0x70] sm:$0xff] %vm416, 0.0
        %432 = vst.msk [vmem:[#allocation2 + $0x78] sm:$0xff] %vm416, 0.0
        %433 = vst.msk [vmem:[#allocation2 + $0x80] sm:$0xff] %vm416, 0.0
        %434 = vst.msk [vmem:[#allocation2 + $0x88] sm:$0xff] %vm416, 0.0
        %435 = vst.msk [vmem:[#allocation2 + $0x90] sm:$0xff] %vm416, 0.0
        %436 = vst.msk [vmem:[#allocation2 + $0x98] sm:$0xff] %vm416, 0.0
        %437 = vst.msk [vmem:[#allocation2 + $0xa0] sm:$0xff] %vm416, 0.0
        %438 = vst.msk [vmem:[#allocation2 + $0xa8] sm:$0xff] %vm416, 0.0
        %439 = vst.msk [vmem:[#allocation2 + $0xb0] sm:$0xff] %vm416, 0.0
        %440 = vst.msk [vmem:[#allocation2 + $0xb8] sm:$0xff] %vm416, 0.0
        %441 = vst.msk [vmem:[#allocation2 + $0xc0] sm:$0xff] %vm416, 0.0
        %442 = vst.msk [vmem:[#allocation2 + $0xc8] sm:$0xff] %vm416, 0.0
        %443 = vst.msk [vmem:[#allocation2 + $0xd0] sm:$0xff] %vm416, 0.0
        %444 = vst.msk [vmem:[#allocation2 + $0xd8] sm:$0xff] %vm416, 0.0
        %445 = vst.msk [vmem:[#allocation2 + $0xe0] sm:$0xff] %vm416, 0.0
        %446 = vst.msk [vmem:[#allocation2 + $0xe8] sm:$0xff] %vm416, 0.0
        %447 = vst.msk [vmem:[#allocation2 + $0xf0] sm:$0xff] %vm416, 0.0
        %448 = vst.msk [vmem:[#allocation2 + $0xf8] sm:$0xff] %vm416, 0.0
      $region40: #{doubleconv_forward.4} parent=31 // pred_fallthru
        _
      %s449 = sadd.s32 %s23, %s24
      %s450 = ssub.s32 %s449, 1
      %p451 = scmp.ge.s32.totalorder %s450, 0
      %p452 = scmp.lt.s32.totalorder %s450, 16
      %p453 = pnand %p451, %p452
      %p454 = pneg %p453
      // Predicated region
      $region41: #{doubleconv_forward.4} parent=31 // pred_check
        _
      $region42: #{doubleconv_forward.4} parent=31 // pred_check_branch
        %456 = sbr.rel (%p453) target = $region44
      $region43: #{doubleconv_forward.4} parent=31 // pred_region
        %v457 = vld [vmem:[%s320] sm:$0xff]
        %v458 = vld [vmem:[%s320 + $0x8] sm:$0xff]
        %v459 = vld [vmem:[%s320 + $0x10] sm:$0xff]
        %v460 = vld [vmem:[%s320 + $0x18] sm:$0xff]
        %v461 = vld [vmem:[%s320 + $0x20] sm:$0xff]
        %v462 = vld [vmem:[%s320 + $0x28] sm:$0xff]
        %v463 = vld [vmem:[%s320 + $0x30] sm:$0xff]
        %v464 = vld [vmem:[%s320 + $0x38] sm:$0xff]
        %v465 = vld [vmem:[%s320 + $0x40] sm:$0xff]
        %v466 = vld [vmem:[%s320 + $0x48] sm:$0xff]
        %v467 = vld [vmem:[%s320 + $0x50] sm:$0xff]
        %v468 = vld [vmem:[%s320 + $0x58] sm:$0xff]
        %v469 = vld [vmem:[%s320 + $0x60] sm:$0xff]
        %v470 = vld [vmem:[%s320 + $0x68] sm:$0xff]
        %v471 = vld [vmem:[%s320 + $0x70] sm:$0xff]
        %v472 = vld [vmem:[%s320 + $0x78] sm:$0xff]
        %v473 = vld [vmem:[%s320 + $0x80] sm:$0xff]
        %v474 = vld [vmem:[%s320 + $0x88] sm:$0xff]
        %v475 = vld [vmem:[%s320 + $0x90] sm:$0xff]
        %v476 = vld [vmem:[%s320 + $0x98] sm:$0xff]
        %v477 = vld [vmem:[%s320 + $0xa0] sm:$0xff]
        %v478 = vld [vmem:[%s320 + $0xa8] sm:$0xff]
        %v479 = vld [vmem:[%s320 + $0xb0] sm:$0xff]
        %v480 = vld [vmem:[%s320 + $0xb8] sm:$0xff]
        %v481 = vld [vmem:[%s320 + $0xc0] sm:$0xff]
        %v482 = vld [vmem:[%s320 + $0xc8] sm:$0xff]
        %v483 = vld [vmem:[%s320 + $0xd0] sm:$0xff]
        %v484 = vld [vmem:[%s320 + $0xd8] sm:$0xff]
        %v485 = vld [vmem:[%s320 + $0xe0] sm:$0xff]
        %v486 = vld [vmem:[%s320 + $0xe8] sm:$0xff]
        %v487 = vld [vmem:[%s320 + $0xf0] sm:$0xff]
        %v488 = vld [vmem:[%s320 + $0xf8] sm:$0xff]
        %v489 = vpack.c.bf16 %v458, %v457
        %v490 = vpack.c.bf16 %v460, %v459
        %v491 = vpack.c.bf16 %v462, %v461
        %v492 = vpack.c.bf16 %v464, %v463
        %v493 = vpack.c.bf16 %v466, %v465
        %v494 = vpack.c.bf16 %v468, %v467
        %v495 = vpack.c.bf16 %v470, %v469
        %v496 = vpack.c.bf16 %v472, %v471
        %v497 = vpack.c.bf16 %v474, %v473
        %v498 = vpack.c.bf16 %v476, %v475
        %v499 = vpack.c.bf16 %v478, %v477
        %v500 = vpack.c.bf16 %v480, %v479
        %v501 = vpack.c.bf16 %v482, %v481
        %v502 = vpack.c.bf16 %v484, %v483
        %v503 = vpack.c.bf16 %v486, %v485
        %v504 = vpack.c.bf16 %v488, %v487
        %v521 = vunpack.c.l.b16 %v489
        %v522 = vunpack.c.h.b16 %v489
        %v523 = vunpack.c.l.b16 %v490
        %v524 = vunpack.c.h.b16 %v490
        %v525 = vunpack.c.l.b16 %v491
        %v526 = vunpack.c.h.b16 %v491
        %v527 = vunpack.c.l.b16 %v492
        %v528 = vunpack.c.h.b16 %v492
        %v529 = vunpack.c.l.b16 %v493
        %v530 = vunpack.c.h.b16 %v493
        %v531 = vunpack.c.l.b16 %v494
        %v532 = vunpack.c.h.b16 %v494
        %v533 = vunpack.c.l.b16 %v495
        %v534 = vunpack.c.h.b16 %v495
        %v535 = vunpack.c.l.b16 %v496
        %v536 = vunpack.c.h.b16 %v496
        %v537 = vunpack.c.l.b16 %v497
        %v538 = vunpack.c.h.b16 %v497
        %v539 = vunpack.c.l.b16 %v498
        %v540 = vunpack.c.h.b16 %v498
        %v541 = vunpack.c.l.b16 %v499
        %v542 = vunpack.c.h.b16 %v499
        %v543 = vunpack.c.l.b16 %v500
        %v544 = vunpack.c.h.b16 %v500
        %v545 = vunpack.c.l.b16 %v501
        %v546 = vunpack.c.h.b16 %v501
        %v547 = vunpack.c.l.b16 %v502
        %v548 = vunpack.c.h.b16 %v502
        %v549 = vunpack.c.l.b16 %v503
        %v550 = vunpack.c.h.b16 %v503
        %v551 = vunpack.c.l.b16 %v504
        %v552 = vunpack.c.h.b16 %v504
        %v553 = vpack.c.b16 %v521, %v521
        %v554 = vpack.c.b16 %v522, %v522
        %v555 = vpack.c.b16 %v523, %v523
        %v556 = vpack.c.b16 %v524, %v524
        %v557 = vpack.c.b16 %v525, %v525
        %v558 = vpack.c.b16 %v526, %v526
        %v559 = vpack.c.b16 %v527, %v527
        %v560 = vpack.c.b16 %v528, %v528
        %v561 = vpack.c.b16 %v529, %v529
        %v562 = vpack.c.b16 %v530, %v530
        %v563 = vpack.c.b16 %v531, %v531
        %v564 = vpack.c.b16 %v532, %v532
        %v565 = vpack.c.b16 %v533, %v533
        %v566 = vpack.c.b16 %v534, %v534
        %v567 = vpack.c.b16 %v535, %v535
        %v568 = vpack.c.b16 %v536, %v536
        %v569 = vpack.c.b16 %v537, %v537
        %v570 = vpack.c.b16 %v538, %v538
        %v571 = vpack.c.b16 %v539, %v539
        %v572 = vpack.c.b16 %v540, %v540
        %v573 = vpack.c.b16 %v541, %v541
        %v574 = vpack.c.b16 %v542, %v542
        %v575 = vpack.c.b16 %v543, %v543
        %v576 = vpack.c.b16 %v544, %v544
        %v577 = vpack.c.b16 %v545, %v545
        %v578 = vpack.c.b16 %v546, %v546
        %v579 = vpack.c.b16 %v547, %v547
        %v580 = vpack.c.b16 %v548, %v548
        %v581 = vpack.c.b16 %v549, %v549
        %v582 = vpack.c.b16 %v550, %v550
        %v583 = vpack.c.b16 %v551, %v551
        %v584 = vpack.c.b16 %v552, %v552
        %vm585 = vsmask.f32 256
        %vm586 = vsmask.f32 4368
        %vm587 = vmor %vm585, %vm586
        %v589 = vshrl.u32 %v553, 16
        %v591 = vrot.slane %v589, 7
        %v592 = vshll.u32 %v553, 16
        %v594 = vor.u32 %v591, %v592
        %v595 = vrot.slane %v591, 4
        %v597 = vshrl.u32 %v554, 16
        %v599 = vrot.slane %v597, 7
        %v600 = vshll.u32 %v554, 16
        %v602 = vor.u32 %v599, %v600
        %v603 = vsel %vm587, %v595, %v602
        %v604 = vrot.slane %v599, 4
        %v606 = vshrl.u32 %v555, 16
        %v608 = vrot.slane %v606, 7
        %v609 = vshll.u32 %v555, 16
        %v611 = vor.u32 %v608, %v609
        %v612 = vrot.slane %v608, 4
        %v614 = vshrl.u32 %v556, 16
        %v616 = vrot.slane %v614, 7
        %v617 = vshll.u32 %v556, 16
        %v619 = vor.u32 %v616, %v617
        %v620 = vsel %vm587, %v612, %v619
        %v621 = vrot.slane %v616, 4
        %v623 = vshrl.u32 %v557, 16
        %v625 = vrot.slane %v623, 7
        %v626 = vshll.u32 %v557, 16
        %v628 = vor.u32 %v625, %v626
        %v629 = vrot.slane %v625, 4
        %v631 = vshrl.u32 %v558, 16
        %v633 = vrot.slane %v631, 7
        %v634 = vshll.u32 %v558, 16
        %v636 = vor.u32 %v633, %v634
        %v637 = vsel %vm587, %v629, %v636
        %v638 = vrot.slane %v633, 4
        %v640 = vshrl.u32 %v559, 16
        %v642 = vrot.slane %v640, 7
        %v643 = vshll.u32 %v559, 16
        %v645 = vor.u32 %v642, %v643
        %v646 = vrot.slane %v642, 4
        %v648 = vshrl.u32 %v560, 16
        %v650 = vrot.slane %v648, 7
        %v651 = vshll.u32 %v560, 16
        %v653 = vor.u32 %v650, %v651
        %v654 = vsel %vm587, %v646, %v653
        %v655 = vrot.slane %v650, 4
        %v657 = vshrl.u32 %v561, 16
        %v659 = vrot.slane %v657, 7
        %v660 = vshll.u32 %v561, 16
        %v662 = vor.u32 %v659, %v660
        %v663 = vrot.slane %v659, 4
        %v665 = vshrl.u32 %v562, 16
        %v667 = vrot.slane %v665, 7
        %v668 = vshll.u32 %v562, 16
        %v670 = vor.u32 %v667, %v668
        %v671 = vsel %vm587, %v663, %v670
        %v672 = vrot.slane %v667, 4
        %v674 = vshrl.u32 %v563, 16
        %v676 = vrot.slane %v674, 7
        %v677 = vshll.u32 %v563, 16
        %v679 = vor.u32 %v676, %v677
        %v680 = vrot.slane %v676, 4
        %v682 = vshrl.u32 %v564, 16
        %v684 = vrot.slane %v682, 7
        %v685 = vshll.u32 %v564, 16
        %v687 = vor.u32 %v684, %v685
        %v688 = vsel %vm587, %v680, %v687
        %v689 = vrot.slane %v684, 4
        %v691 = vshrl.u32 %v565, 16
        %v693 = vrot.slane %v691, 7
        %v694 = vshll.u32 %v565, 16
        %v696 = vor.u32 %v693, %v694
        %v697 = vrot.slane %v693, 4
        %v699 = vshrl.u32 %v566, 16
        %v701 = vrot.slane %v699, 7
        %v702 = vshll.u32 %v566, 16
        %v704 = vor.u32 %v701, %v702
        %v705 = vsel %vm587, %v697, %v704
        %v706 = vrot.slane %v701, 4
        %v708 = vshrl.u32 %v567, 16
        %v710 = vrot.slane %v708, 7
        %v711 = vshll.u32 %v567, 16
        %v713 = vor.u32 %v710, %v711
        %v714 = vrot.slane %v710, 4
        %v716 = vshrl.u32 %v568, 16
        %v718 = vrot.slane %v716, 7
        %v719 = vshll.u32 %v568, 16
        %v721 = vor.u32 %v718, %v719
        %v722 = vsel %vm587, %v714, %v721
        %v723 = vrot.slane %v718, 4
        %v725 = vshrl.u32 %v569, 16
        %v727 = vrot.slane %v725, 7
        %v728 = vshll.u32 %v569, 16
        %v730 = vor.u32 %v727, %v728
        %v731 = vrot.slane %v727, 4
        %v733 = vshrl.u32 %v570, 16
        %v735 = vrot.slane %v733, 7
        %v736 = vshll.u32 %v570, 16
        %v738 = vor.u32 %v735, %v736
        %v739 = vsel %vm587, %v731, %v738
        %v740 = vrot.slane %v735, 4
        %v742 = vshrl.u32 %v571, 16
        %v744 = vrot.slane %v742, 7
        %v745 = vshll.u32 %v571, 16
        %v747 = vor.u32 %v744, %v745
        %v748 = vrot.slane %v744, 4
        %v750 = vshrl.u32 %v572, 16
        %v752 = vrot.slane %v750, 7
        %v753 = vshll.u32 %v572, 16
        %v755 = vor.u32 %v752, %v753
        %v756 = vsel %vm587, %v748, %v755
        %v757 = vrot.slane %v752, 4
        %v759 = vshrl.u32 %v573, 16
        %v761 = vrot.slane %v759, 7
        %v762 = vshll.u32 %v573, 16
        %v764 = vor.u32 %v761, %v762
        %v765 = vrot.slane %v761, 4
        %v767 = vshrl.u32 %v574, 16
        %v769 = vrot.slane %v767, 7
        %v770 = vshll.u32 %v574, 16
        %v772 = vor.u32 %v769, %v770
        %v773 = vsel %vm587, %v765, %v772
        %v774 = vrot.slane %v769, 4
        %v776 = vshrl.u32 %v575, 16
        %v778 = vrot.slane %v776, 7
        %v779 = vshll.u32 %v575, 16
        %v781 = vor.u32 %v778, %v779
        %v782 = vrot.slane %v778, 4
        %v784 = vshrl.u32 %v576, 16
        %v786 = vrot.slane %v784, 7
        %v787 = vshll.u32 %v576, 16
        %v789 = vor.u32 %v786, %v787
        %v790 = vsel %vm587, %v782, %v789
        %v791 = vrot.slane %v786, 4
        %v793 = vshrl.u32 %v577, 16
        %v795 = vrot.slane %v793, 7
        %v796 = vshll.u32 %v577, 16
        %v798 = vor.u32 %v795, %v796
        %v799 = vrot.slane %v795, 4
        %v801 = vshrl.u32 %v578, 16
        %v803 = vrot.slane %v801, 7
        %v804 = vshll.u32 %v578, 16
        %v806 = vor.u32 %v803, %v804
        %v807 = vsel %vm587, %v799, %v806
        %v808 = vrot.slane %v803, 4
        %v810 = vshrl.u32 %v579, 16
        %v812 = vrot.slane %v810, 7
        %v813 = vshll.u32 %v579, 16
        %v815 = vor.u32 %v812, %v813
        %v816 = vrot.slane %v812, 4
        %v818 = vshrl.u32 %v580, 16
        %v820 = vrot.slane %v818, 7
        %v821 = vshll.u32 %v580, 16
        %v823 = vor.u32 %v820, %v821
        %v824 = vsel %vm587, %v816, %v823
        %v825 = vrot.slane %v820, 4
        %v827 = vshrl.u32 %v581, 16
        %v829 = vrot.slane %v827, 7
        %v830 = vshll.u32 %v581, 16
        %v832 = vor.u32 %v829, %v830
        %v833 = vrot.slane %v829, 4
        %v835 = vshrl.u32 %v582, 16
        %v837 = vrot.slane %v835, 7
        %v838 = vshll.u32 %v582, 16
        %v840 = vor.u32 %v837, %v838
        %v841 = vsel %vm587, %v833, %v840
        %v842 = vrot.slane %v837, 4
        %v844 = vshrl.u32 %v583, 16
        %v846 = vrot.slane %v844, 7
        %v847 = vshll.u32 %v583, 16
        %v849 = vor.u32 %v846, %v847
        %v850 = vrot.slane %v846, 4
        %v852 = vshrl.u32 %v584, 16
        %v854 = vrot.slane %v852, 7
        %v855 = vshll.u32 %v584, 16
        %v857 = vor.u32 %v854, %v855
        %v858 = vsel %vm587, %v850, %v857
        %v859 = vrot.slane %v854, 4
        %s908 = scalar_lea.vmem [#allocation3], 12
        %vm909 = vcmask 27648
        %vm910 = vsmask.f32 7938
        %vm911 = vmand %vm909, %vm910
        %v912 = vld [vmem:[%s908] sm:$0xf]
        %v913 = vsel %vm911, %v594, %v912
        %914 = vst [vmem:[%s908] sm:$0xf] %v913
        %vm915 = vcmask 27648
        %916 = vst.msk [vmem:[%s908 + $0x4] sm:$0xf] %vm915, %v603
        %vm917 = vcmask 24576
        %vm918 = vmand %vm917, %vm585
        %v919 = vld [vmem:[%s908 + $0x8] sm:$0x1]
        %v920 = vsel %vm918, %v604, %v919
        %921 = vst [vmem:[%s908 + $0x8] sm:$0x1] %v920
        %v922 = vld [vmem:[%s908 + $0xc] sm:$0xf]
        %v923 = vsel %vm911, %v611, %v922
        %924 = vst [vmem:[%s908 + $0xc] sm:$0xf] %v923
        %925 = vst.msk [vmem:[%s908 + $0x10] sm:$0xf] %vm915, %v620
        %v926 = vld [vmem:[%s908 + $0x14] sm:$0x1]
        %v927 = vsel %vm918, %v621, %v926
        %928 = vst [vmem:[%s908 + $0x14] sm:$0x1] %v927
        %v929 = vld [vmem:[%s908 + $0x18] sm:$0xf]
        %v930 = vsel %vm911, %v628, %v929
        %931 = vst [vmem:[%s908 + $0x18] sm:$0xf] %v930
        %932 = vst.msk [vmem:[%s908 + $0x1c] sm:$0xf] %vm915, %v637
        %v933 = vld [vmem:[%s908 + $0x20] sm:$0x1]
        %v934 = vsel %vm918, %v638, %v933
        %935 = vst [vmem:[%s908 + $0x20] sm:$0x1] %v934
        %v936 = vld [vmem:[%s908 + $0x24] sm:$0xf]
        %v937 = vsel %vm911, %v645, %v936
        %938 = vst [vmem:[%s908 + $0x24] sm:$0xf] %v937
        %939 = vst.msk [vmem:[%s908 + $0x28] sm:$0xf] %vm915, %v654
        %v940 = vld [vmem:[%s908 + $0x2c] sm:$0x1]
        %v941 = vsel %vm918, %v655, %v940
        %942 = vst [vmem:[%s908 + $0x2c] sm:$0x1] %v941
        %v943 = vld [vmem:[%s908 + $0x30] sm:$0xf]
        %v944 = vsel %vm911, %v662, %v943
        %945 = vst [vmem:[%s908 + $0x30] sm:$0xf] %v944
        %946 = vst.msk [vmem:[%s908 + $0x34] sm:$0xf] %vm915, %v671
        %v947 = vld [vmem:[%s908 + $0x38] sm:$0x1]
        %v948 = vsel %vm918, %v672, %v947
        %949 = vst [vmem:[%s908 + $0x38] sm:$0x1] %v948
        %v950 = vld [vmem:[%s908 + $0x3c] sm:$0xf]
        %v951 = vsel %vm911, %v679, %v950
        %952 = vst [vmem:[%s908 + $0x3c] sm:$0xf] %v951
        %953 = vst.msk [vmem:[%s908 + $0x40] sm:$0xf] %vm915, %v688
        %v954 = vld [vmem:[%s908 + $0x44] sm:$0x1]
        %v955 = vsel %vm918, %v689, %v954
        %956 = vst [vmem:[%s908 + $0x44] sm:$0x1] %v955
        %v957 = vld [vmem:[%s908 + $0x48] sm:$0xf]
        %v958 = vsel %vm911, %v696, %v957
        %959 = vst [vmem:[%s908 + $0x48] sm:$0xf] %v958
        %960 = vst.msk [vmem:[%s908 + $0x4c] sm:$0xf] %vm915, %v705
        %v961 = vld [vmem:[%s908 + $0x50] sm:$0x1]
        %v962 = vsel %vm918, %v706, %v961
        %963 = vst [vmem:[%s908 + $0x50] sm:$0x1] %v962
        %v964 = vld [vmem:[%s908 + $0x54] sm:$0xf]
        %v965 = vsel %vm911, %v713, %v964
        %966 = vst [vmem:[%s908 + $0x54] sm:$0xf] %v965
        %967 = vst.msk [vmem:[%s908 + $0x58] sm:$0xf] %vm915, %v722
        %v968 = vld [vmem:[%s908 + $0x5c] sm:$0x1]
        %v969 = vsel %vm918, %v723, %v968
        %970 = vst [vmem:[%s908 + $0x5c] sm:$0x1] %v969
        %v971 = vld [vmem:[%s908 + $0x60] sm:$0xf]
        %v972 = vsel %vm911, %v730, %v971
        %973 = vst [vmem:[%s908 + $0x60] sm:$0xf] %v972
        %974 = vst.msk [vmem:[%s908 + $0x64] sm:$0xf] %vm915, %v739
        %v975 = vld [vmem:[%s908 + $0x68] sm:$0x1]
        %v976 = vsel %vm918, %v740, %v975
        %977 = vst [vmem:[%s908 + $0x68] sm:$0x1] %v976
        %v978 = vld [vmem:[%s908 + $0x6c] sm:$0xf]
        %v979 = vsel %vm911, %v747, %v978
        %980 = vst [vmem:[%s908 + $0x6c] sm:$0xf] %v979
        %981 = vst.msk [vmem:[%s908 + $0x70] sm:$0xf] %vm915, %v756
        %v982 = vld [vmem:[%s908 + $0x74] sm:$0x1]
        %v983 = vsel %vm918, %v757, %v982
        %984 = vst [vmem:[%s908 + $0x74] sm:$0x1] %v983
        %v985 = vld [vmem:[%s908 + $0x78] sm:$0xf]
        %v986 = vsel %vm911, %v764, %v985
        %987 = vst [vmem:[%s908 + $0x78] sm:$0xf] %v986
        %988 = vst.msk [vmem:[%s908 + $0x7c] sm:$0xf] %vm915, %v773
        %v989 = vld [vmem:[%s908 + $0x80] sm:$0x1]
        %v990 = vsel %vm918, %v774, %v989
        %991 = vst [vmem:[%s908 + $0x80] sm:$0x1] %v990
        %v992 = vld [vmem:[%s908 + $0x84] sm:$0xf]
        %v993 = vsel %vm911, %v781, %v992
        %994 = vst [vmem:[%s908 + $0x84] sm:$0xf] %v993
        %995 = vst.msk [vmem:[%s908 + $0x88] sm:$0xf] %vm915, %v790
        %v996 = vld [vmem:[%s908 + $0x8c] sm:$0x1]
        %v997 = vsel %vm918, %v791, %v996
        %998 = vst [vmem:[%s908 + $0x8c] sm:$0x1] %v997
        %v999 = vld [vmem:[%s908 + $0x90] sm:$0xf]
        %v1000 = vsel %vm911, %v798, %v999
        %1001 = vst [vmem:[%s908 + $0x90] sm:$0xf] %v1000
        %1002 = vst.msk [vmem:[%s908 + $0x94] sm:$0xf] %vm915, %v807
        %v1003 = vld [vmem:[%s908 + $0x98] sm:$0x1]
        %v1004 = vsel %vm918, %v808, %v1003
        %1005 = vst [vmem:[%s908 + $0x98] sm:$0x1] %v1004
        %v1006 = vld [vmem:[%s908 + $0x9c] sm:$0xf]
        %v1007 = vsel %vm911, %v815, %v1006
        %1008 = vst [vmem:[%s908 + $0x9c] sm:$0xf] %v1007
        %1009 = vst.msk [vmem:[%s908 + $0xa0] sm:$0xf] %vm915, %v824
        %v1010 = vld [vmem:[%s908 + $0xa4] sm:$0x1]
        %v1011 = vsel %vm918, %v825, %v1010
        %1012 = vst [vmem:[%s908 + $0xa4] sm:$0x1] %v1011
        %v1013 = vld [vmem:[%s908 + $0xa8] sm:$0xf]
        %v1014 = vsel %vm911, %v832, %v1013
        %1015 = vst [vmem:[%s908 + $0xa8] sm:$0xf] %v1014
        %1016 = vst.msk [vmem:[%s908 + $0xac] sm:$0xf] %vm915, %v841
        %v1017 = vld [vmem:[%s908 + $0xb0] sm:$0x1]
        %v1018 = vsel %vm918, %v842, %v1017
        %1019 = vst [vmem:[%s908 + $0xb0] sm:$0x1] %v1018
        %v1020 = vld [vmem:[%s908 + $0xb4] sm:$0xf]
        %v1021 = vsel %vm911, %v849, %v1020
        %1022 = vst [vmem:[%s908 + $0xb4] sm:$0xf] %v1021
        %1023 = vst.msk [vmem:[%s908 + $0xb8] sm:$0xf] %vm915, %v858
        %v1024 = vld [vmem:[%s908 + $0xbc] sm:$0x1]
        %v1025 = vsel %vm918, %v859, %v1024
        %1026 = vst [vmem:[%s908 + $0xbc] sm:$0x1] %v1025
        %v1027 = vld [vmem:[#allocation3] sm:$0xf]
        %v1028 = vld [vmem:[#allocation3 + $0x4] sm:$0xf]
        %v1029 = vld [vmem:[#allocation3 + $0xc] sm:$0xf]
        %v1030 = vld [vmem:[#allocation3 + $0x10] sm:$0xf]
        %v1031 = vld [vmem:[#allocation3 + $0x18] sm:$0xf]
        %v1032 = vld [vmem:[#allocation3 + $0x1c] sm:$0xf]
        %v1033 = vld [vmem:[#allocation3 + $0x24] sm:$0xf]
        %v1034 = vld [vmem:[#allocation3 + $0x28] sm:$0xf]
        %v1035 = vld [vmem:[#allocation3 + $0x30] sm:$0xf]
        %v1036 = vld [vmem:[#allocation3 + $0x34] sm:$0xf]
        %v1037 = vld [vmem:[#allocation3 + $0x3c] sm:$0xf]
        %v1038 = vld [vmem:[#allocation3 + $0x40] sm:$0xf]
        %v1039 = vld [vmem:[#allocation3 + $0x48] sm:$0xf]
        %v1040 = vld [vmem:[#allocation3 + $0x4c] sm:$0xf]
        %v1041 = vld [vmem:[#allocation3 + $0x54] sm:$0xf]
        %v1042 = vld [vmem:[#allocation3 + $0x58] sm:$0xf]
        %v1043 = vld [vmem:[#allocation3 + $0x60] sm:$0xf]
        %v1044 = vld [vmem:[#allocation3 + $0x64] sm:$0xf]
        %v1045 = vld [vmem:[#allocation3 + $0x6c] sm:$0xf]
        %v1046 = vld [vmem:[#allocation3 + $0x70] sm:$0xf]
        %v1047 = vld [vmem:[#allocation3 + $0x78] sm:$0xf]
        %v1048 = vld [vmem:[#allocation3 + $0x7c] sm:$0xf]
        %v1049 = vld [vmem:[#allocation3 + $0x84] sm:$0xf]
        %v1050 = vld [vmem:[#allocation3 + $0x88] sm:$0xf]
        %v1051 = vld [vmem:[#allocation3 + $0x90] sm:$0xf]
        %v1052 = vld [vmem:[#allocation3 + $0x94] sm:$0xf]
        %v1053 = vld [vmem:[#allocation3 + $0x9c] sm:$0xf]
        %v1054 = vld [vmem:[#allocation3 + $0xa0] sm:$0xf]
        %v1055 = vld [vmem:[#allocation3 + $0xa8] sm:$0xf]
        %v1056 = vld [vmem:[#allocation3 + $0xac] sm:$0xf]
        %v1057 = vld [vmem:[#allocation3 + $0xb4] sm:$0xf]
        %v1058 = vld [vmem:[#allocation3 + $0xb8] sm:$0xf]
        %v1059 = vld [vmem:[#allocation3 + $0x8] sm:$0x1]
        %v1060 = vld [vmem:[#allocation3 + $0x14] sm:$0x1]
        %v1061 = vld [vmem:[#allocation3 + $0x20] sm:$0x1]
        %v1062 = vld [vmem:[#allocation3 + $0x2c] sm:$0x1]
        %v1063 = vld [vmem:[#allocation3 + $0x38] sm:$0x1]
        %v1064 = vld [vmem:[#allocation3 + $0x44] sm:$0x1]
        %v1065 = vld [vmem:[#allocation3 + $0x50] sm:$0x1]
        %v1066 = vld [vmem:[#allocation3 + $0x5c] sm:$0x1]
        %v1067 = vld [vmem:[#allocation3 + $0x68] sm:$0x1]
        %v1068 = vld [vmem:[#allocation3 + $0x74] sm:$0x1]
        %v1069 = vld [vmem:[#allocation3 + $0x80] sm:$0x1]
        %v1070 = vld [vmem:[#allocation3 + $0x8c] sm:$0x1]
        %v1071 = vld [vmem:[#allocation3 + $0x98] sm:$0x1]
        %v1072 = vld [vmem:[#allocation3 + $0xa4] sm:$0x1]
        %v1073 = vld [vmem:[#allocation3 + $0xb0] sm:$0x1]
        %v1074 = vld [vmem:[#allocation3 + $0xbc] sm:$0x1]
        %v1075 = vld [vmem:[#allocation3] sm:$0xe]
        %v1076 = vld [vmem:[#allocation3 + $0xc] sm:$0xe]
        %v1077 = vld [vmem:[#allocation3 + $0x18] sm:$0xe]
        %v1078 = vld [vmem:[#allocation3 + $0x24] sm:$0xe]
        %v1079 = vld [vmem:[#allocation3 + $0x30] sm:$0xe]
        %v1080 = vld [vmem:[#allocation3 + $0x3c] sm:$0xe]
        %v1081 = vld [vmem:[#allocation3 + $0x48] sm:$0xe]
        %v1082 = vld [vmem:[#allocation3 + $0x54] sm:$0xe]
        %v1083 = vld [vmem:[#allocation3 + $0x60] sm:$0xe]
        %v1084 = vld [vmem:[#allocation3 + $0x6c] sm:$0xe]
        %v1085 = vld [vmem:[#allocation3 + $0x78] sm:$0xe]
        %v1086 = vld [vmem:[#allocation3 + $0x84] sm:$0xe]
        %v1087 = vld [vmem:[#allocation3 + $0x90] sm:$0xe]
        %v1088 = vld [vmem:[#allocation3 + $0x9c] sm:$0xe]
        %v1089 = vld [vmem:[#allocation3 + $0xa8] sm:$0xe]
        %v1090 = vld [vmem:[#allocation3 + $0xb4] sm:$0xe]
        %v1091 = vld [vmem:[%s908] sm:$0xf]
        %v1092 = vld [vmem:[%s908 + $0x4] sm:$0xf]
        %v1093 = vld [vmem:[%s908 + $0xc] sm:$0xf]
        %v1094 = vld [vmem:[%s908 + $0x10] sm:$0xf]
        %v1095 = vld [vmem:[%s908 + $0x18] sm:$0xf]
        %v1096 = vld [vmem:[%s908 + $0x1c] sm:$0xf]
        %v1097 = vld [vmem:[%s908 + $0x24] sm:$0xf]
        %v1098 = vld [vmem:[%s908 + $0x28] sm:$0xf]
        %v1099 = vld [vmem:[%s908 + $0x30] sm:$0xf]
        %v1100 = vld [vmem:[%s908 + $0x34] sm:$0xf]
        %v1101 = vld [vmem:[%s908 + $0x3c] sm:$0xf]
        %v1102 = vld [vmem:[%s908 + $0x40] sm:$0xf]
        %v1103 = vld [vmem:[%s908 + $0x48] sm:$0xf]
        %v1104 = vld [vmem:[%s908 + $0x4c] sm:$0xf]
        %v1105 = vld [vmem:[%s908 + $0x54] sm:$0xf]
        %v1106 = vld [vmem:[%s908 + $0x58] sm:$0xf]
        %v1107 = vld [vmem:[%s908 + $0x60] sm:$0xf]
        %v1108 = vld [vmem:[%s908 + $0x64] sm:$0xf]
        %v1109 = vld [vmem:[%s908 + $0x6c] sm:$0xf]
        %v1110 = vld [vmem:[%s908 + $0x70] sm:$0xf]
        %v1111 = vld [vmem:[%s908 + $0x78] sm:$0xf]
        %v1112 = vld [vmem:[%s908 + $0x7c] sm:$0xf]
        %v1113 = vld [vmem:[%s908 + $0x84] sm:$0xf]
        %v1114 = vld [vmem:[%s908 + $0x88] sm:$0xf]
        %v1115 = vld [vmem:[%s908 + $0x90] sm:$0xf]
        %v1116 = vld [vmem:[%s908 + $0x94] sm:$0xf]
        %v1117 = vld [vmem:[%s908 + $0x9c] sm:$0xf]
        %v1118 = vld [vmem:[%s908 + $0xa0] sm:$0xf]
        %v1119 = vld [vmem:[%s908 + $0xa8] sm:$0xf]
        %v1120 = vld [vmem:[%s908 + $0xac] sm:$0xf]
        %v1121 = vld [vmem:[%s908 + $0xb4] sm:$0xf]
        %v1122 = vld [vmem:[%s908 + $0xb8] sm:$0xf]
        %v1123 = vld [vmem:[%s908 + $0x8] sm:$0x1]
        %v1124 = vld [vmem:[%s908 + $0x14] sm:$0x1]
        %v1125 = vld [vmem:[%s908 + $0x20] sm:$0x1]
        %v1126 = vld [vmem:[%s908 + $0x2c] sm:$0x1]
        %v1127 = vld [vmem:[%s908 + $0x38] sm:$0x1]
        %v1128 = vld [vmem:[%s908 + $0x44] sm:$0x1]
        %v1129 = vld [vmem:[%s908 + $0x50] sm:$0x1]
        %v1130 = vld [vmem:[%s908 + $0x5c] sm:$0x1]
        %v1131 = vld [vmem:[%s908 + $0x68] sm:$0x1]
        %v1132 = vld [vmem:[%s908 + $0x74] sm:$0x1]
        %v1133 = vld [vmem:[%s908 + $0x80] sm:$0x1]
        %v1134 = vld [vmem:[%s908 + $0x8c] sm:$0x1]
        %v1135 = vld [vmem:[%s908 + $0x98] sm:$0x1]
        %v1136 = vld [vmem:[%s908 + $0xa4] sm:$0x1]
        %v1137 = vld [vmem:[%s908 + $0xb0] sm:$0x1]
        %v1138 = vld [vmem:[%s908 + $0xbc] sm:$0x1]
        %v1139 = vld [vmem:[%s908] sm:$0xe]
        %v1140 = vld [vmem:[%s908 + $0xc] sm:$0xe]
        %v1141 = vld [vmem:[%s908 + $0x18] sm:$0xe]
        %v1142 = vld [vmem:[%s908 + $0x24] sm:$0xe]
        %v1143 = vld [vmem:[%s908 + $0x30] sm:$0xe]
        %v1144 = vld [vmem:[%s908 + $0x3c] sm:$0xe]
        %v1145 = vld [vmem:[%s908 + $0x48] sm:$0xe]
        %v1146 = vld [vmem:[%s908 + $0x54] sm:$0xe]
        %v1147 = vld [vmem:[%s908 + $0x60] sm:$0xe]
        %v1148 = vld [vmem:[%s908 + $0x6c] sm:$0xe]
        %v1149 = vld [vmem:[%s908 + $0x78] sm:$0xe]
        %v1150 = vld [vmem:[%s908 + $0x84] sm:$0xe]
        %v1151 = vld [vmem:[%s908 + $0x90] sm:$0xe]
        %v1152 = vld [vmem:[%s908 + $0x9c] sm:$0xe]
        %v1153 = vld [vmem:[%s908 + $0xa8] sm:$0xe]
        %v1154 = vld [vmem:[%s908 + $0xb4] sm:$0xe]
        %s1155 = scalar_lea.vmem [#allocation3], 24
        %v1156 = vld [vmem:[%s1155] sm:$0xf]
        %v1157 = vld [vmem:[%s1155 + $0x4] sm:$0xf]
        %v1158 = vld [vmem:[%s1155 + $0xc] sm:$0xf]
        %v1159 = vld [vmem:[%s1155 + $0x10] sm:$0xf]
        %v1160 = vld [vmem:[%s1155 + $0x18] sm:$0xf]
        %v1161 = vld [vmem:[%s1155 + $0x1c] sm:$0xf]
        %v1162 = vld [vmem:[%s1155 + $0x24] sm:$0xf]
        %v1163 = vld [vmem:[%s1155 + $0x28] sm:$0xf]
        %v1164 = vld [vmem:[%s1155 + $0x30] sm:$0xf]
        %v1165 = vld [vmem:[%s1155 + $0x34] sm:$0xf]
        %v1166 = vld [vmem:[%s1155 + $0x3c] sm:$0xf]
        %v1167 = vld [vmem:[%s1155 + $0x40] sm:$0xf]
        %v1168 = vld [vmem:[%s1155 + $0x48] sm:$0xf]
        %v1169 = vld [vmem:[%s1155 + $0x4c] sm:$0xf]
        %v1170 = vld [vmem:[%s1155 + $0x54] sm:$0xf]
        %v1171 = vld [vmem:[%s1155 + $0x58] sm:$0xf]
        %v1172 = vld [vmem:[%s1155 + $0x60] sm:$0xf]
        %v1173 = vld [vmem:[%s1155 + $0x64] sm:$0xf]
        %v1174 = vld [vmem:[%s1155 + $0x6c] sm:$0xf]
        %v1175 = vld [vmem:[%s1155 + $0x70] sm:$0xf]
        %v1176 = vld [vmem:[%s1155 + $0x78] sm:$0xf]
        %v1177 = vld [vmem:[%s1155 + $0x7c] sm:$0xf]
        %v1178 = vld [vmem:[%s1155 + $0x84] sm:$0xf]
        %v1179 = vld [vmem:[%s1155 + $0x88] sm:$0xf]
        %v1180 = vld [vmem:[%s1155 + $0x90] sm:$0xf]
        %v1181 = vld [vmem:[%s1155 + $0x94] sm:$0xf]
        %v1182 = vld [vmem:[%s1155 + $0x9c] sm:$0xf]
        %v1183 = vld [vmem:[%s1155 + $0xa0] sm:$0xf]
        %v1184 = vld [vmem:[%s1155 + $0xa8] sm:$0xf]
        %v1185 = vld [vmem:[%s1155 + $0xac] sm:$0xf]
        %v1186 = vld [vmem:[%s1155 + $0xb4] sm:$0xf]
        %v1187 = vld [vmem:[%s1155 + $0xb8] sm:$0xf]
        %v1188 = vld [vmem:[%s1155 + $0x8] sm:$0x1]
        %v1189 = vld [vmem:[%s1155 + $0x14] sm:$0x1]
        %v1190 = vld [vmem:[%s1155 + $0x20] sm:$0x1]
        %v1191 = vld [vmem:[%s1155 + $0x2c] sm:$0x1]
        %v1192 = vld [vmem:[%s1155 + $0x38] sm:$0x1]
        %v1193 = vld [vmem:[%s1155 + $0x44] sm:$0x1]
        %v1194 = vld [vmem:[%s1155 + $0x50] sm:$0x1]
        %v1195 = vld [vmem:[%s1155 + $0x5c] sm:$0x1]
        %v1196 = vld [vmem:[%s1155 + $0x68] sm:$0x1]
        %v1197 = vld [vmem:[%s1155 + $0x74] sm:$0x1]
        %v1198 = vld [vmem:[%s1155 + $0x80] sm:$0x1]
        %v1199 = vld [vmem:[%s1155 + $0x8c] sm:$0x1]
        %v1200 = vld [vmem:[%s1155 + $0x98] sm:$0x1]
        %v1201 = vld [vmem:[%s1155 + $0xa4] sm:$0x1]
        %v1202 = vld [vmem:[%s1155 + $0xb0] sm:$0x1]
        %v1203 = vld [vmem:[%s1155 + $0xbc] sm:$0x1]
        %v1204 = vld [vmem:[%s1155] sm:$0xe]
        %v1205 = vld [vmem:[%s1155 + $0xc] sm:$0xe]
        %v1206 = vld [vmem:[%s1155 + $0x18] sm:$0xe]
        %v1207 = vld [vmem:[%s1155 + $0x24] sm:$0xe]
        %v1208 = vld [vmem:[%s1155 + $0x30] sm:$0xe]
        %v1209 = vld [vmem:[%s1155 + $0x3c] sm:$0xe]
        %v1210 = vld [vmem:[%s1155 + $0x48] sm:$0xe]
        %v1211 = vld [vmem:[%s1155 + $0x54] sm:$0xe]
        %v1212 = vld [vmem:[%s1155 + $0x60] sm:$0xe]
        %v1213 = vld [vmem:[%s1155 + $0x6c] sm:$0xe]
        %v1214 = vld [vmem:[%s1155 + $0x78] sm:$0xe]
        %v1215 = vld [vmem:[%s1155 + $0x84] sm:$0xe]
        %v1216 = vld [vmem:[%s1155 + $0x90] sm:$0xe]
        %v1217 = vld [vmem:[%s1155 + $0x9c] sm:$0xe]
        %v1218 = vld [vmem:[%s1155 + $0xa8] sm:$0xe]
        %v1219 = vld [vmem:[%s1155 + $0xb4] sm:$0xe]
        %v1252 = vunpack.c.l.b16 %v1027
        %v1253 = vunpack.c.l.b16 %v1028
        %v1254 = vunpack.c.l.b16 %v1029
        %v1255 = vunpack.c.l.b16 %v1030
        %v1256 = vunpack.c.l.b16 %v1031
        %v1257 = vunpack.c.l.b16 %v1032
        %v1258 = vunpack.c.l.b16 %v1033
        %v1259 = vunpack.c.l.b16 %v1034
        %v1260 = vunpack.c.l.b16 %v1035
        %v1261 = vunpack.c.l.b16 %v1036
        %v1262 = vunpack.c.l.b16 %v1037
        %v1263 = vunpack.c.l.b16 %v1038
        %v1264 = vunpack.c.l.b16 %v1039
        %v1265 = vunpack.c.l.b16 %v1040
        %v1266 = vunpack.c.l.b16 %v1041
        %v1267 = vunpack.c.l.b16 %v1042
        %v1268 = vunpack.c.l.b16 %v1043
        %v1269 = vunpack.c.l.b16 %v1044
        %v1270 = vunpack.c.l.b16 %v1045
        %v1271 = vunpack.c.l.b16 %v1046
        %v1272 = vunpack.c.l.b16 %v1047
        %v1273 = vunpack.c.l.b16 %v1048
        %v1274 = vunpack.c.l.b16 %v1049
        %v1275 = vunpack.c.l.b16 %v1050
        %v1276 = vunpack.c.l.b16 %v1051
        %v1277 = vunpack.c.l.b16 %v1052
        %v1278 = vunpack.c.l.b16 %v1053
        %v1279 = vunpack.c.l.b16 %v1054
        %v1280 = vunpack.c.l.b16 %v1055
        %v1281 = vunpack.c.l.b16 %v1056
        %v1282 = vunpack.c.l.b16 %v1057
        %v1283 = vunpack.c.l.b16 %v1058
        %v1284 = vpack.c.b16 %v1253, %v1252
        %v1285 = vpack.c.b16 %v1255, %v1254
        %v1286 = vpack.c.b16 %v1257, %v1256
        %v1287 = vpack.c.b16 %v1259, %v1258
        %v1288 = vpack.c.b16 %v1261, %v1260
        %v1289 = vpack.c.b16 %v1263, %v1262
        %v1290 = vpack.c.b16 %v1265, %v1264
        %v1291 = vpack.c.b16 %v1267, %v1266
        %v1292 = vpack.c.b16 %v1269, %v1268
        %v1293 = vpack.c.b16 %v1271, %v1270
        %v1294 = vpack.c.b16 %v1273, %v1272
        %v1295 = vpack.c.b16 %v1275, %v1274
        %v1296 = vpack.c.b16 %v1277, %v1276
        %v1297 = vpack.c.b16 %v1279, %v1278
        %v1298 = vpack.c.b16 %v1281, %v1280
        %v1299 = vpack.c.b16 %v1283, %v1282
        %v1316 = vunpack.c.l.b16 %v1059
        %v1317 = vunpack.c.l.b16 %v1060
        %v1318 = vunpack.c.l.b16 %v1061
        %v1319 = vunpack.c.l.b16 %v1062
        %v1320 = vunpack.c.l.b16 %v1063
        %v1321 = vunpack.c.l.b16 %v1064
        %v1322 = vunpack.c.l.b16 %v1065
        %v1323 = vunpack.c.l.b16 %v1066
        %v1324 = vunpack.c.l.b16 %v1067
        %v1325 = vunpack.c.l.b16 %v1068
        %v1326 = vunpack.c.l.b16 %v1069
        %v1327 = vunpack.c.l.b16 %v1070
        %v1328 = vunpack.c.l.b16 %v1071
        %v1329 = vunpack.c.l.b16 %v1072
        %v1330 = vunpack.c.l.b16 %v1073
        %v1331 = vunpack.c.l.b16 %v1074
        %v1332 = vpack.c.b16 %v1316, %v1316
        %v1333 = vpack.c.b16 %v1317, %v1317
        %v1334 = vpack.c.b16 %v1318, %v1318
        %v1335 = vpack.c.b16 %v1319, %v1319
        %v1336 = vpack.c.b16 %v1320, %v1320
        %v1337 = vpack.c.b16 %v1321, %v1321
        %v1338 = vpack.c.b16 %v1322, %v1322
        %v1339 = vpack.c.b16 %v1323, %v1323
        %v1340 = vpack.c.b16 %v1324, %v1324
        %v1341 = vpack.c.b16 %v1325, %v1325
        %v1342 = vpack.c.b16 %v1326, %v1326
        %v1343 = vpack.c.b16 %v1327, %v1327
        %v1344 = vpack.c.b16 %v1328, %v1328
        %v1345 = vpack.c.b16 %v1329, %v1329
        %v1346 = vpack.c.b16 %v1330, %v1330
        %v1347 = vpack.c.b16 %v1331, %v1331
        %vm1348 = vsmask.f32 7424
        %v1350 = vshrl.u32 %v1284, 16
        %v1352 = vshll.u32 %v1284, 16
        %v1354 = vrot.slane %v1352, 1
        %v1355 = vor.u32 %v1350, %v1354
        %v1357 = vshll.u32 %v1332, 16
        %v1359 = vrot.slane %v1357, 1
        %v1360 = vsel %vm1348, %v1355, %v1359
        %v1362 = vshrl.u32 %v1285, 16
        %v1364 = vshll.u32 %v1285, 16
        %v1366 = vrot.slane %v1364, 1
        %v1367 = vor.u32 %v1362, %v1366
        %v1369 = vshll.u32 %v1333, 16
        %v1371 = vrot.slane %v1369, 1
        %v1372 = vsel %vm1348, %v1367, %v1371
        %v1374 = vshrl.u32 %v1286, 16
        %v1376 = vshll.u32 %v1286, 16
        %v1378 = vrot.slane %v1376, 1
        %v1379 = vor.u32 %v1374, %v1378
        %v1381 = vshll.u32 %v1334, 16
        %v1383 = vrot.slane %v1381, 1
        %v1384 = vsel %vm1348, %v1379, %v1383
        %v1386 = vshrl.u32 %v1287, 16
        %v1388 = vshll.u32 %v1287, 16
        %v1390 = vrot.slane %v1388, 1
        %v1391 = vor.u32 %v1386, %v1390
        %v1393 = vshll.u32 %v1335, 16
        %v1395 = vrot.slane %v1393, 1
        %v1396 = vsel %vm1348, %v1391, %v1395
        %v1398 = vshrl.u32 %v1288, 16
        %v1400 = vshll.u32 %v1288, 16
        %v1402 = vrot.slane %v1400, 1
        %v1403 = vor.u32 %v1398, %v1402
        %v1405 = vshll.u32 %v1336, 16
        %v1407 = vrot.slane %v1405, 1
        %v1408 = vsel %vm1348, %v1403, %v1407
        %v1410 = vshrl.u32 %v1289, 16
        %v1412 = vshll.u32 %v1289, 16
        %v1414 = vrot.slane %v1412, 1
        %v1415 = vor.u32 %v1410, %v1414
        %v1417 = vshll.u32 %v1337, 16
        %v1419 = vrot.slane %v1417, 1
        %v1420 = vsel %vm1348, %v1415, %v1419
        %v1422 = vshrl.u32 %v1290, 16
        %v1424 = vshll.u32 %v1290, 16
        %v1426 = vrot.slane %v1424, 1
        %v1427 = vor.u32 %v1422, %v1426
        %v1429 = vshll.u32 %v1338, 16
        %v1431 = vrot.slane %v1429, 1
        %v1432 = vsel %vm1348, %v1427, %v1431
        %v1434 = vshrl.u32 %v1291, 16
        %v1436 = vshll.u32 %v1291, 16
        %v1438 = vrot.slane %v1436, 1
        %v1439 = vor.u32 %v1434, %v1438
        %v1441 = vshll.u32 %v1339, 16
        %v1443 = vrot.slane %v1441, 1
        %v1444 = vsel %vm1348, %v1439, %v1443
        %v1446 = vshrl.u32 %v1292, 16
        %v1448 = vshll.u32 %v1292, 16
        %v1450 = vrot.slane %v1448, 1
        %v1451 = vor.u32 %v1446, %v1450
        %v1453 = vshll.u32 %v1340, 16
        %v1455 = vrot.slane %v1453, 1
        %v1456 = vsel %vm1348, %v1451, %v1455
        %v1458 = vshrl.u32 %v1293, 16
        %v1460 = vshll.u32 %v1293, 16
        %v1462 = vrot.slane %v1460, 1
        %v1463 = vor.u32 %v1458, %v1462
        %v1465 = vshll.u32 %v1341, 16
        %v1467 = vrot.slane %v1465, 1
        %v1468 = vsel %vm1348, %v1463, %v1467
        %v1470 = vshrl.u32 %v1294, 16
        %v1472 = vshll.u32 %v1294, 16
        %v1474 = vrot.slane %v1472, 1
        %v1475 = vor.u32 %v1470, %v1474
        %v1477 = vshll.u32 %v1342, 16
        %v1479 = vrot.slane %v1477, 1
        %v1480 = vsel %vm1348, %v1475, %v1479
        %v1482 = vshrl.u32 %v1295, 16
        %v1484 = vshll.u32 %v1295, 16
        %v1486 = vrot.slane %v1484, 1
        %v1487 = vor.u32 %v1482, %v1486
        %v1489 = vshll.u32 %v1343, 16
        %v1491 = vrot.slane %v1489, 1
        %v1492 = vsel %vm1348, %v1487, %v1491
        %v1494 = vshrl.u32 %v1296, 16
        %v1496 = vshll.u32 %v1296, 16
        %v1498 = vrot.slane %v1496, 1
        %v1499 = vor.u32 %v1494, %v1498
        %v1501 = vshll.u32 %v1344, 16
        %v1503 = vrot.slane %v1501, 1
        %v1504 = vsel %vm1348, %v1499, %v1503
        %v1506 = vshrl.u32 %v1297, 16
        %v1508 = vshll.u32 %v1297, 16
        %v1510 = vrot.slane %v1508, 1
        %v1511 = vor.u32 %v1506, %v1510
        %v1513 = vshll.u32 %v1345, 16
        %v1515 = vrot.slane %v1513, 1
        %v1516 = vsel %vm1348, %v1511, %v1515
        %v1518 = vshrl.u32 %v1298, 16
        %v1520 = vshll.u32 %v1298, 16
        %v1522 = vrot.slane %v1520, 1
        %v1523 = vor.u32 %v1518, %v1522
        %v1525 = vshll.u32 %v1346, 16
        %v1527 = vrot.slane %v1525, 1
        %v1528 = vsel %vm1348, %v1523, %v1527
        %v1530 = vshrl.u32 %v1299, 16
        %v1532 = vshll.u32 %v1299, 16
        %v1534 = vrot.slane %v1532, 1
        %v1535 = vor.u32 %v1530, %v1534
        %v1537 = vshll.u32 %v1347, 16
        %v1539 = vrot.slane %v1537, 1
        %v1540 = vsel %vm1348, %v1535, %v1539
        %1541 = vrot.lane.b32.xlu0 %v1360, 4
        %v1542 = vpop.permute.xlu0 %1541
        %1543 = vrot.lane.b32.xlu0 %v1372, 4
        %v1544 = vpop.permute.xlu0 %1543
        %1545 = vrot.lane.b32.xlu0 %v1384, 4
        %v1546 = vpop.permute.xlu0 %1545
        %1547 = vrot.lane.b32.xlu0 %v1396, 4
        %v1548 = vpop.permute.xlu0 %1547
        %1549 = vrot.lane.b32.xlu0 %v1408, 4
        %v1550 = vpop.permute.xlu0 %1549
        %1551 = vrot.lane.b32.xlu0 %v1420, 4
        %v1552 = vpop.permute.xlu0 %1551
        %1553 = vrot.lane.b32.xlu0 %v1432, 4
        %v1554 = vpop.permute.xlu0 %1553
        %1555 = vrot.lane.b32.xlu0 %v1444, 4
        %v1556 = vpop.permute.xlu0 %1555
        %1557 = vrot.lane.b32.xlu0 %v1456, 4
        %v1558 = vpop.permute.xlu0 %1557
        %1559 = vrot.lane.b32.xlu0 %v1468, 4
        %v1560 = vpop.permute.xlu0 %1559
        %1561 = vrot.lane.b32.xlu0 %v1480, 4
        %v1562 = vpop.permute.xlu0 %1561
        %1563 = vrot.lane.b32.xlu0 %v1492, 4
        %v1564 = vpop.permute.xlu0 %1563
        %1565 = vrot.lane.b32.xlu0 %v1504, 4
        %v1566 = vpop.permute.xlu0 %1565
        %1567 = vrot.lane.b32.xlu0 %v1516, 4
        %v1568 = vpop.permute.xlu0 %1567
        %1569 = vrot.lane.b32.xlu0 %v1528, 4
        %v1570 = vpop.permute.xlu0 %1569
        %1571 = vrot.lane.b32.xlu0 %v1540, 4
        %v1572 = vpop.permute.xlu0 %1571
        %v1589 = vunpack.c.l.b16 %v1075
        %v1590 = vunpack.c.l.b16 %v1076
        %v1591 = vunpack.c.l.b16 %v1077
        %v1592 = vunpack.c.l.b16 %v1078
        %v1593 = vunpack.c.l.b16 %v1079
        %v1594 = vunpack.c.l.b16 %v1080
        %v1595 = vunpack.c.l.b16 %v1081
        %v1596 = vunpack.c.l.b16 %v1082
        %v1597 = vunpack.c.l.b16 %v1083
        %v1598 = vunpack.c.l.b16 %v1084
        %v1599 = vunpack.c.l.b16 %v1085
        %v1600 = vunpack.c.l.b16 %v1086
        %v1601 = vunpack.c.l.b16 %v1087
        %v1602 = vunpack.c.l.b16 %v1088
        %v1603 = vunpack.c.l.b16 %v1089
        %v1604 = vunpack.c.l.b16 %v1090
        %v1605 = vpack.c.b16 %v1253, %v1589
        %v1606 = vpack.c.b16 %v1255, %v1590
        %v1607 = vpack.c.b16 %v1257, %v1591
        %v1608 = vpack.c.b16 %v1259, %v1592
        %v1609 = vpack.c.b16 %v1261, %v1593
        %v1610 = vpack.c.b16 %v1263, %v1594
        %v1611 = vpack.c.b16 %v1265, %v1595
        %v1612 = vpack.c.b16 %v1267, %v1596
        %v1613 = vpack.c.b16 %v1269, %v1597
        %v1614 = vpack.c.b16 %v1271, %v1598
        %v1615 = vpack.c.b16 %v1273, %v1599
        %v1616 = vpack.c.b16 %v1275, %v1600
        %v1617 = vpack.c.b16 %v1277, %v1601
        %v1618 = vpack.c.b16 %v1279, %v1602
        %v1619 = vpack.c.b16 %v1281, %v1603
        %v1620 = vpack.c.b16 %v1283, %v1604
        %vm1621 = vcmask 1046528
        %v1622 = vrot.slane %v1605, 1
        %v1623 = vrot.slane %v1332, 1
        %v1624 = vsel %vm1621, %v1622, %v1623
        %v1625 = vrot.slane %v1606, 1
        %v1626 = vrot.slane %v1333, 1
        %v1627 = vsel %vm1621, %v1625, %v1626
        %v1628 = vrot.slane %v1607, 1
        %v1629 = vrot.slane %v1334, 1
        %v1630 = vsel %vm1621, %v1628, %v1629
        %v1631 = vrot.slane %v1608, 1
        %v1632 = vrot.slane %v1335, 1
        %v1633 = vsel %vm1621, %v1631, %v1632
        %v1634 = vrot.slane %v1609, 1
        %v1635 = vrot.slane %v1336, 1
        %v1636 = vsel %vm1621, %v1634, %v1635
        %v1637 = vrot.slane %v1610, 1
        %v1638 = vrot.slane %v1337, 1
        %v1639 = vsel %vm1621, %v1637, %v1638
        %v1640 = vrot.slane %v1611, 1
        %v1641 = vrot.slane %v1338, 1
        %v1642 = vsel %vm1621, %v1640, %v1641
        %v1643 = vrot.slane %v1612, 1
        %v1644 = vrot.slane %v1339, 1
        %v1645 = vsel %vm1621, %v1643, %v1644
        %v1646 = vrot.slane %v1613, 1
        %v1647 = vrot.slane %v1340, 1
        %v1648 = vsel %vm1621, %v1646, %v1647
        %v1649 = vrot.slane %v1614, 1
        %v1650 = vrot.slane %v1341, 1
        %v1651 = vsel %vm1621, %v1649, %v1650
        %v1652 = vrot.slane %v1615, 1
        %v1653 = vrot.slane %v1342, 1
        %v1654 = vsel %vm1621, %v1652, %v1653
        %v1655 = vrot.slane %v1616, 1
        %v1656 = vrot.slane %v1343, 1
        %v1657 = vsel %vm1621, %v1655, %v1656
        %v1658 = vrot.slane %v1617, 1
        %v1659 = vrot.slane %v1344, 1
        %v1660 = vsel %vm1621, %v1658, %v1659
        %v1661 = vrot.slane %v1618, 1
        %v1662 = vrot.slane %v1345, 1
        %v1663 = vsel %vm1621, %v1661, %v1662
        %v1664 = vrot.slane %v1619, 1
        %v1665 = vrot.slane %v1346, 1
        %v1666 = vsel %vm1621, %v1664, %v1665
        %v1667 = vrot.slane %v1620, 1
        %v1668 = vrot.slane %v1347, 1
        %v1669 = vsel %vm1621, %v1667, %v1668
        %1670 = vrot.lane.b32.xlu0 %v1624, 8
        %v1671 = vpop.permute.xlu0 %1670
        %1672 = vrot.lane.b32.xlu0 %v1627, 8
        %v1673 = vpop.permute.xlu0 %1672
        %1674 = vrot.lane.b32.xlu0 %v1630, 8
        %v1675 = vpop.permute.xlu0 %1674
        %1676 = vrot.lane.b32.xlu0 %v1633, 8
        %v1677 = vpop.permute.xlu0 %1676
        %1678 = vrot.lane.b32.xlu0 %v1636, 8
        %v1679 = vpop.permute.xlu0 %1678
        %1680 = vrot.lane.b32.xlu0 %v1639, 8
        %v1681 = vpop.permute.xlu0 %1680
        %1682 = vrot.lane.b32.xlu0 %v1642, 8
        %v1683 = vpop.permute.xlu0 %1682
        %1684 = vrot.lane.b32.xlu0 %v1645, 8
        %v1685 = vpop.permute.xlu0 %1684
        %1686 = vrot.lane.b32.xlu0 %v1648, 8
        %v1687 = vpop.permute.xlu0 %1686
        %1688 = vrot.lane.b32.xlu0 %v1651, 8
        %v1689 = vpop.permute.xlu0 %1688
        %1690 = vrot.lane.b32.xlu0 %v1654, 8
        %v1691 = vpop.permute.xlu0 %1690
        %1692 = vrot.lane.b32.xlu0 %v1657, 8
        %v1693 = vpop.permute.xlu0 %1692
        %1694 = vrot.lane.b32.xlu0 %v1660, 8
        %v1695 = vpop.permute.xlu0 %1694
        %1696 = vrot.lane.b32.xlu0 %v1663, 8
        %v1697 = vpop.permute.xlu0 %1696
        %1698 = vrot.lane.b32.xlu0 %v1666, 8
        %v1699 = vpop.permute.xlu0 %1698
        %1700 = vrot.lane.b32.xlu0 %v1669, 8
        %v1701 = vpop.permute.xlu0 %1700
        %v1734 = vunpack.c.l.b16 %v1091
        %v1735 = vunpack.c.l.b16 %v1092
        %v1736 = vunpack.c.l.b16 %v1093
        %v1737 = vunpack.c.l.b16 %v1094
        %v1738 = vunpack.c.l.b16 %v1095
        %v1739 = vunpack.c.l.b16 %v1096
        %v1740 = vunpack.c.l.b16 %v1097
        %v1741 = vunpack.c.l.b16 %v1098
        %v1742 = vunpack.c.l.b16 %v1099
        %v1743 = vunpack.c.l.b16 %v1100
        %v1744 = vunpack.c.l.b16 %v1101
        %v1745 = vunpack.c.l.b16 %v1102
        %v1746 = vunpack.c.l.b16 %v1103
        %v1747 = vunpack.c.l.b16 %v1104
        %v1748 = vunpack.c.l.b16 %v1105
        %v1749 = vunpack.c.l.b16 %v1106
        %v1750 = vunpack.c.l.b16 %v1107
        %v1751 = vunpack.c.l.b16 %v1108
        %v1752 = vunpack.c.l.b16 %v1109
        %v1753 = vunpack.c.l.b16 %v1110
        %v1754 = vunpack.c.l.b16 %v1111
        %v1755 = vunpack.c.l.b16 %v1112
        %v1756 = vunpack.c.l.b16 %v1113
        %v1757 = vunpack.c.l.b16 %v1114
        %v1758 = vunpack.c.l.b16 %v1115
        %v1759 = vunpack.c.l.b16 %v1116
        %v1760 = vunpack.c.l.b16 %v1117
        %v1761 = vunpack.c.l.b16 %v1118
        %v1762 = vunpack.c.l.b16 %v1119
        %v1763 = vunpack.c.l.b16 %v1120
        %v1764 = vunpack.c.l.b16 %v1121
        %v1765 = vunpack.c.l.b16 %v1122
        %v1766 = vpack.c.b16 %v1735, %v1734
        %v1767 = vpack.c.b16 %v1737, %v1736
        %v1768 = vpack.c.b16 %v1739, %v1738
        %v1769 = vpack.c.b16 %v1741, %v1740
        %v1770 = vpack.c.b16 %v1743, %v1742
        %v1771 = vpack.c.b16 %v1745, %v1744
        %v1772 = vpack.c.b16 %v1747, %v1746
        %v1773 = vpack.c.b16 %v1749, %v1748
        %v1774 = vpack.c.b16 %v1751, %v1750
        %v1775 = vpack.c.b16 %v1753, %v1752
        %v1776 = vpack.c.b16 %v1755, %v1754
        %v1777 = vpack.c.b16 %v1757, %v1756
        %v1778 = vpack.c.b16 %v1759, %v1758
        %v1779 = vpack.c.b16 %v1761, %v1760
        %v1780 = vpack.c.b16 %v1763, %v1762
        %v1781 = vpack.c.b16 %v1765, %v1764
        %1782 = vrot.lane.b32.xlu0 %v1766, 12
        %v1783 = vpop.permute.xlu0 %1782
        %1784 = vrot.lane.b32.xlu0 %v1767, 12
        %v1785 = vpop.permute.xlu0 %1784
        %1786 = vrot.lane.b32.xlu0 %v1768, 12
        %v1787 = vpop.permute.xlu0 %1786
        %1788 = vrot.lane.b32.xlu0 %v1769, 12
        %v1789 = vpop.permute.xlu0 %1788
        %1790 = vrot.lane.b32.xlu0 %v1770, 12
        %v1791 = vpop.permute.xlu0 %1790
        %1792 = vrot.lane.b32.xlu0 %v1771, 12
        %v1793 = vpop.permute.xlu0 %1792
        %1794 = vrot.lane.b32.xlu0 %v1772, 12
        %v1795 = vpop.permute.xlu0 %1794
        %1796 = vrot.lane.b32.xlu0 %v1773, 12
        %v1797 = vpop.permute.xlu0 %1796
        %1798 = vrot.lane.b32.xlu0 %v1774, 12
        %v1799 = vpop.permute.xlu0 %1798
        %1800 = vrot.lane.b32.xlu0 %v1775, 12
        %v1801 = vpop.permute.xlu0 %1800
        %1802 = vrot.lane.b32.xlu0 %v1776, 12
        %v1803 = vpop.permute.xlu0 %1802
        %1804 = vrot.lane.b32.xlu0 %v1777, 12
        %v1805 = vpop.permute.xlu0 %1804
        %1806 = vrot.lane.b32.xlu0 %v1778, 12
        %v1807 = vpop.permute.xlu0 %1806
        %1808 = vrot.lane.b32.xlu0 %v1779, 12
        %v1809 = vpop.permute.xlu0 %1808
        %1810 = vrot.lane.b32.xlu0 %v1780, 12
        %v1811 = vpop.permute.xlu0 %1810
        %1812 = vrot.lane.b32.xlu0 %v1781, 12
        %v1813 = vpop.permute.xlu0 %1812
        %v1830 = vunpack.c.l.b16 %v1123
        %v1831 = vunpack.c.l.b16 %v1124
        %v1832 = vunpack.c.l.b16 %v1125
        %v1833 = vunpack.c.l.b16 %v1126
        %v1834 = vunpack.c.l.b16 %v1127
        %v1835 = vunpack.c.l.b16 %v1128
        %v1836 = vunpack.c.l.b16 %v1129
        %v1837 = vunpack.c.l.b16 %v1130
        %v1838 = vunpack.c.l.b16 %v1131
        %v1839 = vunpack.c.l.b16 %v1132
        %v1840 = vunpack.c.l.b16 %v1133
        %v1841 = vunpack.c.l.b16 %v1134
        %v1842 = vunpack.c.l.b16 %v1135
        %v1843 = vunpack.c.l.b16 %v1136
        %v1844 = vunpack.c.l.b16 %v1137
        %v1845 = vunpack.c.l.b16 %v1138
        %v1846 = vpack.c.b16 %v1830, %v1830
        %v1847 = vpack.c.b16 %v1831, %v1831
        %v1848 = vpack.c.b16 %v1832, %v1832
        %v1849 = vpack.c.b16 %v1833, %v1833
        %v1850 = vpack.c.b16 %v1834, %v1834
        %v1851 = vpack.c.b16 %v1835, %v1835
        %v1852 = vpack.c.b16 %v1836, %v1836
        %v1853 = vpack.c.b16 %v1837, %v1837
        %v1854 = vpack.c.b16 %v1838, %v1838
        %v1855 = vpack.c.b16 %v1839, %v1839
        %v1856 = vpack.c.b16 %v1840, %v1840
        %v1857 = vpack.c.b16 %v1841, %v1841
        %v1858 = vpack.c.b16 %v1842, %v1842
        %v1859 = vpack.c.b16 %v1843, %v1843
        %v1860 = vpack.c.b16 %v1844, %v1844
        %v1861 = vpack.c.b16 %v1845, %v1845
        %v1863 = vshrl.u32 %v1766, 16
        %v1865 = vshll.u32 %v1766, 16
        %v1867 = vrot.slane %v1865, 1
        %v1868 = vor.u32 %v1863, %v1867
        %v1870 = vshll.u32 %v1846, 16
        %v1872 = vrot.slane %v1870, 1
        %v1873 = vsel %vm1348, %v1868, %v1872
        %v1875 = vshrl.u32 %v1767, 16
        %v1877 = vshll.u32 %v1767, 16
        %v1879 = vrot.slane %v1877, 1
        %v1880 = vor.u32 %v1875, %v1879
        %v1882 = vshll.u32 %v1847, 16
        %v1884 = vrot.slane %v1882, 1
        %v1885 = vsel %vm1348, %v1880, %v1884
        %v1887 = vshrl.u32 %v1768, 16
        %v1889 = vshll.u32 %v1768, 16
        %v1891 = vrot.slane %v1889, 1
        %v1892 = vor.u32 %v1887, %v1891
        %v1894 = vshll.u32 %v1848, 16
        %v1896 = vrot.slane %v1894, 1
        %v1897 = vsel %vm1348, %v1892, %v1896
        %v1899 = vshrl.u32 %v1769, 16
        %v1901 = vshll.u32 %v1769, 16
        %v1903 = vrot.slane %v1901, 1
        %v1904 = vor.u32 %v1899, %v1903
        %v1906 = vshll.u32 %v1849, 16
        %v1908 = vrot.slane %v1906, 1
        %v1909 = vsel %vm1348, %v1904, %v1908
        %v1911 = vshrl.u32 %v1770, 16
        %v1913 = vshll.u32 %v1770, 16
        %v1915 = vrot.slane %v1913, 1
        %v1916 = vor.u32 %v1911, %v1915
        %v1918 = vshll.u32 %v1850, 16
        %v1920 = vrot.slane %v1918, 1
        %v1921 = vsel %vm1348, %v1916, %v1920
        %v1923 = vshrl.u32 %v1771, 16
        %v1925 = vshll.u32 %v1771, 16
        %v1927 = vrot.slane %v1925, 1
        %v1928 = vor.u32 %v1923, %v1927
        %v1930 = vshll.u32 %v1851, 16
        %v1932 = vrot.slane %v1930, 1
        %v1933 = vsel %vm1348, %v1928, %v1932
        %v1935 = vshrl.u32 %v1772, 16
        %v1937 = vshll.u32 %v1772, 16
        %v1939 = vrot.slane %v1937, 1
        %v1940 = vor.u32 %v1935, %v1939
        %v1942 = vshll.u32 %v1852, 16
        %v1944 = vrot.slane %v1942, 1
        %v1945 = vsel %vm1348, %v1940, %v1944
        %v1947 = vshrl.u32 %v1773, 16
        %v1949 = vshll.u32 %v1773, 16
        %v1951 = vrot.slane %v1949, 1
        %v1952 = vor.u32 %v1947, %v1951
        %v1954 = vshll.u32 %v1853, 16
        %v1956 = vrot.slane %v1954, 1
        %v1957 = vsel %vm1348, %v1952, %v1956
        %v1959 = vshrl.u32 %v1774, 16
        %v1961 = vshll.u32 %v1774, 16
        %v1963 = vrot.slane %v1961, 1
        %v1964 = vor.u32 %v1959, %v1963
        %v1966 = vshll.u32 %v1854, 16
        %v1968 = vrot.slane %v1966, 1
        %v1969 = vsel %vm1348, %v1964, %v1968
        %v1971 = vshrl.u32 %v1775, 16
        %v1973 = vshll.u32 %v1775, 16
        %v1975 = vrot.slane %v1973, 1
        %v1976 = vor.u32 %v1971, %v1975
        %v1978 = vshll.u32 %v1855, 16
        %v1980 = vrot.slane %v1978, 1
        %v1981 = vsel %vm1348, %v1976, %v1980
        %v1983 = vshrl.u32 %v1776, 16
        %v1985 = vshll.u32 %v1776, 16
        %v1987 = vrot.slane %v1985, 1
        %v1988 = vor.u32 %v1983, %v1987
        %v1990 = vshll.u32 %v1856, 16
        %v1992 = vrot.slane %v1990, 1
        %v1993 = vsel %vm1348, %v1988, %v1992
        %v1995 = vshrl.u32 %v1777, 16
        %v1997 = vshll.u32 %v1777, 16
        %v1999 = vrot.slane %v1997, 1
        %v2000 = vor.u32 %v1995, %v1999
        %v2002 = vshll.u32 %v1857, 16
        %v2004 = vrot.slane %v2002, 1
        %v2005 = vsel %vm1348, %v2000, %v2004
        %v2007 = vshrl.u32 %v1778, 16
        %v2009 = vshll.u32 %v1778, 16
        %v2011 = vrot.slane %v2009, 1
        %v2012 = vor.u32 %v2007, %v2011
        %v2014 = vshll.u32 %v1858, 16
        %v2016 = vrot.slane %v2014, 1
        %v2017 = vsel %vm1348, %v2012, %v2016
        %v2019 = vshrl.u32 %v1779, 16
        %v2021 = vshll.u32 %v1779, 16
        %v2023 = vrot.slane %v2021, 1
        %v2024 = vor.u32 %v2019, %v2023
        %v2026 = vshll.u32 %v1859, 16
        %v2028 = vrot.slane %v2026, 1
        %v2029 = vsel %vm1348, %v2024, %v2028
        %v2031 = vshrl.u32 %v1780, 16
        %v2033 = vshll.u32 %v1780, 16
        %v2035 = vrot.slane %v2033, 1
        %v2036 = vor.u32 %v2031, %v2035
        %v2038 = vshll.u32 %v1860, 16
        %v2040 = vrot.slane %v2038, 1
        %v2041 = vsel %vm1348, %v2036, %v2040
        %v2043 = vshrl.u32 %v1781, 16
        %v2045 = vshll.u32 %v1781, 16
        %v2047 = vrot.slane %v2045, 1
        %v2048 = vor.u32 %v2043, %v2047
        %v2050 = vshll.u32 %v1861, 16
        %v2052 = vrot.slane %v2050, 1
        %v2053 = vsel %vm1348, %v2048, %v2052
        %2054 = vrot.lane.b32.xlu0 %v1873, 16
        %v2055 = vpop.permute.xlu0 %2054
        %2056 = vrot.lane.b32.xlu0 %v1885, 16
        %v2057 = vpop.permute.xlu0 %2056
        %2058 = vrot.lane.b32.xlu0 %v1897, 16
        %v2059 = vpop.permute.xlu0 %2058
        %2060 = vrot.lane.b32.xlu0 %v1909, 16
        %v2061 = vpop.permute.xlu0 %2060
        %2062 = vrot.lane.b32.xlu0 %v1921, 16
        %v2063 = vpop.permute.xlu0 %2062
        %2064 = vrot.lane.b32.xlu0 %v1933, 16
        %v2065 = vpop.permute.xlu0 %2064
        %2066 = vrot.lane.b32.xlu0 %v1945, 16
        %v2067 = vpop.permute.xlu0 %2066
        %2068 = vrot.lane.b32.xlu0 %v1957, 16
        %v2069 = vpop.permute.xlu0 %2068
        %2070 = vrot.lane.b32.xlu0 %v1969, 16
        %v2071 = vpop.permute.xlu0 %2070
        %2072 = vrot.lane.b32.xlu0 %v1981, 16
        %v2073 = vpop.permute.xlu0 %2072
        %2074 = vrot.lane.b32.xlu0 %v1993, 16
        %v2075 = vpop.permute.xlu0 %2074
        %2076 = vrot.lane.b32.xlu0 %v2005, 16
        %v2077 = vpop.permute.xlu0 %2076
        %2078 = vrot.lane.b32.xlu0 %v2017, 16
        %v2079 = vpop.permute.xlu0 %2078
        %2080 = vrot.lane.b32.xlu0 %v2029, 16
        %v2081 = vpop.permute.xlu0 %2080
        %2082 = vrot.lane.b32.xlu0 %v2041, 16
        %v2083 = vpop.permute.xlu0 %2082
        %2084 = vrot.lane.b32.xlu0 %v2053, 16
        %v2085 = vpop.permute.xlu0 %2084
        %v2102 = vunpack.c.l.b16 %v1139
        %v2103 = vunpack.c.l.b16 %v1140
        %v2104 = vunpack.c.l.b16 %v1141
        %v2105 = vunpack.c.l.b16 %v1142
        %v2106 = vunpack.c.l.b16 %v1143
        %v2107 = vunpack.c.l.b16 %v1144
        %v2108 = vunpack.c.l.b16 %v1145
        %v2109 = vunpack.c.l.b16 %v1146
        %v2110 = vunpack.c.l.b16 %v1147
        %v2111 = vunpack.c.l.b16 %v1148
        %v2112 = vunpack.c.l.b16 %v1149
        %v2113 = vunpack.c.l.b16 %v1150
        %v2114 = vunpack.c.l.b16 %v1151
        %v2115 = vunpack.c.l.b16 %v1152
        %v2116 = vunpack.c.l.b16 %v1153
        %v2117 = vunpack.c.l.b16 %v1154
        %v2118 = vpack.c.b16 %v1735, %v2102
        %v2119 = vpack.c.b16 %v1737, %v2103
        %v2120 = vpack.c.b16 %v1739, %v2104
        %v2121 = vpack.c.b16 %v1741, %v2105
        %v2122 = vpack.c.b16 %v1743, %v2106
        %v2123 = vpack.c.b16 %v1745, %v2107
        %v2124 = vpack.c.b16 %v1747, %v2108
        %v2125 = vpack.c.b16 %v1749, %v2109
        %v2126 = vpack.c.b16 %v1751, %v2110
        %v2127 = vpack.c.b16 %v1753, %v2111
        %v2128 = vpack.c.b16 %v1755, %v2112
        %v2129 = vpack.c.b16 %v1757, %v2113
        %v2130 = vpack.c.b16 %v1759, %v2114
        %v2131 = vpack.c.b16 %v1761, %v2115
        %v2132 = vpack.c.b16 %v1763, %v2116
        %v2133 = vpack.c.b16 %v1765, %v2117
        %v2134 = vrot.slane %v2118, 1
        %v2135 = vrot.slane %v1846, 1
        %v2136 = vsel %vm1621, %v2134, %v2135
        %v2137 = vrot.slane %v2119, 1
        %v2138 = vrot.slane %v1847, 1
        %v2139 = vsel %vm1621, %v2137, %v2138
        %v2140 = vrot.slane %v2120, 1
        %v2141 = vrot.slane %v1848, 1
        %v2142 = vsel %vm1621, %v2140, %v2141
        %v2143 = vrot.slane %v2121, 1
        %v2144 = vrot.slane %v1849, 1
        %v2145 = vsel %vm1621, %v2143, %v2144
        %v2146 = vrot.slane %v2122, 1
        %v2147 = vrot.slane %v1850, 1
        %v2148 = vsel %vm1621, %v2146, %v2147
        %v2149 = vrot.slane %v2123, 1
        %v2150 = vrot.slane %v1851, 1
        %v2151 = vsel %vm1621, %v2149, %v2150
        %v2152 = vrot.slane %v2124, 1
        %v2153 = vrot.slane %v1852, 1
        %v2154 = vsel %vm1621, %v2152, %v2153
        %v2155 = vrot.slane %v2125, 1
        %v2156 = vrot.slane %v1853, 1
        %v2157 = vsel %vm1621, %v2155, %v2156
        %v2158 = vrot.slane %v2126, 1
        %v2159 = vrot.slane %v1854, 1
        %v2160 = vsel %vm1621, %v2158, %v2159
        %v2161 = vrot.slane %v2127, 1
        %v2162 = vrot.slane %v1855, 1
        %v2163 = vsel %vm1621, %v2161, %v2162
        %v2164 = vrot.slane %v2128, 1
        %v2165 = vrot.slane %v1856, 1
        %v2166 = vsel %vm1621, %v2164, %v2165
        %v2167 = vrot.slane %v2129, 1
        %v2168 = vrot.slane %v1857, 1
        %v2169 = vsel %vm1621, %v2167, %v2168
        %v2170 = vrot.slane %v2130, 1
        %v2171 = vrot.slane %v1858, 1
        %v2172 = vsel %vm1621, %v2170, %v2171
        %v2173 = vrot.slane %v2131, 1
        %v2174 = vrot.slane %v1859, 1
        %v2175 = vsel %vm1621, %v2173, %v2174
        %v2176 = vrot.slane %v2132, 1
        %v2177 = vrot.slane %v1860, 1
        %v2178 = vsel %vm1621, %v2176, %v2177
        %v2179 = vrot.slane %v2133, 1
        %v2180 = vrot.slane %v1861, 1
        %v2181 = vsel %vm1621, %v2179, %v2180
        %2182 = vrot.lane.b32.xlu0 %v2136, 20
        %v2183 = vpop.permute.xlu0 %2182
        %2184 = vrot.lane.b32.xlu0 %v2139, 20
        %v2185 = vpop.permute.xlu0 %2184
        %2186 = vrot.lane.b32.xlu0 %v2142, 20
        %v2187 = vpop.permute.xlu0 %2186
        %2188 = vrot.lane.b32.xlu0 %v2145, 20
        %v2189 = vpop.permute.xlu0 %2188
        %2190 = vrot.lane.b32.xlu0 %v2148, 20
        %v2191 = vpop.permute.xlu0 %2190
        %2192 = vrot.lane.b32.xlu0 %v2151, 20
        %v2193 = vpop.permute.xlu0 %2192
        %2194 = vrot.lane.b32.xlu0 %v2154, 20
        %v2195 = vpop.permute.xlu0 %2194
        %2196 = vrot.lane.b32.xlu0 %v2157, 20
        %v2197 = vpop.permute.xlu0 %2196
        %2198 = vrot.lane.b32.xlu0 %v2160, 20
        %v2199 = vpop.permute.xlu0 %2198
        %2200 = vrot.lane.b32.xlu0 %v2163, 20
        %v2201 = vpop.permute.xlu0 %2200
        %2202 = vrot.lane.b32.xlu0 %v2166, 20
        %v2203 = vpop.permute.xlu0 %2202
        %2204 = vrot.lane.b32.xlu0 %v2169, 20
        %v2205 = vpop.permute.xlu0 %2204
        %2206 = vrot.lane.b32.xlu0 %v2172, 20
        %v2207 = vpop.permute.xlu0 %2206
        %2208 = vrot.lane.b32.xlu0 %v2175, 20
        %v2209 = vpop.permute.xlu0 %2208
        %2210 = vrot.lane.b32.xlu0 %v2178, 20
        %v2211 = vpop.permute.xlu0 %2210
        %2212 = vrot.lane.b32.xlu0 %v2181, 20
        %v2213 = vpop.permute.xlu0 %2212
        %v2246 = vunpack.c.l.b16 %v1156
        %v2247 = vunpack.c.l.b16 %v1157
        %v2248 = vunpack.c.l.b16 %v1158
        %v2249 = vunpack.c.l.b16 %v1159
        %v2250 = vunpack.c.l.b16 %v1160
        %v2251 = vunpack.c.l.b16 %v1161
        %v2252 = vunpack.c.l.b16 %v1162
        %v2253 = vunpack.c.l.b16 %v1163
        %v2254 = vunpack.c.l.b16 %v1164
        %v2255 = vunpack.c.l.b16 %v1165
        %v2256 = vunpack.c.l.b16 %v1166
        %v2257 = vunpack.c.l.b16 %v1167
        %v2258 = vunpack.c.l.b16 %v1168
        %v2259 = vunpack.c.l.b16 %v1169
        %v2260 = vunpack.c.l.b16 %v1170
        %v2261 = vunpack.c.l.b16 %v1171
        %v2262 = vunpack.c.l.b16 %v1172
        %v2263 = vunpack.c.l.b16 %v1173
        %v2264 = vunpack.c.l.b16 %v1174
        %v2265 = vunpack.c.l.b16 %v1175
        %v2266 = vunpack.c.l.b16 %v1176
        %v2267 = vunpack.c.l.b16 %v1177
        %v2268 = vunpack.c.l.b16 %v1178
        %v2269 = vunpack.c.l.b16 %v1179
        %v2270 = vunpack.c.l.b16 %v1180
        %v2271 = vunpack.c.l.b16 %v1181
        %v2272 = vunpack.c.l.b16 %v1182
        %v2273 = vunpack.c.l.b16 %v1183
        %v2274 = vunpack.c.l.b16 %v1184
        %v2275 = vunpack.c.l.b16 %v1185
        %v2276 = vunpack.c.l.b16 %v1186
        %v2277 = vunpack.c.l.b16 %v1187
        %v2278 = vpack.c.b16 %v2247, %v2246
        %v2279 = vpack.c.b16 %v2249, %v2248
        %v2280 = vpack.c.b16 %v2251, %v2250
        %v2281 = vpack.c.b16 %v2253, %v2252
        %v2282 = vpack.c.b16 %v2255, %v2254
        %v2283 = vpack.c.b16 %v2257, %v2256
        %v2284 = vpack.c.b16 %v2259, %v2258
        %v2285 = vpack.c.b16 %v2261, %v2260
        %v2286 = vpack.c.b16 %v2263, %v2262
        %v2287 = vpack.c.b16 %v2265, %v2264
        %v2288 = vpack.c.b16 %v2267, %v2266
        %v2289 = vpack.c.b16 %v2269, %v2268
        %v2290 = vpack.c.b16 %v2271, %v2270
        %v2291 = vpack.c.b16 %v2273, %v2272
        %v2292 = vpack.c.b16 %v2275, %v2274
        %v2293 = vpack.c.b16 %v2277, %v2276
        %2294 = vrot.lane.b32.xlu0 %v2278, 24
        %v2295 = vpop.permute.xlu0 %2294
        %2296 = vrot.lane.b32.xlu0 %v2279, 24
        %v2297 = vpop.permute.xlu0 %2296
        %2298 = vrot.lane.b32.xlu0 %v2280, 24
        %v2299 = vpop.permute.xlu0 %2298
        %2300 = vrot.lane.b32.xlu0 %v2281, 24
        %v2301 = vpop.permute.xlu0 %2300
        %2302 = vrot.lane.b32.xlu0 %v2282, 24
        %v2303 = vpop.permute.xlu0 %2302
        %2304 = vrot.lane.b32.xlu0 %v2283, 24
        %v2305 = vpop.permute.xlu0 %2304
        %2306 = vrot.lane.b32.xlu0 %v2284, 24
        %v2307 = vpop.permute.xlu0 %2306
        %2308 = vrot.lane.b32.xlu0 %v2285, 24
        %v2309 = vpop.permute.xlu0 %2308
        %2310 = vrot.lane.b32.xlu0 %v2286, 24
        %v2311 = vpop.permute.xlu0 %2310
        %2312 = vrot.lane.b32.xlu0 %v2287, 24
        %v2313 = vpop.permute.xlu0 %2312
        %2314 = vrot.lane.b32.xlu0 %v2288, 24
        %v2315 = vpop.permute.xlu0 %2314
        %2316 = vrot.lane.b32.xlu0 %v2289, 24
        %v2317 = vpop.permute.xlu0 %2316
        %2318 = vrot.lane.b32.xlu0 %v2290, 24
        %v2319 = vpop.permute.xlu0 %2318
        %2320 = vrot.lane.b32.xlu0 %v2291, 24
        %v2321 = vpop.permute.xlu0 %2320
        %2322 = vrot.lane.b32.xlu0 %v2292, 24
        %v2323 = vpop.permute.xlu0 %2322
        %2324 = vrot.lane.b32.xlu0 %v2293, 24
        %v2325 = vpop.permute.xlu0 %2324
        %v2342 = vunpack.c.l.b16 %v1188
        %v2343 = vunpack.c.l.b16 %v1189
        %v2344 = vunpack.c.l.b16 %v1190
        %v2345 = vunpack.c.l.b16 %v1191
        %v2346 = vunpack.c.l.b16 %v1192
        %v2347 = vunpack.c.l.b16 %v1193
        %v2348 = vunpack.c.l.b16 %v1194
        %v2349 = vunpack.c.l.b16 %v1195
        %v2350 = vunpack.c.l.b16 %v1196
        %v2351 = vunpack.c.l.b16 %v1197
        %v2352 = vunpack.c.l.b16 %v1198
        %v2353 = vunpack.c.l.b16 %v1199
        %v2354 = vunpack.c.l.b16 %v1200
        %v2355 = vunpack.c.l.b16 %v1201
        %v2356 = vunpack.c.l.b16 %v1202
        %v2357 = vunpack.c.l.b16 %v1203
        %v2358 = vpack.c.b16 %v2342, %v2342
        %v2359 = vpack.c.b16 %v2343, %v2343
        %v2360 = vpack.c.b16 %v2344, %v2344
        %v2361 = vpack.c.b16 %v2345, %v2345
        %v2362 = vpack.c.b16 %v2346, %v2346
        %v2363 = vpack.c.b16 %v2347, %v2347
        %v2364 = vpack.c.b16 %v2348, %v2348
        %v2365 = vpack.c.b16 %v2349, %v2349
        %v2366 = vpack.c.b16 %v2350, %v2350
        %v2367 = vpack.c.b16 %v2351, %v2351
        %v2368 = vpack.c.b16 %v2352, %v2352
        %v2369 = vpack.c.b16 %v2353, %v2353
        %v2370 = vpack.c.b16 %v2354, %v2354
        %v2371 = vpack.c.b16 %v2355, %v2355
        %v2372 = vpack.c.b16 %v2356, %v2356
        %v2373 = vpack.c.b16 %v2357, %v2357
        %v2375 = vshrl.u32 %v2278, 16
        %v2377 = vshll.u32 %v2278, 16
        %v2379 = vrot.slane %v2377, 1
        %v2380 = vor.u32 %v2375, %v2379
        %v2382 = vshll.u32 %v2358, 16
        %v2384 = vrot.slane %v2382, 1
        %v2385 = vsel %vm1348, %v2380, %v2384
        %v2387 = vshrl.u32 %v2279, 16
        %v2389 = vshll.u32 %v2279, 16
        %v2391 = vrot.slane %v2389, 1
        %v2392 = vor.u32 %v2387, %v2391
        %v2394 = vshll.u32 %v2359, 16
        %v2396 = vrot.slane %v2394, 1
        %v2397 = vsel %vm1348, %v2392, %v2396
        %v2399 = vshrl.u32 %v2280, 16
        %v2401 = vshll.u32 %v2280, 16
        %v2403 = vrot.slane %v2401, 1
        %v2404 = vor.u32 %v2399, %v2403
        %v2406 = vshll.u32 %v2360, 16
        %v2408 = vrot.slane %v2406, 1
        %v2409 = vsel %vm1348, %v2404, %v2408
        %v2411 = vshrl.u32 %v2281, 16
        %v2413 = vshll.u32 %v2281, 16
        %v2415 = vrot.slane %v2413, 1
        %v2416 = vor.u32 %v2411, %v2415
        %v2418 = vshll.u32 %v2361, 16
        %v2420 = vrot.slane %v2418, 1
        %v2421 = vsel %vm1348, %v2416, %v2420
        %v2423 = vshrl.u32 %v2282, 16
        %v2425 = vshll.u32 %v2282, 16
        %v2427 = vrot.slane %v2425, 1
        %v2428 = vor.u32 %v2423, %v2427
        %v2430 = vshll.u32 %v2362, 16
        %v2432 = vrot.slane %v2430, 1
        %v2433 = vsel %vm1348, %v2428, %v2432
        %v2435 = vshrl.u32 %v2283, 16
        %v2437 = vshll.u32 %v2283, 16
        %v2439 = vrot.slane %v2437, 1
        %v2440 = vor.u32 %v2435, %v2439
        %v2442 = vshll.u32 %v2363, 16
        %v2444 = vrot.slane %v2442, 1
        %v2445 = vsel %vm1348, %v2440, %v2444
        %v2447 = vshrl.u32 %v2284, 16
        %v2449 = vshll.u32 %v2284, 16
        %v2451 = vrot.slane %v2449, 1
        %v2452 = vor.u32 %v2447, %v2451
        %v2454 = vshll.u32 %v2364, 16
        %v2456 = vrot.slane %v2454, 1
        %v2457 = vsel %vm1348, %v2452, %v2456
        %v2459 = vshrl.u32 %v2285, 16
        %v2461 = vshll.u32 %v2285, 16
        %v2463 = vrot.slane %v2461, 1
        %v2464 = vor.u32 %v2459, %v2463
        %v2466 = vshll.u32 %v2365, 16
        %v2468 = vrot.slane %v2466, 1
        %v2469 = vsel %vm1348, %v2464, %v2468
        %v2471 = vshrl.u32 %v2286, 16
        %v2473 = vshll.u32 %v2286, 16
        %v2475 = vrot.slane %v2473, 1
        %v2476 = vor.u32 %v2471, %v2475
        %v2478 = vshll.u32 %v2366, 16
        %v2480 = vrot.slane %v2478, 1
        %v2481 = vsel %vm1348, %v2476, %v2480
        %v2483 = vshrl.u32 %v2287, 16
        %v2485 = vshll.u32 %v2287, 16
        %v2487 = vrot.slane %v2485, 1
        %v2488 = vor.u32 %v2483, %v2487
        %v2490 = vshll.u32 %v2367, 16
        %v2492 = vrot.slane %v2490, 1
        %v2493 = vsel %vm1348, %v2488, %v2492
        %v2495 = vshrl.u32 %v2288, 16
        %v2497 = vshll.u32 %v2288, 16
        %v2499 = vrot.slane %v2497, 1
        %v2500 = vor.u32 %v2495, %v2499
        %v2502 = vshll.u32 %v2368, 16
        %v2504 = vrot.slane %v2502, 1
        %v2505 = vsel %vm1348, %v2500, %v2504
        %v2507 = vshrl.u32 %v2289, 16
        %v2509 = vshll.u32 %v2289, 16
        %v2511 = vrot.slane %v2509, 1
        %v2512 = vor.u32 %v2507, %v2511
        %v2514 = vshll.u32 %v2369, 16
        %v2516 = vrot.slane %v2514, 1
        %v2517 = vsel %vm1348, %v2512, %v2516
        %v2519 = vshrl.u32 %v2290, 16
        %v2521 = vshll.u32 %v2290, 16
        %v2523 = vrot.slane %v2521, 1
        %v2524 = vor.u32 %v2519, %v2523
        %v2526 = vshll.u32 %v2370, 16
        %v2528 = vrot.slane %v2526, 1
        %v2529 = vsel %vm1348, %v2524, %v2528
        %v2531 = vshrl.u32 %v2291, 16
        %v2533 = vshll.u32 %v2291, 16
        %v2535 = vrot.slane %v2533, 1
        %v2536 = vor.u32 %v2531, %v2535
        %v2538 = vshll.u32 %v2371, 16
        %v2540 = vrot.slane %v2538, 1
        %v2541 = vsel %vm1348, %v2536, %v2540
        %v2543 = vshrl.u32 %v2292, 16
        %v2545 = vshll.u32 %v2292, 16
        %v2547 = vrot.slane %v2545, 1
        %v2548 = vor.u32 %v2543, %v2547
        %v2550 = vshll.u32 %v2372, 16
        %v2552 = vrot.slane %v2550, 1
        %v2553 = vsel %vm1348, %v2548, %v2552
        %v2555 = vshrl.u32 %v2293, 16
        %v2557 = vshll.u32 %v2293, 16
        %v2559 = vrot.slane %v2557, 1
        %v2560 = vor.u32 %v2555, %v2559
        %v2562 = vshll.u32 %v2373, 16
        %v2564 = vrot.slane %v2562, 1
        %v2565 = vsel %vm1348, %v2560, %v2564
        %2566 = vrot.lane.b32.xlu0 %v2385, 28
        %v2567 = vpop.permute.xlu0 %2566
        %2568 = vrot.lane.b32.xlu0 %v2397, 28
        %v2569 = vpop.permute.xlu0 %2568
        %2570 = vrot.lane.b32.xlu0 %v2409, 28
        %v2571 = vpop.permute.xlu0 %2570
        %2572 = vrot.lane.b32.xlu0 %v2421, 28
        %v2573 = vpop.permute.xlu0 %2572
        %2574 = vrot.lane.b32.xlu0 %v2433, 28
        %v2575 = vpop.permute.xlu0 %2574
        %2576 = vrot.lane.b32.xlu0 %v2445, 28
        %v2577 = vpop.permute.xlu0 %2576
        %2578 = vrot.lane.b32.xlu0 %v2457, 28
        %v2579 = vpop.permute.xlu0 %2578
        %2580 = vrot.lane.b32.xlu0 %v2469, 28
        %v2581 = vpop.permute.xlu0 %2580
        %2582 = vrot.lane.b32.xlu0 %v2481, 28
        %v2583 = vpop.permute.xlu0 %2582
        %2584 = vrot.lane.b32.xlu0 %v2493, 28
        %v2585 = vpop.permute.xlu0 %2584
        %2586 = vrot.lane.b32.xlu0 %v2505, 28
        %v2587 = vpop.permute.xlu0 %2586
        %2588 = vrot.lane.b32.xlu0 %v2517, 28
        %v2589 = vpop.permute.xlu0 %2588
        %2590 = vrot.lane.b32.xlu0 %v2529, 28
        %v2591 = vpop.permute.xlu0 %2590
        %2592 = vrot.lane.b32.xlu0 %v2541, 28
        %v2593 = vpop.permute.xlu0 %2592
        %2594 = vrot.lane.b32.xlu0 %v2553, 28
        %v2595 = vpop.permute.xlu0 %2594
        %2596 = vrot.lane.b32.xlu0 %v2565, 28
        %v2597 = vpop.permute.xlu0 %2596
        %v2614 = vunpack.c.l.b16 %v1204
        %v2615 = vunpack.c.l.b16 %v1205
        %v2616 = vunpack.c.l.b16 %v1206
        %v2617 = vunpack.c.l.b16 %v1207
        %v2618 = vunpack.c.l.b16 %v1208
        %v2619 = vunpack.c.l.b16 %v1209
        %v2620 = vunpack.c.l.b16 %v1210
        %v2621 = vunpack.c.l.b16 %v1211
        %v2622 = vunpack.c.l.b16 %v1212
        %v2623 = vunpack.c.l.b16 %v1213
        %v2624 = vunpack.c.l.b16 %v1214
        %v2625 = vunpack.c.l.b16 %v1215
        %v2626 = vunpack.c.l.b16 %v1216
        %v2627 = vunpack.c.l.b16 %v1217
        %v2628 = vunpack.c.l.b16 %v1218
        %v2629 = vunpack.c.l.b16 %v1219
        %v2630 = vpack.c.b16 %v2247, %v2614
        %v2631 = vpack.c.b16 %v2249, %v2615
        %v2632 = vpack.c.b16 %v2251, %v2616
        %v2633 = vpack.c.b16 %v2253, %v2617
        %v2634 = vpack.c.b16 %v2255, %v2618
        %v2635 = vpack.c.b16 %v2257, %v2619
        %v2636 = vpack.c.b16 %v2259, %v2620
        %v2637 = vpack.c.b16 %v2261, %v2621
        %v2638 = vpack.c.b16 %v2263, %v2622
        %v2639 = vpack.c.b16 %v2265, %v2623
        %v2640 = vpack.c.b16 %v2267, %v2624
        %v2641 = vpack.c.b16 %v2269, %v2625
        %v2642 = vpack.c.b16 %v2271, %v2626
        %v2643 = vpack.c.b16 %v2273, %v2627
        %v2644 = vpack.c.b16 %v2275, %v2628
        %v2645 = vpack.c.b16 %v2277, %v2629
        %v2646 = vrot.slane %v2630, 1
        %v2647 = vrot.slane %v2358, 1
        %v2648 = vsel %vm1621, %v2646, %v2647
        %v2649 = vrot.slane %v2631, 1
        %v2650 = vrot.slane %v2359, 1
        %v2651 = vsel %vm1621, %v2649, %v2650
        %v2652 = vrot.slane %v2632, 1
        %v2653 = vrot.slane %v2360, 1
        %v2654 = vsel %vm1621, %v2652, %v2653
        %v2655 = vrot.slane %v2633, 1
        %v2656 = vrot.slane %v2361, 1
        %v2657 = vsel %vm1621, %v2655, %v2656
        %v2658 = vrot.slane %v2634, 1
        %v2659 = vrot.slane %v2362, 1
        %v2660 = vsel %vm1621, %v2658, %v2659
        %v2661 = vrot.slane %v2635, 1
        %v2662 = vrot.slane %v2363, 1
        %v2663 = vsel %vm1621, %v2661, %v2662
        %v2664 = vrot.slane %v2636, 1
        %v2665 = vrot.slane %v2364, 1
        %v2666 = vsel %vm1621, %v2664, %v2665
        %v2667 = vrot.slane %v2637, 1
        %v2668 = vrot.slane %v2365, 1
        %v2669 = vsel %vm1621, %v2667, %v2668
        %v2670 = vrot.slane %v2638, 1
        %v2671 = vrot.slane %v2366, 1
        %v2672 = vsel %vm1621, %v2670, %v2671
        %v2673 = vrot.slane %v2639, 1
        %v2674 = vrot.slane %v2367, 1
        %v2675 = vsel %vm1621, %v2673, %v2674
        %v2676 = vrot.slane %v2640, 1
        %v2677 = vrot.slane %v2368, 1
        %v2678 = vsel %vm1621, %v2676, %v2677
        %v2679 = vrot.slane %v2641, 1
        %v2680 = vrot.slane %v2369, 1
        %v2681 = vsel %vm1621, %v2679, %v2680
        %v2682 = vrot.slane %v2642, 1
        %v2683 = vrot.slane %v2370, 1
        %v2684 = vsel %vm1621, %v2682, %v2683
        %v2685 = vrot.slane %v2643, 1
        %v2686 = vrot.slane %v2371, 1
        %v2687 = vsel %vm1621, %v2685, %v2686
        %v2688 = vrot.slane %v2644, 1
        %v2689 = vrot.slane %v2372, 1
        %v2690 = vsel %vm1621, %v2688, %v2689
        %v2691 = vrot.slane %v2645, 1
        %v2692 = vrot.slane %v2373, 1
        %v2693 = vsel %vm1621, %v2691, %v2692
        %2694 = vrot.lane.b32.xlu0 %v2648, 32
        %v2695 = vpop.permute.xlu0 %2694
        %2696 = vrot.lane.b32.xlu0 %v2651, 32
        %v2697 = vpop.permute.xlu0 %2696
        %2698 = vrot.lane.b32.xlu0 %v2654, 32
        %v2699 = vpop.permute.xlu0 %2698
        %2700 = vrot.lane.b32.xlu0 %v2657, 32
        %v2701 = vpop.permute.xlu0 %2700
        %2702 = vrot.lane.b32.xlu0 %v2660, 32
        %v2703 = vpop.permute.xlu0 %2702
        %2704 = vrot.lane.b32.xlu0 %v2663, 32
        %v2705 = vpop.permute.xlu0 %2704
        %2706 = vrot.lane.b32.xlu0 %v2666, 32
        %v2707 = vpop.permute.xlu0 %2706
        %2708 = vrot.lane.b32.xlu0 %v2669, 32
        %v2709 = vpop.permute.xlu0 %2708
        %2710 = vrot.lane.b32.xlu0 %v2672, 32
        %v2711 = vpop.permute.xlu0 %2710
        %2712 = vrot.lane.b32.xlu0 %v2675, 32
        %v2713 = vpop.permute.xlu0 %2712
        %2714 = vrot.lane.b32.xlu0 %v2678, 32
        %v2715 = vpop.permute.xlu0 %2714
        %2716 = vrot.lane.b32.xlu0 %v2681, 32
        %v2717 = vpop.permute.xlu0 %2716
        %2718 = vrot.lane.b32.xlu0 %v2684, 32
        %v2719 = vpop.permute.xlu0 %2718
        %2720 = vrot.lane.b32.xlu0 %v2687, 32
        %v2721 = vpop.permute.xlu0 %2720
        %2722 = vrot.lane.b32.xlu0 %v2690, 32
        %v2723 = vpop.permute.xlu0 %2722
        %2724 = vrot.lane.b32.xlu0 %v2693, 32
        %v2725 = vpop.permute.xlu0 %2724
        %vm2726 = vcmask 31744
        %v2728 = vsel %vm2726, %v1284, %v1542
        %v2730 = vsel %vm2726, %v1285, %v1544
        %v2732 = vsel %vm2726, %v1286, %v1546
        %v2734 = vsel %vm2726, %v1287, %v1548
        %v2736 = vsel %vm2726, %v1288, %v1550
        %v2738 = vsel %vm2726, %v1289, %v1552
        %v2740 = vsel %vm2726, %v1290, %v1554
        %v2742 = vsel %vm2726, %v1291, %v1556
        %v2744 = vsel %vm2726, %v1292, %v1558
        %v2746 = vsel %vm2726, %v1293, %v1560
        %v2748 = vsel %vm2726, %v1294, %v1562
        %v2750 = vsel %vm2726, %v1295, %v1564
        %v2752 = vsel %vm2726, %v1296, %v1566
        %v2754 = vsel %vm2726, %v1297, %v1568
        %v2756 = vsel %vm2726, %v1298, %v1570
        %v2758 = vsel %vm2726, %v1299, %v1572
        %vm2759 = vcmask 64512
        %v2761 = vsel %vm2759, %v2728, %v1671
        %v2763 = vsel %vm2759, %v2730, %v1673
        %v2765 = vsel %vm2759, %v2732, %v1675
        %v2767 = vsel %vm2759, %v2734, %v1677
        %v2769 = vsel %vm2759, %v2736, %v1679
        %v2771 = vsel %vm2759, %v2738, %v1681
        %v2773 = vsel %vm2759, %v2740, %v1683
        %v2775 = vsel %vm2759, %v2742, %v1685
        %v2777 = vsel %vm2759, %v2744, %v1687
        %v2779 = vsel %vm2759, %v2746, %v1689
        %v2781 = vsel %vm2759, %v2748, %v1691
        %v2783 = vsel %vm2759, %v2750, %v1693
        %v2785 = vsel %vm2759, %v2752, %v1695
        %v2787 = vsel %vm2759, %v2754, %v1697
        %v2789 = vsel %vm2759, %v2756, %v1699
        %v2791 = vsel %vm2759, %v2758, %v1701
        %vm2792 = vcmask 97280
        %v2794 = vsel %vm2792, %v2761, %v1783
        %v2796 = vsel %vm2792, %v2763, %v1785
        %v2798 = vsel %vm2792, %v2765, %v1787
        %v2800 = vsel %vm2792, %v2767, %v1789
        %v2802 = vsel %vm2792, %v2769, %v1791
        %v2804 = vsel %vm2792, %v2771, %v1793
        %v2806 = vsel %vm2792, %v2773, %v1795
        %v2808 = vsel %vm2792, %v2775, %v1797
        %v2810 = vsel %vm2792, %v2777, %v1799
        %v2812 = vsel %vm2792, %v2779, %v1801
        %v2814 = vsel %vm2792, %v2781, %v1803
        %v2816 = vsel %vm2792, %v2783, %v1805
        %v2818 = vsel %vm2792, %v2785, %v1807
        %v2820 = vsel %vm2792, %v2787, %v1809
        %v2822 = vsel %vm2792, %v2789, %v1811
        %v2824 = vsel %vm2792, %v2791, %v1813
        %vm2825 = vcmask 130048
        %v2827 = vsel %vm2825, %v2794, %v2055
        %v2829 = vsel %vm2825, %v2796, %v2057
        %v2831 = vsel %vm2825, %v2798, %v2059
        %v2833 = vsel %vm2825, %v2800, %v2061
        %v2835 = vsel %vm2825, %v2802, %v2063
        %v2837 = vsel %vm2825, %v2804, %v2065
        %v2839 = vsel %vm2825, %v2806, %v2067
        %v2841 = vsel %vm2825, %v2808, %v2069
        %v2843 = vsel %vm2825, %v2810, %v2071
        %v2845 = vsel %vm2825, %v2812, %v2073
        %v2847 = vsel %vm2825, %v2814, %v2075
        %v2849 = vsel %vm2825, %v2816, %v2077
        %v2851 = vsel %vm2825, %v2818, %v2079
        %v2853 = vsel %vm2825, %v2820, %v2081
        %v2855 = vsel %vm2825, %v2822, %v2083
        %v2857 = vsel %vm2825, %v2824, %v2085
        %vm2858 = vcmask 162816
        %v2860 = vsel %vm2858, %v2827, %v2183
        %v2862 = vsel %vm2858, %v2829, %v2185
        %v2864 = vsel %vm2858, %v2831, %v2187
        %v2866 = vsel %vm2858, %v2833, %v2189
        %v2868 = vsel %vm2858, %v2835, %v2191
        %v2870 = vsel %vm2858, %v2837, %v2193
        %v2872 = vsel %vm2858, %v2839, %v2195
        %v2874 = vsel %vm2858, %v2841, %v2197
        %v2876 = vsel %vm2858, %v2843, %v2199
        %v2878 = vsel %vm2858, %v2845, %v2201
        %v2880 = vsel %vm2858, %v2847, %v2203
        %v2882 = vsel %vm2858, %v2849, %v2205
        %v2884 = vsel %vm2858, %v2851, %v2207
        %v2886 = vsel %vm2858, %v2853, %v2209
        %v2888 = vsel %vm2858, %v2855, %v2211
        %v2890 = vsel %vm2858, %v2857, %v2213
        %vm2891 = vcmask 195584
        %v2893 = vsel %vm2891, %v2860, %v2295
        %v2895 = vsel %vm2891, %v2862, %v2297
        %v2897 = vsel %vm2891, %v2864, %v2299
        %v2899 = vsel %vm2891, %v2866, %v2301
        %v2901 = vsel %vm2891, %v2868, %v2303
        %v2903 = vsel %vm2891, %v2870, %v2305
        %v2905 = vsel %vm2891, %v2872, %v2307
        %v2907 = vsel %vm2891, %v2874, %v2309
        %v2909 = vsel %vm2891, %v2876, %v2311
        %v2911 = vsel %vm2891, %v2878, %v2313
        %v2913 = vsel %vm2891, %v2880, %v2315
        %v2915 = vsel %vm2891, %v2882, %v2317
        %v2917 = vsel %vm2891, %v2884, %v2319
        %v2919 = vsel %vm2891, %v2886, %v2321
        %v2921 = vsel %vm2891, %v2888, %v2323
        %v2923 = vsel %vm2891, %v2890, %v2325
        %vm2924 = vcmask 228352
        %v2926 = vsel %vm2924, %v2893, %v2567
        %v2928 = vsel %vm2924, %v2895, %v2569
        %v2930 = vsel %vm2924, %v2897, %v2571
        %v2932 = vsel %vm2924, %v2899, %v2573
        %v2934 = vsel %vm2924, %v2901, %v2575
        %v2936 = vsel %vm2924, %v2903, %v2577
        %v2938 = vsel %vm2924, %v2905, %v2579
        %v2940 = vsel %vm2924, %v2907, %v2581
        %v2942 = vsel %vm2924, %v2909, %v2583
        %v2944 = vsel %vm2924, %v2911, %v2585
        %v2946 = vsel %vm2924, %v2913, %v2587
        %v2948 = vsel %vm2924, %v2915, %v2589
        %v2950 = vsel %vm2924, %v2917, %v2591
        %v2952 = vsel %vm2924, %v2919, %v2593
        %v2954 = vsel %vm2924, %v2921, %v2595
        %v2956 = vsel %vm2924, %v2923, %v2597
        %vm2957 = vcmask 261120
        %v2959 = vsel %vm2957, %v2926, %v2695
        %v2961 = vsel %vm2957, %v2928, %v2697
        %v2963 = vsel %vm2957, %v2930, %v2699
        %v2965 = vsel %vm2957, %v2932, %v2701
        %v2967 = vsel %vm2957, %v2934, %v2703
        %v2969 = vsel %vm2957, %v2936, %v2705
        %v2971 = vsel %vm2957, %v2938, %v2707
        %v2973 = vsel %vm2957, %v2940, %v2709
        %v2975 = vsel %vm2957, %v2942, %v2711
        %v2977 = vsel %vm2957, %v2944, %v2713
        %v2979 = vsel %vm2957, %v2946, %v2715
        %v2981 = vsel %vm2957, %v2948, %v2717
        %v2983 = vsel %vm2957, %v2950, %v2719
        %v2985 = vsel %vm2957, %v2952, %v2721
        %v2987 = vsel %vm2957, %v2954, %v2723
        %v2989 = vsel %vm2957, %v2956, %v2725
        %v2990 = vld [vmem:[#allocation2] sm:$0xff]
        %v2991 = vld [vmem:[#allocation2 + $0x8] sm:$0xff]
        %v2992 = vld [vmem:[#allocation2 + $0x10] sm:$0xff]
        %v2993 = vld [vmem:[#allocation2 + $0x18] sm:$0xff]
        %v2994 = vld [vmem:[#allocation2 + $0x20] sm:$0xff]
        %v2995 = vld [vmem:[#allocation2 + $0x28] sm:$0xff]
        %v2996 = vld [vmem:[#allocation2 + $0x30] sm:$0xff]
        %v2997 = vld [vmem:[#allocation2 + $0x38] sm:$0xff]
        %v2998 = vld [vmem:[#allocation2 + $0x40] sm:$0xff]
        %v2999 = vld [vmem:[#allocation2 + $0x48] sm:$0xff]
        %v3000 = vld [vmem:[#allocation2 + $0x50] sm:$0xff]
        %v3001 = vld [vmem:[#allocation2 + $0x58] sm:$0xff]
        %v3002 = vld [vmem:[#allocation2 + $0x60] sm:$0xff]
        %v3003 = vld [vmem:[#allocation2 + $0x68] sm:$0xff]
        %v3004 = vld [vmem:[#allocation2 + $0x70] sm:$0xff]
        %v3005 = vld [vmem:[#allocation2 + $0x78] sm:$0xff]
        %v3006 = vld [vmem:[#allocation2 + $0x80] sm:$0xff]
        %v3007 = vld [vmem:[#allocation2 + $0x88] sm:$0xff]
        %v3008 = vld [vmem:[#allocation2 + $0x90] sm:$0xff]
        %v3009 = vld [vmem:[#allocation2 + $0x98] sm:$0xff]
        %v3010 = vld [vmem:[#allocation2 + $0xa0] sm:$0xff]
        %v3011 = vld [vmem:[#allocation2 + $0xa8] sm:$0xff]
        %v3012 = vld [vmem:[#allocation2 + $0xb0] sm:$0xff]
        %v3013 = vld [vmem:[#allocation2 + $0xb8] sm:$0xff]
        %v3014 = vld [vmem:[#allocation2 + $0xc0] sm:$0xff]
        %v3015 = vld [vmem:[#allocation2 + $0xc8] sm:$0xff]
        %v3016 = vld [vmem:[#allocation2 + $0xd0] sm:$0xff]
        %v3017 = vld [vmem:[#allocation2 + $0xd8] sm:$0xff]
        %v3018 = vld [vmem:[#allocation2 + $0xe0] sm:$0xff]
        %v3019 = vld [vmem:[#allocation2 + $0xe8] sm:$0xff]
        %v3020 = vld [vmem:[#allocation2 + $0xf0] sm:$0xff]
        %v3021 = vld [vmem:[#allocation2 + $0xf8] sm:$0xff]
        %v3022 = vld [vmem:[%s331] sm:$0xf]
        %v3023 = vld [vmem:[%s331 + $0x4] sm:$0xf]
        %v3024 = vld [vmem:[%s331 + $0x8] sm:$0xf]
        %v3025 = vld [vmem:[%s331 + $0xc] sm:$0xf]
        %v3026 = vld [vmem:[%s331 + $0x10] sm:$0x3]
        %v3032 = vunpack.c.l.b16 %v3022
        %v3033 = vunpack.c.l.b16 %v3023
        %v3034 = vunpack.c.l.b16 %v3024
        %v3035 = vunpack.c.l.b16 %v3025
        %v3036 = vunpack.c.l.b16 %v3026
        %v3037 = vpack.c.b16 %v3033, %v3032
        %v3038 = vpack.c.b16 %v3035, %v3034
        %v3039 = vpack.c.b16 %v3036, %v3036
        %vm3042 = vcmask 293888
        %v3043 = vsel %vm3042, %v2959, 0
        %v3045 = vsel %vm3042, %v2961, 0
        %v3047 = vsel %vm3042, %v2963, 0
        %v3049 = vsel %vm3042, %v2965, 0
        %v3051 = vsel %vm3042, %v2967, 0
        %v3053 = vsel %vm3042, %v2969, 0
        %v3055 = vsel %vm3042, %v2971, 0
        %v3057 = vsel %vm3042, %v2973, 0
        %v3059 = vsel %vm3042, %v2975, 0
        %v3061 = vsel %vm3042, %v2977, 0
        %v3063 = vsel %vm3042, %v2979, 0
        %v3065 = vsel %vm3042, %v2981, 0
        %v3067 = vsel %vm3042, %v2983, 0
        %v3069 = vsel %vm3042, %v2985, 0
        %v3071 = vsel %vm3042, %v2987, 0
        %v3073 = vsel %vm3042, %v2989, 0
        %vm3075 = vcmask 1041408
        %v3077 = vsel %vm3075, %v3039, 0
        %3079 = vmatprep.subr.bf16.mxu0 0
        %3080 = vmatpush1.bf16.msra.mxu0 0
        %3081 = vmatprep.subr.bf16.mxu0 0
        %3082 = vmatpush1.bf16.msra.mxu0 0
        %3083 = vmatprep.subr.bf16.mxu0 0
        %3084 = vmatpush1.bf16.msra.mxu0 0
        %3085 = vmatprep.subr.bf16.mxu0 0
        %3086 = vmatpush1.bf16.msra.mxu0 0
        %3087 = vmatprep.subr.bf16.mxu0 0
        %3088 = vmatpush1.bf16.msra.mxu0 0
        %3089 = vmatprep.subr.bf16.mxu0 0
        %3090 = vmatpush1.bf16.msra.mxu0 %v3077
        %3091 = vmatprep.subr.bf16.mxu0 0
        %3092 = vmatpush1.bf16.msra.mxu0 %v3038
        %3093 = vmatprep.subr.bf16.mxu0 0
        %3094 = vmatpush1.bf16.msra.mxu0 %v3037
        %3095 = vmatprep.subr.bf16.mxu0 0
        %3096 = vmatpush2.bf16.msra.mxu0 0
        %3097 = vmatprep.subr.bf16.mxu0 0
        %3098 = vmatpush2.bf16.msra.mxu0 0
        %3099 = vmatprep.subr.bf16.mxu0 0
        %3100 = vmatpush2.bf16.msra.mxu0 0
        %3101 = vmatprep.subr.bf16.mxu0 0
        %3102 = vmatpush2.bf16.msra.mxu0 0
        %3103 = vmatprep.subr.bf16.mxu0 0
        %3104 = vmatpush2.bf16.msra.mxu0 0
        %3105 = vmatprep.subr.bf16.mxu0 0
        %3106 = vmatpush2.bf16.msra.mxu0 0
        %3107 = vmatprep.subr.bf16.mxu0 0
        %3108 = vmatpush2.bf16.msra.mxu0 0
        %3109 = vmatprep.subr.bf16.mxu0 0
        %3110 = vmatpush2.bf16.msra.mxu0 0
        %3111 = vmatprep.mubr.bf16.mxu0 0
        %3112 = vmatmul.mubr.bf16.gmra.mxu0 %v3043
        %v3113 = vpop.f32.mrf.mxu0
        %v3114 = vadd.f32 0.0, %v3113
        %v3115 = vpop.f32.mrf.mxu0
        %v3116 = vpop.f32.mrf.mxu0
        %v3117 = vadd.f32 0.0, %v3116
        %v3118 = vpop.f32.mrf.mxu0
        %3119 = vmatprep.mubr.bf16.mxu0 0
        %3120 = vmatmul.mubr.bf16.gmra.mxu0 %v3045
        %v3121 = vpop.f32.mrf.mxu0
        %v3122 = vadd.f32 0.0, %v3121
        %v3123 = vpop.f32.mrf.mxu0
        %v3124 = vpop.f32.mrf.mxu0
        %v3125 = vadd.f32 0.0, %v3124
        %v3126 = vpop.f32.mrf.mxu0
        %3127 = vmatprep.mubr.bf16.mxu0 0
        %3128 = vmatmul.mubr.bf16.gmra.mxu0 %v3047
        %v3129 = vpop.f32.mrf.mxu0
        %v3130 = vadd.f32 0.0, %v3129
        %v3131 = vpop.f32.mrf.mxu0
        %v3132 = vpop.f32.mrf.mxu0
        %v3133 = vadd.f32 0.0, %v3132
        %v3134 = vpop.f32.mrf.mxu0
        %3135 = vmatprep.mubr.bf16.mxu0 0
        %3136 = vmatmul.mubr.bf16.gmra.mxu0 %v3049
        %v3137 = vpop.f32.mrf.mxu0
        %v3138 = vadd.f32 0.0, %v3137
        %v3139 = vpop.f32.mrf.mxu0
        %v3140 = vpop.f32.mrf.mxu0
        %v3141 = vadd.f32 0.0, %v3140
        %v3142 = vpop.f32.mrf.mxu0
        %3143 = vmatprep.mubr.bf16.mxu0 0
        %3144 = vmatmul.mubr.bf16.gmra.mxu0 %v3051
        %v3145 = vpop.f32.mrf.mxu0
        %v3146 = vadd.f32 0.0, %v3145
        %v3147 = vpop.f32.mrf.mxu0
        %v3148 = vpop.f32.mrf.mxu0
        %v3149 = vadd.f32 0.0, %v3148
        %v3150 = vpop.f32.mrf.mxu0
        %3151 = vmatprep.mubr.bf16.mxu0 0
        %3152 = vmatmul.mubr.bf16.gmra.mxu0 %v3053
        %v3153 = vpop.f32.mrf.mxu0
        %v3154 = vadd.f32 0.0, %v3153
        %v3155 = vpop.f32.mrf.mxu0
        %v3156 = vpop.f32.mrf.mxu0
        %v3157 = vadd.f32 0.0, %v3156
        %v3158 = vpop.f32.mrf.mxu0
        %3159 = vmatprep.mubr.bf16.mxu0 0
        %3160 = vmatmul.mubr.bf16.gmra.mxu0 %v3055
        %v3161 = vpop.f32.mrf.mxu0
        %v3162 = vadd.f32 0.0, %v3161
        %v3163 = vpop.f32.mrf.mxu0
        %v3164 = vpop.f32.mrf.mxu0
        %v3165 = vadd.f32 0.0, %v3164
        %v3166 = vpop.f32.mrf.mxu0
        %3167 = vmatprep.mubr.bf16.mxu0 0
        %3168 = vmatmul.mubr.bf16.gmra.mxu0 %v3057
        %v3169 = vpop.f32.mrf.mxu0
        %v3170 = vadd.f32 0.0, %v3169
        %v3171 = vpop.f32.mrf.mxu0
        %v3172 = vpop.f32.mrf.mxu0
        %v3173 = vadd.f32 0.0, %v3172
        %v3174 = vpop.f32.mrf.mxu0
        %3175 = vmatprep.mubr.bf16.mxu0 0
        %3176 = vmatmul.mubr.bf16.gmra.mxu0 %v3059
        %v3177 = vpop.f32.mrf.mxu0
        %v3178 = vadd.f32 0.0, %v3177
        %v3179 = vpop.f32.mrf.mxu0
        %v3180 = vpop.f32.mrf.mxu0
        %v3181 = vadd.f32 0.0, %v3180
        %v3182 = vpop.f32.mrf.mxu0
        %3183 = vmatprep.mubr.bf16.mxu0 0
        %3184 = vmatmul.mubr.bf16.gmra.mxu0 %v3061
        %v3185 = vpop.f32.mrf.mxu0
        %v3186 = vadd.f32 0.0, %v3185
        %v3187 = vpop.f32.mrf.mxu0
        %v3188 = vpop.f32.mrf.mxu0
        %v3189 = vadd.f32 0.0, %v3188
        %v3190 = vpop.f32.mrf.mxu0
        %3191 = vmatprep.mubr.bf16.mxu0 0
        %3192 = vmatmul.mubr.bf16.gmra.mxu0 %v3063
        %v3193 = vpop.f32.mrf.mxu0
        %v3194 = vadd.f32 0.0, %v3193
        %v3195 = vpop.f32.mrf.mxu0
        %v3196 = vpop.f32.mrf.mxu0
        %v3197 = vadd.f32 0.0, %v3196
        %v3198 = vpop.f32.mrf.mxu0
        %3199 = vmatprep.mubr.bf16.mxu0 0
        %3200 = vmatmul.mubr.bf16.gmra.mxu0 %v3065
        %v3201 = vpop.f32.mrf.mxu0
        %v3202 = vadd.f32 0.0, %v3201
        %v3203 = vpop.f32.mrf.mxu0
        %v3204 = vpop.f32.mrf.mxu0
        %v3205 = vadd.f32 0.0, %v3204
        %v3206 = vpop.f32.mrf.mxu0
        %3207 = vmatprep.mubr.bf16.mxu0 0
        %3208 = vmatmul.mubr.bf16.gmra.mxu0 %v3067
        %v3209 = vpop.f32.mrf.mxu0
        %v3210 = vadd.f32 0.0, %v3209
        %v3211 = vpop.f32.mrf.mxu0
        %v3212 = vpop.f32.mrf.mxu0
        %v3213 = vadd.f32 0.0, %v3212
        %v3214 = vpop.f32.mrf.mxu0
        %3215 = vmatprep.mubr.bf16.mxu0 0
        %3216 = vmatmul.mubr.bf16.gmra.mxu0 %v3069
        %v3217 = vpop.f32.mrf.mxu0
        %v3218 = vadd.f32 0.0, %v3217
        %v3219 = vpop.f32.mrf.mxu0
        %v3220 = vpop.f32.mrf.mxu0
        %v3221 = vadd.f32 0.0, %v3220
        %v3222 = vpop.f32.mrf.mxu0
        %3223 = vmatprep.mubr.bf16.mxu0 0
        %3224 = vmatmul.mubr.bf16.gmra.mxu0 %v3071
        %v3225 = vpop.f32.mrf.mxu0
        %v3226 = vadd.f32 0.0, %v3225
        %v3227 = vpop.f32.mrf.mxu0
        %v3228 = vpop.f32.mrf.mxu0
        %v3229 = vadd.f32 0.0, %v3228
        %v3230 = vpop.f32.mrf.mxu0
        %3231 = vmatprep.mubr.bf16.mxu0 0
        %3232 = vmatmul.mubr.bf16.gmra.mxu0 %v3073
        %v3233 = vpop.f32.mrf.mxu0
        %v3234 = vadd.f32 0.0, %v3233
        %v3235 = vpop.f32.mrf.mxu0
        %v3236 = vpop.f32.mrf.mxu0
        %v3237 = vadd.f32 0.0, %v3236
        %v3238 = vpop.f32.mrf.mxu0
        %3239 = vdwg.mxu0
        %v3240 = vadd.f32 %v2990, %v3114
        %v3241 = vadd.f32 %v2991, %v3117
        %v3242 = vadd.f32 %v2992, %v3122
        %v3243 = vadd.f32 %v2993, %v3125
        %v3244 = vadd.f32 %v2994, %v3130
        %v3245 = vadd.f32 %v2995, %v3133
        %v3246 = vadd.f32 %v2996, %v3138
        %v3247 = vadd.f32 %v2997, %v3141
        %v3248 = vadd.f32 %v2998, %v3146
        %v3249 = vadd.f32 %v2999, %v3149
        %v3250 = vadd.f32 %v3000, %v3154
        %v3251 = vadd.f32 %v3001, %v3157
        %v3252 = vadd.f32 %v3002, %v3162
        %v3253 = vadd.f32 %v3003, %v3165
        %v3254 = vadd.f32 %v3004, %v3170
        %v3255 = vadd.f32 %v3005, %v3173
        %v3256 = vadd.f32 %v3006, %v3178
        %v3257 = vadd.f32 %v3007, %v3181
        %v3258 = vadd.f32 %v3008, %v3186
        %v3259 = vadd.f32 %v3009, %v3189
        %v3260 = vadd.f32 %v3010, %v3194
        %v3261 = vadd.f32 %v3011, %v3197
        %v3262 = vadd.f32 %v3012, %v3202
        %v3263 = vadd.f32 %v3013, %v3205
        %v3264 = vadd.f32 %v3014, %v3210
        %v3265 = vadd.f32 %v3015, %v3213
        %v3266 = vadd.f32 %v3016, %v3218
        %v3267 = vadd.f32 %v3017, %v3221
        %v3268 = vadd.f32 %v3018, %v3226
        %v3269 = vadd.f32 %v3019, %v3229
        %v3270 = vadd.f32 %v3020, %v3234
        %v3271 = vadd.f32 %v3021, %v3237
        %3272 = vst.msk [vmem:[#allocation2] sm:$0xff] %vm2957, %v3240
        %3273 = vst.msk [vmem:[#allocation2 + $0x8] sm:$0xff] %vm2957, %v3241
        %3274 = vst.msk [vmem:[#allocation2 + $0x10] sm:$0xff] %vm2957, %v3242
        %3275 = vst.msk [vmem:[#allocation2 + $0x18] sm:$0xff] %vm2957, %v3243
        %3276 = vst.msk [vmem:[#allocation2 + $0x20] sm:$0xff] %vm2957, %v3244
        %3277 = vst.msk [vmem:[#allocation2 + $0x28] sm:$0xff] %vm2957, %v3245
        %3278 = vst.msk [vmem:[#allocation2 + $0x30] sm:$0xff] %vm2957, %v3246
        %3279 = vst.msk [vmem:[#allocation2 + $0x38] sm:$0xff] %vm2957, %v3247
        %3280 = vst.msk [vmem:[#allocation2 + $0x40] sm:$0xff] %vm2957, %v3248
        %3281 = vst.msk [vmem:[#allocation2 + $0x48] sm:$0xff] %vm2957, %v3249
        %3282 = vst.msk [vmem:[#allocation2 + $0x50] sm:$0xff] %vm2957, %v3250
        %3283 = vst.msk [vmem:[#allocation2 + $0x58] sm:$0xff] %vm2957, %v3251
        %3284 = vst.msk [vmem:[#allocation2 + $0x60] sm:$0xff] %vm2957, %v3252
        %3285 = vst.msk [vmem:[#allocation2 + $0x68] sm:$0xff] %vm2957, %v3253
        %3286 = vst.msk [vmem:[#allocation2 + $0x70] sm:$0xff] %vm2957, %v3254
        %3287 = vst.msk [vmem:[#allocation2 + $0x78] sm:$0xff] %vm2957, %v3255
        %3288 = vst.msk [vmem:[#allocation2 + $0x80] sm:$0xff] %vm2957, %v3256
        %3289 = vst.msk [vmem:[#allocation2 + $0x88] sm:$0xff] %vm2957, %v3257
        %3290 = vst.msk [vmem:[#allocation2 + $0x90] sm:$0xff] %vm2957, %v3258
        %3291 = vst.msk [vmem:[#allocation2 + $0x98] sm:$0xff] %vm2957, %v3259
        %3292 = vst.msk [vmem:[#allocation2 + $0xa0] sm:$0xff] %vm2957, %v3260
        %3293 = vst.msk [vmem:[#allocation2 + $0xa8] sm:$0xff] %vm2957, %v3261
        %3294 = vst.msk [vmem:[#allocation2 + $0xb0] sm:$0xff] %vm2957, %v3262
        %3295 = vst.msk [vmem:[#allocation2 + $0xb8] sm:$0xff] %vm2957, %v3263
        %3296 = vst.msk [vmem:[#allocation2 + $0xc0] sm:$0xff] %vm2957, %v3264
        %3297 = vst.msk [vmem:[#allocation2 + $0xc8] sm:$0xff] %vm2957, %v3265
        %3298 = vst.msk [vmem:[#allocation2 + $0xd0] sm:$0xff] %vm2957, %v3266
        %3299 = vst.msk [vmem:[#allocation2 + $0xd8] sm:$0xff] %vm2957, %v3267
        %3300 = vst.msk [vmem:[#allocation2 + $0xe0] sm:$0xff] %vm2957, %v3268
        %3301 = vst.msk [vmem:[#allocation2 + $0xe8] sm:$0xff] %vm2957, %v3269
        %3302 = vst.msk [vmem:[#allocation2 + $0xf0] sm:$0xff] %vm2957, %v3270
        %3303 = vst.msk [vmem:[#allocation2 + $0xf8] sm:$0xff] %vm2957, %v3271
      $region44: #{doubleconv_forward.4} parent=31 // pred_fallthru
        _
      %p3304 = scmp.eq.s32.totalorder %s24, 2
      // Predicated region
      $region45: #{doubleconv_forward.4} parent=31 // pred_check
        %p3305 = pneg %p3304
      $region46: #{doubleconv_forward.4} parent=31 // pred_check_branch
        %3307 = sbr.rel (%p3305) target = $region48
      $region47: #{doubleconv_forward.4} parent=31 // pred_region
        %v3308 = vld [vmem:[#allocation2] sm:$0xff]
        %v3309 = vld [vmem:[#allocation2 + $0x8] sm:$0xff]
        %v3310 = vld [vmem:[#allocation2 + $0x10] sm:$0xff]
        %v3311 = vld [vmem:[#allocation2 + $0x18] sm:$0xff]
        %v3312 = vld [vmem:[#allocation2 + $0x20] sm:$0xff]
        %v3313 = vld [vmem:[#allocation2 + $0x28] sm:$0xff]
        %v3314 = vld [vmem:[#allocation2 + $0x30] sm:$0xff]
        %v3315 = vld [vmem:[#allocation2 + $0x38] sm:$0xff]
        %v3316 = vld [vmem:[#allocation2 + $0x40] sm:$0xff]
        %v3317 = vld [vmem:[#allocation2 + $0x48] sm:$0xff]
        %v3318 = vld [vmem:[#allocation2 + $0x50] sm:$0xff]
        %v3319 = vld [vmem:[#allocation2 + $0x58] sm:$0xff]
        %v3320 = vld [vmem:[#allocation2 + $0x60] sm:$0xff]
        %v3321 = vld [vmem:[#allocation2 + $0x68] sm:$0xff]
        %v3322 = vld [vmem:[#allocation2 + $0x70] sm:$0xff]
        %v3323 = vld [vmem:[#allocation2 + $0x78] sm:$0xff]
        %v3324 = vld [vmem:[#allocation2 + $0x80] sm:$0xff]
        %v3325 = vld [vmem:[#allocation2 + $0x88] sm:$0xff]
        %v3326 = vld [vmem:[#allocation2 + $0x90] sm:$0xff]
        %v3327 = vld [vmem:[#allocation2 + $0x98] sm:$0xff]
        %v3328 = vld [vmem:[#allocation2 + $0xa0] sm:$0xff]
        %v3329 = vld [vmem:[#allocation2 + $0xa8] sm:$0xff]
        %v3330 = vld [vmem:[#allocation2 + $0xb0] sm:$0xff]
        %v3331 = vld [vmem:[#allocation2 + $0xb8] sm:$0xff]
        %v3332 = vld [vmem:[#allocation2 + $0xc0] sm:$0xff]
        %v3333 = vld [vmem:[#allocation2 + $0xc8] sm:$0xff]
        %v3334 = vld [vmem:[#allocation2 + $0xd0] sm:$0xff]
        %v3335 = vld [vmem:[#allocation2 + $0xd8] sm:$0xff]
        %v3336 = vld [vmem:[#allocation2 + $0xe0] sm:$0xff]
        %v3337 = vld [vmem:[#allocation2 + $0xe8] sm:$0xff]
        %v3338 = vld [vmem:[#allocation2 + $0xf0] sm:$0xff]
        %v3339 = vld [vmem:[#allocation2 + $0xf8] sm:$0xff]
        %v3340 = vld [vmem:[%s2] sm:$0x1]
        %v3342 = vlaneseq
        %v3343 = vshrl.u32 %v3342, 7
        %v3344 = vsub.s32 0, %v3343
        %v3345 = vrot.slane %v3340, %v3344
        %v3347 = vadd.f32 %v3308, %v3345
        %v3348 = vadd.f32 %v3309, %v3345
        %v3349 = vadd.f32 %v3310, %v3345
        %v3350 = vadd.f32 %v3311, %v3345
        %v3351 = vadd.f32 %v3312, %v3345
        %v3352 = vadd.f32 %v3313, %v3345
        %v3353 = vadd.f32 %v3314, %v3345
        %v3354 = vadd.f32 %v3315, %v3345
        %v3355 = vadd.f32 %v3316, %v3345
        %v3356 = vadd.f32 %v3317, %v3345
        %v3357 = vadd.f32 %v3318, %v3345
        %v3358 = vadd.f32 %v3319, %v3345
        %v3359 = vadd.f32 %v3320, %v3345
        %v3360 = vadd.f32 %v3321, %v3345
        %v3361 = vadd.f32 %v3322, %v3345
        %v3362 = vadd.f32 %v3323, %v3345
        %v3363 = vadd.f32 %v3324, %v3345
        %v3364 = vadd.f32 %v3325, %v3345
        %v3365 = vadd.f32 %v3326, %v3345
        %v3366 = vadd.f32 %v3327, %v3345
        %v3367 = vadd.f32 %v3328, %v3345
        %v3368 = vadd.f32 %v3329, %v3345
        %v3369 = vadd.f32 %v3330, %v3345
        %v3370 = vadd.f32 %v3331, %v3345
        %v3371 = vadd.f32 %v3332, %v3345
        %v3372 = vadd.f32 %v3333, %v3345
        %v3373 = vadd.f32 %v3334, %v3345
        %v3374 = vadd.f32 %v3335, %v3345
        %v3375 = vadd.f32 %v3336, %v3345
        %v3376 = vadd.f32 %v3337, %v3345
        %v3377 = vadd.f32 %v3338, %v3345
        %v3378 = vadd.f32 %v3339, %v3345
        %vm3379 = vcmask 261120
        %3380 = vst.msk [vmem:[%s340] sm:$0xff] %vm3379, %v3347
        %3381 = vst.msk [vmem:[%s340 + $0x8] sm:$0xff] %vm3379, %v3348
        %3382 = vst.msk [vmem:[%s340 + $0x10] sm:$0xff] %vm3379, %v3349
        %3383 = vst.msk [vmem:[%s340 + $0x18] sm:$0xff] %vm3379, %v3350
        %3384 = vst.msk [vmem:[%s340 + $0x20] sm:$0xff] %vm3379, %v3351
        %3385 = vst.msk [vmem:[%s340 + $0x28] sm:$0xff] %vm3379, %v3352
        %3386 = vst.msk [vmem:[%s340 + $0x30] sm:$0xff] %vm3379, %v3353
        %3387 = vst.msk [vmem:[%s340 + $0x38] sm:$0xff] %vm3379, %v3354
        %3388 = vst.msk [vmem:[%s340 + $0x40] sm:$0xff] %vm3379, %v3355
        %3389 = vst.msk [vmem:[%s340 + $0x48] sm:$0xff] %vm3379, %v3356
        %3390 = vst.msk [vmem:[%s340 + $0x50] sm:$0xff] %vm3379, %v3357
        %3391 = vst.msk [vmem:[%s340 + $0x58] sm:$0xff] %vm3379, %v3358
        %3392 = vst.msk [vmem:[%s340 + $0x60] sm:$0xff] %vm3379, %v3359
        %3393 = vst.msk [vmem:[%s340 + $0x68] sm:$0xff] %vm3379, %v3360
        %3394 = vst.msk [vmem:[%s340 + $0x70] sm:$0xff] %vm3379, %v3361
        %3395 = vst.msk [vmem:[%s340 + $0x78] sm:$0xff] %vm3379, %v3362
        %3396 = vst.msk [vmem:[%s340 + $0x80] sm:$0xff] %vm3379, %v3363
        %3397 = vst.msk [vmem:[%s340 + $0x88] sm:$0xff] %vm3379, %v3364
        %3398 = vst.msk [vmem:[%s340 + $0x90] sm:$0xff] %vm3379, %v3365
        %3399 = vst.msk [vmem:[%s340 + $0x98] sm:$0xff] %vm3379, %v3366
        %3400 = vst.msk [vmem:[%s340 + $0xa0] sm:$0xff] %vm3379, %v3367
        %3401 = vst.msk [vmem:[%s340 + $0xa8] sm:$0xff] %vm3379, %v3368
        %3402 = vst.msk [vmem:[%s340 + $0xb0] sm:$0xff] %vm3379, %v3369
        %3403 = vst.msk [vmem:[%s340 + $0xb8] sm:$0xff] %vm3379, %v3370
        %3404 = vst.msk [vmem:[%s340 + $0xc0] sm:$0xff] %vm3379, %v3371
        %3405 = vst.msk [vmem:[%s340 + $0xc8] sm:$0xff] %vm3379, %v3372
        %3406 = vst.msk [vmem:[%s340 + $0xd0] sm:$0xff] %vm3379, %v3373
        %3407 = vst.msk [vmem:[%s340 + $0xd8] sm:$0xff] %vm3379, %v3374
        %3408 = vst.msk [vmem:[%s340 + $0xe0] sm:$0xff] %vm3379, %v3375
        %3409 = vst.msk [vmem:[%s340 + $0xe8] sm:$0xff] %vm3379, %v3376
        %3410 = vst.msk [vmem:[%s340 + $0xf0] sm:$0xff] %vm3379, %v3377
        %3411 = vst.msk [vmem:[%s340 + $0xf8] sm:$0xff] %vm3379, %v3378
        %v3412 = vld [vmem:[%s343] sm:$0x1]
        %v3413 = vsel %vm3379, %v3347, 0.0
        %v3414 = vsel %vm3379, %v3348, 0.0
        %v3415 = vadd.f32 %v3413, %v3414
        %v3416 = vsel %vm3379, %v3349, 0.0
        %v3417 = vadd.f32 %v3415, %v3416
        %v3418 = vsel %vm3379, %v3350, 0.0
        %v3419 = vadd.f32 %v3417, %v3418
        %v3420 = vsel %vm3379, %v3351, 0.0
        %v3421 = vadd.f32 %v3419, %v3420
        %v3422 = vsel %vm3379, %v3352, 0.0
        %v3423 = vadd.f32 %v3421, %v3422
        %v3424 = vsel %vm3379, %v3353, 0.0
        %v3425 = vadd.f32 %v3423, %v3424
        %v3426 = vsel %vm3379, %v3354, 0.0
        %v3427 = vadd.f32 %v3425, %v3426
        %v3428 = vsel %vm3379, %v3355, 0.0
        %v3429 = vadd.f32 %v3427, %v3428
        %v3430 = vsel %vm3379, %v3356, 0.0
        %v3431 = vadd.f32 %v3429, %v3430
        %v3432 = vsel %vm3379, %v3357, 0.0
        %v3433 = vadd.f32 %v3431, %v3432
        %v3434 = vsel %vm3379, %v3358, 0.0
        %v3435 = vadd.f32 %v3433, %v3434
        %v3436 = vsel %vm3379, %v3359, 0.0
        %v3437 = vadd.f32 %v3435, %v3436
        %v3438 = vsel %vm3379, %v3360, 0.0
        %v3439 = vadd.f32 %v3437, %v3438
        %v3440 = vsel %vm3379, %v3361, 0.0
        %v3441 = vadd.f32 %v3439, %v3440
        %v3442 = vsel %vm3379, %v3362, 0.0
        %v3443 = vadd.f32 %v3441, %v3442
        %v3444 = vsel %vm3379, %v3363, 0.0
        %v3445 = vadd.f32 %v3443, %v3444
        %v3446 = vsel %vm3379, %v3364, 0.0
        %v3447 = vadd.f32 %v3445, %v3446
        %v3448 = vsel %vm3379, %v3365, 0.0
        %v3449 = vadd.f32 %v3447, %v3448
        %v3450 = vsel %vm3379, %v3366, 0.0
        %v3451 = vadd.f32 %v3449, %v3450
        %v3452 = vsel %vm3379, %v3367, 0.0
        %v3453 = vadd.f32 %v3451, %v3452
        %v3454 = vsel %vm3379, %v3368, 0.0
        %v3455 = vadd.f32 %v3453, %v3454
        %v3456 = vsel %vm3379, %v3369, 0.0
        %v3457 = vadd.f32 %v3455, %v3456
        %v3458 = vsel %vm3379, %v3370, 0.0
        %v3459 = vadd.f32 %v3457, %v3458
        %v3460 = vsel %vm3379, %v3371, 0.0
        %v3461 = vadd.f32 %v3459, %v3460
        %v3462 = vsel %vm3379, %v3372, 0.0
        %v3463 = vadd.f32 %v3461, %v3462
        %v3464 = vsel %vm3379, %v3373, 0.0
        %v3465 = vadd.f32 %v3463, %v3464
        %v3466 = vsel %vm3379, %v3374, 0.0
        %v3467 = vadd.f32 %v3465, %v3466
        %v3468 = vsel %vm3379, %v3375, 0.0
        %v3469 = vadd.f32 %v3467, %v3468
        %v3470 = vsel %vm3379, %v3376, 0.0
        %v3471 = vadd.f32 %v3469, %v3470
        %v3472 = vsel %vm3379, %v3377, 0.0
        %v3473 = vadd.f32 %v3471, %v3472
        %v3474 = vsel %vm3379, %v3378, 0.0
        %v3475 = vadd.f32 %v3473, %v3474
        %v3476 = vrot.slane %v3475, 4
        %v3477 = vadd.f32 %v3475, %v3476
        %v3478 = vrot.slane %v3477, 2
        %v3479 = vadd.f32 %v3477, %v3478
        %v3480 = vrot.slane %v3479, 1
        %v3481 = vadd.f32 %v3479, %v3480
        %v3482 = vadd.f32 %v3412, %v3481
        %vm3483 = vcmask 253952
        %3484 = vst.msk [vmem:[%s343] sm:$0x1] %vm3483, %v3482
        %v3485 = vld [vmem:[%s346] sm:$0x1]
        %v3486 = vmul.f32 %v3347, %v3347
        %v3487 = vmul.f32 %v3348, %v3348
        %v3488 = vmul.f32 %v3349, %v3349
        %v3489 = vmul.f32 %v3350, %v3350
        %v3490 = vmul.f32 %v3351, %v3351
        %v3491 = vmul.f32 %v3352, %v3352
        %v3492 = vmul.f32 %v3353, %v3353
        %v3493 = vmul.f32 %v3354, %v3354
        %v3494 = vmul.f32 %v3355, %v3355
        %v3495 = vmul.f32 %v3356, %v3356
        %v3496 = vmul.f32 %v3357, %v3357
        %v3497 = vmul.f32 %v3358, %v3358
        %v3498 = vmul.f32 %v3359, %v3359
        %v3499 = vmul.f32 %v3360, %v3360
        %v3500 = vmul.f32 %v3361, %v3361
        %v3501 = vmul.f32 %v3362, %v3362
        %v3502 = vmul.f32 %v3363, %v3363
        %v3503 = vmul.f32 %v3364, %v3364
        %v3504 = vmul.f32 %v3365, %v3365
        %v3505 = vmul.f32 %v3366, %v3366
        %v3506 = vmul.f32 %v3367, %v3367
        %v3507 = vmul.f32 %v3368, %v3368
        %v3508 = vmul.f32 %v3369, %v3369
        %v3509 = vmul.f32 %v3370, %v3370
        %v3510 = vmul.f32 %v3371, %v3371
        %v3511 = vmul.f32 %v3372, %v3372
        %v3512 = vmul.f32 %v3373, %v3373
        %v3513 = vmul.f32 %v3374, %v3374
        %v3514 = vmul.f32 %v3375, %v3375
        %v3515 = vmul.f32 %v3376, %v3376
        %v3516 = vmul.f32 %v3377, %v3377
        %v3517 = vmul.f32 %v3378, %v3378
        %v3518 = vsel %vm3379, %v3486, 0.0
        %v3519 = vsel %vm3379, %v3487, 0.0
        %v3520 = vadd.f32 %v3518, %v3519
        %v3521 = vsel %vm3379, %v3488, 0.0
        %v3522 = vadd.f32 %v3520, %v3521
        %v3523 = vsel %vm3379, %v3489, 0.0
        %v3524 = vadd.f32 %v3522, %v3523
        %v3525 = vsel %vm3379, %v3490, 0.0
        %v3526 = vadd.f32 %v3524, %v3525
        %v3527 = vsel %vm3379, %v3491, 0.0
        %v3528 = vadd.f32 %v3526, %v3527
        %v3529 = vsel %vm3379, %v3492, 0.0
        %v3530 = vadd.f32 %v3528, %v3529
        %v3531 = vsel %vm3379, %v3493, 0.0
        %v3532 = vadd.f32 %v3530, %v3531
        %v3533 = vsel %vm3379, %v3494, 0.0
        %v3534 = vadd.f32 %v3532, %v3533
        %v3535 = vsel %vm3379, %v3495, 0.0
        %v3536 = vadd.f32 %v3534, %v3535
        %v3537 = vsel %vm3379, %v3496, 0.0
        %v3538 = vadd.f32 %v3536, %v3537
        %v3539 = vsel %vm3379, %v3497, 0.0
        %v3540 = vadd.f32 %v3538, %v3539
        %v3541 = vsel %vm3379, %v3498, 0.0
        %v3542 = vadd.f32 %v3540, %v3541
        %v3543 = vsel %vm3379, %v3499, 0.0
        %v3544 = vadd.f32 %v3542, %v3543
        %v3545 = vsel %vm3379, %v3500, 0.0
        %v3546 = vadd.f32 %v3544, %v3545
        %v3547 = vsel %vm3379, %v3501, 0.0
        %v3548 = vadd.f32 %v3546, %v3547
        %v3549 = vsel %vm3379, %v3502, 0.0
        %v3550 = vadd.f32 %v3548, %v3549
        %v3551 = vsel %vm3379, %v3503, 0.0
        %v3552 = vadd.f32 %v3550, %v3551
        %v3553 = vsel %vm3379, %v3504, 0.0
        %v3554 = vadd.f32 %v3552, %v3553
        %v3555 = vsel %vm3379, %v3505, 0.0
        %v3556 = vadd.f32 %v3554, %v3555
        %v3557 = vsel %vm3379, %v3506, 0.0
        %v3558 = vadd.f32 %v3556, %v3557
        %v3559 = vsel %vm3379, %v3507, 0.0
        %v3560 = vadd.f32 %v3558, %v3559
        %v3561 = vsel %vm3379, %v3508, 0.0
        %v3562 = vadd.f32 %v3560, %v3561
        %v3563 = vsel %vm3379, %v3509, 0.0
        %v3564 = vadd.f32 %v3562, %v3563
        %v3565 = vsel %vm3379, %v3510, 0.0
        %v3566 = vadd.f32 %v3564, %v3565
        %v3567 = vsel %vm3379, %v3511, 0.0
        %v3568 = vadd.f32 %v3566, %v3567
        %v3569 = vsel %vm3379, %v3512, 0.0
        %v3570 = vadd.f32 %v3568, %v3569
        %v3571 = vsel %vm3379, %v3513, 0.0
        %v3572 = vadd.f32 %v3570, %v3571
        %v3573 = vsel %vm3379, %v3514, 0.0
        %v3574 = vadd.f32 %v3572, %v3573
        %v3575 = vsel %vm3379, %v3515, 0.0
        %v3576 = vadd.f32 %v3574, %v3575
        %v3577 = vsel %vm3379, %v3516, 0.0
        %v3578 = vadd.f32 %v3576, %v3577
        %v3579 = vsel %vm3379, %v3517, 0.0
        %v3580 = vadd.f32 %v3578, %v3579
        %v3581 = vrot.slane %v3580, 4
        %v3582 = vadd.f32 %v3580, %v3581
        %v3583 = vrot.slane %v3582, 2
        %v3584 = vadd.f32 %v3582, %v3583
        %v3585 = vrot.slane %v3584, 1
        %v3586 = vadd.f32 %v3584, %v3585
        %v3587 = vadd.f32 %v3485, %v3586
        %3588 = vst.msk [vmem:[%s346] sm:$0x1] %vm3483, %v3587
      $region48: #{doubleconv_forward.4} parent=31 // pred_fallthru
        _
      %p3589 = scmp.lt.s32.totalorder %s22, 1
      %s3590 = scalar_select %p3589, %s22, 1
      %p3591 = scmp.lt.s32.totalorder %s23, 15
      %s3592 = scalar_select %p3591, %s23, 15
      %s3593 = smul.addr %s3592, 32
      %s3594 = smul.addr %s3590, 512
      %s3595 = sadd.s32 %s3593, %s3594
      %s3596 = smul.addr %s3595, 8
      %s3597 = scalar_lea.vmem %s3, %s3596
      %p3598 = scmp.lt.s32.totalorder %s22, 1
      %s3599 = scalar_select %p3598, %s22, 1
      %s3600 = scalar_lea.vmem %s4, %s3599
      %p3601 = scmp.lt.s32.totalorder %s22, 1
      %s3602 = scalar_select %p3601, %s22, 1
      %s3603 = scalar_lea.vmem %s5, %s3602
      // Predicated region
      $region49: #{doubleconv_forward.4} parent=31 // pred_check
        %p3604 = pneg %p143
      $region50: #{doubleconv_forward.4} parent=31 // pred_check_branch
        %3606 = sbr.rel (%p3604) target = $region52
      $region51: #{doubleconv_forward.4} parent=31 // pred_region
        _
      $region52: #{doubleconv_forward.4} parent=31 // pred_fallthru
        _
      // Predicated region
      $region53: #{doubleconv_forward.4} parent=31 // pred_check
        %p3607 = pneg %p169
      $region54: #{doubleconv_forward.4} parent=31 // pred_check_branch
        %3609 = sbr.rel (%p3607) target = $region56
      $region55: #{doubleconv_forward.4} parent=31 // pred_region
        _
      $region56: #{doubleconv_forward.4} parent=31 // pred_fallthru
        _
      // Predicated region
      $region57: #{doubleconv_forward.4} parent=31 // pred_check
        %p3610 = pneg %p195
      $region58: #{doubleconv_forward.4} parent=31 // pred_check_branch
        %3612 = sbr.rel (%p3610) target = $region60
      $region59: #{doubleconv_forward.4} parent=31 // pred_region
        _
      $region60: #{doubleconv_forward.4} parent=31 // pred_fallthru
        _
    $region32: #{doubleconv_forward.4} parent=5 // pred_fallthru
      _
    %p3613 = scmp.le.s32.totalorder 2, %s12
    // Predicated region
    $region61: #{doubleconv_forward.4} parent=5 // pred_check
      %p3614 = pneg %p3613
    $region62: #{doubleconv_forward.4} parent=5 // pred_check_branch
      %3616 = sbr.rel (%p3614) target = $region64
    $region63: #{doubleconv_forward.4} parent=5 // pred_region
      %s3617 = ssub.s32 %s12, 2
      // Predicated region
      $region65: #{doubleconv_forward.4} parent=63 // pred_check
        %p3618 = pneg %p149
      $region66: #{doubleconv_forward.4} parent=63 // pred_check_branch
        %3620 = sbr.rel (%p3618) target = $region68
      $region67: #{doubleconv_forward.4} parent=63 // pred_region
        %p3621 = scmp.lt.s32.totalorder %s25, 1
        %s3622 = scalar_select %p3621, %s25, 1
        %p3623 = scmp.lt.s32.totalorder %s26, 15
        %s3624 = scalar_select %p3623, %s26, 15
        %s3625 = smul.addr %s3624, 32
        %s3626 = smul.addr %s3622, 512
        %s3627 = sadd.s32 %s3625, %s3626
        %s3628 = smul.addr %s3627, 8
        %s3629 = scalar_lea.vmem %s3, %s3628
      $region68: #{doubleconv_forward.4} parent=63 // pred_fallthru
        _
      // Predicated region
      $region69: #{doubleconv_forward.4} parent=63 // pred_check
        %p3630 = pneg %p175
      $region70: #{doubleconv_forward.4} parent=63 // pred_check_branch
        %3632 = sbr.rel (%p3630) target = $region72
      $region71: #{doubleconv_forward.4} parent=63 // pred_region
        %p3633 = scmp.lt.s32.totalorder %s25, 1
        %s3634 = scalar_select %p3633, %s25, 1
        %s3635 = scalar_lea.vmem %s4, %s3634
      $region72: #{doubleconv_forward.4} parent=63 // pred_fallthru
        _
      // Predicated region
      $region73: #{doubleconv_forward.4} parent=63 // pred_check
        %p3636 = pneg %p201
      $region74: #{doubleconv_forward.4} parent=63 // pred_check_branch
        %3638 = sbr.rel (%p3636) target = $region76
      $region75: #{doubleconv_forward.4} parent=63 // pred_region
        %p3639 = scmp.lt.s32.totalorder %s25, 1
        %s3640 = scalar_select %p3639, %s25, 1
        %s3641 = scalar_lea.vmem %s5, %s3640
      $region76: #{doubleconv_forward.4} parent=63 // pred_fallthru
        _
    $region64: #{doubleconv_forward.4} parent=5 // pred_fallthru
      _
  $region6: #{doubleconv_forward.4} parent=0 // loop_footer
    %s16 = sadd.s32 1, %s12
  $region7: #{doubleconv_forward.4} parent=0 // loop_footer_branch
    %11 = sbr.rel target = $region3
  $region8: #{doubleconv_forward.4} parent=0 // loop_exit
    _

// kernel: doubleconv_forward.6
$region0: #{doubleconv_forward.6}
  #allocation0 [shape = 'u32[]', space=smem, size = 0x4, offset = 0x4, fixed_abs, tag = 'smem constant byte address 0x4 - core index']
  #allocation1 [shape = 'u32[144,128]{1,0:T(1,128)}', space=vmem, size = 0x12000, scoped, tag = 'internal scratch']
  #allocation2 [shape = 'f32[256,32]{1,0:T(8,128)}', space=vmem, size = 0x20000, scoped, tag = 'scratch operand']
  #allocation3 [shape = 'bf16[18,18,32]{2,1,0:T(8,128)(2,1)}', space=vmem, size = 0x1b000, scoped, tag = 'scratch operand']
  %s0 = inlined_call_operand.vmem [shape: bf16[2,16,16,16,32], index: 0, kind: input, shape index: {}]
  %s1 = inlined_call_operand.vmem [shape: bf16[3,288,32], index: 1, kind: input, shape index: {}]
  %s2 = inlined_call_operand.vmem [shape: f32[1,32], index: 2, kind: input, shape index: {}]
  %s3 = inlined_call_operand.vmem [shape: f32[2,16,16,16,32], index: 3, kind: output, shape index: {0}]
  %s4 = inlined_call_operand.vmem [shape: f32[2,1,32], index: 4, kind: output, shape index: {1}]
  %s5 = inlined_call_operand.vmem [shape: f32[2,1,32], index: 5, kind: output, shape index: {2}]
  %6 = xla_tuple %s3, %s4, %s5
  %s7 = sld [smem:[#allocation0]]
  $region77: #{doubleconv_forward.6} parent=0
    _
  %s9 = ssub.s32 1, %s7
  %s10 = scalar_select 0, %s9, %s7
  loop: start=0, step=1, limit=98
  $region2: #{doubleconv_forward.6} parent=0 // loop_pre_header
    _
  $region3: #{doubleconv_forward.6} parent=0 // loop_header
    %s12 = sphi 0, %s16
    %p13 = scmp.ge.s32.totalorder %s12, 98
    %s19 = sphi 0, %s38
    %s20 = sphi 0, %s34
    %s21 = sphi 0, %s30
    %s22 = sphi 0, %s19
    %s23 = sphi 0, %s20
    %s24 = sphi 0, %s21
    %s25 = sphi 0, %s22
    %s26 = sphi 0, %s23
    %s27 = sphi 0, %s24
    %s55 = sphi 0, %s57
    %s58 = sphi 0, %s55
    %s59 = sphi 0, %s58
    %s75 = sphi 0, %s59
    %s81 = sphi 0, %s83
    %s84 = sphi 0, %s81
    %s85 = sphi 0, %s84
    %s101 = sphi 0, %s85
    %s105 = sphi 0, %s105
    %s107 = sphi 0, %s105
    %s108 = sphi 0, %s107
    %s122 = sphi 0, %s108
    %s130 = sphi 0, %s132
    %s133 = sphi 0, %s130
    %s134 = sphi 0, %s133
    %s150 = sphi 0, %s134
    %s156 = sphi 0, %s158
    %s159 = sphi 0, %s156
    %s160 = sphi 0, %s159
    %s176 = sphi 0, %s160
    %s182 = sphi 0, %s184
    %s185 = sphi 0, %s182
    %s186 = sphi 0, %s185
    %s202 = sphi 0, %s186
  $region4: #{doubleconv_forward.6} parent=0 // loop_header_branch
    %15 = sbr.rel (%p13) target = $region8
  $region5: #{doubleconv_forward.6} parent=0 // loop_body
    %s17 = ssub.s32 %s12, 1
    %s18 = ssub.s32 %s12, 2
    %s28 = sadd.s32 1, %s21
    %p29 = scmp.ge.s32.totalorder %s28, 3
    %s30 = scalar_select %p29, 0, %s28
    %s31 = sadd.s32 1, %s20
    %s32 = scalar_select %p29, %s31, %s20
    %p33 = scmp.ge.s32.totalorder %s32, 16
    %s34 = scalar_select %p33, 0, %s32
    %s35 = sadd.s32 1, %s19
    %s36 = scalar_select %p33, %s35, %s19
    %p37 = scmp.ge.s32.totalorder %s36, 2
    %s38 = scalar_select %p37, 0, %s36
    %s39 = sadd.s32 %s20, %s21
    %s40 = ssub.s32 %s39, 1
    %p41 = scmp.gt.s32.totalorder %s40, 0
    %s42 = scalar_select %p41, %s40, 0
    %p43 = scmp.lt.s32.totalorder %s42, 15
    %s44 = scalar_select %p43, %s42, 15
    %s45 = sadd.s32 %s34, %s30
    %s46 = ssub.s32 %s45, 1
    %p47 = scmp.gt.s32.totalorder %s46, 0
    %s48 = scalar_select %p47, %s46, 0
    %p49 = scmp.lt.s32.totalorder %s48, 15
    %s50 = scalar_select %p49, %s48, 15
    %s51 = ssub.s32 %s19, %s38
    %s52 = ssub.s32 %s44, %s50
    %s53 = sor.u32 %s51, %s52
    %p54 = scmp.eq.s32.totalorder %s53, 0
    %s56 = sadd.s32 %s55, 1
    %s57 = scalar_select %p54, %s55, %s56
    %p60 = pneg %p54
    %p61 = scmp.eq.s32.totalorder %s12, 95
    %p62 = por %p60, %p61
    %p63 = scmp.ne.s32.totalorder %s55, %s58
    %p64 = scmp.eq.s32.totalorder %s12, 0
    %p65 = por %p63, %p64
    %p66 = scmp.ne.s32.totalorder %s55, %s58
    %p67 = scmp.eq.s32.totalorder %s17, 95
    %p68 = por %p66, %p67
    %p69 = scmp.ne.s32.totalorder %s58, %s59
    %p70 = scmp.eq.s32.totalorder %s17, 0
    %p71 = por %p69, %p70
    %p72 = scmp.ne.s32.totalorder %s58, %s59
    %p73 = scmp.eq.s32.totalorder %s18, 95
    %p74 = por %p72, %p73
    %p76 = scmp.ne.s32.totalorder %s59, %s75
    %p77 = scmp.eq.s32.totalorder %s18, 0
    %p78 = por %p76, %p77
    %s79 = ssub.s32 %s21, %s30
    %p80 = scmp.eq.s32.totalorder %s79, 0
    %s82 = sadd.s32 %s81, 1
    %s83 = scalar_select %p80, %s81, %s82
    %p86 = pneg %p80
    %p87 = scmp.eq.s32.totalorder %s12, 95
    %p88 = por %p86, %p87
    %p89 = scmp.ne.s32.totalorder %s81, %s84
    %p90 = scmp.eq.s32.totalorder %s12, 0
    %p91 = por %p89, %p90
    %p92 = scmp.ne.s32.totalorder %s81, %s84
    %p93 = scmp.eq.s32.totalorder %s17, 95
    %p94 = por %p92, %p93
    %p95 = scmp.ne.s32.totalorder %s84, %s85
    %p96 = scmp.eq.s32.totalorder %s17, 0
    %p97 = por %p95, %p96
    %p98 = scmp.ne.s32.totalorder %s84, %s85
    %p99 = scmp.eq.s32.totalorder %s18, 95
    %p100 = por %p98, %p99
    %p102 = scmp.ne.s32.totalorder %s85, %s101
    %p103 = scmp.eq.s32.totalorder %s18, 0
    %p104 = por %p102, %p103
    %s106 = sadd.s32 %s105, 1
    %p109 = scmp.eq.s32.totalorder %s12, 95
    %p110 = scmp.ne.s32.totalorder %s105, %s107
    %p111 = scmp.eq.s32.totalorder %s12, 0
    %p112 = por %p110, %p111
    %p113 = scmp.ne.s32.totalorder %s105, %s107
    %p114 = scmp.eq.s32.totalorder %s17, 95
    %p115 = por %p113, %p114
    %p116 = scmp.ne.s32.totalorder %s107, %s108
    %p117 = scmp.eq.s32.totalorder %s17, 0
    %p118 = por %p116, %p117
    %p119 = scmp.ne.s32.totalorder %s107, %s108
    %p120 = scmp.eq.s32.totalorder %s18, 95
    %p121 = por %p119, %p120
    %p123 = scmp.ne.s32.totalorder %s108, %s122
    %p124 = scmp.eq.s32.totalorder %s18, 0
    %p125 = por %p123, %p124
    %s126 = ssub.s32 %s19, %s38
    %s127 = ssub.s32 %s20, %s34
    %s128 = sor.u32 %s126, %s127
    %p129 = scmp.eq.s32.totalorder %s128, 0
    %s131 = sadd.s32 %s130, 1
    %s132 = scalar_select %p129, %s130, %s131
    %p135 = pneg %p129
    %p136 = scmp.eq.s32.totalorder %s12, 95
    %p137 = por %p135, %p136
    %p138 = scmp.ne.s32.totalorder %s130, %s133
    %p139 = scmp.eq.s32.totalorder %s12, 0
    %p140 = por %p138, %p139
    %p141 = scmp.ne.s32.totalorder %s130, %s133
    %p142 = scmp.eq.s32.totalorder %s17, 95
    %p143 = por %p141, %p142
    %p144 = scmp.ne.s32.totalorder %s133, %s134
    %p145 = scmp.eq.s32.totalorder %s17, 0
    %p146 = por %p144, %p145
    %p147 = scmp.ne.s32.totalorder %s133, %s134
    %p148 = scmp.eq.s32.totalorder %s18, 95
    %p149 = por %p147, %p148
    %p151 = scmp.ne.s32.totalorder %s134, %s150
    %p152 = scmp.eq.s32.totalorder %s18, 0
    %p153 = por %p151, %p152
    %s154 = ssub.s32 %s19, %s38
    %p155 = scmp.eq.s32.totalorder %s154, 0
    %s157 = sadd.s32 %s156, 1
    %s158 = scalar_select %p155, %s156, %s157
    %p161 = pneg %p155
    %p162 = scmp.eq.s32.totalorder %s12, 95
    %p163 = por %p161, %p162
    %p164 = scmp.ne.s32.totalorder %s156, %s159
    %p165 = scmp.eq.s32.totalorder %s12, 0
    %p166 = por %p164, %p165
    %p167 = scmp.ne.s32.totalorder %s156, %s159
    %p168 = scmp.eq.s32.totalorder %s17, 95
    %p169 = por %p167, %p168
    %p170 = scmp.ne.s32.totalorder %s159, %s160
    %p171 = scmp.eq.s32.totalorder %s17, 0
    %p172 = por %p170, %p171
    %p173 = scmp.ne.s32.totalorder %s159, %s160
    %p174 = scmp.eq.s32.totalorder %s18, 95
    %p175 = por %p173, %p174
    %p177 = scmp.ne.s32.totalorder %s160, %s176
    %p178 = scmp.eq.s32.totalorder %s18, 0
    %p179 = por %p177, %p178
    %s180 = ssub.s32 %s19, %s38
    %p181 = scmp.eq.s32.totalorder %s180, 0
    %s183 = sadd.s32 %s182, 1
    %s184 = scalar_select %p181, %s182, %s183
    %p187 = pneg %p181
    %p188 = scmp.eq.s32.totalorder %s12, 95
    %p189 = por %p187, %p188
    %p190 = scmp.ne.s32.totalorder %s182, %s185
    %p191 = scmp.eq.s32.totalorder %s12, 0
    %p192 = por %p190, %p191
    %p193 = scmp.ne.s32.totalorder %s182, %s185
    %p194 = scmp.eq.s32.totalorder %s17, 95
    %p195 = por %p193, %p194
    %p196 = scmp.ne.s32.totalorder %s185, %s186
    %p197 = scmp.eq.s32.totalorder %s17, 0
    %p198 = por %p196, %p197
    %p199 = scmp.ne.s32.totalorder %s185, %s186
    %p200 = scmp.eq.s32.totalorder %s18, 95
    %p201 = por %p199, %p200
    %p203 = scmp.ne.s32.totalorder %s186, %s202
    %p204 = scmp.eq.s32.totalorder %s18, 0
    %p205 = por %p203, %p204
    %p206 = scmp.le.s32.totalorder 1, %s12
    %p207 = scmp.lt.s32.totalorder %s12, 97
    %p208 = pnand %p206, %p207
    %p209 = pneg %p208
    // Predicated region
    $region9: #{doubleconv_forward.6} parent=5 // pred_check
      _
    $region10: #{doubleconv_forward.6} parent=5 // pred_check_branch
      %211 = sbr.rel (%p208) target = $region12
    $region11: #{doubleconv_forward.6} parent=5 // pred_region
      %s212 = ssub.s32 %s12, 1
      // Predicated region
      $region13: #{doubleconv_forward.6} parent=11 // pred_check
        %p213 = pneg %p118
      $region14: #{doubleconv_forward.6} parent=11 // pred_check_branch
        %215 = sbr.rel (%p213) target = $region16
      $region15: #{doubleconv_forward.6} parent=11 // pred_region
        _
      $region16: #{doubleconv_forward.6} parent=11 // pred_fallthru
        _
    $region12: #{doubleconv_forward.6} parent=5 // pred_fallthru
      _
    %p216 = scmp.lt.s32.totalorder %s12, 96
    // Predicated region
    $region17: #{doubleconv_forward.6} parent=5 // pred_check
      %p217 = pneg %p216
    $region18: #{doubleconv_forward.6} parent=5 // pred_check_branch
      %219 = sbr.rel (%p217) target = $region20
    $region19: #{doubleconv_forward.6} parent=5 // pred_region
      // Predicated region
      $region21: #{doubleconv_forward.6} parent=19 // pred_check
        %p220 = pneg %p65
      $region22: #{doubleconv_forward.6} parent=19 // pred_check_branch
        %222 = sbr.rel (%p220) target = $region24
      $region23: #{doubleconv_forward.6} parent=19 // pred_region
        %s223 = sadd.s32 %s20, %s21
        %s224 = ssub.s32 %s223, 1
        %p225 = scmp.gt.s32.totalorder %s224, 0
        %s226 = scalar_select %p225, %s224, 0
        %p227 = scmp.lt.s32.totalorder %s226, 15
        %s228 = scalar_select %p227, %s226, 15
        %p229 = scmp.lt.s32.totalorder %s19, 1
        %s230 = scalar_select %p229, %s19, 1
        %p231 = scmp.lt.s32.totalorder %s228, 15
        %s232 = scalar_select %p231, %s228, 15
        %s233 = smul.addr %s232, 32
        %s234 = smul.addr %s230, 512
        %s235 = sadd.s32 %s233, %s234
        %s236 = smul.addr %s235, 4
        %s237 = scalar_lea.vmem %s0, %s236
        %s238 = sadd.s32 %s20, %s21
        %s239 = ssub.s32 %s238, 1
        %p240 = scmp.gt.s32.totalorder %s239, 0
        %s241 = scalar_select %p240, %s239, 0
        %p242 = scmp.lt.s32.totalorder %s241, 15
        %s243 = scalar_select %p242, %s241, 15
      $region24: #{doubleconv_forward.6} parent=19 // pred_fallthru
        _
      // Predicated region
      $region25: #{doubleconv_forward.6} parent=19 // pred_check
        %p244 = pneg %p91
      $region26: #{doubleconv_forward.6} parent=19 // pred_check_branch
        %246 = sbr.rel (%p244) target = $region28
      $region27: #{doubleconv_forward.6} parent=19 // pred_region
        %p247 = scmp.lt.s32.totalorder %s21, 2
        %s248 = scalar_select %p247, %s21, 2
        %s249 = smul.addr %s248, 36
        %s250 = smul.addr %s249, 4
        %s251 = scalar_lea.vmem %s1, %s250
      $region28: #{doubleconv_forward.6} parent=19 // pred_fallthru
        _
    $region20: #{doubleconv_forward.6} parent=5 // pred_fallthru
      _
    %p252 = scmp.le.s32.totalorder 1, %s12
    %p253 = scmp.lt.s32.totalorder %s12, 97
    %p254 = pnand %p252, %p253
    %p255 = pneg %p254
    // Predicated region
    $region29: #{doubleconv_forward.6} parent=5 // pred_check
      _
    $region30: #{doubleconv_forward.6} parent=5 // pred_check_branch
      %257 = sbr.rel (%p254) target = $region32
    $region31: #{doubleconv_forward.6} parent=5 // pred_region
      %s258 = ssub.s32 %s12, 1
      %s259 = sadd.s32 %s23, %s24
      %s260 = ssub.s32 %s259, 1
      %p261 = scmp.gt.s32.totalorder %s260, 0
      %s262 = scalar_select %p261, %s260, 0
      %p263 = scmp.lt.s32.totalorder %s262, 15
      %s264 = scalar_select %p263, %s262, 15
      %p265 = scmp.lt.s32.totalorder %s22, 1
      %s266 = scalar_select %p265, %s22, 1
      %p267 = scmp.lt.s32.totalorder %s264, 15
      %s268 = scalar_select %p267, %s264, 15
      %s269 = smul.addr %s268, 32
      %s270 = smul.addr %s266, 512
      %s271 = sadd.s32 %s269, %s270
      %s272 = smul.addr %s271, 4
      %s273 = scalar_lea.vmem %s0, %s272
      %p274 = pneg %p71
      %p275 = pneg %p68
      %p276 = scmp.lt.s32.totalorder %s24, 2
      %s277 = scalar_select %p276, %s24, 2
      %s278 = smul.addr %s277, 36
      %s279 = smul.addr %s278, 4
      %s280 = scalar_lea.vmem %s1, %s279
      %p281 = pneg %p97
      %p282 = pneg %p94
      %p283 = pneg %p118
      %p284 = pneg %p115
      %p285 = pneg %p146
      %p286 = pneg %p143
      %p287 = scmp.lt.s32.totalorder %s22, 1
      %s288 = scalar_select %p287, %s22, 1
      %p289 = scmp.lt.s32.totalorder %s23, 15
      %s290 = scalar_select %p289, %s23, 15
      %s291 = smul.addr %s290, 32
      %s292 = smul.addr %s288, 512
      %s293 = sadd.s32 %s291, %s292
      %s294 = smul.addr %s293, 8
      %s295 = scalar_lea.vmem %s3, %s294
      %p296 = pneg %p172
      %p297 = pneg %p169
      %p298 = scmp.lt.s32.totalorder %s22, 1
      %s299 = scalar_select %p298, %s22, 1
      %s300 = scalar_lea.vmem %s4, %s299
      %p301 = pneg %p198
      %p302 = pneg %p195
      %p303 = scmp.lt.s32.totalorder %s22, 1
      %s304 = scalar_select %p303, %s22, 1
      %s305 = scalar_lea.vmem %s5, %s304
      %s306 = sadd.s32 %s23, %s24
      %s307 = ssub.s32 %s306, 1
      %p308 = scmp.gt.s32.totalorder %s307, 0
      %s309 = scalar_select %p308, %s307, 0
      %p310 = scmp.lt.s32.totalorder %s309, 15
      %s311 = scalar_select %p310, %s309, 15
      %p312 = scmp.lt.s32.totalorder %s22, 1
      %s313 = scalar_select %p312, %s22, 1
      %p314 = scmp.lt.s32.totalorder %s311, 15
      %s315 = scalar_select %p314, %s311, 15
      %s316 = smul.addr %s315, 32
      %s317 = smul.addr %s313, 512
      %s318 = sadd.s32 %s316, %s317
      %s319 = smul.addr %s318, 4
      %s320 = scalar_lea.vmem %s0, %s319
      %s321 = sadd.s32 %s23, %s24
      %s322 = ssub.s32 %s321, 1
      %p323 = scmp.gt.s32.totalorder %s322, 0
      %s324 = scalar_select %p323, %s322, 0
      %p325 = scmp.lt.s32.totalorder %s324, 15
      %s326 = scalar_select %p325, %s324, 15
      %p327 = scmp.lt.s32.totalorder %s24, 2
      %s328 = scalar_select %p327, %s24, 2
      %s329 = smul.addr %s328, 36
      %s330 = smul.addr %s329, 4
      %s331 = scalar_lea.vmem %s1, %s330
      %p332 = scmp.lt.s32.totalorder %s22, 1
      %s333 = scalar_select %p332, %s22, 1
      %p334 = scmp.lt.s32.totalorder %s23, 15
      %s335 = scalar_select %p334, %s23, 15
      %s336 = smul.addr %s335, 32
      %s337 = smul.addr %s333, 512
      %s338 = sadd.s32 %s336, %s337
      %s339 = smul.addr %s338, 8
      %s340 = scalar_lea.vmem %s3, %s339
      %p341 = scmp.lt.s32.totalorder %s22, 1
      %s342 = scalar_select %p341, %s22, 1
      %s343 = scalar_lea.vmem %s4, %s342
      %p344 = scmp.lt.s32.totalorder %s22, 1
      %s345 = scalar_select %p344, %s22, 1
      %s346 = scalar_lea.vmem %s5, %s345
      %p348 = scmp.eq.s32.totalorder %s23, 0
      %p349 = scmp.eq.s32.totalorder %s24, 0
      %p350 = pnand %p348, %p349
      %p351 = pneg %p350
      // Predicated region
      $region33: #{doubleconv_forward.6} parent=31 // pred_check
        _
      $region34: #{doubleconv_forward.6} parent=31 // pred_check_branch
        %353 = sbr.rel (%p350) target = $region36
      $region35: #{doubleconv_forward.6} parent=31 // pred_region
        %vm354 = vcmask 257024
        %355 = vst.msk [vmem:[#allocation3] sm:$0xf] %vm354, 0
        %356 = vst.msk [vmem:[#allocation3 + $0x4] sm:$0xf] %vm354, 0
        %vm357 = vcmask 253952
        %358 = vst.msk [vmem:[#allocation3 + $0x8] sm:$0x1] %vm357, 0
        %359 = vst.msk [vmem:[#allocation3 + $0xc] sm:$0xf] %vm354, 0
        %360 = vst.msk [vmem:[#allocation3 + $0x10] sm:$0xf] %vm354, 0
        %361 = vst.msk [vmem:[#allocation3 + $0x14] sm:$0x1] %vm357, 0
        %362 = vst.msk [vmem:[#allocation3 + $0x18] sm:$0xf] %vm354, 0
        %363 = vst.msk [vmem:[#allocation3 + $0x1c] sm:$0xf] %vm354, 0
        %364 = vst.msk [vmem:[#allocation3 + $0x20] sm:$0x1] %vm357, 0
        %365 = vst.msk [vmem:[#allocation3 + $0x24] sm:$0xf] %vm354, 0
        %366 = vst.msk [vmem:[#allocation3 + $0x28] sm:$0xf] %vm354, 0
        %367 = vst.msk [vmem:[#allocation3 + $0x2c] sm:$0x1] %vm357, 0
        %368 = vst.msk [vmem:[#allocation3 + $0x30] sm:$0xf] %vm354, 0
        %369 = vst.msk [vmem:[#allocation3 + $0x34] sm:$0xf] %vm354, 0
        %370 = vst.msk [vmem:[#allocation3 + $0x38] sm:$0x1] %vm357, 0
        %371 = vst.msk [vmem:[#allocation3 + $0x3c] sm:$0xf] %vm354, 0
        %372 = vst.msk [vmem:[#allocation3 + $0x40] sm:$0xf] %vm354, 0
        %373 = vst.msk [vmem:[#allocation3 + $0x44] sm:$0x1] %vm357, 0
        %374 = vst.msk [vmem:[#allocation3 + $0x48] sm:$0xf] %vm354, 0
        %375 = vst.msk [vmem:[#allocation3 + $0x4c] sm:$0xf] %vm354, 0
        %376 = vst.msk [vmem:[#allocation3 + $0x50] sm:$0x1] %vm357, 0
        %377 = vst.msk [vmem:[#allocation3 + $0x54] sm:$0xf] %vm354, 0
        %378 = vst.msk [vmem:[#allocation3 + $0x58] sm:$0xf] %vm354, 0
        %379 = vst.msk [vmem:[#allocation3 + $0x5c] sm:$0x1] %vm357, 0
        %380 = vst.msk [vmem:[#allocation3 + $0x60] sm:$0xf] %vm354, 0
        %381 = vst.msk [vmem:[#allocation3 + $0x64] sm:$0xf] %vm354, 0
        %382 = vst.msk [vmem:[#allocation3 + $0x68] sm:$0x1] %vm357, 0
        %383 = vst.msk [vmem:[#allocation3 + $0x6c] sm:$0xf] %vm354, 0
        %384 = vst.msk [vmem:[#allocation3 + $0x70] sm:$0xf] %vm354, 0
        %385 = vst.msk [vmem:[#allocation3 + $0x74] sm:$0x1] %vm357, 0
        %386 = vst.msk [vmem:[#allocation3 + $0x78] sm:$0xf] %vm354, 0
        %387 = vst.msk [vmem:[#allocation3 + $0x7c] sm:$0xf] %vm354, 0
        %388 = vst.msk [vmem:[#allocation3 + $0x80] sm:$0x1] %vm357, 0
        %389 = vst.msk [vmem:[#allocation3 + $0x84] sm:$0xf] %vm354, 0
        %390 = vst.msk [vmem:[#allocation3 + $0x88] sm:$0xf] %vm354, 0
        %391 = vst.msk [vmem:[#allocation3 + $0x8c] sm:$0x1] %vm357, 0
        %392 = vst.msk [vmem:[#allocation3 + $0x90] sm:$0xf] %vm354, 0
        %393 = vst.msk [vmem:[#allocation3 + $0x94] sm:$0xf] %vm354, 0
        %394 = vst.msk [vmem:[#allocation3 + $0x98] sm:$0x1] %vm357, 0
        %395 = vst.msk [vmem:[#allocation3 + $0x9c] sm:$0xf] %vm354, 0
        %396 = vst.msk [vmem:[#allocation3 + $0xa0] sm:$0xf] %vm354, 0
        %397 = vst.msk [vmem:[#allocation3 + $0xa4] sm:$0x1] %vm357, 0
        %398 = vst.msk [vmem:[#allocation3 + $0xa8] sm:$0xf] %vm354, 0
        %399 = vst.msk [vmem:[#allocation3 + $0xac] sm:$0xf] %vm354, 0
        %400 = vst.msk [vmem:[#allocation3 + $0xb0] sm:$0x1] %vm357, 0
        %401 = vst.msk [vmem:[#allocation3 + $0xb4] sm:$0xf] %vm354, 0
        %402 = vst.msk [vmem:[#allocation3 + $0xb8] sm:$0xf] %vm354, 0
        %403 = vst.msk [vmem:[#allocation3 + $0xbc] sm:$0x1] %vm357, 0
        %404 = vst.msk [vmem:[#allocation3 + $0xc0] sm:$0xf] %vm354, 0
        %405 = vst.msk [vmem:[#allocation3 + $0xc4] sm:$0xf] %vm354, 0
        %406 = vst.msk [vmem:[#allocation3 + $0xc8] sm:$0x1] %vm357, 0
        %407 = vst.msk [vmem:[#allocation3 + $0xcc] sm:$0xf] %vm354, 0
        %408 = vst.msk [vmem:[#allocation3 + $0xd0] sm:$0xf] %vm354, 0
        %409 = vst.msk [vmem:[#allocation3 + $0xd4] sm:$0x1] %vm357, 0
        %410 = vst.msk [vmem:[%s343] sm:$0x1] %vm357, 0.0
        %411 = vst.msk [vmem:[%s346] sm:$0x1] %vm357, 0.0
      $region36: #{doubleconv_forward.6} parent=31 // pred_fallthru
        _
      // Predicated region
      $region37: #{doubleconv_forward.6} parent=31 // pred_check
        %p412 = pneg %p349
      $region38: #{doubleconv_forward.6} parent=31 // pred_check_branch
        %414 = sbr.rel (%p412) target = $region40
      $region39: #{doubleconv_forward.6} parent=31 // pred_region
        %vm415 = vcmask 261120
        %416 = vst.msk [vmem:[#allocation2] sm:$0xff] %vm415, 0.0
        %417 = vst.msk [vmem:[#allocation2 + $0x8] sm:$0xff] %vm415, 0.0
        %418 = vst.msk [vmem:[#allocation2 + $0x10] sm:$0xff] %vm415, 0.0
        %419 = vst.msk [vmem:[#allocation2 + $0x18] sm:$0xff] %vm415, 0.0
        %420 = vst.msk [vmem:[#allocation2 + $0x20] sm:$0xff] %vm415, 0.0
        %421 = vst.msk [vmem:[#allocation2 + $0x28] sm:$0xff] %vm415, 0.0
        %422 = vst.msk [vmem:[#allocation2 + $0x30] sm:$0xff] %vm415, 0.0
        %423 = vst.msk [vmem:[#allocation2 + $0x38] sm:$0xff] %vm415, 0.0
        %424 = vst.msk [vmem:[#allocation2 + $0x40] sm:$0xff] %vm415, 0.0
        %425 = vst.msk [vmem:[#allocation2 + $0x48] sm:$0xff] %vm415, 0.0
        %426 = vst.msk [vmem:[#allocation2 + $0x50] sm:$0xff] %vm415, 0.0
        %427 = vst.msk [vmem:[#allocation2 + $0x58] sm:$0xff] %vm415, 0.0
        %428 = vst.msk [vmem:[#allocation2 + $0x60] sm:$0xff] %vm415, 0.0
        %429 = vst.msk [vmem:[#allocation2 + $0x68] sm:$0xff] %vm415, 0.0
        %430 = vst.msk [vmem:[#allocation2 + $0x70] sm:$0xff] %vm415, 0.0
        %431 = vst.msk [vmem:[#allocation2 + $0x78] sm:$0xff] %vm415, 0.0
        %432 = vst.msk [vmem:[#allocation2 + $0x80] sm:$0xff] %vm415, 0.0
        %433 = vst.msk [vmem:[#allocation2 + $0x88] sm:$0xff] %vm415, 0.0
        %434 = vst.msk [vmem:[#allocation2 + $0x90] sm:$0xff] %vm415, 0.0
        %435 = vst.msk [vmem:[#allocation2 + $0x98] sm:$0xff] %vm415, 0.0
        %436 = vst.msk [vmem:[#allocation2 + $0xa0] sm:$0xff] %vm415, 0.0
        %437 = vst.msk [vmem:[#allocation2 + $0xa8] sm:$0xff] %vm415, 0.0
        %438 = vst.msk [vmem:[#allocation2 + $0xb0] sm:$0xff] %vm415, 0.0
        %439 = vst.msk [vmem:[#allocation2 + $0xb8] sm:$0xff] %vm415, 0.0
        %440 = vst.msk [vmem:[#allocation2 + $0xc0] sm:$0xff] %vm415, 0.0
        %441 = vst.msk [vmem:[#allocation2 + $0xc8] sm:$0xff] %vm415, 0.0
        %442 = vst.msk [vmem:[#allocation2 + $0xd0] sm:$0xff] %vm415, 0.0
        %443 = vst.msk [vmem:[#allocation2 + $0xd8] sm:$0xff] %vm415, 0.0
        %444 = vst.msk [vmem:[#allocation2 + $0xe0] sm:$0xff] %vm415, 0.0
        %445 = vst.msk [vmem:[#allocation2 + $0xe8] sm:$0xff] %vm415, 0.0
        %446 = vst.msk [vmem:[#allocation2 + $0xf0] sm:$0xff] %vm415, 0.0
        %447 = vst.msk [vmem:[#allocation2 + $0xf8] sm:$0xff] %vm415, 0.0
      $region40: #{doubleconv_forward.6} parent=31 // pred_fallthru
        _
      %s448 = sadd.s32 %s23, %s24
      %s449 = ssub.s32 %s448, 1
      %p450 = scmp.ge.s32.totalorder %s449, 0
      %p451 = scmp.lt.s32.totalorder %s449, 16
      %p452 = pnand %p450, %p451
      %p453 = pneg %p452
      // Predicated region
      $region41: #{doubleconv_forward.6} parent=31 // pred_check
        _
      $region42: #{doubleconv_forward.6} parent=31 // pred_check_branch
        %455 = sbr.rel (%p452) target = $region44
      $region43: #{doubleconv_forward.6} parent=31 // pred_region
        %v456 = vld [vmem:[%s320] sm:$0xf]
        %v457 = vld [vmem:[%s320 + $0x4] sm:$0xf]
        %v458 = vld [vmem:[%s320 + $0x8] sm:$0xf]
        %v459 = vld [vmem:[%s320 + $0xc] sm:$0xf]
        %v460 = vld [vmem:[%s320 + $0x10] sm:$0xf]
        %v461 = vld [vmem:[%s320 + $0x14] sm:$0xf]
        %v462 = vld [vmem:[%s320 + $0x18] sm:$0xf]
        %v463 = vld [vmem:[%s320 + $0x1c] sm:$0xf]
        %v464 = vld [vmem:[%s320 + $0x20] sm:$0xf]
        %v465 = vld [vmem:[%s320 + $0x24] sm:$0xf]
        %v466 = vld [vmem:[%s320 + $0x28] sm:$0xf]
        %v467 = vld [vmem:[%s320 + $0x2c] sm:$0xf]
        %v468 = vld [vmem:[%s320 + $0x30] sm:$0xf]
        %v469 = vld [vmem:[%s320 + $0x34] sm:$0xf]
        %v470 = vld [vmem:[%s320 + $0x38] sm:$0xf]
        %v471 = vld [vmem:[%s320 + $0x3c] sm:$0xf]
        %v472 = vld [vmem:[%s320 + $0x40] sm:$0xf]
        %v473 = vld [vmem:[%s320 + $0x44] sm:$0xf]
        %v474 = vld [vmem:[%s320 + $0x48] sm:$0xf]
        %v475 = vld [vmem:[%s320 + $0x4c] sm:$0xf]
        %v476 = vld [vmem:[%s320 + $0x50] sm:$0xf]
        %v477 = vld [vmem:[%s320 + $0x54] sm:$0xf]
        %v478 = vld [vmem:[%s320 + $0x58] sm:$0xf]
        %v479 = vld [vmem:[%s320 + $0x5c] sm:$0xf]
        %v480 = vld [vmem:[%s320 + $0x60] sm:$0xf]
        %v481 = vld [vmem:[%s320 + $0x64] sm:$0xf]
        %v482 = vld [vmem:[%s320 + $0x68] sm:$0xf]
        %v483 = vld [vmem:[%s320 + $0x6c] sm:$0xf]
        %v484 = vld [vmem:[%s320 + $0x70] sm:$0xf]
        %v485 = vld [vmem:[%s320 + $0x74] sm:$0xf]
        %v486 = vld [vmem:[%s320 + $0x78] sm:$0xf]
        %v487 = vld [vmem:[%s320 + $0x7c] sm:$0xf]
        %vm488 = vsmask.f32 256
        %vm489 = vsmask.f32 4368
        %vm490 = vmor %vm488, %vm489
        %v492 = vshrl.u32 %v456, 16
        %v494 = vrot.slane %v492, 7
        %v495 = vshll.u32 %v456, 16
        %v497 = vor.u32 %v494, %v495
        %v498 = vrot.slane %v494, 4
        %v500 = vshrl.u32 %v457, 16
        %v502 = vrot.slane %v500, 7
        %v503 = vshll.u32 %v457, 16
        %v505 = vor.u32 %v502, %v503
        %v506 = vsel %vm490, %v498, %v505
        %v507 = vrot.slane %v502, 4
        %v509 = vshrl.u32 %v458, 16
        %v511 = vrot.slane %v509, 7
        %v512 = vshll.u32 %v458, 16
        %v514 = vor.u32 %v511, %v512
        %v515 = vrot.slane %v511, 4
        %v517 = vshrl.u32 %v459, 16
        %v519 = vrot.slane %v517, 7
        %v520 = vshll.u32 %v459, 16
        %v522 = vor.u32 %v519, %v520
        %v523 = vsel %vm490, %v515, %v522
        %v524 = vrot.slane %v519, 4
        %v526 = vshrl.u32 %v460, 16
        %v528 = vrot.slane %v526, 7
        %v529 = vshll.u32 %v460, 16
        %v531 = vor.u32 %v528, %v529
        %v532 = vrot.slane %v528, 4
        %v534 = vshrl.u32 %v461, 16
        %v536 = vrot.slane %v534, 7
        %v537 = vshll.u32 %v461, 16
        %v539 = vor.u32 %v536, %v537
        %v540 = vsel %vm490, %v532, %v539
        %v541 = vrot.slane %v536, 4
        %v543 = vshrl.u32 %v462, 16
        %v545 = vrot.slane %v543, 7
        %v546 = vshll.u32 %v462, 16
        %v548 = vor.u32 %v545, %v546
        %v549 = vrot.slane %v545, 4
        %v551 = vshrl.u32 %v463, 16
        %v553 = vrot.slane %v551, 7
        %v554 = vshll.u32 %v463, 16
        %v556 = vor.u32 %v553, %v554
        %v557 = vsel %vm490, %v549, %v556
        %v558 = vrot.slane %v553, 4
        %v560 = vshrl.u32 %v464, 16
        %v562 = vrot.slane %v560, 7
        %v563 = vshll.u32 %v464, 16
        %v565 = vor.u32 %v562, %v563
        %v566 = vrot.slane %v562, 4
        %v568 = vshrl.u32 %v465, 16
        %v570 = vrot.slane %v568, 7
        %v571 = vshll.u32 %v465, 16
        %v573 = vor.u32 %v570, %v571
        %v574 = vsel %vm490, %v566, %v573
        %v575 = vrot.slane %v570, 4
        %v577 = vshrl.u32 %v466, 16
        %v579 = vrot.slane %v577, 7
        %v580 = vshll.u32 %v466, 16
        %v582 = vor.u32 %v579, %v580
        %v583 = vrot.slane %v579, 4
        %v585 = vshrl.u32 %v467, 16
        %v587 = vrot.slane %v585, 7
        %v588 = vshll.u32 %v467, 16
        %v590 = vor.u32 %v587, %v588
        %v591 = vsel %vm490, %v583, %v590
        %v592 = vrot.slane %v587, 4
        %v594 = vshrl.u32 %v468, 16
        %v596 = vrot.slane %v594, 7
        %v597 = vshll.u32 %v468, 16
        %v599 = vor.u32 %v596, %v597
        %v600 = vrot.slane %v596, 4
        %v602 = vshrl.u32 %v469, 16
        %v604 = vrot.slane %v602, 7
        %v605 = vshll.u32 %v469, 16
        %v607 = vor.u32 %v604, %v605
        %v608 = vsel %vm490, %v600, %v607
        %v609 = vrot.slane %v604, 4
        %v611 = vshrl.u32 %v470, 16
        %v613 = vrot.slane %v611, 7
        %v614 = vshll.u32 %v470, 16
        %v616 = vor.u32 %v613, %v614
        %v617 = vrot.slane %v613, 4
        %v619 = vshrl.u32 %v471, 16
        %v621 = vrot.slane %v619, 7
        %v622 = vshll.u32 %v471, 16
        %v624 = vor.u32 %v621, %v622
        %v625 = vsel %vm490, %v617, %v624
        %v626 = vrot.slane %v621, 4
        %v628 = vshrl.u32 %v472, 16
        %v630 = vrot.slane %v628, 7
        %v631 = vshll.u32 %v472, 16
        %v633 = vor.u32 %v630, %v631
        %v634 = vrot.slane %v630, 4
        %v636 = vshrl.u32 %v473, 16
        %v638 = vrot.slane %v636, 7
        %v639 = vshll.u32 %v473, 16
        %v641 = vor.u32 %v638, %v639
        %v642 = vsel %vm490, %v634, %v641
        %v643 = vrot.slane %v638, 4
        %v645 = vshrl.u32 %v474, 16
        %v647 = vrot.slane %v645, 7
        %v648 = vshll.u32 %v474, 16
        %v650 = vor.u32 %v647, %v648
        %v651 = vrot.slane %v647, 4
        %v653 = vshrl.u32 %v475, 16
        %v655 = vrot.slane %v653, 7
        %v656 = vshll.u32 %v475, 16
        %v658 = vor.u32 %v655, %v656
        %v659 = vsel %vm490, %v651, %v658
        %v660 = vrot.slane %v655, 4
        %v662 = vshrl.u32 %v476, 16
        %v664 = vrot.slane %v662, 7
        %v665 = vshll.u32 %v476, 16
        %v667 = vor.u32 %v664, %v665
        %v668 = vrot.slane %v664, 4
        %v670 = vshrl.u32 %v477, 16
        %v672 = vrot.slane %v670, 7
        %v673 = vshll.u32 %v477, 16
        %v675 = vor.u32 %v672, %v673
        %v676 = vsel %vm490, %v668, %v675
        %v677 = vrot.slane %v672, 4
        %v679 = vshrl.u32 %v478, 16
        %v681 = vrot.slane %v679, 7
        %v682 = vshll.u32 %v478, 16
        %v684 = vor.u32 %v681, %v682
        %v685 = vrot.slane %v681, 4
        %v687 = vshrl.u32 %v479, 16
        %v689 = vrot.slane %v687, 7
        %v690 = vshll.u32 %v479, 16
        %v692 = vor.u32 %v689, %v690
        %v693 = vsel %vm490, %v685, %v692
        %v694 = vrot.slane %v689, 4
        %v696 = vshrl.u32 %v480, 16
        %v698 = vrot.slane %v696, 7
        %v699 = vshll.u32 %v480, 16
        %v701 = vor.u32 %v698, %v699
        %v702 = vrot.slane %v698, 4
        %v704 = vshrl.u32 %v481, 16
        %v706 = vrot.slane %v704, 7
        %v707 = vshll.u32 %v481, 16
        %v709 = vor.u32 %v706, %v707
        %v710 = vsel %vm490, %v702, %v709
        %v711 = vrot.slane %v706, 4
        %v713 = vshrl.u32 %v482, 16
        %v715 = vrot.slane %v713, 7
        %v716 = vshll.u32 %v482, 16
        %v718 = vor.u32 %v715, %v716
        %v719 = vrot.slane %v715, 4
        %v721 = vshrl.u32 %v483, 16
        %v723 = vrot.slane %v721, 7
        %v724 = vshll.u32 %v483, 16
        %v726 = vor.u32 %v723, %v724
        %v727 = vsel %vm490, %v719, %v726
        %v728 = vrot.slane %v723, 4
        %v730 = vshrl.u32 %v484, 16
        %v732 = vrot.slane %v730, 7
        %v733 = vshll.u32 %v484, 16
        %v735 = vor.u32 %v732, %v733
        %v736 = vrot.slane %v732, 4
        %v738 = vshrl.u32 %v485, 16
        %v740 = vrot.slane %v738, 7
        %v741 = vshll.u32 %v485, 16
        %v743 = vor.u32 %v740, %v741
        %v744 = vsel %vm490, %v736, %v743
        %v745 = vrot.slane %v740, 4
        %v747 = vshrl.u32 %v486, 16
        %v749 = vrot.slane %v747, 7
        %v750 = vshll.u32 %v486, 16
        %v752 = vor.u32 %v749, %v750
        %v753 = vrot.slane %v749, 4
        %v755 = vshrl.u32 %v487, 16
        %v757 = vrot.slane %v755, 7
        %v758 = vshll.u32 %v487, 16
        %v760 = vor.u32 %v757, %v758
        %v761 = vsel %vm490, %v753, %v760
        %v762 = vrot.slane %v757, 4
        %s811 = scalar_lea.vmem [#allocation3], 12
        %vm812 = vcmask 257024
        %vm813 = vsmask.f32 7938
        %vm814 = vmand %vm812, %vm813
        %v815 = vld [vmem:[%s811] sm:$0xf]
        %v816 = vsel %vm814, %v497, %v815
        %817 = vst [vmem:[%s811] sm:$0xf] %v816
        %vm818 = vcmask 257024
        %819 = vst.msk [vmem:[%s811 + $0x4] sm:$0xf] %vm818, %v506
        %vm820 = vcmask 253952
        %vm821 = vmand %vm820, %vm488
        %v822 = vld [vmem:[%s811 + $0x8] sm:$0x1]
        %v823 = vsel %vm821, %v507, %v822
        %824 = vst [vmem:[%s811 + $0x8] sm:$0x1] %v823
        %v825 = vld [vmem:[%s811 + $0xc] sm:$0xf]
        %v826 = vsel %vm814, %v514, %v825
        %827 = vst [vmem:[%s811 + $0xc] sm:$0xf] %v826
        %828 = vst.msk [vmem:[%s811 + $0x10] sm:$0xf] %vm818, %v523
        %v829 = vld [vmem:[%s811 + $0x14] sm:$0x1]
        %v830 = vsel %vm821, %v524, %v829
        %831 = vst [vmem:[%s811 + $0x14] sm:$0x1] %v830
        %v832 = vld [vmem:[%s811 + $0x18] sm:$0xf]
        %v833 = vsel %vm814, %v531, %v832
        %834 = vst [vmem:[%s811 + $0x18] sm:$0xf] %v833
        %835 = vst.msk [vmem:[%s811 + $0x1c] sm:$0xf] %vm818, %v540
        %v836 = vld [vmem:[%s811 + $0x20] sm:$0x1]
        %v837 = vsel %vm821, %v541, %v836
        %838 = vst [vmem:[%s811 + $0x20] sm:$0x1] %v837
        %v839 = vld [vmem:[%s811 + $0x24] sm:$0xf]
        %v840 = vsel %vm814, %v548, %v839
        %841 = vst [vmem:[%s811 + $0x24] sm:$0xf] %v840
        %842 = vst.msk [vmem:[%s811 + $0x28] sm:$0xf] %vm818, %v557
        %v843 = vld [vmem:[%s811 + $0x2c] sm:$0x1]
        %v844 = vsel %vm821, %v558, %v843
        %845 = vst [vmem:[%s811 + $0x2c] sm:$0x1] %v844
        %v846 = vld [vmem:[%s811 + $0x30] sm:$0xf]
        %v847 = vsel %vm814, %v565, %v846
        %848 = vst [vmem:[%s811 + $0x30] sm:$0xf] %v847
        %849 = vst.msk [vmem:[%s811 + $0x34] sm:$0xf] %vm818, %v574
        %v850 = vld [vmem:[%s811 + $0x38] sm:$0x1]
        %v851 = vsel %vm821, %v575, %v850
        %852 = vst [vmem:[%s811 + $0x38] sm:$0x1] %v851
        %v853 = vld [vmem:[%s811 + $0x3c] sm:$0xf]
        %v854 = vsel %vm814, %v582, %v853
        %855 = vst [vmem:[%s811 + $0x3c] sm:$0xf] %v854
        %856 = vst.msk [vmem:[%s811 + $0x40] sm:$0xf] %vm818, %v591
        %v857 = vld [vmem:[%s811 + $0x44] sm:$0x1]
        %v858 = vsel %vm821, %v592, %v857
        %859 = vst [vmem:[%s811 + $0x44] sm:$0x1] %v858
        %v860 = vld [vmem:[%s811 + $0x48] sm:$0xf]
        %v861 = vsel %vm814, %v599, %v860
        %862 = vst [vmem:[%s811 + $0x48] sm:$0xf] %v861
        %863 = vst.msk [vmem:[%s811 + $0x4c] sm:$0xf] %vm818, %v608
        %v864 = vld [vmem:[%s811 + $0x50] sm:$0x1]
        %v865 = vsel %vm821, %v609, %v864
        %866 = vst [vmem:[%s811 + $0x50] sm:$0x1] %v865
        %v867 = vld [vmem:[%s811 + $0x54] sm:$0xf]
        %v868 = vsel %vm814, %v616, %v867
        %869 = vst [vmem:[%s811 + $0x54] sm:$0xf] %v868
        %870 = vst.msk [vmem:[%s811 + $0x58] sm:$0xf] %vm818, %v625
        %v871 = vld [vmem:[%s811 + $0x5c] sm:$0x1]
        %v872 = vsel %vm821, %v626, %v871
        %873 = vst [vmem:[%s811 + $0x5c] sm:$0x1] %v872
        %v874 = vld [vmem:[%s811 + $0x60] sm:$0xf]
        %v875 = vsel %vm814, %v633, %v874
        %876 = vst [vmem:[%s811 + $0x60] sm:$0xf] %v875
        %877 = vst.msk [vmem:[%s811 + $0x64] sm:$0xf] %vm818, %v642
        %v878 = vld [vmem:[%s811 + $0x68] sm:$0x1]
        %v879 = vsel %vm821, %v643, %v878
        %880 = vst [vmem:[%s811 + $0x68] sm:$0x1] %v879
        %v881 = vld [vmem:[%s811 + $0x6c] sm:$0xf]
        %v882 = vsel %vm814, %v650, %v881
        %883 = vst [vmem:[%s811 + $0x6c] sm:$0xf] %v882
        %884 = vst.msk [vmem:[%s811 + $0x70] sm:$0xf] %vm818, %v659
        %v885 = vld [vmem:[%s811 + $0x74] sm:$0x1]
        %v886 = vsel %vm821, %v660, %v885
        %887 = vst [vmem:[%s811 + $0x74] sm:$0x1] %v886
        %v888 = vld [vmem:[%s811 + $0x78] sm:$0xf]
        %v889 = vsel %vm814, %v667, %v888
        %890 = vst [vmem:[%s811 + $0x78] sm:$0xf] %v889
        %891 = vst.msk [vmem:[%s811 + $0x7c] sm:$0xf] %vm818, %v676
        %v892 = vld [vmem:[%s811 + $0x80] sm:$0x1]
        %v893 = vsel %vm821, %v677, %v892
        %894 = vst [vmem:[%s811 + $0x80] sm:$0x1] %v893
        %v895 = vld [vmem:[%s811 + $0x84] sm:$0xf]
        %v896 = vsel %vm814, %v684, %v895
        %897 = vst [vmem:[%s811 + $0x84] sm:$0xf] %v896
        %898 = vst.msk [vmem:[%s811 + $0x88] sm:$0xf] %vm818, %v693
        %v899 = vld [vmem:[%s811 + $0x8c] sm:$0x1]
        %v900 = vsel %vm821, %v694, %v899
        %901 = vst [vmem:[%s811 + $0x8c] sm:$0x1] %v900
        %v902 = vld [vmem:[%s811 + $0x90] sm:$0xf]
        %v903 = vsel %vm814, %v701, %v902
        %904 = vst [vmem:[%s811 + $0x90] sm:$0xf] %v903
        %905 = vst.msk [vmem:[%s811 + $0x94] sm:$0xf] %vm818, %v710
        %v906 = vld [vmem:[%s811 + $0x98] sm:$0x1]
        %v907 = vsel %vm821, %v711, %v906
        %908 = vst [vmem:[%s811 + $0x98] sm:$0x1] %v907
        %v909 = vld [vmem:[%s811 + $0x9c] sm:$0xf]
        %v910 = vsel %vm814, %v718, %v909
        %911 = vst [vmem:[%s811 + $0x9c] sm:$0xf] %v910
        %912 = vst.msk [vmem:[%s811 + $0xa0] sm:$0xf] %vm818, %v727
        %v913 = vld [vmem:[%s811 + $0xa4] sm:$0x1]
        %v914 = vsel %vm821, %v728, %v913
        %915 = vst [vmem:[%s811 + $0xa4] sm:$0x1] %v914
        %v916 = vld [vmem:[%s811 + $0xa8] sm:$0xf]
        %v917 = vsel %vm814, %v735, %v916
        %918 = vst [vmem:[%s811 + $0xa8] sm:$0xf] %v917
        %919 = vst.msk [vmem:[%s811 + $0xac] sm:$0xf] %vm818, %v744
        %v920 = vld [vmem:[%s811 + $0xb0] sm:$0x1]
        %v921 = vsel %vm821, %v745, %v920
        %922 = vst [vmem:[%s811 + $0xb0] sm:$0x1] %v921
        %v923 = vld [vmem:[%s811 + $0xb4] sm:$0xf]
        %v924 = vsel %vm814, %v752, %v923
        %925 = vst [vmem:[%s811 + $0xb4] sm:$0xf] %v924
        %926 = vst.msk [vmem:[%s811 + $0xb8] sm:$0xf] %vm818, %v761
        %v927 = vld [vmem:[%s811 + $0xbc] sm:$0x1]
        %v928 = vsel %vm821, %v762, %v927
        %929 = vst [vmem:[%s811 + $0xbc] sm:$0x1] %v928
        %v930 = vld [vmem:[#allocation3] sm:$0xf]
        %v931 = vld [vmem:[#allocation3 + $0x4] sm:$0xf]
        %v932 = vld [vmem:[#allocation3 + $0xc] sm:$0xf]
        %v933 = vld [vmem:[#allocation3 + $0x10] sm:$0xf]
        %v934 = vld [vmem:[#allocation3 + $0x18] sm:$0xf]
        %v935 = vld [vmem:[#allocation3 + $0x1c] sm:$0xf]
        %v936 = vld [vmem:[#allocation3 + $0x24] sm:$0xf]
        %v937 = vld [vmem:[#allocation3 + $0x28] sm:$0xf]
        %v938 = vld [vmem:[#allocation3 + $0x30] sm:$0xf]
        %v939 = vld [vmem:[#allocation3 + $0x34] sm:$0xf]
        %v940 = vld [vmem:[#allocation3 + $0x3c] sm:$0xf]
        %v941 = vld [vmem:[#allocation3 + $0x40] sm:$0xf]
        %v942 = vld [vmem:[#allocation3 + $0x48] sm:$0xf]
        %v943 = vld [vmem:[#allocation3 + $0x4c] sm:$0xf]
        %v944 = vld [vmem:[#allocation3 + $0x54] sm:$0xf]
        %v945 = vld [vmem:[#allocation3 + $0x58] sm:$0xf]
        %v946 = vld [vmem:[#allocation3 + $0x60] sm:$0xf]
        %v947 = vld [vmem:[#allocation3 + $0x64] sm:$0xf]
        %v948 = vld [vmem:[#allocation3 + $0x6c] sm:$0xf]
        %v949 = vld [vmem:[#allocation3 + $0x70] sm:$0xf]
        %v950 = vld [vmem:[#allocation3 + $0x78] sm:$0xf]
        %v951 = vld [vmem:[#allocation3 + $0x7c] sm:$0xf]
        %v952 = vld [vmem:[#allocation3 + $0x84] sm:$0xf]
        %v953 = vld [vmem:[#allocation3 + $0x88] sm:$0xf]
        %v954 = vld [vmem:[#allocation3 + $0x90] sm:$0xf]
        %v955 = vld [vmem:[#allocation3 + $0x94] sm:$0xf]
        %v956 = vld [vmem:[#allocation3 + $0x9c] sm:$0xf]
        %v957 = vld [vmem:[#allocation3 + $0xa0] sm:$0xf]
        %v958 = vld [vmem:[#allocation3 + $0xa8] sm:$0xf]
        %v959 = vld [vmem:[#allocation3 + $0xac] sm:$0xf]
        %v960 = vld [vmem:[#allocation3 + $0xb4] sm:$0xf]
        %v961 = vld [vmem:[#allocation3 + $0xb8] sm:$0xf]
        %v962 = vld [vmem:[#allocation3 + $0x8] sm:$0x1]
        %v963 = vld [vmem:[#allocation3 + $0x14] sm:$0x1]
        %v964 = vld [vmem:[#allocation3 + $0x20] sm:$0x1]
        %v965 = vld [vmem:[#allocation3 + $0x2c] sm:$0x1]
        %v966 = vld [vmem:[#allocation3 + $0x38] sm:$0x1]
        %v967 = vld [vmem:[#allocation3 + $0x44] sm:$0x1]
        %v968 = vld [vmem:[#allocation3 + $0x50] sm:$0x1]
        %v969 = vld [vmem:[#allocation3 + $0x5c] sm:$0x1]
        %v970 = vld [vmem:[#allocation3 + $0x68] sm:$0x1]
        %v971 = vld [vmem:[#allocation3 + $0x74] sm:$0x1]
        %v972 = vld [vmem:[#allocation3 + $0x80] sm:$0x1]
        %v973 = vld [vmem:[#allocation3 + $0x8c] sm:$0x1]
        %v974 = vld [vmem:[#allocation3 + $0x98] sm:$0x1]
        %v975 = vld [vmem:[#allocation3 + $0xa4] sm:$0x1]
        %v976 = vld [vmem:[#allocation3 + $0xb0] sm:$0x1]
        %v977 = vld [vmem:[#allocation3 + $0xbc] sm:$0x1]
        %v978 = vld [vmem:[#allocation3] sm:$0xe]
        %v979 = vld [vmem:[#allocation3 + $0xc] sm:$0xe]
        %v980 = vld [vmem:[#allocation3 + $0x18] sm:$0xe]
        %v981 = vld [vmem:[#allocation3 + $0x24] sm:$0xe]
        %v982 = vld [vmem:[#allocation3 + $0x30] sm:$0xe]
        %v983 = vld [vmem:[#allocation3 + $0x3c] sm:$0xe]
        %v984 = vld [vmem:[#allocation3 + $0x48] sm:$0xe]
        %v985 = vld [vmem:[#allocation3 + $0x54] sm:$0xe]
        %v986 = vld [vmem:[#allocation3 + $0x60] sm:$0xe]
        %v987 = vld [vmem:[#allocation3 + $0x6c] sm:$0xe]
        %v988 = vld [vmem:[#allocation3 + $0x78] sm:$0xe]
        %v989 = vld [vmem:[#allocation3 + $0x84] sm:$0xe]
        %v990 = vld [vmem:[#allocation3 + $0x90] sm:$0xe]
        %v991 = vld [vmem:[#allocation3 + $0x9c] sm:$0xe]
        %v992 = vld [vmem:[#allocation3 + $0xa8] sm:$0xe]
        %v993 = vld [vmem:[#allocation3 + $0xb4] sm:$0xe]
        %v994 = vld [vmem:[%s811] sm:$0xf]
        %v995 = vld [vmem:[%s811 + $0x4] sm:$0xf]
        %v996 = vld [vmem:[%s811 + $0xc] sm:$0xf]
        %v997 = vld [vmem:[%s811 + $0x10] sm:$0xf]
        %v998 = vld [vmem:[%s811 + $0x18] sm:$0xf]
        %v999 = vld [vmem:[%s811 + $0x1c] sm:$0xf]
        %v1000 = vld [vmem:[%s811 + $0x24] sm:$0xf]
        %v1001 = vld [vmem:[%s811 + $0x28] sm:$0xf]
        %v1002 = vld [vmem:[%s811 + $0x30] sm:$0xf]
        %v1003 = vld [vmem:[%s811 + $0x34] sm:$0xf]
        %v1004 = vld [vmem:[%s811 + $0x3c] sm:$0xf]
        %v1005 = vld [vmem:[%s811 + $0x40] sm:$0xf]
        %v1006 = vld [vmem:[%s811 + $0x48] sm:$0xf]
        %v1007 = vld [vmem:[%s811 + $0x4c] sm:$0xf]
        %v1008 = vld [vmem:[%s811 + $0x54] sm:$0xf]
        %v1009 = vld [vmem:[%s811 + $0x58] sm:$0xf]
        %v1010 = vld [vmem:[%s811 + $0x60] sm:$0xf]
        %v1011 = vld [vmem:[%s811 + $0x64] sm:$0xf]
        %v1012 = vld [vmem:[%s811 + $0x6c] sm:$0xf]
        %v1013 = vld [vmem:[%s811 + $0x70] sm:$0xf]
        %v1014 = vld [vmem:[%s811 + $0x78] sm:$0xf]
        %v1015 = vld [vmem:[%s811 + $0x7c] sm:$0xf]
        %v1016 = vld [vmem:[%s811 + $0x84] sm:$0xf]
        %v1017 = vld [vmem:[%s811 + $0x88] sm:$0xf]
        %v1018 = vld [vmem:[%s811 + $0x90] sm:$0xf]
        %v1019 = vld [vmem:[%s811 + $0x94] sm:$0xf]
        %v1020 = vld [vmem:[%s811 + $0x9c] sm:$0xf]
        %v1021 = vld [vmem:[%s811 + $0xa0] sm:$0xf]
        %v1022 = vld [vmem:[%s811 + $0xa8] sm:$0xf]
        %v1023 = vld [vmem:[%s811 + $0xac] sm:$0xf]
        %v1024 = vld [vmem:[%s811 + $0xb4] sm:$0xf]
        %v1025 = vld [vmem:[%s811 + $0xb8] sm:$0xf]
        %v1026 = vld [vmem:[%s811 + $0x8] sm:$0x1]
        %v1027 = vld [vmem:[%s811 + $0x14] sm:$0x1]
        %v1028 = vld [vmem:[%s811 + $0x20] sm:$0x1]
        %v1029 = vld [vmem:[%s811 + $0x2c] sm:$0x1]
        %v1030 = vld [vmem:[%s811 + $0x38] sm:$0x1]
        %v1031 = vld [vmem:[%s811 + $0x44] sm:$0x1]
        %v1032 = vld [vmem:[%s811 + $0x50] sm:$0x1]
        %v1033 = vld [vmem:[%s811 + $0x5c] sm:$0x1]
        %v1034 = vld [vmem:[%s811 + $0x68] sm:$0x1]
        %v1035 = vld [vmem:[%s811 + $0x74] sm:$0x1]
        %v1036 = vld [vmem:[%s811 + $0x80] sm:$0x1]
        %v1037 = vld [vmem:[%s811 + $0x8c] sm:$0x1]
        %v1038 = vld [vmem:[%s811 + $0x98] sm:$0x1]
        %v1039 = vld [vmem:[%s811 + $0xa4] sm:$0x1]
        %v1040 = vld [vmem:[%s811 + $0xb0] sm:$0x1]
        %v1041 = vld [vmem:[%s811 + $0xbc] sm:$0x1]
        %v1042 = vld [vmem:[%s811] sm:$0xe]
        %v1043 = vld [vmem:[%s811 + $0xc] sm:$0xe]
        %v1044 = vld [vmem:[%s811 + $0x18] sm:$0xe]
        %v1045 = vld [vmem:[%s811 + $0x24] sm:$0xe]
        %v1046 = vld [vmem:[%s811 + $0x30] sm:$0xe]
        %v1047 = vld [vmem:[%s811 + $0x3c] sm:$0xe]
        %v1048 = vld [vmem:[%s811 + $0x48] sm:$0xe]
        %v1049 = vld [vmem:[%s811 + $0x54] sm:$0xe]
        %v1050 = vld [vmem:[%s811 + $0x60] sm:$0xe]
        %v1051 = vld [vmem:[%s811 + $0x6c] sm:$0xe]
        %v1052 = vld [vmem:[%s811 + $0x78] sm:$0xe]
        %v1053 = vld [vmem:[%s811 + $0x84] sm:$0xe]
        %v1054 = vld [vmem:[%s811 + $0x90] sm:$0xe]
        %v1055 = vld [vmem:[%s811 + $0x9c] sm:$0xe]
        %v1056 = vld [vmem:[%s811 + $0xa8] sm:$0xe]
        %v1057 = vld [vmem:[%s811 + $0xb4] sm:$0xe]
        %s1058 = scalar_lea.vmem [#allocation3], 24
        %v1059 = vld [vmem:[%s1058] sm:$0xf]
        %v1060 = vld [vmem:[%s1058 + $0x4] sm:$0xf]
        %v1061 = vld [vmem:[%s1058 + $0xc] sm:$0xf]
        %v1062 = vld [vmem:[%s1058 + $0x10] sm:$0xf]
        %v1063 = vld [vmem:[%s1058 + $0x18] sm:$0xf]
        %v1064 = vld [vmem:[%s1058 + $0x1c] sm:$0xf]
        %v1065 = vld [vmem:[%s1058 + $0x24] sm:$0xf]
        %v1066 = vld [vmem:[%s1058 + $0x28] sm:$0xf]
        %v1067 = vld [vmem:[%s1058 + $0x30] sm:$0xf]
        %v1068 = vld [vmem:[%s1058 + $0x34] sm:$0xf]
        %v1069 = vld [vmem:[%s1058 + $0x3c] sm:$0xf]
        %v1070 = vld [vmem:[%s1058 + $0x40] sm:$0xf]
        %v1071 = vld [vmem:[%s1058 + $0x48] sm:$0xf]
        %v1072 = vld [vmem:[%s1058 + $0x4c] sm:$0xf]
        %v1073 = vld [vmem:[%s1058 + $0x54] sm:$0xf]
        %v1074 = vld [vmem:[%s1058 + $0x58] sm:$0xf]
        %v1075 = vld [vmem:[%s1058 + $0x60] sm:$0xf]
        %v1076 = vld [vmem:[%s1058 + $0x64] sm:$0xf]
        %v1077 = vld [vmem:[%s1058 + $0x6c] sm:$0xf]
        %v1078 = vld [vmem:[%s1058 + $0x70] sm:$0xf]
        %v1079 = vld [vmem:[%s1058 + $0x78] sm:$0xf]
        %v1080 = vld [vmem:[%s1058 + $0x7c] sm:$0xf]
        %v1081 = vld [vmem:[%s1058 + $0x84] sm:$0xf]
        %v1082 = vld [vmem:[%s1058 + $0x88] sm:$0xf]
        %v1083 = vld [vmem:[%s1058 + $0x90] sm:$0xf]
        %v1084 = vld [vmem:[%s1058 + $0x94] sm:$0xf]
        %v1085 = vld [vmem:[%s1058 + $0x9c] sm:$0xf]
        %v1086 = vld [vmem:[%s1058 + $0xa0] sm:$0xf]
        %v1087 = vld [vmem:[%s1058 + $0xa8] sm:$0xf]
        %v1088 = vld [vmem:[%s1058 + $0xac] sm:$0xf]
        %v1089 = vld [vmem:[%s1058 + $0xb4] sm:$0xf]
        %v1090 = vld [vmem:[%s1058 + $0xb8] sm:$0xf]
        %v1091 = vld [vmem:[%s1058 + $0x8] sm:$0x1]
        %v1092 = vld [vmem:[%s1058 + $0x14] sm:$0x1]
        %v1093 = vld [vmem:[%s1058 + $0x20] sm:$0x1]
        %v1094 = vld [vmem:[%s1058 + $0x2c] sm:$0x1]
        %v1095 = vld [vmem:[%s1058 + $0x38] sm:$0x1]
        %v1096 = vld [vmem:[%s1058 + $0x44] sm:$0x1]
        %v1097 = vld [vmem:[%s1058 + $0x50] sm:$0x1]
        %v1098 = vld [vmem:[%s1058 + $0x5c] sm:$0x1]
        %v1099 = vld [vmem:[%s1058 + $0x68] sm:$0x1]
        %v1100 = vld [vmem:[%s1058 + $0x74] sm:$0x1]
        %v1101 = vld [vmem:[%s1058 + $0x80] sm:$0x1]
        %v1102 = vld [vmem:[%s1058 + $0x8c] sm:$0x1]
        %v1103 = vld [vmem:[%s1058 + $0x98] sm:$0x1]
        %v1104 = vld [vmem:[%s1058 + $0xa4] sm:$0x1]
        %v1105 = vld [vmem:[%s1058 + $0xb0] sm:$0x1]
        %v1106 = vld [vmem:[%s1058 + $0xbc] sm:$0x1]
        %v1107 = vld [vmem:[%s1058] sm:$0xe]
        %v1108 = vld [vmem:[%s1058 + $0xc] sm:$0xe]
        %v1109 = vld [vmem:[%s1058 + $0x18] sm:$0xe]
        %v1110 = vld [vmem:[%s1058 + $0x24] sm:$0xe]
        %v1111 = vld [vmem:[%s1058 + $0x30] sm:$0xe]
        %v1112 = vld [vmem:[%s1058 + $0x3c] sm:$0xe]
        %v1113 = vld [vmem:[%s1058 + $0x48] sm:$0xe]
        %v1114 = vld [vmem:[%s1058 + $0x54] sm:$0xe]
        %v1115 = vld [vmem:[%s1058 + $0x60] sm:$0xe]
        %v1116 = vld [vmem:[%s1058 + $0x6c] sm:$0xe]
        %v1117 = vld [vmem:[%s1058 + $0x78] sm:$0xe]
        %v1118 = vld [vmem:[%s1058 + $0x84] sm:$0xe]
        %v1119 = vld [vmem:[%s1058 + $0x90] sm:$0xe]
        %v1120 = vld [vmem:[%s1058 + $0x9c] sm:$0xe]
        %v1121 = vld [vmem:[%s1058 + $0xa8] sm:$0xe]
        %v1122 = vld [vmem:[%s1058 + $0xb4] sm:$0xe]
        %v1155 = vunpack.c.l.b16 %v930
        %v1156 = vunpack.c.l.b16 %v931
        %v1157 = vunpack.c.l.b16 %v932
        %v1158 = vunpack.c.l.b16 %v933
        %v1159 = vunpack.c.l.b16 %v934
        %v1160 = vunpack.c.l.b16 %v935
        %v1161 = vunpack.c.l.b16 %v936
        %v1162 = vunpack.c.l.b16 %v937
        %v1163 = vunpack.c.l.b16 %v938
        %v1164 = vunpack.c.l.b16 %v939
        %v1165 = vunpack.c.l.b16 %v940
        %v1166 = vunpack.c.l.b16 %v941
        %v1167 = vunpack.c.l.b16 %v942
        %v1168 = vunpack.c.l.b16 %v943
        %v1169 = vunpack.c.l.b16 %v944
        %v1170 = vunpack.c.l.b16 %v945
        %v1171 = vunpack.c.l.b16 %v946
        %v1172 = vunpack.c.l.b16 %v947
        %v1173 = vunpack.c.l.b16 %v948
        %v1174 = vunpack.c.l.b16 %v949
        %v1175 = vunpack.c.l.b16 %v950
        %v1176 = vunpack.c.l.b16 %v951
        %v1177 = vunpack.c.l.b16 %v952
        %v1178 = vunpack.c.l.b16 %v953
        %v1179 = vunpack.c.l.b16 %v954
        %v1180 = vunpack.c.l.b16 %v955
        %v1181 = vunpack.c.l.b16 %v956
        %v1182 = vunpack.c.l.b16 %v957
        %v1183 = vunpack.c.l.b16 %v958
        %v1184 = vunpack.c.l.b16 %v959
        %v1185 = vunpack.c.l.b16 %v960
        %v1186 = vunpack.c.l.b16 %v961
        %v1187 = vpack.c.b16 %v1156, %v1155
        %v1188 = vpack.c.b16 %v1158, %v1157
        %v1189 = vpack.c.b16 %v1160, %v1159
        %v1190 = vpack.c.b16 %v1162, %v1161
        %v1191 = vpack.c.b16 %v1164, %v1163
        %v1192 = vpack.c.b16 %v1166, %v1165
        %v1193 = vpack.c.b16 %v1168, %v1167
        %v1194 = vpack.c.b16 %v1170, %v1169
        %v1195 = vpack.c.b16 %v1172, %v1171
        %v1196 = vpack.c.b16 %v1174, %v1173
        %v1197 = vpack.c.b16 %v1176, %v1175
        %v1198 = vpack.c.b16 %v1178, %v1177
        %v1199 = vpack.c.b16 %v1180, %v1179
        %v1200 = vpack.c.b16 %v1182, %v1181
        %v1201 = vpack.c.b16 %v1184, %v1183
        %v1202 = vpack.c.b16 %v1186, %v1185
        %v1219 = vunpack.c.l.b16 %v962
        %v1220 = vunpack.c.l.b16 %v963
        %v1221 = vunpack.c.l.b16 %v964
        %v1222 = vunpack.c.l.b16 %v965
        %v1223 = vunpack.c.l.b16 %v966
        %v1224 = vunpack.c.l.b16 %v967
        %v1225 = vunpack.c.l.b16 %v968
        %v1226 = vunpack.c.l.b16 %v969
        %v1227 = vunpack.c.l.b16 %v970
        %v1228 = vunpack.c.l.b16 %v971
        %v1229 = vunpack.c.l.b16 %v972
        %v1230 = vunpack.c.l.b16 %v973
        %v1231 = vunpack.c.l.b16 %v974
        %v1232 = vunpack.c.l.b16 %v975
        %v1233 = vunpack.c.l.b16 %v976
        %v1234 = vunpack.c.l.b16 %v977
        %v1235 = vpack.c.b16 %v1219, %v1219
        %v1236 = vpack.c.b16 %v1220, %v1220
        %v1237 = vpack.c.b16 %v1221, %v1221
        %v1238 = vpack.c.b16 %v1222, %v1222
        %v1239 = vpack.c.b16 %v1223, %v1223
        %v1240 = vpack.c.b16 %v1224, %v1224
        %v1241 = vpack.c.b16 %v1225, %v1225
        %v1242 = vpack.c.b16 %v1226, %v1226
        %v1243 = vpack.c.b16 %v1227, %v1227
        %v1244 = vpack.c.b16 %v1228, %v1228
        %v1245 = vpack.c.b16 %v1229, %v1229
        %v1246 = vpack.c.b16 %v1230, %v1230
        %v1247 = vpack.c.b16 %v1231, %v1231
        %v1248 = vpack.c.b16 %v1232, %v1232
        %v1249 = vpack.c.b16 %v1233, %v1233
        %v1250 = vpack.c.b16 %v1234, %v1234
        %vm1251 = vsmask.f32 7424
        %v1253 = vshrl.u32 %v1187, 16
        %v1255 = vshll.u32 %v1187, 16
        %v1257 = vrot.slane %v1255, 1
        %v1258 = vor.u32 %v1253, %v1257
        %v1260 = vshll.u32 %v1235, 16
        %v1262 = vrot.slane %v1260, 1
        %v1263 = vsel %vm1251, %v1258, %v1262
        %v1265 = vshrl.u32 %v1188, 16
        %v1267 = vshll.u32 %v1188, 16
        %v1269 = vrot.slane %v1267, 1
        %v1270 = vor.u32 %v1265, %v1269
        %v1272 = vshll.u32 %v1236, 16
        %v1274 = vrot.slane %v1272, 1
        %v1275 = vsel %vm1251, %v1270, %v1274
        %v1277 = vshrl.u32 %v1189, 16
        %v1279 = vshll.u32 %v1189, 16
        %v1281 = vrot.slane %v1279, 1
        %v1282 = vor.u32 %v1277, %v1281
        %v1284 = vshll.u32 %v1237, 16
        %v1286 = vrot.slane %v1284, 1
        %v1287 = vsel %vm1251, %v1282, %v1286
        %v1289 = vshrl.u32 %v1190, 16
        %v1291 = vshll.u32 %v1190, 16
        %v1293 = vrot.slane %v1291, 1
        %v1294 = vor.u32 %v1289, %v1293
        %v1296 = vshll.u32 %v1238, 16
        %v1298 = vrot.slane %v1296, 1
        %v1299 = vsel %vm1251, %v1294, %v1298
        %v1301 = vshrl.u32 %v1191, 16
        %v1303 = vshll.u32 %v1191, 16
        %v1305 = vrot.slane %v1303, 1
        %v1306 = vor.u32 %v1301, %v1305
        %v1308 = vshll.u32 %v1239, 16
        %v1310 = vrot.slane %v1308, 1
        %v1311 = vsel %vm1251, %v1306, %v1310
        %v1313 = vshrl.u32 %v1192, 16
        %v1315 = vshll.u32 %v1192, 16
        %v1317 = vrot.slane %v1315, 1
        %v1318 = vor.u32 %v1313, %v1317
        %v1320 = vshll.u32 %v1240, 16
        %v1322 = vrot.slane %v1320, 1
        %v1323 = vsel %vm1251, %v1318, %v1322
        %v1325 = vshrl.u32 %v1193, 16
        %v1327 = vshll.u32 %v1193, 16
        %v1329 = vrot.slane %v1327, 1
        %v1330 = vor.u32 %v1325, %v1329
        %v1332 = vshll.u32 %v1241, 16
        %v1334 = vrot.slane %v1332, 1
        %v1335 = vsel %vm1251, %v1330, %v1334
        %v1337 = vshrl.u32 %v1194, 16
        %v1339 = vshll.u32 %v1194, 16
        %v1341 = vrot.slane %v1339, 1
        %v1342 = vor.u32 %v1337, %v1341
        %v1344 = vshll.u32 %v1242, 16
        %v1346 = vrot.slane %v1344, 1
        %v1347 = vsel %vm1251, %v1342, %v1346
        %v1349 = vshrl.u32 %v1195, 16
        %v1351 = vshll.u32 %v1195, 16
        %v1353 = vrot.slane %v1351, 1
        %v1354 = vor.u32 %v1349, %v1353
        %v1356 = vshll.u32 %v1243, 16
        %v1358 = vrot.slane %v1356, 1
        %v1359 = vsel %vm1251, %v1354, %v1358
        %v1361 = vshrl.u32 %v1196, 16
        %v1363 = vshll.u32 %v1196, 16
        %v1365 = vrot.slane %v1363, 1
        %v1366 = vor.u32 %v1361, %v1365
        %v1368 = vshll.u32 %v1244, 16
        %v1370 = vrot.slane %v1368, 1
        %v1371 = vsel %vm1251, %v1366, %v1370
        %v1373 = vshrl.u32 %v1197, 16
        %v1375 = vshll.u32 %v1197, 16
        %v1377 = vrot.slane %v1375, 1
        %v1378 = vor.u32 %v1373, %v1377
        %v1380 = vshll.u32 %v1245, 16
        %v1382 = vrot.slane %v1380, 1
        %v1383 = vsel %vm1251, %v1378, %v1382
        %v1385 = vshrl.u32 %v1198, 16
        %v1387 = vshll.u32 %v1198, 16
        %v1389 = vrot.slane %v1387, 1
        %v1390 = vor.u32 %v1385, %v1389
        %v1392 = vshll.u32 %v1246, 16
        %v1394 = vrot.slane %v1392, 1
        %v1395 = vsel %vm1251, %v1390, %v1394
        %v1397 = vshrl.u32 %v1199, 16
        %v1399 = vshll.u32 %v1199, 16
        %v1401 = vrot.slane %v1399, 1
        %v1402 = vor.u32 %v1397, %v1401
        %v1404 = vshll.u32 %v1247, 16
        %v1406 = vrot.slane %v1404, 1
        %v1407 = vsel %vm1251, %v1402, %v1406
        %v1409 = vshrl.u32 %v1200, 16
        %v1411 = vshll.u32 %v1200, 16
        %v1413 = vrot.slane %v1411, 1
        %v1414 = vor.u32 %v1409, %v1413
        %v1416 = vshll.u32 %v1248, 16
        %v1418 = vrot.slane %v1416, 1
        %v1419 = vsel %vm1251, %v1414, %v1418
        %v1421 = vshrl.u32 %v1201, 16
        %v1423 = vshll.u32 %v1201, 16
        %v1425 = vrot.slane %v1423, 1
        %v1426 = vor.u32 %v1421, %v1425
        %v1428 = vshll.u32 %v1249, 16
        %v1430 = vrot.slane %v1428, 1
        %v1431 = vsel %vm1251, %v1426, %v1430
        %v1433 = vshrl.u32 %v1202, 16
        %v1435 = vshll.u32 %v1202, 16
        %v1437 = vrot.slane %v1435, 1
        %v1438 = vor.u32 %v1433, %v1437
        %v1440 = vshll.u32 %v1250, 16
        %v1442 = vrot.slane %v1440, 1
        %v1443 = vsel %vm1251, %v1438, %v1442
        %1444 = vrot.lane.b32.xlu0 %v1263, 32
        %v1445 = vpop.permute.xlu0 %1444
        %1446 = vrot.lane.b32.xlu0 %v1275, 32
        %v1447 = vpop.permute.xlu0 %1446
        %1448 = vrot.lane.b32.xlu0 %v1287, 32
        %v1449 = vpop.permute.xlu0 %1448
        %1450 = vrot.lane.b32.xlu0 %v1299, 32
        %v1451 = vpop.permute.xlu0 %1450
        %1452 = vrot.lane.b32.xlu0 %v1311, 32
        %v1453 = vpop.permute.xlu0 %1452
        %1454 = vrot.lane.b32.xlu0 %v1323, 32
        %v1455 = vpop.permute.xlu0 %1454
        %1456 = vrot.lane.b32.xlu0 %v1335, 32
        %v1457 = vpop.permute.xlu0 %1456
        %1458 = vrot.lane.b32.xlu0 %v1347, 32
        %v1459 = vpop.permute.xlu0 %1458
        %1460 = vrot.lane.b32.xlu0 %v1359, 32
        %v1461 = vpop.permute.xlu0 %1460
        %1462 = vrot.lane.b32.xlu0 %v1371, 32
        %v1463 = vpop.permute.xlu0 %1462
        %1464 = vrot.lane.b32.xlu0 %v1383, 32
        %v1465 = vpop.permute.xlu0 %1464
        %1466 = vrot.lane.b32.xlu0 %v1395, 32
        %v1467 = vpop.permute.xlu0 %1466
        %1468 = vrot.lane.b32.xlu0 %v1407, 32
        %v1469 = vpop.permute.xlu0 %1468
        %1470 = vrot.lane.b32.xlu0 %v1419, 32
        %v1471 = vpop.permute.xlu0 %1470
        %1472 = vrot.lane.b32.xlu0 %v1431, 32
        %v1473 = vpop.permute.xlu0 %1472
        %1474 = vrot.lane.b32.xlu0 %v1443, 32
        %v1475 = vpop.permute.xlu0 %1474
        %v1492 = vunpack.c.l.b16 %v978
        %v1493 = vunpack.c.l.b16 %v979
        %v1494 = vunpack.c.l.b16 %v980
        %v1495 = vunpack.c.l.b16 %v981
        %v1496 = vunpack.c.l.b16 %v982
        %v1497 = vunpack.c.l.b16 %v983
        %v1498 = vunpack.c.l.b16 %v984
        %v1499 = vunpack.c.l.b16 %v985
        %v1500 = vunpack.c.l.b16 %v986
        %v1501 = vunpack.c.l.b16 %v987
        %v1502 = vunpack.c.l.b16 %v988
        %v1503 = vunpack.c.l.b16 %v989
        %v1504 = vunpack.c.l.b16 %v990
        %v1505 = vunpack.c.l.b16 %v991
        %v1506 = vunpack.c.l.b16 %v992
        %v1507 = vunpack.c.l.b16 %v993
        %v1508 = vpack.c.b16 %v1156, %v1492
        %v1509 = vpack.c.b16 %v1158, %v1493
        %v1510 = vpack.c.b16 %v1160, %v1494
        %v1511 = vpack.c.b16 %v1162, %v1495
        %v1512 = vpack.c.b16 %v1164, %v1496
        %v1513 = vpack.c.b16 %v1166, %v1497
        %v1514 = vpack.c.b16 %v1168, %v1498
        %v1515 = vpack.c.b16 %v1170, %v1499
        %v1516 = vpack.c.b16 %v1172, %v1500
        %v1517 = vpack.c.b16 %v1174, %v1501
        %v1518 = vpack.c.b16 %v1176, %v1502
        %v1519 = vpack.c.b16 %v1178, %v1503
        %v1520 = vpack.c.b16 %v1180, %v1504
        %v1521 = vpack.c.b16 %v1182, %v1505
        %v1522 = vpack.c.b16 %v1184, %v1506
        %v1523 = vpack.c.b16 %v1186, %v1507
        %vm1524 = vcmask 1046528
        %v1525 = vrot.slane %v1508, 1
        %v1526 = vrot.slane %v1235, 1
        %v1527 = vsel %vm1524, %v1525, %v1526
        %v1528 = vrot.slane %v1509, 1
        %v1529 = vrot.slane %v1236, 1
        %v1530 = vsel %vm1524, %v1528, %v1529
        %v1531 = vrot.slane %v1510, 1
        %v1532 = vrot.slane %v1237, 1
        %v1533 = vsel %vm1524, %v1531, %v1532
        %v1534 = vrot.slane %v1511, 1
        %v1535 = vrot.slane %v1238, 1
        %v1536 = vsel %vm1524, %v1534, %v1535
        %v1537 = vrot.slane %v1512, 1
        %v1538 = vrot.slane %v1239, 1
        %v1539 = vsel %vm1524, %v1537, %v1538
        %v1540 = vrot.slane %v1513, 1
        %v1541 = vrot.slane %v1240, 1
        %v1542 = vsel %vm1524, %v1540, %v1541
        %v1543 = vrot.slane %v1514, 1
        %v1544 = vrot.slane %v1241, 1
        %v1545 = vsel %vm1524, %v1543, %v1544
        %v1546 = vrot.slane %v1515, 1
        %v1547 = vrot.slane %v1242, 1
        %v1548 = vsel %vm1524, %v1546, %v1547
        %v1549 = vrot.slane %v1516, 1
        %v1550 = vrot.slane %v1243, 1
        %v1551 = vsel %vm1524, %v1549, %v1550
        %v1552 = vrot.slane %v1517, 1
        %v1553 = vrot.slane %v1244, 1
        %v1554 = vsel %vm1524, %v1552, %v1553
        %v1555 = vrot.slane %v1518, 1
        %v1556 = vrot.slane %v1245, 1
        %v1557 = vsel %vm1524, %v1555, %v1556
        %v1558 = vrot.slane %v1519, 1
        %v1559 = vrot.slane %v1246, 1
        %v1560 = vsel %vm1524, %v1558, %v1559
        %v1561 = vrot.slane %v1520, 1
        %v1562 = vrot.slane %v1247, 1
        %v1563 = vsel %vm1524, %v1561, %v1562
        %v1564 = vrot.slane %v1521, 1
        %v1565 = vrot.slane %v1248, 1
        %v1566 = vsel %vm1524, %v1564, %v1565
        %v1567 = vrot.slane %v1522, 1
        %v1568 = vrot.slane %v1249, 1
        %v1569 = vsel %vm1524, %v1567, %v1568
        %v1570 = vrot.slane %v1523, 1
        %v1571 = vrot.slane %v1250, 1
        %v1572 = vsel %vm1524, %v1570, %v1571
        %1573 = vrot.lane.b32.xlu0 %v1527, 64
        %v1574 = vpop.permute.xlu0 %1573
        %1575 = vrot.lane.b32.xlu0 %v1530, 64
        %v1576 = vpop.permute.xlu0 %1575
        %1577 = vrot.lane.b32.xlu0 %v1533, 64
        %v1578 = vpop.permute.xlu0 %1577
        %1579 = vrot.lane.b32.xlu0 %v1536, 64
        %v1580 = vpop.permute.xlu0 %1579
        %1581 = vrot.lane.b32.xlu0 %v1539, 64
        %v1582 = vpop.permute.xlu0 %1581
        %1583 = vrot.lane.b32.xlu0 %v1542, 64
        %v1584 = vpop.permute.xlu0 %1583
        %1585 = vrot.lane.b32.xlu0 %v1545, 64
        %v1586 = vpop.permute.xlu0 %1585
        %1587 = vrot.lane.b32.xlu0 %v1548, 64
        %v1588 = vpop.permute.xlu0 %1587
        %1589 = vrot.lane.b32.xlu0 %v1551, 64
        %v1590 = vpop.permute.xlu0 %1589
        %1591 = vrot.lane.b32.xlu0 %v1554, 64
        %v1592 = vpop.permute.xlu0 %1591
        %1593 = vrot.lane.b32.xlu0 %v1557, 64
        %v1594 = vpop.permute.xlu0 %1593
        %1595 = vrot.lane.b32.xlu0 %v1560, 64
        %v1596 = vpop.permute.xlu0 %1595
        %1597 = vrot.lane.b32.xlu0 %v1563, 64
        %v1598 = vpop.permute.xlu0 %1597
        %1599 = vrot.lane.b32.xlu0 %v1566, 64
        %v1600 = vpop.permute.xlu0 %1599
        %1601 = vrot.lane.b32.xlu0 %v1569, 64
        %v1602 = vpop.permute.xlu0 %1601
        %1603 = vrot.lane.b32.xlu0 %v1572, 64
        %v1604 = vpop.permute.xlu0 %1603
        %v1637 = vunpack.c.l.b16 %v994
        %v1638 = vunpack.c.l.b16 %v995
        %v1639 = vunpack.c.l.b16 %v996
        %v1640 = vunpack.c.l.b16 %v997
        %v1641 = vunpack.c.l.b16 %v998
        %v1642 = vunpack.c.l.b16 %v999
        %v1643 = vunpack.c.l.b16 %v1000
        %v1644 = vunpack.c.l.b16 %v1001
        %v1645 = vunpack.c.l.b16 %v1002
        %v1646 = vunpack.c.l.b16 %v1003
        %v1647 = vunpack.c.l.b16 %v1004
        %v1648 = vunpack.c.l.b16 %v1005
        %v1649 = vunpack.c.l.b16 %v1006
        %v1650 = vunpack.c.l.b16 %v1007
        %v1651 = vunpack.c.l.b16 %v1008
        %v1652 = vunpack.c.l.b16 %v1009
        %v1653 = vunpack.c.l.b16 %v1010
        %v1654 = vunpack.c.l.b16 %v1011
        %v1655 = vunpack.c.l.b16 %v1012
        %v1656 = vunpack.c.l.b16 %v1013
        %v1657 = vunpack.c.l.b16 %v1014
        %v1658 = vunpack.c.l.b16 %v1015
        %v1659 = vunpack.c.l.b16 %v1016
        %v1660 = vunpack.c.l.b16 %v1017
        %v1661 = vunpack.c.l.b16 %v1018
        %v1662 = vunpack.c.l.b16 %v1019
        %v1663 = vunpack.c.l.b16 %v1020
        %v1664 = vunpack.c.l.b16 %v1021
        %v1665 = vunpack.c.l.b16 %v1022
        %v1666 = vunpack.c.l.b16 %v1023
        %v1667 = vunpack.c.l.b16 %v1024
        %v1668 = vunpack.c.l.b16 %v1025
        %v1669 = vpack.c.b16 %v1638, %v1637
        %v1670 = vpack.c.b16 %v1640, %v1639
        %v1671 = vpack.c.b16 %v1642, %v1641
        %v1672 = vpack.c.b16 %v1644, %v1643
        %v1673 = vpack.c.b16 %v1646, %v1645
        %v1674 = vpack.c.b16 %v1648, %v1647
        %v1675 = vpack.c.b16 %v1650, %v1649
        %v1676 = vpack.c.b16 %v1652, %v1651
        %v1677 = vpack.c.b16 %v1654, %v1653
        %v1678 = vpack.c.b16 %v1656, %v1655
        %v1679 = vpack.c.b16 %v1658, %v1657
        %v1680 = vpack.c.b16 %v1660, %v1659
        %v1681 = vpack.c.b16 %v1662, %v1661
        %v1682 = vpack.c.b16 %v1664, %v1663
        %v1683 = vpack.c.b16 %v1666, %v1665
        %v1684 = vpack.c.b16 %v1668, %v1667
        %1685 = vrot.lane.b32.xlu0 %v1669, 96
        %v1686 = vpop.permute.xlu0 %1685
        %1687 = vrot.lane.b32.xlu0 %v1670, 96
        %v1688 = vpop.permute.xlu0 %1687
        %1689 = vrot.lane.b32.xlu0 %v1671, 96
        %v1690 = vpop.permute.xlu0 %1689
        %1691 = vrot.lane.b32.xlu0 %v1672, 96
        %v1692 = vpop.permute.xlu0 %1691
        %1693 = vrot.lane.b32.xlu0 %v1673, 96
        %v1694 = vpop.permute.xlu0 %1693
        %1695 = vrot.lane.b32.xlu0 %v1674, 96
        %v1696 = vpop.permute.xlu0 %1695
        %1697 = vrot.lane.b32.xlu0 %v1675, 96
        %v1698 = vpop.permute.xlu0 %1697
        %1699 = vrot.lane.b32.xlu0 %v1676, 96
        %v1700 = vpop.permute.xlu0 %1699
        %1701 = vrot.lane.b32.xlu0 %v1677, 96
        %v1702 = vpop.permute.xlu0 %1701
        %1703 = vrot.lane.b32.xlu0 %v1678, 96
        %v1704 = vpop.permute.xlu0 %1703
        %1705 = vrot.lane.b32.xlu0 %v1679, 96
        %v1706 = vpop.permute.xlu0 %1705
        %1707 = vrot.lane.b32.xlu0 %v1680, 96
        %v1708 = vpop.permute.xlu0 %1707
        %1709 = vrot.lane.b32.xlu0 %v1681, 96
        %v1710 = vpop.permute.xlu0 %1709
        %1711 = vrot.lane.b32.xlu0 %v1682, 96
        %v1712 = vpop.permute.xlu0 %1711
        %1713 = vrot.lane.b32.xlu0 %v1683, 96
        %v1714 = vpop.permute.xlu0 %1713
        %1715 = vrot.lane.b32.xlu0 %v1684, 96
        %v1716 = vpop.permute.xlu0 %1715
        %v1733 = vunpack.c.l.b16 %v1026
        %v1734 = vunpack.c.l.b16 %v1027
        %v1735 = vunpack.c.l.b16 %v1028
        %v1736 = vunpack.c.l.b16 %v1029
        %v1737 = vunpack.c.l.b16 %v1030
        %v1738 = vunpack.c.l.b16 %v1031
        %v1739 = vunpack.c.l.b16 %v1032
        %v1740 = vunpack.c.l.b16 %v1033
        %v1741 = vunpack.c.l.b16 %v1034
        %v1742 = vunpack.c.l.b16 %v1035
        %v1743 = vunpack.c.l.b16 %v1036
        %v1744 = vunpack.c.l.b16 %v1037
        %v1745 = vunpack.c.l.b16 %v1038
        %v1746 = vunpack.c.l.b16 %v1039
        %v1747 = vunpack.c.l.b16 %v1040
        %v1748 = vunpack.c.l.b16 %v1041
        %v1749 = vpack.c.b16 %v1733, %v1733
        %v1750 = vpack.c.b16 %v1734, %v1734
        %v1751 = vpack.c.b16 %v1735, %v1735
        %v1752 = vpack.c.b16 %v1736, %v1736
        %v1753 = vpack.c.b16 %v1737, %v1737
        %v1754 = vpack.c.b16 %v1738, %v1738
        %v1755 = vpack.c.b16 %v1739, %v1739
        %v1756 = vpack.c.b16 %v1740, %v1740
        %v1757 = vpack.c.b16 %v1741, %v1741
        %v1758 = vpack.c.b16 %v1742, %v1742
        %v1759 = vpack.c.b16 %v1743, %v1743
        %v1760 = vpack.c.b16 %v1744, %v1744
        %v1761 = vpack.c.b16 %v1745, %v1745
        %v1762 = vpack.c.b16 %v1746, %v1746
        %v1763 = vpack.c.b16 %v1747, %v1747
        %v1764 = vpack.c.b16 %v1748, %v1748
        %v1766 = vshrl.u32 %v1669, 16
        %v1768 = vshll.u32 %v1669, 16
        %v1770 = vrot.slane %v1768, 1
        %v1771 = vor.u32 %v1766, %v1770
        %v1773 = vshll.u32 %v1749, 16
        %v1775 = vrot.slane %v1773, 1
        %v1776 = vsel %vm1251, %v1771, %v1775
        %v1778 = vshrl.u32 %v1670, 16
        %v1780 = vshll.u32 %v1670, 16
        %v1782 = vrot.slane %v1780, 1
        %v1783 = vor.u32 %v1778, %v1782
        %v1785 = vshll.u32 %v1750, 16
        %v1787 = vrot.slane %v1785, 1
        %v1788 = vsel %vm1251, %v1783, %v1787
        %v1790 = vshrl.u32 %v1671, 16
        %v1792 = vshll.u32 %v1671, 16
        %v1794 = vrot.slane %v1792, 1
        %v1795 = vor.u32 %v1790, %v1794
        %v1797 = vshll.u32 %v1751, 16
        %v1799 = vrot.slane %v1797, 1
        %v1800 = vsel %vm1251, %v1795, %v1799
        %v1802 = vshrl.u32 %v1672, 16
        %v1804 = vshll.u32 %v1672, 16
        %v1806 = vrot.slane %v1804, 1
        %v1807 = vor.u32 %v1802, %v1806
        %v1809 = vshll.u32 %v1752, 16
        %v1811 = vrot.slane %v1809, 1
        %v1812 = vsel %vm1251, %v1807, %v1811
        %v1814 = vshrl.u32 %v1673, 16
        %v1816 = vshll.u32 %v1673, 16
        %v1818 = vrot.slane %v1816, 1
        %v1819 = vor.u32 %v1814, %v1818
        %v1821 = vshll.u32 %v1753, 16
        %v1823 = vrot.slane %v1821, 1
        %v1824 = vsel %vm1251, %v1819, %v1823
        %v1826 = vshrl.u32 %v1674, 16
        %v1828 = vshll.u32 %v1674, 16
        %v1830 = vrot.slane %v1828, 1
        %v1831 = vor.u32 %v1826, %v1830
        %v1833 = vshll.u32 %v1754, 16
        %v1835 = vrot.slane %v1833, 1
        %v1836 = vsel %vm1251, %v1831, %v1835
        %v1838 = vshrl.u32 %v1675, 16
        %v1840 = vshll.u32 %v1675, 16
        %v1842 = vrot.slane %v1840, 1
        %v1843 = vor.u32 %v1838, %v1842
        %v1845 = vshll.u32 %v1755, 16
        %v1847 = vrot.slane %v1845, 1
        %v1848 = vsel %vm1251, %v1843, %v1847
        %v1850 = vshrl.u32 %v1676, 16
        %v1852 = vshll.u32 %v1676, 16
        %v1854 = vrot.slane %v1852, 1
        %v1855 = vor.u32 %v1850, %v1854
        %v1857 = vshll.u32 %v1756, 16
        %v1859 = vrot.slane %v1857, 1
        %v1860 = vsel %vm1251, %v1855, %v1859
        %v1862 = vshrl.u32 %v1677, 16
        %v1864 = vshll.u32 %v1677, 16
        %v1866 = vrot.slane %v1864, 1
        %v1867 = vor.u32 %v1862, %v1866
        %v1869 = vshll.u32 %v1757, 16
        %v1871 = vrot.slane %v1869, 1
        %v1872 = vsel %vm1251, %v1867, %v1871
        %v1874 = vshrl.u32 %v1678, 16
        %v1876 = vshll.u32 %v1678, 16
        %v1878 = vrot.slane %v1876, 1
        %v1879 = vor.u32 %v1874, %v1878
        %v1881 = vshll.u32 %v1758, 16
        %v1883 = vrot.slane %v1881, 1
        %v1884 = vsel %vm1251, %v1879, %v1883
        %v1886 = vshrl.u32 %v1679, 16
        %v1888 = vshll.u32 %v1679, 16
        %v1890 = vrot.slane %v1888, 1
        %v1891 = vor.u32 %v1886, %v1890
        %v1893 = vshll.u32 %v1759, 16
        %v1895 = vrot.slane %v1893, 1
        %v1896 = vsel %vm1251, %v1891, %v1895
        %v1898 = vshrl.u32 %v1680, 16
        %v1900 = vshll.u32 %v1680, 16
        %v1902 = vrot.slane %v1900, 1
        %v1903 = vor.u32 %v1898, %v1902
        %v1905 = vshll.u32 %v1760, 16
        %v1907 = vrot.slane %v1905, 1
        %v1908 = vsel %vm1251, %v1903, %v1907
        %v1910 = vshrl.u32 %v1681, 16
        %v1912 = vshll.u32 %v1681, 16
        %v1914 = vrot.slane %v1912, 1
        %v1915 = vor.u32 %v1910, %v1914
        %v1917 = vshll.u32 %v1761, 16
        %v1919 = vrot.slane %v1917, 1
        %v1920 = vsel %vm1251, %v1915, %v1919
        %v1922 = vshrl.u32 %v1682, 16
        %v1924 = vshll.u32 %v1682, 16
        %v1926 = vrot.slane %v1924, 1
        %v1927 = vor.u32 %v1922, %v1926
        %v1929 = vshll.u32 %v1762, 16
        %v1931 = vrot.slane %v1929, 1
        %v1932 = vsel %vm1251, %v1927, %v1931
        %v1934 = vshrl.u32 %v1683, 16
        %v1936 = vshll.u32 %v1683, 16
        %v1938 = vrot.slane %v1936, 1
        %v1939 = vor.u32 %v1934, %v1938
        %v1941 = vshll.u32 %v1763, 16
        %v1943 = vrot.slane %v1941, 1
        %v1944 = vsel %vm1251, %v1939, %v1943
        %v1946 = vshrl.u32 %v1684, 16
        %v1948 = vshll.u32 %v1684, 16
        %v1950 = vrot.slane %v1948, 1
        %v1951 = vor.u32 %v1946, %v1950
        %v1953 = vshll.u32 %v1764, 16
        %v1955 = vrot.slane %v1953, 1
        %v1956 = vsel %vm1251, %v1951, %v1955
        %v1973 = vunpack.c.l.b16 %v1042
        %v1974 = vunpack.c.l.b16 %v1043
        %v1975 = vunpack.c.l.b16 %v1044
        %v1976 = vunpack.c.l.b16 %v1045
        %v1977 = vunpack.c.l.b16 %v1046
        %v1978 = vunpack.c.l.b16 %v1047
        %v1979 = vunpack.c.l.b16 %v1048
        %v1980 = vunpack.c.l.b16 %v1049
        %v1981 = vunpack.c.l.b16 %v1050
        %v1982 = vunpack.c.l.b16 %v1051
        %v1983 = vunpack.c.l.b16 %v1052
        %v1984 = vunpack.c.l.b16 %v1053
        %v1985 = vunpack.c.l.b16 %v1054
        %v1986 = vunpack.c.l.b16 %v1055
        %v1987 = vunpack.c.l.b16 %v1056
        %v1988 = vunpack.c.l.b16 %v1057
        %v1989 = vpack.c.b16 %v1638, %v1973
        %v1990 = vpack.c.b16 %v1640, %v1974
        %v1991 = vpack.c.b16 %v1642, %v1975
        %v1992 = vpack.c.b16 %v1644, %v1976
        %v1993 = vpack.c.b16 %v1646, %v1977
        %v1994 = vpack.c.b16 %v1648, %v1978
        %v1995 = vpack.c.b16 %v1650, %v1979
        %v1996 = vpack.c.b16 %v1652, %v1980
        %v1997 = vpack.c.b16 %v1654, %v1981
        %v1998 = vpack.c.b16 %v1656, %v1982
        %v1999 = vpack.c.b16 %v1658, %v1983
        %v2000 = vpack.c.b16 %v1660, %v1984
        %v2001 = vpack.c.b16 %v1662, %v1985
        %v2002 = vpack.c.b16 %v1664, %v1986
        %v2003 = vpack.c.b16 %v1666, %v1987
        %v2004 = vpack.c.b16 %v1668, %v1988
        %v2005 = vrot.slane %v1989, 1
        %v2006 = vrot.slane %v1749, 1
        %v2007 = vsel %vm1524, %v2005, %v2006
        %v2008 = vrot.slane %v1990, 1
        %v2009 = vrot.slane %v1750, 1
        %v2010 = vsel %vm1524, %v2008, %v2009
        %v2011 = vrot.slane %v1991, 1
        %v2012 = vrot.slane %v1751, 1
        %v2013 = vsel %vm1524, %v2011, %v2012
        %v2014 = vrot.slane %v1992, 1
        %v2015 = vrot.slane %v1752, 1
        %v2016 = vsel %vm1524, %v2014, %v2015
        %v2017 = vrot.slane %v1993, 1
        %v2018 = vrot.slane %v1753, 1
        %v2019 = vsel %vm1524, %v2017, %v2018
        %v2020 = vrot.slane %v1994, 1
        %v2021 = vrot.slane %v1754, 1
        %v2022 = vsel %vm1524, %v2020, %v2021
        %v2023 = vrot.slane %v1995, 1
        %v2024 = vrot.slane %v1755, 1
        %v2025 = vsel %vm1524, %v2023, %v2024
        %v2026 = vrot.slane %v1996, 1
        %v2027 = vrot.slane %v1756, 1
        %v2028 = vsel %vm1524, %v2026, %v2027
        %v2029 = vrot.slane %v1997, 1
        %v2030 = vrot.slane %v1757, 1
        %v2031 = vsel %vm1524, %v2029, %v2030
        %v2032 = vrot.slane %v1998, 1
        %v2033 = vrot.slane %v1758, 1
        %v2034 = vsel %vm1524, %v2032, %v2033
        %v2035 = vrot.slane %v1999, 1
        %v2036 = vrot.slane %v1759, 1
        %v2037 = vsel %vm1524, %v2035, %v2036
        %v2038 = vrot.slane %v2000, 1
        %v2039 = vrot.slane %v1760, 1
        %v2040 = vsel %vm1524, %v2038, %v2039
        %v2041 = vrot.slane %v2001, 1
        %v2042 = vrot.slane %v1761, 1
        %v2043 = vsel %vm1524, %v2041, %v2042
        %v2044 = vrot.slane %v2002, 1
        %v2045 = vrot.slane %v1762, 1
        %v2046 = vsel %vm1524, %v2044, %v2045
        %v2047 = vrot.slane %v2003, 1
        %v2048 = vrot.slane %v1763, 1
        %v2049 = vsel %vm1524, %v2047, %v2048
        %v2050 = vrot.slane %v2004, 1
        %v2051 = vrot.slane %v1764, 1
        %v2052 = vsel %vm1524, %v2050, %v2051
        %2053 = vrot.lane.b32.xlu0 %v2007, 32
        %v2054 = vpop.permute.xlu0 %2053
        %2055 = vrot.lane.b32.xlu0 %v2010, 32
        %v2056 = vpop.permute.xlu0 %2055
        %2057 = vrot.lane.b32.xlu0 %v2013, 32
        %v2058 = vpop.permute.xlu0 %2057
        %2059 = vrot.lane.b32.xlu0 %v2016, 32
        %v2060 = vpop.permute.xlu0 %2059
        %2061 = vrot.lane.b32.xlu0 %v2019, 32
        %v2062 = vpop.permute.xlu0 %2061
        %2063 = vrot.lane.b32.xlu0 %v2022, 32
        %v2064 = vpop.permute.xlu0 %2063
        %2065 = vrot.lane.b32.xlu0 %v2025, 32
        %v2066 = vpop.permute.xlu0 %2065
        %2067 = vrot.lane.b32.xlu0 %v2028, 32
        %v2068 = vpop.permute.xlu0 %2067
        %2069 = vrot.lane.b32.xlu0 %v2031, 32
        %v2070 = vpop.permute.xlu0 %2069
        %2071 = vrot.lane.b32.xlu0 %v2034, 32
        %v2072 = vpop.permute.xlu0 %2071
        %2073 = vrot.lane.b32.xlu0 %v2037, 32
        %v2074 = vpop.permute.xlu0 %2073
        %2075 = vrot.lane.b32.xlu0 %v2040, 32
        %v2076 = vpop.permute.xlu0 %2075
        %2077 = vrot.lane.b32.xlu0 %v2043, 32
        %v2078 = vpop.permute.xlu0 %2077
        %2079 = vrot.lane.b32.xlu0 %v2046, 32
        %v2080 = vpop.permute.xlu0 %2079
        %2081 = vrot.lane.b32.xlu0 %v2049, 32
        %v2082 = vpop.permute.xlu0 %2081
        %2083 = vrot.lane.b32.xlu0 %v2052, 32
        %v2084 = vpop.permute.xlu0 %2083
        %v2117 = vunpack.c.l.b16 %v1059
        %v2118 = vunpack.c.l.b16 %v1060
        %v2119 = vunpack.c.l.b16 %v1061
        %v2120 = vunpack.c.l.b16 %v1062
        %v2121 = vunpack.c.l.b16 %v1063
        %v2122 = vunpack.c.l.b16 %v1064
        %v2123 = vunpack.c.l.b16 %v1065
        %v2124 = vunpack.c.l.b16 %v1066
        %v2125 = vunpack.c.l.b16 %v1067
        %v2126 = vunpack.c.l.b16 %v1068
        %v2127 = vunpack.c.l.b16 %v1069
        %v2128 = vunpack.c.l.b16 %v1070
        %v2129 = vunpack.c.l.b16 %v1071
        %v2130 = vunpack.c.l.b16 %v1072
        %v2131 = vunpack.c.l.b16 %v1073
        %v2132 = vunpack.c.l.b16 %v1074
        %v2133 = vunpack.c.l.b16 %v1075
        %v2134 = vunpack.c.l.b16 %v1076
        %v2135 = vunpack.c.l.b16 %v1077
        %v2136 = vunpack.c.l.b16 %v1078
        %v2137 = vunpack.c.l.b16 %v1079
        %v2138 = vunpack.c.l.b16 %v1080
        %v2139 = vunpack.c.l.b16 %v1081
        %v2140 = vunpack.c.l.b16 %v1082
        %v2141 = vunpack.c.l.b16 %v1083
        %v2142 = vunpack.c.l.b16 %v1084
        %v2143 = vunpack.c.l.b16 %v1085
        %v2144 = vunpack.c.l.b16 %v1086
        %v2145 = vunpack.c.l.b16 %v1087
        %v2146 = vunpack.c.l.b16 %v1088
        %v2147 = vunpack.c.l.b16 %v1089
        %v2148 = vunpack.c.l.b16 %v1090
        %v2149 = vpack.c.b16 %v2118, %v2117
        %v2150 = vpack.c.b16 %v2120, %v2119
        %v2151 = vpack.c.b16 %v2122, %v2121
        %v2152 = vpack.c.b16 %v2124, %v2123
        %v2153 = vpack.c.b16 %v2126, %v2125
        %v2154 = vpack.c.b16 %v2128, %v2127
        %v2155 = vpack.c.b16 %v2130, %v2129
        %v2156 = vpack.c.b16 %v2132, %v2131
        %v2157 = vpack.c.b16 %v2134, %v2133
        %v2158 = vpack.c.b16 %v2136, %v2135
        %v2159 = vpack.c.b16 %v2138, %v2137
        %v2160 = vpack.c.b16 %v2140, %v2139
        %v2161 = vpack.c.b16 %v2142, %v2141
        %v2162 = vpack.c.b16 %v2144, %v2143
        %v2163 = vpack.c.b16 %v2146, %v2145
        %v2164 = vpack.c.b16 %v2148, %v2147
        %2165 = vrot.lane.b32.xlu0 %v2149, 64
        %v2166 = vpop.permute.xlu0 %2165
        %2167 = vrot.lane.b32.xlu0 %v2150, 64
        %v2168 = vpop.permute.xlu0 %2167
        %2169 = vrot.lane.b32.xlu0 %v2151, 64
        %v2170 = vpop.permute.xlu0 %2169
        %2171 = vrot.lane.b32.xlu0 %v2152, 64
        %v2172 = vpop.permute.xlu0 %2171
        %2173 = vrot.lane.b32.xlu0 %v2153, 64
        %v2174 = vpop.permute.xlu0 %2173
        %2175 = vrot.lane.b32.xlu0 %v2154, 64
        %v2176 = vpop.permute.xlu0 %2175
        %2177 = vrot.lane.b32.xlu0 %v2155, 64
        %v2178 = vpop.permute.xlu0 %2177
        %2179 = vrot.lane.b32.xlu0 %v2156, 64
        %v2180 = vpop.permute.xlu0 %2179
        %2181 = vrot.lane.b32.xlu0 %v2157, 64
        %v2182 = vpop.permute.xlu0 %2181
        %2183 = vrot.lane.b32.xlu0 %v2158, 64
        %v2184 = vpop.permute.xlu0 %2183
        %2185 = vrot.lane.b32.xlu0 %v2159, 64
        %v2186 = vpop.permute.xlu0 %2185
        %2187 = vrot.lane.b32.xlu0 %v2160, 64
        %v2188 = vpop.permute.xlu0 %2187
        %2189 = vrot.lane.b32.xlu0 %v2161, 64
        %v2190 = vpop.permute.xlu0 %2189
        %2191 = vrot.lane.b32.xlu0 %v2162, 64
        %v2192 = vpop.permute.xlu0 %2191
        %2193 = vrot.lane.b32.xlu0 %v2163, 64
        %v2194 = vpop.permute.xlu0 %2193
        %2195 = vrot.lane.b32.xlu0 %v2164, 64
        %v2196 = vpop.permute.xlu0 %2195
        %v2213 = vunpack.c.l.b16 %v1091
        %v2214 = vunpack.c.l.b16 %v1092
        %v2215 = vunpack.c.l.b16 %v1093
        %v2216 = vunpack.c.l.b16 %v1094
        %v2217 = vunpack.c.l.b16 %v1095
        %v2218 = vunpack.c.l.b16 %v1096
        %v2219 = vunpack.c.l.b16 %v1097
        %v2220 = vunpack.c.l.b16 %v1098
        %v2221 = vunpack.c.l.b16 %v1099
        %v2222 = vunpack.c.l.b16 %v1100
        %v2223 = vunpack.c.l.b16 %v1101
        %v2224 = vunpack.c.l.b16 %v1102
        %v2225 = vunpack.c.l.b16 %v1103
        %v2226 = vunpack.c.l.b16 %v1104
        %v2227 = vunpack.c.l.b16 %v1105
        %v2228 = vunpack.c.l.b16 %v1106
        %v2229 = vpack.c.b16 %v2213, %v2213
        %v2230 = vpack.c.b16 %v2214, %v2214
        %v2231 = vpack.c.b16 %v2215, %v2215
        %v2232 = vpack.c.b16 %v2216, %v2216
        %v2233 = vpack.c.b16 %v2217, %v2217
        %v2234 = vpack.c.b16 %v2218, %v2218
        %v2235 = vpack.c.b16 %v2219, %v2219
        %v2236 = vpack.c.b16 %v2220, %v2220
        %v2237 = vpack.c.b16 %v2221, %v2221
        %v2238 = vpack.c.b16 %v2222, %v2222
        %v2239 = vpack.c.b16 %v2223, %v2223
        %v2240 = vpack.c.b16 %v2224, %v2224
        %v2241 = vpack.c.b16 %v2225, %v2225
        %v2242 = vpack.c.b16 %v2226, %v2226
        %v2243 = vpack.c.b16 %v2227, %v2227
        %v2244 = vpack.c.b16 %v2228, %v2228
        %v2246 = vshrl.u32 %v2149, 16
        %v2248 = vshll.u32 %v2149, 16
        %v2250 = vrot.slane %v2248, 1
        %v2251 = vor.u32 %v2246, %v2250
        %v2253 = vshll.u32 %v2229, 16
        %v2255 = vrot.slane %v2253, 1
        %v2256 = vsel %vm1251, %v2251, %v2255
        %v2258 = vshrl.u32 %v2150, 16
        %v2260 = vshll.u32 %v2150, 16
        %v2262 = vrot.slane %v2260, 1
        %v2263 = vor.u32 %v2258, %v2262
        %v2265 = vshll.u32 %v2230, 16
        %v2267 = vrot.slane %v2265, 1
        %v2268 = vsel %vm1251, %v2263, %v2267
        %v2270 = vshrl.u32 %v2151, 16
        %v2272 = vshll.u32 %v2151, 16
        %v2274 = vrot.slane %v2272, 1
        %v2275 = vor.u32 %v2270, %v2274
        %v2277 = vshll.u32 %v2231, 16
        %v2279 = vrot.slane %v2277, 1
        %v2280 = vsel %vm1251, %v2275, %v2279
        %v2282 = vshrl.u32 %v2152, 16
        %v2284 = vshll.u32 %v2152, 16
        %v2286 = vrot.slane %v2284, 1
        %v2287 = vor.u32 %v2282, %v2286
        %v2289 = vshll.u32 %v2232, 16
        %v2291 = vrot.slane %v2289, 1
        %v2292 = vsel %vm1251, %v2287, %v2291
        %v2294 = vshrl.u32 %v2153, 16
        %v2296 = vshll.u32 %v2153, 16
        %v2298 = vrot.slane %v2296, 1
        %v2299 = vor.u32 %v2294, %v2298
        %v2301 = vshll.u32 %v2233, 16
        %v2303 = vrot.slane %v2301, 1
        %v2304 = vsel %vm1251, %v2299, %v2303
        %v2306 = vshrl.u32 %v2154, 16
        %v2308 = vshll.u32 %v2154, 16
        %v2310 = vrot.slane %v2308, 1
        %v2311 = vor.u32 %v2306, %v2310
        %v2313 = vshll.u32 %v2234, 16
        %v2315 = vrot.slane %v2313, 1
        %v2316 = vsel %vm1251, %v2311, %v2315
        %v2318 = vshrl.u32 %v2155, 16
        %v2320 = vshll.u32 %v2155, 16
        %v2322 = vrot.slane %v2320, 1
        %v2323 = vor.u32 %v2318, %v2322
        %v2325 = vshll.u32 %v2235, 16
        %v2327 = vrot.slane %v2325, 1
        %v2328 = vsel %vm1251, %v2323, %v2327
        %v2330 = vshrl.u32 %v2156, 16
        %v2332 = vshll.u32 %v2156, 16
        %v2334 = vrot.slane %v2332, 1
        %v2335 = vor.u32 %v2330, %v2334
        %v2337 = vshll.u32 %v2236, 16
        %v2339 = vrot.slane %v2337, 1
        %v2340 = vsel %vm1251, %v2335, %v2339
        %v2342 = vshrl.u32 %v2157, 16
        %v2344 = vshll.u32 %v2157, 16
        %v2346 = vrot.slane %v2344, 1
        %v2347 = vor.u32 %v2342, %v2346
        %v2349 = vshll.u32 %v2237, 16
        %v2351 = vrot.slane %v2349, 1
        %v2352 = vsel %vm1251, %v2347, %v2351
        %v2354 = vshrl.u32 %v2158, 16
        %v2356 = vshll.u32 %v2158, 16
        %v2358 = vrot.slane %v2356, 1
        %v2359 = vor.u32 %v2354, %v2358
        %v2361 = vshll.u32 %v2238, 16
        %v2363 = vrot.slane %v2361, 1
        %v2364 = vsel %vm1251, %v2359, %v2363
        %v2366 = vshrl.u32 %v2159, 16
        %v2368 = vshll.u32 %v2159, 16
        %v2370 = vrot.slane %v2368, 1
        %v2371 = vor.u32 %v2366, %v2370
        %v2373 = vshll.u32 %v2239, 16
        %v2375 = vrot.slane %v2373, 1
        %v2376 = vsel %vm1251, %v2371, %v2375
        %v2378 = vshrl.u32 %v2160, 16
        %v2380 = vshll.u32 %v2160, 16
        %v2382 = vrot.slane %v2380, 1
        %v2383 = vor.u32 %v2378, %v2382
        %v2385 = vshll.u32 %v2240, 16
        %v2387 = vrot.slane %v2385, 1
        %v2388 = vsel %vm1251, %v2383, %v2387
        %v2390 = vshrl.u32 %v2161, 16
        %v2392 = vshll.u32 %v2161, 16
        %v2394 = vrot.slane %v2392, 1
        %v2395 = vor.u32 %v2390, %v2394
        %v2397 = vshll.u32 %v2241, 16
        %v2399 = vrot.slane %v2397, 1
        %v2400 = vsel %vm1251, %v2395, %v2399
        %v2402 = vshrl.u32 %v2162, 16
        %v2404 = vshll.u32 %v2162, 16
        %v2406 = vrot.slane %v2404, 1
        %v2407 = vor.u32 %v2402, %v2406
        %v2409 = vshll.u32 %v2242, 16
        %v2411 = vrot.slane %v2409, 1
        %v2412 = vsel %vm1251, %v2407, %v2411
        %v2414 = vshrl.u32 %v2163, 16
        %v2416 = vshll.u32 %v2163, 16
        %v2418 = vrot.slane %v2416, 1
        %v2419 = vor.u32 %v2414, %v2418
        %v2421 = vshll.u32 %v2243, 16
        %v2423 = vrot.slane %v2421, 1
        %v2424 = vsel %vm1251, %v2419, %v2423
        %v2426 = vshrl.u32 %v2164, 16
        %v2428 = vshll.u32 %v2164, 16
        %v2430 = vrot.slane %v2428, 1
        %v2431 = vor.u32 %v2426, %v2430
        %v2433 = vshll.u32 %v2244, 16
        %v2435 = vrot.slane %v2433, 1
        %v2436 = vsel %vm1251, %v2431, %v2435
        %2437 = vrot.lane.b32.xlu0 %v2256, 96
        %v2438 = vpop.permute.xlu0 %2437
        %2439 = vrot.lane.b32.xlu0 %v2268, 96
        %v2440 = vpop.permute.xlu0 %2439
        %2441 = vrot.lane.b32.xlu0 %v2280, 96
        %v2442 = vpop.permute.xlu0 %2441
        %2443 = vrot.lane.b32.xlu0 %v2292, 96
        %v2444 = vpop.permute.xlu0 %2443
        %2445 = vrot.lane.b32.xlu0 %v2304, 96
        %v2446 = vpop.permute.xlu0 %2445
        %2447 = vrot.lane.b32.xlu0 %v2316, 96
        %v2448 = vpop.permute.xlu0 %2447
        %2449 = vrot.lane.b32.xlu0 %v2328, 96
        %v2450 = vpop.permute.xlu0 %2449
        %2451 = vrot.lane.b32.xlu0 %v2340, 96
        %v2452 = vpop.permute.xlu0 %2451
        %2453 = vrot.lane.b32.xlu0 %v2352, 96
        %v2454 = vpop.permute.xlu0 %2453
        %2455 = vrot.lane.b32.xlu0 %v2364, 96
        %v2456 = vpop.permute.xlu0 %2455
        %2457 = vrot.lane.b32.xlu0 %v2376, 96
        %v2458 = vpop.permute.xlu0 %2457
        %2459 = vrot.lane.b32.xlu0 %v2388, 96
        %v2460 = vpop.permute.xlu0 %2459
        %2461 = vrot.lane.b32.xlu0 %v2400, 96
        %v2462 = vpop.permute.xlu0 %2461
        %2463 = vrot.lane.b32.xlu0 %v2412, 96
        %v2464 = vpop.permute.xlu0 %2463
        %2465 = vrot.lane.b32.xlu0 %v2424, 96
        %v2466 = vpop.permute.xlu0 %2465
        %2467 = vrot.lane.b32.xlu0 %v2436, 96
        %v2468 = vpop.permute.xlu0 %2467
        %v2485 = vunpack.c.l.b16 %v1107
        %v2486 = vunpack.c.l.b16 %v1108
        %v2487 = vunpack.c.l.b16 %v1109
        %v2488 = vunpack.c.l.b16 %v1110
        %v2489 = vunpack.c.l.b16 %v1111
        %v2490 = vunpack.c.l.b16 %v1112
        %v2491 = vunpack.c.l.b16 %v1113
        %v2492 = vunpack.c.l.b16 %v1114
        %v2493 = vunpack.c.l.b16 %v1115
        %v2494 = vunpack.c.l.b16 %v1116
        %v2495 = vunpack.c.l.b16 %v1117
        %v2496 = vunpack.c.l.b16 %v1118
        %v2497 = vunpack.c.l.b16 %v1119
        %v2498 = vunpack.c.l.b16 %v1120
        %v2499 = vunpack.c.l.b16 %v1121
        %v2500 = vunpack.c.l.b16 %v1122
        %v2501 = vpack.c.b16 %v2118, %v2485
        %v2502 = vpack.c.b16 %v2120, %v2486
        %v2503 = vpack.c.b16 %v2122, %v2487
        %v2504 = vpack.c.b16 %v2124, %v2488
        %v2505 = vpack.c.b16 %v2126, %v2489
        %v2506 = vpack.c.b16 %v2128, %v2490
        %v2507 = vpack.c.b16 %v2130, %v2491
        %v2508 = vpack.c.b16 %v2132, %v2492
        %v2509 = vpack.c.b16 %v2134, %v2493
        %v2510 = vpack.c.b16 %v2136, %v2494
        %v2511 = vpack.c.b16 %v2138, %v2495
        %v2512 = vpack.c.b16 %v2140, %v2496
        %v2513 = vpack.c.b16 %v2142, %v2497
        %v2514 = vpack.c.b16 %v2144, %v2498
        %v2515 = vpack.c.b16 %v2146, %v2499
        %v2516 = vpack.c.b16 %v2148, %v2500
        %v2517 = vrot.slane %v2501, 1
        %v2518 = vrot.slane %v2229, 1
        %v2519 = vsel %vm1524, %v2517, %v2518
        %v2520 = vrot.slane %v2502, 1
        %v2521 = vrot.slane %v2230, 1
        %v2522 = vsel %vm1524, %v2520, %v2521
        %v2523 = vrot.slane %v2503, 1
        %v2524 = vrot.slane %v2231, 1
        %v2525 = vsel %vm1524, %v2523, %v2524
        %v2526 = vrot.slane %v2504, 1
        %v2527 = vrot.slane %v2232, 1
        %v2528 = vsel %vm1524, %v2526, %v2527
        %v2529 = vrot.slane %v2505, 1
        %v2530 = vrot.slane %v2233, 1
        %v2531 = vsel %vm1524, %v2529, %v2530
        %v2532 = vrot.slane %v2506, 1
        %v2533 = vrot.slane %v2234, 1
        %v2534 = vsel %vm1524, %v2532, %v2533
        %v2535 = vrot.slane %v2507, 1
        %v2536 = vrot.slane %v2235, 1
        %v2537 = vsel %vm1524, %v2535, %v2536
        %v2538 = vrot.slane %v2508, 1
        %v2539 = vrot.slane %v2236, 1
        %v2540 = vsel %vm1524, %v2538, %v2539
        %v2541 = vrot.slane %v2509, 1
        %v2542 = vrot.slane %v2237, 1
        %v2543 = vsel %vm1524, %v2541, %v2542
        %v2544 = vrot.slane %v2510, 1
        %v2545 = vrot.slane %v2238, 1
        %v2546 = vsel %vm1524, %v2544, %v2545
        %v2547 = vrot.slane %v2511, 1
        %v2548 = vrot.slane %v2239, 1
        %v2549 = vsel %vm1524, %v2547, %v2548
        %v2550 = vrot.slane %v2512, 1
        %v2551 = vrot.slane %v2240, 1
        %v2552 = vsel %vm1524, %v2550, %v2551
        %v2553 = vrot.slane %v2513, 1
        %v2554 = vrot.slane %v2241, 1
        %v2555 = vsel %vm1524, %v2553, %v2554
        %v2556 = vrot.slane %v2514, 1
        %v2557 = vrot.slane %v2242, 1
        %v2558 = vsel %vm1524, %v2556, %v2557
        %v2559 = vrot.slane %v2515, 1
        %v2560 = vrot.slane %v2243, 1
        %v2561 = vsel %vm1524, %v2559, %v2560
        %v2562 = vrot.slane %v2516, 1
        %v2563 = vrot.slane %v2244, 1
        %v2564 = vsel %vm1524, %v2562, %v2563
        %vm2565 = vcmask 261120
        %v2567 = vsel %vm2565, %v1187, %v1445
        %v2569 = vsel %vm2565, %v1188, %v1447
        %v2571 = vsel %vm2565, %v1189, %v1449
        %v2573 = vsel %vm2565, %v1190, %v1451
        %v2575 = vsel %vm2565, %v1191, %v1453
        %v2577 = vsel %vm2565, %v1192, %v1455
        %v2579 = vsel %vm2565, %v1193, %v1457
        %v2581 = vsel %vm2565, %v1194, %v1459
        %v2583 = vsel %vm2565, %v1195, %v1461
        %v2585 = vsel %vm2565, %v1196, %v1463
        %v2587 = vsel %vm2565, %v1197, %v1465
        %v2589 = vsel %vm2565, %v1198, %v1467
        %v2591 = vsel %vm2565, %v1199, %v1469
        %v2593 = vsel %vm2565, %v1200, %v1471
        %v2595 = vsel %vm2565, %v1201, %v1473
        %v2597 = vsel %vm2565, %v1202, %v1475
        %vm2598 = vcmask 523264
        %v2600 = vsel %vm2598, %v2567, %v1574
        %v2602 = vsel %vm2598, %v2569, %v1576
        %v2604 = vsel %vm2598, %v2571, %v1578
        %v2606 = vsel %vm2598, %v2573, %v1580
        %v2608 = vsel %vm2598, %v2575, %v1582
        %v2610 = vsel %vm2598, %v2577, %v1584
        %v2612 = vsel %vm2598, %v2579, %v1586
        %v2614 = vsel %vm2598, %v2581, %v1588
        %v2616 = vsel %vm2598, %v2583, %v1590
        %v2618 = vsel %vm2598, %v2585, %v1592
        %v2620 = vsel %vm2598, %v2587, %v1594
        %v2622 = vsel %vm2598, %v2589, %v1596
        %v2624 = vsel %vm2598, %v2591, %v1598
        %v2626 = vsel %vm2598, %v2593, %v1600
        %v2628 = vsel %vm2598, %v2595, %v1602
        %v2630 = vsel %vm2598, %v2597, %v1604
        %vm2631 = vcmask 785408
        %v2633 = vsel %vm2631, %v2600, %v1686
        %v2636 = vsel %vm2631, %v2602, %v1688
        %v2639 = vsel %vm2631, %v2604, %v1690
        %v2642 = vsel %vm2631, %v2606, %v1692
        %v2645 = vsel %vm2631, %v2608, %v1694
        %v2648 = vsel %vm2631, %v2610, %v1696
        %v2651 = vsel %vm2631, %v2612, %v1698
        %v2654 = vsel %vm2631, %v2614, %v1700
        %v2657 = vsel %vm2631, %v2616, %v1702
        %v2660 = vsel %vm2631, %v2618, %v1704
        %v2663 = vsel %vm2631, %v2620, %v1706
        %v2666 = vsel %vm2631, %v2622, %v1708
        %v2669 = vsel %vm2631, %v2624, %v1710
        %v2672 = vsel %vm2631, %v2626, %v1712
        %v2675 = vsel %vm2631, %v2628, %v1714
        %v2678 = vsel %vm2631, %v2630, %v1716
        %v2682 = vsel %vm2565, %v1776, %v2054
        %v2685 = vsel %vm2565, %v1788, %v2056
        %v2688 = vsel %vm2565, %v1800, %v2058
        %v2691 = vsel %vm2565, %v1812, %v2060
        %v2694 = vsel %vm2565, %v1824, %v2062
        %v2697 = vsel %vm2565, %v1836, %v2064
        %v2700 = vsel %vm2565, %v1848, %v2066
        %v2703 = vsel %vm2565, %v1860, %v2068
        %v2706 = vsel %vm2565, %v1872, %v2070
        %v2709 = vsel %vm2565, %v1884, %v2072
        %v2712 = vsel %vm2565, %v1896, %v2074
        %v2715 = vsel %vm2565, %v1908, %v2076
        %v2718 = vsel %vm2565, %v1920, %v2078
        %v2721 = vsel %vm2565, %v1932, %v2080
        %v2724 = vsel %vm2565, %v1944, %v2082
        %v2727 = vsel %vm2565, %v1956, %v2084
        %v2729 = vsel %vm2598, %v2682, %v2166
        %v2731 = vsel %vm2598, %v2685, %v2168
        %v2733 = vsel %vm2598, %v2688, %v2170
        %v2735 = vsel %vm2598, %v2691, %v2172
        %v2737 = vsel %vm2598, %v2694, %v2174
        %v2739 = vsel %vm2598, %v2697, %v2176
        %v2741 = vsel %vm2598, %v2700, %v2178
        %v2743 = vsel %vm2598, %v2703, %v2180
        %v2745 = vsel %vm2598, %v2706, %v2182
        %v2747 = vsel %vm2598, %v2709, %v2184
        %v2749 = vsel %vm2598, %v2712, %v2186
        %v2751 = vsel %vm2598, %v2715, %v2188
        %v2753 = vsel %vm2598, %v2718, %v2190
        %v2755 = vsel %vm2598, %v2721, %v2192
        %v2757 = vsel %vm2598, %v2724, %v2194
        %v2759 = vsel %vm2598, %v2727, %v2196
        %v2761 = vsel %vm2631, %v2729, %v2438
        %v2764 = vsel %vm2631, %v2731, %v2440
        %v2767 = vsel %vm2631, %v2733, %v2442
        %v2770 = vsel %vm2631, %v2735, %v2444
        %v2773 = vsel %vm2631, %v2737, %v2446
        %v2776 = vsel %vm2631, %v2739, %v2448
        %v2779 = vsel %vm2631, %v2741, %v2450
        %v2782 = vsel %vm2631, %v2743, %v2452
        %v2785 = vsel %vm2631, %v2745, %v2454
        %v2788 = vsel %vm2631, %v2747, %v2456
        %v2791 = vsel %vm2631, %v2749, %v2458
        %v2794 = vsel %vm2631, %v2751, %v2460
        %v2797 = vsel %vm2631, %v2753, %v2462
        %v2800 = vsel %vm2631, %v2755, %v2464
        %v2803 = vsel %vm2631, %v2757, %v2466
        %v2806 = vsel %vm2631, %v2759, %v2468
        %v2808 = vld [vmem:[#allocation2] sm:$0xff]
        %v2809 = vld [vmem:[#allocation2 + $0x8] sm:$0xff]
        %v2810 = vld [vmem:[#allocation2 + $0x10] sm:$0xff]
        %v2811 = vld [vmem:[#allocation2 + $0x18] sm:$0xff]
        %v2812 = vld [vmem:[#allocation2 + $0x20] sm:$0xff]
        %v2813 = vld [vmem:[#allocation2 + $0x28] sm:$0xff]
        %v2814 = vld [vmem:[#allocation2 + $0x30] sm:$0xff]
        %v2815 = vld [vmem:[#allocation2 + $0x38] sm:$0xff]
        %v2816 = vld [vmem:[#allocation2 + $0x40] sm:$0xff]
        %v2817 = vld [vmem:[#allocation2 + $0x48] sm:$0xff]
        %v2818 = vld [vmem:[#allocation2 + $0x50] sm:$0xff]
        %v2819 = vld [vmem:[#allocation2 + $0x58] sm:$0xff]
        %v2820 = vld [vmem:[#allocation2 + $0x60] sm:$0xff]
        %v2821 = vld [vmem:[#allocation2 + $0x68] sm:$0xff]
        %v2822 = vld [vmem:[#allocation2 + $0x70] sm:$0xff]
        %v2823 = vld [vmem:[#allocation2 + $0x78] sm:$0xff]
        %v2824 = vld [vmem:[#allocation2 + $0x80] sm:$0xff]
        %v2825 = vld [vmem:[#allocation2 + $0x88] sm:$0xff]
        %v2826 = vld [vmem:[#allocation2 + $0x90] sm:$0xff]
        %v2827 = vld [vmem:[#allocation2 + $0x98] sm:$0xff]
        %v2828 = vld [vmem:[#allocation2 + $0xa0] sm:$0xff]
        %v2829 = vld [vmem:[#allocation2 + $0xa8] sm:$0xff]
        %v2830 = vld [vmem:[#allocation2 + $0xb0] sm:$0xff]
        %v2831 = vld [vmem:[#allocation2 + $0xb8] sm:$0xff]
        %v2832 = vld [vmem:[#allocation2 + $0xc0] sm:$0xff]
        %v2833 = vld [vmem:[#allocation2 + $0xc8] sm:$0xff]
        %v2834 = vld [vmem:[#allocation2 + $0xd0] sm:$0xff]
        %v2835 = vld [vmem:[#allocation2 + $0xd8] sm:$0xff]
        %v2836 = vld [vmem:[#allocation2 + $0xe0] sm:$0xff]
        %v2837 = vld [vmem:[#allocation2 + $0xe8] sm:$0xff]
        %v2838 = vld [vmem:[#allocation2 + $0xf0] sm:$0xff]
        %v2839 = vld [vmem:[#allocation2 + $0xf8] sm:$0xff]
        %v2840 = vld [vmem:[%s331] sm:$0xf]
        %v2841 = vld [vmem:[%s331 + $0x4] sm:$0xf]
        %v2842 = vld [vmem:[%s331 + $0x8] sm:$0xf]
        %v2843 = vld [vmem:[%s331 + $0xc] sm:$0xf]
        %v2844 = vld [vmem:[%s331 + $0x10] sm:$0xf]
        %v2845 = vld [vmem:[%s331 + $0x14] sm:$0xf]
        %v2846 = vld [vmem:[%s331 + $0x18] sm:$0xf]
        %v2847 = vld [vmem:[%s331 + $0x1c] sm:$0xf]
        %v2848 = vld [vmem:[%s331 + $0x20] sm:$0xf]
        %v2849 = vld [vmem:[%s331 + $0x24] sm:$0xf]
        %v2850 = vld [vmem:[%s331 + $0x28] sm:$0xf]
        %v2851 = vld [vmem:[%s331 + $0x2c] sm:$0xf]
        %v2852 = vld [vmem:[%s331 + $0x30] sm:$0xf]
        %v2853 = vld [vmem:[%s331 + $0x34] sm:$0xf]
        %v2854 = vld [vmem:[%s331 + $0x38] sm:$0xf]
        %v2855 = vld [vmem:[%s331 + $0x3c] sm:$0xf]
        %v2856 = vld [vmem:[%s331 + $0x40] sm:$0xf]
        %v2857 = vld [vmem:[%s331 + $0x44] sm:$0xf]
        %v2858 = vld [vmem:[%s331 + $0x48] sm:$0xf]
        %v2859 = vld [vmem:[%s331 + $0x4c] sm:$0xf]
        %v2860 = vld [vmem:[%s331 + $0x50] sm:$0xf]
        %v2861 = vld [vmem:[%s331 + $0x54] sm:$0xf]
        %v2862 = vld [vmem:[%s331 + $0x58] sm:$0xf]
        %v2863 = vld [vmem:[%s331 + $0x5c] sm:$0xf]
        %v2864 = vld [vmem:[%s331 + $0x60] sm:$0xf]
        %v2865 = vld [vmem:[%s331 + $0x64] sm:$0xf]
        %v2866 = vld [vmem:[%s331 + $0x68] sm:$0xf]
        %v2867 = vld [vmem:[%s331 + $0x6c] sm:$0xf]
        %v2868 = vld [vmem:[%s331 + $0x70] sm:$0xf]
        %v2869 = vld [vmem:[%s331 + $0x74] sm:$0xf]
        %v2870 = vld [vmem:[%s331 + $0x78] sm:$0xf]
        %v2871 = vld [vmem:[%s331 + $0x7c] sm:$0xf]
        %v2872 = vld [vmem:[%s331 + $0x80] sm:$0xf]
        %v2873 = vld [vmem:[%s331 + $0x84] sm:$0xf]
        %v2874 = vld [vmem:[%s331 + $0x88] sm:$0xf]
        %v2875 = vld [vmem:[%s331 + $0x8c] sm:$0xf]
        %v2912 = vunpack.c.l.b16 %v2840
        %v2913 = vunpack.c.l.b16 %v2841
        %v2914 = vunpack.c.l.b16 %v2842
        %v2915 = vunpack.c.l.b16 %v2843
        %v2916 = vunpack.c.l.b16 %v2844
        %v2917 = vunpack.c.l.b16 %v2845
        %v2918 = vunpack.c.l.b16 %v2846
        %v2919 = vunpack.c.l.b16 %v2847
        %v2920 = vunpack.c.l.b16 %v2848
        %v2921 = vunpack.c.l.b16 %v2849
        %v2922 = vunpack.c.l.b16 %v2850
        %v2923 = vunpack.c.l.b16 %v2851
        %v2924 = vunpack.c.l.b16 %v2852
        %v2925 = vunpack.c.l.b16 %v2853
        %v2926 = vunpack.c.l.b16 %v2854
        %v2927 = vunpack.c.l.b16 %v2855
        %v2928 = vunpack.c.l.b16 %v2856
        %v2929 = vunpack.c.l.b16 %v2857
        %v2930 = vunpack.c.l.b16 %v2858
        %v2931 = vunpack.c.l.b16 %v2859
        %v2932 = vunpack.c.l.b16 %v2860
        %v2933 = vunpack.c.l.b16 %v2861
        %v2934 = vunpack.c.l.b16 %v2862
        %v2935 = vunpack.c.l.b16 %v2863
        %v2936 = vunpack.c.l.b16 %v2864
        %v2937 = vunpack.c.l.b16 %v2865
        %v2938 = vunpack.c.l.b16 %v2866
        %v2939 = vunpack.c.l.b16 %v2867
        %v2940 = vunpack.c.l.b16 %v2868
        %v2941 = vunpack.c.l.b16 %v2869
        %v2942 = vunpack.c.l.b16 %v2870
        %v2943 = vunpack.c.l.b16 %v2871
        %v2944 = vunpack.c.l.b16 %v2872
        %v2945 = vunpack.c.l.b16 %v2873
        %v2946 = vunpack.c.l.b16 %v2874
        %v2947 = vunpack.c.l.b16 %v2875
        %v2948 = vpack.c.b16 %v2913, %v2912
        %v2949 = vpack.c.b16 %v2915, %v2914
        %v2950 = vpack.c.b16 %v2917, %v2916
        %v2951 = vpack.c.b16 %v2919, %v2918
        %v2952 = vpack.c.b16 %v2921, %v2920
        %v2953 = vpack.c.b16 %v2923, %v2922
        %v2954 = vpack.c.b16 %v2925, %v2924
        %v2955 = vpack.c.b16 %v2927, %v2926
        %v2956 = vpack.c.b16 %v2929, %v2928
        %v2957 = vpack.c.b16 %v2931, %v2930
        %v2958 = vpack.c.b16 %v2933, %v2932
        %v2959 = vpack.c.b16 %v2935, %v2934
        %v2960 = vpack.c.b16 %v2937, %v2936
        %v2961 = vpack.c.b16 %v2939, %v2938
        %v2962 = vpack.c.b16 %v2941, %v2940
        %v2963 = vpack.c.b16 %v2943, %v2942
        %v2964 = vpack.c.b16 %v2945, %v2944
        %v2965 = vpack.c.b16 %v2947, %v2946
        %v2985 = vsel %vm2565, %v2519, 0
        %v2988 = vsel %vm2565, %v2522, 0
        %v2991 = vsel %vm2565, %v2525, 0
        %v2994 = vsel %vm2565, %v2528, 0
        %v2997 = vsel %vm2565, %v2531, 0
        %v3000 = vsel %vm2565, %v2534, 0
        %v3003 = vsel %vm2565, %v2537, 0
        %v3006 = vsel %vm2565, %v2540, 0
        %v3009 = vsel %vm2565, %v2543, 0
        %v3012 = vsel %vm2565, %v2546, 0
        %v3015 = vsel %vm2565, %v2549, 0
        %v3018 = vsel %vm2565, %v2552, 0
        %v3021 = vsel %vm2565, %v2555, 0
        %v3024 = vsel %vm2565, %v2558, 0
        %v3027 = vsel %vm2565, %v2561, 0
        %v3030 = vsel %vm2565, %v2564, 0
        %3032 = vmatprep.subr.bf16.mxu0 0
        %3033 = vmatpush1.bf16.msra.mxu0 %v2955
        %3034 = vmatprep.subr.bf16.mxu0 0
        %3035 = vmatpush1.bf16.msra.mxu0 %v2954
        %3036 = vmatprep.subr.bf16.mxu0 0
        %3037 = vmatpush1.bf16.msra.mxu0 %v2953
        %3038 = vmatprep.subr.bf16.mxu0 0
        %3039 = vmatpush1.bf16.msra.mxu0 %v2952
        %3040 = vmatprep.subr.bf16.mxu0 0
        %3041 = vmatpush1.bf16.msra.mxu0 %v2951
        %3042 = vmatprep.subr.bf16.mxu0 0
        %3043 = vmatpush1.bf16.msra.mxu0 %v2950
        %3044 = vmatprep.subr.bf16.mxu0 0
        %3045 = vmatpush1.bf16.msra.mxu0 %v2949
        %3046 = vmatprep.subr.bf16.mxu0 0
        %3047 = vmatpush1.bf16.msra.mxu0 %v2948
        %3048 = vmatprep.subr.bf16.mxu0 0
        %3049 = vmatpush2.bf16.msra.mxu0 %v2963
        %3050 = vmatprep.subr.bf16.mxu0 0
        %3051 = vmatpush2.bf16.msra.mxu0 %v2962
        %3052 = vmatprep.subr.bf16.mxu0 0
        %3053 = vmatpush2.bf16.msra.mxu0 %v2961
        %3054 = vmatprep.subr.bf16.mxu0 0
        %3055 = vmatpush2.bf16.msra.mxu0 %v2960
        %3056 = vmatprep.subr.bf16.mxu0 0
        %3057 = vmatpush2.bf16.msra.mxu0 %v2959
        %3058 = vmatprep.subr.bf16.mxu0 0
        %3059 = vmatpush2.bf16.msra.mxu0 %v2958
        %3060 = vmatprep.subr.bf16.mxu0 0
        %3061 = vmatpush2.bf16.msra.mxu0 %v2957
        %3062 = vmatprep.subr.bf16.mxu0 0
        %3063 = vmatpush2.bf16.msra.mxu0 %v2956
        %3064 = vmatprep.mubr.bf16.mxu0 %v2761
        %3065 = vmatmul.mubr.bf16.gmra.mxu0 %v2633
        %v3066 = vpop.f32.mrf.mxu0
        %v3067 = vadd.f32 0.0, %v3066
        %v3068 = vpop.f32.mrf.mxu0
        %v3069 = vpop.f32.mrf.mxu0
        %v3070 = vadd.f32 0.0, %v3069
        %v3071 = vpop.f32.mrf.mxu0
        %3072 = vmatprep.mubr.bf16.mxu0 %v2764
        %3073 = vmatmul.mubr.bf16.gmra.mxu0 %v2636
        %v3074 = vpop.f32.mrf.mxu0
        %v3075 = vadd.f32 0.0, %v3074
        %v3076 = vpop.f32.mrf.mxu0
        %v3077 = vpop.f32.mrf.mxu0
        %v3078 = vadd.f32 0.0, %v3077
        %v3079 = vpop.f32.mrf.mxu0
        %3080 = vmatprep.mubr.bf16.mxu0 %v2767
        %3081 = vmatmul.mubr.bf16.gmra.mxu0 %v2639
        %v3082 = vpop.f32.mrf.mxu0
        %v3083 = vadd.f32 0.0, %v3082
        %v3084 = vpop.f32.mrf.mxu0
        %v3085 = vpop.f32.mrf.mxu0
        %v3086 = vadd.f32 0.0, %v3085
        %v3087 = vpop.f32.mrf.mxu0
        %3088 = vmatprep.mubr.bf16.mxu0 %v2770
        %3089 = vmatmul.mubr.bf16.gmra.mxu0 %v2642
        %v3090 = vpop.f32.mrf.mxu0
        %v3091 = vadd.f32 0.0, %v3090
        %v3092 = vpop.f32.mrf.mxu0
        %v3093 = vpop.f32.mrf.mxu0
        %v3094 = vadd.f32 0.0, %v3093
        %v3095 = vpop.f32.mrf.mxu0
        %3096 = vmatprep.mubr.bf16.mxu0 %v2773
        %3097 = vmatmul.mubr.bf16.gmra.mxu0 %v2645
        %v3098 = vpop.f32.mrf.mxu0
        %v3099 = vadd.f32 0.0, %v3098
        %v3100 = vpop.f32.mrf.mxu0
        %v3101 = vpop.f32.mrf.mxu0
        %v3102 = vadd.f32 0.0, %v3101
        %v3103 = vpop.f32.mrf.mxu0
        %3104 = vmatprep.mubr.bf16.mxu0 %v2776
        %3105 = vmatmul.mubr.bf16.gmra.mxu0 %v2648
        %v3106 = vpop.f32.mrf.mxu0
        %v3107 = vadd.f32 0.0, %v3106
        %v3108 = vpop.f32.mrf.mxu0
        %v3109 = vpop.f32.mrf.mxu0
        %v3110 = vadd.f32 0.0, %v3109
        %v3111 = vpop.f32.mrf.mxu0
        %3112 = vmatprep.mubr.bf16.mxu0 %v2779
        %3113 = vmatmul.mubr.bf16.gmra.mxu0 %v2651
        %v3114 = vpop.f32.mrf.mxu0
        %v3115 = vadd.f32 0.0, %v3114
        %v3116 = vpop.f32.mrf.mxu0
        %v3117 = vpop.f32.mrf.mxu0
        %v3118 = vadd.f32 0.0, %v3117
        %v3119 = vpop.f32.mrf.mxu0
        %3120 = vmatprep.mubr.bf16.mxu0 %v2782
        %3121 = vmatmul.mubr.bf16.gmra.mxu0 %v2654
        %v3122 = vpop.f32.mrf.mxu0
        %v3123 = vadd.f32 0.0, %v3122
        %v3124 = vpop.f32.mrf.mxu0
        %v3125 = vpop.f32.mrf.mxu0
        %v3126 = vadd.f32 0.0, %v3125
        %v3127 = vpop.f32.mrf.mxu0
        %3128 = vmatprep.mubr.bf16.mxu0 %v2785
        %3129 = vmatmul.mubr.bf16.gmra.mxu0 %v2657
        %v3130 = vpop.f32.mrf.mxu0
        %v3131 = vadd.f32 0.0, %v3130
        %v3132 = vpop.f32.mrf.mxu0
        %v3133 = vpop.f32.mrf.mxu0
        %v3134 = vadd.f32 0.0, %v3133
        %v3135 = vpop.f32.mrf.mxu0
        %3136 = vmatprep.mubr.bf16.mxu0 %v2788
        %3137 = vmatmul.mubr.bf16.gmra.mxu0 %v2660
        %v3138 = vpop.f32.mrf.mxu0
        %v3139 = vadd.f32 0.0, %v3138
        %v3140 = vpop.f32.mrf.mxu0
        %v3141 = vpop.f32.mrf.mxu0
        %v3142 = vadd.f32 0.0, %v3141
        %v3143 = vpop.f32.mrf.mxu0
        %3144 = vmatprep.mubr.bf16.mxu0 %v2791
        %3145 = vmatmul.mubr.bf16.gmra.mxu0 %v2663
        %v3146 = vpop.f32.mrf.mxu0
        %v3147 = vadd.f32 0.0, %v3146
        %v3148 = vpop.f32.mrf.mxu0
        %v3149 = vpop.f32.mrf.mxu0
        %v3150 = vadd.f32 0.0, %v3149
        %v3151 = vpop.f32.mrf.mxu0
        %3152 = vmatprep.mubr.bf16.mxu0 %v2794
        %3153 = vmatmul.mubr.bf16.gmra.mxu0 %v2666
        %v3154 = vpop.f32.mrf.mxu0
        %v3155 = vadd.f32 0.0, %v3154
        %v3156 = vpop.f32.mrf.mxu0
        %v3157 = vpop.f32.mrf.mxu0
        %v3158 = vadd.f32 0.0, %v3157
        %v3159 = vpop.f32.mrf.mxu0
        %3160 = vmatprep.mubr.bf16.mxu0 %v2797
        %3161 = vmatmul.mubr.bf16.gmra.mxu0 %v2669
        %v3162 = vpop.f32.mrf.mxu0
        %v3163 = vadd.f32 0.0, %v3162
        %v3164 = vpop.f32.mrf.mxu0
        %v3165 = vpop.f32.mrf.mxu0
        %v3166 = vadd.f32 0.0, %v3165
        %v3167 = vpop.f32.mrf.mxu0
        %3168 = vmatprep.mubr.bf16.mxu0 %v2800
        %3169 = vmatmul.mubr.bf16.gmra.mxu0 %v2672
        %v3170 = vpop.f32.mrf.mxu0
        %v3171 = vadd.f32 0.0, %v3170
        %v3172 = vpop.f32.mrf.mxu0
        %v3173 = vpop.f32.mrf.mxu0
        %v3174 = vadd.f32 0.0, %v3173
        %v3175 = vpop.f32.mrf.mxu0
        %3176 = vmatprep.mubr.bf16.mxu0 %v2803
        %3177 = vmatmul.mubr.bf16.gmra.mxu0 %v2675
        %v3178 = vpop.f32.mrf.mxu0
        %v3179 = vadd.f32 0.0, %v3178
        %v3180 = vpop.f32.mrf.mxu0
        %v3181 = vpop.f32.mrf.mxu0
        %v3182 = vadd.f32 0.0, %v3181
        %v3183 = vpop.f32.mrf.mxu0
        %3184 = vmatprep.mubr.bf16.mxu0 %v2806
        %3185 = vmatmul.mubr.bf16.gmra.mxu0 %v2678
        %v3186 = vpop.f32.mrf.mxu0
        %v3187 = vadd.f32 0.0, %v3186
        %v3188 = vpop.f32.mrf.mxu0
        %v3189 = vpop.f32.mrf.mxu0
        %v3190 = vadd.f32 0.0, %v3189
        %v3191 = vpop.f32.mrf.mxu0
        %3192 = vdwg.mxu0
        %3193 = vmatprep.subr.bf16.mxu0 0
        %3194 = vmatpush1.bf16.msra.mxu0 0
        %3195 = vmatprep.subr.bf16.mxu0 0
        %3196 = vmatpush1.bf16.msra.mxu0 0
        %3197 = vmatprep.subr.bf16.mxu0 0
        %3198 = vmatpush1.bf16.msra.mxu0 0
        %3199 = vmatprep.subr.bf16.mxu0 0
        %3200 = vmatpush1.bf16.msra.mxu0 0
        %3201 = vmatprep.subr.bf16.mxu0 0
        %3202 = vmatpush1.bf16.msra.mxu0 0
        %3203 = vmatprep.subr.bf16.mxu0 0
        %3204 = vmatpush1.bf16.msra.mxu0 0
        %3205 = vmatprep.subr.bf16.mxu0 0
        %3206 = vmatpush1.bf16.msra.mxu0 %v2965
        %3207 = vmatprep.subr.bf16.mxu0 0
        %3208 = vmatpush1.bf16.msra.mxu0 %v2964
        %3209 = vmatprep.subr.bf16.mxu0 0
        %3210 = vmatpush2.bf16.msra.mxu0 0
        %3211 = vmatprep.subr.bf16.mxu0 0
        %3212 = vmatpush2.bf16.msra.mxu0 0
        %3213 = vmatprep.subr.bf16.mxu0 0
        %3214 = vmatpush2.bf16.msra.mxu0 0
        %3215 = vmatprep.subr.bf16.mxu0 0
        %3216 = vmatpush2.bf16.msra.mxu0 0
        %3217 = vmatprep.subr.bf16.mxu0 0
        %3218 = vmatpush2.bf16.msra.mxu0 0
        %3219 = vmatprep.subr.bf16.mxu0 0
        %3220 = vmatpush2.bf16.msra.mxu0 0
        %3221 = vmatprep.subr.bf16.mxu0 0
        %3222 = vmatpush2.bf16.msra.mxu0 0
        %3223 = vmatprep.subr.bf16.mxu0 0
        %3224 = vmatpush2.bf16.msra.mxu0 0
        %3225 = vmatprep.mubr.bf16.mxu0 0
        %3226 = vmatmul.mubr.bf16.gmra.mxu0 %v2985
        %v3227 = vpop.f32.mrf.mxu0
        %v3228 = vadd.f32 %v3067, %v3227
        %v3229 = vpop.f32.mrf.mxu0
        %v3230 = vpop.f32.mrf.mxu0
        %v3231 = vadd.f32 %v3070, %v3230
        %v3232 = vpop.f32.mrf.mxu0
        %3233 = vmatprep.mubr.bf16.mxu0 0
        %3234 = vmatmul.mubr.bf16.gmra.mxu0 %v2988
        %v3235 = vpop.f32.mrf.mxu0
        %v3236 = vadd.f32 %v3075, %v3235
        %v3237 = vpop.f32.mrf.mxu0
        %v3238 = vpop.f32.mrf.mxu0
        %v3239 = vadd.f32 %v3078, %v3238
        %v3240 = vpop.f32.mrf.mxu0
        %3241 = vmatprep.mubr.bf16.mxu0 0
        %3242 = vmatmul.mubr.bf16.gmra.mxu0 %v2991
        %v3243 = vpop.f32.mrf.mxu0
        %v3244 = vadd.f32 %v3083, %v3243
        %v3245 = vpop.f32.mrf.mxu0
        %v3246 = vpop.f32.mrf.mxu0
        %v3247 = vadd.f32 %v3086, %v3246
        %v3248 = vpop.f32.mrf.mxu0
        %3249 = vmatprep.mubr.bf16.mxu0 0
        %3250 = vmatmul.mubr.bf16.gmra.mxu0 %v2994
        %v3251 = vpop.f32.mrf.mxu0
        %v3252 = vadd.f32 %v3091, %v3251
        %v3253 = vpop.f32.mrf.mxu0
        %v3254 = vpop.f32.mrf.mxu0
        %v3255 = vadd.f32 %v3094, %v3254
        %v3256 = vpop.f32.mrf.mxu0
        %3257 = vmatprep.mubr.bf16.mxu0 0
        %3258 = vmatmul.mubr.bf16.gmra.mxu0 %v2997
        %v3259 = vpop.f32.mrf.mxu0
        %v3260 = vadd.f32 %v3099, %v3259
        %v3261 = vpop.f32.mrf.mxu0
        %v3262 = vpop.f32.mrf.mxu0
        %v3263 = vadd.f32 %v3102, %v3262
        %v3264 = vpop.f32.mrf.mxu0
        %3265 = vmatprep.mubr.bf16.mxu0 0
        %3266 = vmatmul.mubr.bf16.gmra.mxu0 %v3000
        %v3267 = vpop.f32.mrf.mxu0
        %v3268 = vadd.f32 %v3107, %v3267
        %v3269 = vpop.f32.mrf.mxu0
        %v3270 = vpop.f32.mrf.mxu0
        %v3271 = vadd.f32 %v3110, %v3270
        %v3272 = vpop.f32.mrf.mxu0
        %3273 = vmatprep.mubr.bf16.mxu0 0
        %3274 = vmatmul.mubr.bf16.gmra.mxu0 %v3003
        %v3275 = vpop.f32.mrf.mxu0
        %v3276 = vadd.f32 %v3115, %v3275
        %v3277 = vpop.f32.mrf.mxu0
        %v3278 = vpop.f32.mrf.mxu0
        %v3279 = vadd.f32 %v3118, %v3278
        %v3280 = vpop.f32.mrf.mxu0
        %3281 = vmatprep.mubr.bf16.mxu0 0
        %3282 = vmatmul.mubr.bf16.gmra.mxu0 %v3006
        %v3283 = vpop.f32.mrf.mxu0
        %v3284 = vadd.f32 %v3123, %v3283
        %v3285 = vpop.f32.mrf.mxu0
        %v3286 = vpop.f32.mrf.mxu0
        %v3287 = vadd.f32 %v3126, %v3286
        %v3288 = vpop.f32.mrf.mxu0
        %3289 = vmatprep.mubr.bf16.mxu0 0
        %3290 = vmatmul.mubr.bf16.gmra.mxu0 %v3009
        %v3291 = vpop.f32.mrf.mxu0
        %v3292 = vadd.f32 %v3131, %v3291
        %v3293 = vpop.f32.mrf.mxu0
        %v3294 = vpop.f32.mrf.mxu0
        %v3295 = vadd.f32 %v3134, %v3294
        %v3296 = vpop.f32.mrf.mxu0
        %3297 = vmatprep.mubr.bf16.mxu0 0
        %3298 = vmatmul.mubr.bf16.gmra.mxu0 %v3012
        %v3299 = vpop.f32.mrf.mxu0
        %v3300 = vadd.f32 %v3139, %v3299
        %v3301 = vpop.f32.mrf.mxu0
        %v3302 = vpop.f32.mrf.mxu0
        %v3303 = vadd.f32 %v3142, %v3302
        %v3304 = vpop.f32.mrf.mxu0
        %3305 = vmatprep.mubr.bf16.mxu0 0
        %3306 = vmatmul.mubr.bf16.gmra.mxu0 %v3015
        %v3307 = vpop.f32.mrf.mxu0
        %v3308 = vadd.f32 %v3147, %v3307
        %v3309 = vpop.f32.mrf.mxu0
        %v3310 = vpop.f32.mrf.mxu0
        %v3311 = vadd.f32 %v3150, %v3310
        %v3312 = vpop.f32.mrf.mxu0
        %3313 = vmatprep.mubr.bf16.mxu0 0
        %3314 = vmatmul.mubr.bf16.gmra.mxu0 %v3018
        %v3315 = vpop.f32.mrf.mxu0
        %v3316 = vadd.f32 %v3155, %v3315
        %v3317 = vpop.f32.mrf.mxu0
        %v3318 = vpop.f32.mrf.mxu0
        %v3319 = vadd.f32 %v3158, %v3318
        %v3320 = vpop.f32.mrf.mxu0
        %3321 = vmatprep.mubr.bf16.mxu0 0
        %3322 = vmatmul.mubr.bf16.gmra.mxu0 %v3021
        %v3323 = vpop.f32.mrf.mxu0
        %v3324 = vadd.f32 %v3163, %v3323
        %v3325 = vpop.f32.mrf.mxu0
        %v3326 = vpop.f32.mrf.mxu0
        %v3327 = vadd.f32 %v3166, %v3326
        %v3328 = vpop.f32.mrf.mxu0
        %3329 = vmatprep.mubr.bf16.mxu0 0
        %3330 = vmatmul.mubr.bf16.gmra.mxu0 %v3024
        %v3331 = vpop.f32.mrf.mxu0
        %v3332 = vadd.f32 %v3171, %v3331
        %v3333 = vpop.f32.mrf.mxu0
        %v3334 = vpop.f32.mrf.mxu0
        %v3335 = vadd.f32 %v3174, %v3334
        %v3336 = vpop.f32.mrf.mxu0
        %3337 = vmatprep.mubr.bf16.mxu0 0
        %3338 = vmatmul.mubr.bf16.gmra.mxu0 %v3027
        %v3339 = vpop.f32.mrf.mxu0
        %v3340 = vadd.f32 %v3179, %v3339
        %v3341 = vpop.f32.mrf.mxu0
        %v3342 = vpop.f32.mrf.mxu0
        %v3343 = vadd.f32 %v3182, %v3342
        %v3344 = vpop.f32.mrf.mxu0
        %3345 = vmatprep.mubr.bf16.mxu0 0
        %3346 = vmatmul.mubr.bf16.gmra.mxu0 %v3030
        %v3347 = vpop.f32.mrf.mxu0
        %v3348 = vadd.f32 %v3187, %v3347
        %v3349 = vpop.f32.mrf.mxu0
        %v3350 = vpop.f32.mrf.mxu0
        %v3351 = vadd.f32 %v3190, %v3350
        %v3352 = vpop.f32.mrf.mxu0
        %3353 = vdwg.mxu0
        %v3354 = vadd.f32 %v2808, %v3228
        %v3355 = vadd.f32 %v2809, %v3231
        %v3356 = vadd.f32 %v2810, %v3236
        %v3357 = vadd.f32 %v2811, %v3239
        %v3358 = vadd.f32 %v2812, %v3244
        %v3359 = vadd.f32 %v2813, %v3247
        %v3360 = vadd.f32 %v2814, %v3252
        %v3361 = vadd.f32 %v2815, %v3255
        %v3362 = vadd.f32 %v2816, %v3260
        %v3363 = vadd.f32 %v2817, %v3263
        %v3364 = vadd.f32 %v2818, %v3268
        %v3365 = vadd.f32 %v2819, %v3271
        %v3366 = vadd.f32 %v2820, %v3276
        %v3367 = vadd.f32 %v2821, %v3279
        %v3368 = vadd.f32 %v2822, %v3284
        %v3369 = vadd.f32 %v2823, %v3287
        %v3370 = vadd.f32 %v2824, %v3292
        %v3371 = vadd.f32 %v2825, %v3295
        %v3372 = vadd.f32 %v2826, %v3300
        %v3373 = vadd.f32 %v2827, %v3303
        %v3374 = vadd.f32 %v2828, %v3308
        %v3375 = vadd.f32 %v2829, %v3311
        %v3376 = vadd.f32 %v2830, %v3316
        %v3377 = vadd.f32 %v2831, %v3319
        %v3378 = vadd.f32 %v2832, %v3324
        %v3379 = vadd.f32 %v2833, %v3327
        %v3380 = vadd.f32 %v2834, %v3332
        %v3381 = vadd.f32 %v2835, %v3335
        %v3382 = vadd.f32 %v2836, %v3340
        %v3383 = vadd.f32 %v2837, %v3343
        %v3384 = vadd.f32 %v2838, %v3348
        %v3385 = vadd.f32 %v2839, %v3351
        %3386 = vst.msk [vmem:[#allocation2] sm:$0xff] %vm2565, %v3354
        %3387 = vst.msk [vmem:[#allocation2 + $0x8] sm:$0xff] %vm2565, %v3355
        %3388 = vst.msk [vmem:[#allocation2 + $0x10] sm:$0xff] %vm2565, %v3356
        %3389 = vst.msk [vmem:[#allocation2 + $0x18] sm:$0xff] %vm2565, %v3357
        %3390 = vst.msk [vmem:[#allocation2 + $0x20] sm:$0xff] %vm2565, %v3358
        %3391 = vst.msk [vmem:[#allocation2 + $0x28] sm:$0xff] %vm2565, %v3359
        %3392 = vst.msk [vmem:[#allocation2 + $0x30] sm:$0xff] %vm2565, %v3360
        %3393 = vst.msk [vmem:[#allocation2 + $0x38] sm:$0xff] %vm2565, %v3361
        %3394 = vst.msk [vmem:[#allocation2 + $0x40] sm:$0xff] %vm2565, %v3362
        %3395 = vst.msk [vmem:[#allocation2 + $0x48] sm:$0xff] %vm2565, %v3363
        %3396 = vst.msk [vmem:[#allocation2 + $0x50] sm:$0xff] %vm2565, %v3364
        %3397 = vst.msk [vmem:[#allocation2 + $0x58] sm:$0xff] %vm2565, %v3365
        %3398 = vst.msk [vmem:[#allocation2 + $0x60] sm:$0xff] %vm2565, %v3366
        %3399 = vst.msk [vmem:[#allocation2 + $0x68] sm:$0xff] %vm2565, %v3367
        %3400 = vst.msk [vmem:[#allocation2 + $0x70] sm:$0xff] %vm2565, %v3368
        %3401 = vst.msk [vmem:[#allocation2 + $0x78] sm:$0xff] %vm2565, %v3369
        %3402 = vst.msk [vmem:[#allocation2 + $0x80] sm:$0xff] %vm2565, %v3370
        %3403 = vst.msk [vmem:[#allocation2 + $0x88] sm:$0xff] %vm2565, %v3371
        %3404 = vst.msk [vmem:[#allocation2 + $0x90] sm:$0xff] %vm2565, %v3372
        %3405 = vst.msk [vmem:[#allocation2 + $0x98] sm:$0xff] %vm2565, %v3373
        %3406 = vst.msk [vmem:[#allocation2 + $0xa0] sm:$0xff] %vm2565, %v3374
        %3407 = vst.msk [vmem:[#allocation2 + $0xa8] sm:$0xff] %vm2565, %v3375
        %3408 = vst.msk [vmem:[#allocation2 + $0xb0] sm:$0xff] %vm2565, %v3376
        %3409 = vst.msk [vmem:[#allocation2 + $0xb8] sm:$0xff] %vm2565, %v3377
        %3410 = vst.msk [vmem:[#allocation2 + $0xc0] sm:$0xff] %vm2565, %v3378
        %3411 = vst.msk [vmem:[#allocation2 + $0xc8] sm:$0xff] %vm2565, %v3379
        %3412 = vst.msk [vmem:[#allocation2 + $0xd0] sm:$0xff] %vm2565, %v3380
        %3413 = vst.msk [vmem:[#allocation2 + $0xd8] sm:$0xff] %vm2565, %v3381
        %3414 = vst.msk [vmem:[#allocation2 + $0xe0] sm:$0xff] %vm2565, %v3382
        %3415 = vst.msk [vmem:[#allocation2 + $0xe8] sm:$0xff] %vm2565, %v3383
        %3416 = vst.msk [vmem:[#allocation2 + $0xf0] sm:$0xff] %vm2565, %v3384
        %3417 = vst.msk [vmem:[#allocation2 + $0xf8] sm:$0xff] %vm2565, %v3385
      $region44: #{doubleconv_forward.6} parent=31 // pred_fallthru
        _
      %p3418 = scmp.eq.s32.totalorder %s24, 2
      // Predicated region
      $region45: #{doubleconv_forward.6} parent=31 // pred_check
        %p3419 = pneg %p3418
      $region46: #{doubleconv_forward.6} parent=31 // pred_check_branch
        %3421 = sbr.rel (%p3419) target = $region48
      $region47: #{doubleconv_forward.6} parent=31 // pred_region
        %v3422 = vld [vmem:[#allocation2] sm:$0xff]
        %v3423 = vld [vmem:[#allocation2 + $0x8] sm:$0xff]
        %v3424 = vld [vmem:[#allocation2 + $0x10] sm:$0xff]
        %v3425 = vld [vmem:[#allocation2 + $0x18] sm:$0xff]
        %v3426 = vld [vmem:[#allocation2 + $0x20] sm:$0xff]
        %v3427 = vld [vmem:[#allocation2 + $0x28] sm:$0xff]
        %v3428 = vld [vmem:[#allocation2 + $0x30] sm:$0xff]
        %v3429 = vld [vmem:[#allocation2 + $0x38] sm:$0xff]
        %v3430 = vld [vmem:[#allocation2 + $0x40] sm:$0xff]
        %v3431 = vld [vmem:[#allocation2 + $0x48] sm:$0xff]
        %v3432 = vld [vmem:[#allocation2 + $0x50] sm:$0xff]
        %v3433 = vld [vmem:[#allocation2 + $0x58] sm:$0xff]
        %v3434 = vld [vmem:[#allocation2 + $0x60] sm:$0xff]
        %v3435 = vld [vmem:[#allocation2 + $0x68] sm:$0xff]
        %v3436 = vld [vmem:[#allocation2 + $0x70] sm:$0xff]
        %v3437 = vld [vmem:[#allocation2 + $0x78] sm:$0xff]
        %v3438 = vld [vmem:[#allocation2 + $0x80] sm:$0xff]
        %v3439 = vld [vmem:[#allocation2 + $0x88] sm:$0xff]
        %v3440 = vld [vmem:[#allocation2 + $0x90] sm:$0xff]
        %v3441 = vld [vmem:[#allocation2 + $0x98] sm:$0xff]
        %v3442 = vld [vmem:[#allocation2 + $0xa0] sm:$0xff]
        %v3443 = vld [vmem:[#allocation2 + $0xa8] sm:$0xff]
        %v3444 = vld [vmem:[#allocation2 + $0xb0] sm:$0xff]
        %v3445 = vld [vmem:[#allocation2 + $0xb8] sm:$0xff]
        %v3446 = vld [vmem:[#allocation2 + $0xc0] sm:$0xff]
        %v3447 = vld [vmem:[#allocation2 + $0xc8] sm:$0xff]
        %v3448 = vld [vmem:[#allocation2 + $0xd0] sm:$0xff]
        %v3449 = vld [vmem:[#allocation2 + $0xd8] sm:$0xff]
        %v3450 = vld [vmem:[#allocation2 + $0xe0] sm:$0xff]
        %v3451 = vld [vmem:[#allocation2 + $0xe8] sm:$0xff]
        %v3452 = vld [vmem:[#allocation2 + $0xf0] sm:$0xff]
        %v3453 = vld [vmem:[#allocation2 + $0xf8] sm:$0xff]
        %v3454 = vld [vmem:[%s2] sm:$0x1]
        %v3456 = vlaneseq
        %v3457 = vshrl.u32 %v3456, 7
        %v3458 = vsub.s32 0, %v3457
        %v3459 = vrot.slane %v3454, %v3458
        %v3461 = vadd.f32 %v3422, %v3459
        %v3462 = vadd.f32 %v3423, %v3459
        %v3463 = vadd.f32 %v3424, %v3459
        %v3464 = vadd.f32 %v3425, %v3459
        %v3465 = vadd.f32 %v3426, %v3459
        %v3466 = vadd.f32 %v3427, %v3459
        %v3467 = vadd.f32 %v3428, %v3459
        %v3468 = vadd.f32 %v3429, %v3459
        %v3469 = vadd.f32 %v3430, %v3459
        %v3470 = vadd.f32 %v3431, %v3459
        %v3471 = vadd.f32 %v3432, %v3459
        %v3472 = vadd.f32 %v3433, %v3459
        %v3473 = vadd.f32 %v3434, %v3459
        %v3474 = vadd.f32 %v3435, %v3459
        %v3475 = vadd.f32 %v3436, %v3459
        %v3476 = vadd.f32 %v3437, %v3459
        %v3477 = vadd.f32 %v3438, %v3459
        %v3478 = vadd.f32 %v3439, %v3459
        %v3479 = vadd.f32 %v3440, %v3459
        %v3480 = vadd.f32 %v3441, %v3459
        %v3481 = vadd.f32 %v3442, %v3459
        %v3482 = vadd.f32 %v3443, %v3459
        %v3483 = vadd.f32 %v3444, %v3459
        %v3484 = vadd.f32 %v3445, %v3459
        %v3485 = vadd.f32 %v3446, %v3459
        %v3486 = vadd.f32 %v3447, %v3459
        %v3487 = vadd.f32 %v3448, %v3459
        %v3488 = vadd.f32 %v3449, %v3459
        %v3489 = vadd.f32 %v3450, %v3459
        %v3490 = vadd.f32 %v3451, %v3459
        %v3491 = vadd.f32 %v3452, %v3459
        %v3492 = vadd.f32 %v3453, %v3459
        %vm3493 = vcmask 261120
        %3494 = vst.msk [vmem:[%s340] sm:$0xff] %vm3493, %v3461
        %3495 = vst.msk [vmem:[%s340 + $0x8] sm:$0xff] %vm3493, %v3462
        %3496 = vst.msk [vmem:[%s340 + $0x10] sm:$0xff] %vm3493, %v3463
        %3497 = vst.msk [vmem:[%s340 + $0x18] sm:$0xff] %vm3493, %v3464
        %3498 = vst.msk [vmem:[%s340 + $0x20] sm:$0xff] %vm3493, %v3465
        %3499 = vst.msk [vmem:[%s340 + $0x28] sm:$0xff] %vm3493, %v3466
        %3500 = vst.msk [vmem:[%s340 + $0x30] sm:$0xff] %vm3493, %v3467
        %3501 = vst.msk [vmem:[%s340 + $0x38] sm:$0xff] %vm3493, %v3468
        %3502 = vst.msk [vmem:[%s340 + $0x40] sm:$0xff] %vm3493, %v3469
        %3503 = vst.msk [vmem:[%s340 + $0x48] sm:$0xff] %vm3493, %v3470
        %3504 = vst.msk [vmem:[%s340 + $0x50] sm:$0xff] %vm3493, %v3471
        %3505 = vst.msk [vmem:[%s340 + $0x58] sm:$0xff] %vm3493, %v3472
        %3506 = vst.msk [vmem:[%s340 + $0x60] sm:$0xff] %vm3493, %v3473
        %3507 = vst.msk [vmem:[%s340 + $0x68] sm:$0xff] %vm3493, %v3474
        %3508 = vst.msk [vmem:[%s340 + $0x70] sm:$0xff] %vm3493, %v3475
        %3509 = vst.msk [vmem:[%s340 + $0x78] sm:$0xff] %vm3493, %v3476
        %3510 = vst.msk [vmem:[%s340 + $0x80] sm:$0xff] %vm3493, %v3477
        %3511 = vst.msk [vmem:[%s340 + $0x88] sm:$0xff] %vm3493, %v3478
        %3512 = vst.msk [vmem:[%s340 + $0x90] sm:$0xff] %vm3493, %v3479
        %3513 = vst.msk [vmem:[%s340 + $0x98] sm:$0xff] %vm3493, %v3480
        %3514 = vst.msk [vmem:[%s340 + $0xa0] sm:$0xff] %vm3493, %v3481
        %3515 = vst.msk [vmem:[%s340 + $0xa8] sm:$0xff] %vm3493, %v3482
        %3516 = vst.msk [vmem:[%s340 + $0xb0] sm:$0xff] %vm3493, %v3483
        %3517 = vst.msk [vmem:[%s340 + $0xb8] sm:$0xff] %vm3493, %v3484
        %3518 = vst.msk [vmem:[%s340 + $0xc0] sm:$0xff] %vm3493, %v3485
        %3519 = vst.msk [vmem:[%s340 + $0xc8] sm:$0xff] %vm3493, %v3486
        %3520 = vst.msk [vmem:[%s340 + $0xd0] sm:$0xff] %vm3493, %v3487
        %3521 = vst.msk [vmem:[%s340 + $0xd8] sm:$0xff] %vm3493, %v3488
        %3522 = vst.msk [vmem:[%s340 + $0xe0] sm:$0xff] %vm3493, %v3489
        %3523 = vst.msk [vmem:[%s340 + $0xe8] sm:$0xff] %vm3493, %v3490
        %3524 = vst.msk [vmem:[%s340 + $0xf0] sm:$0xff] %vm3493, %v3491
        %3525 = vst.msk [vmem:[%s340 + $0xf8] sm:$0xff] %vm3493, %v3492
        %v3526 = vld [vmem:[%s343] sm:$0x1]
        %v3527 = vsel %vm3493, %v3461, 0.0
        %v3528 = vsel %vm3493, %v3462, 0.0
        %v3529 = vadd.f32 %v3527, %v3528
        %v3530 = vsel %vm3493, %v3463, 0.0
        %v3531 = vadd.f32 %v3529, %v3530
        %v3532 = vsel %vm3493, %v3464, 0.0
        %v3533 = vadd.f32 %v3531, %v3532
        %v3534 = vsel %vm3493, %v3465, 0.0
        %v3535 = vadd.f32 %v3533, %v3534
        %v3536 = vsel %vm3493, %v3466, 0.0
        %v3537 = vadd.f32 %v3535, %v3536
        %v3538 = vsel %vm3493, %v3467, 0.0
        %v3539 = vadd.f32 %v3537, %v3538
        %v3540 = vsel %vm3493, %v3468, 0.0
        %v3541 = vadd.f32 %v3539, %v3540
        %v3542 = vsel %vm3493, %v3469, 0.0
        %v3543 = vadd.f32 %v3541, %v3542
        %v3544 = vsel %vm3493, %v3470, 0.0
        %v3545 = vadd.f32 %v3543, %v3544
        %v3546 = vsel %vm3493, %v3471, 0.0
        %v3547 = vadd.f32 %v3545, %v3546
        %v3548 = vsel %vm3493, %v3472, 0.0
        %v3549 = vadd.f32 %v3547, %v3548
        %v3550 = vsel %vm3493, %v3473, 0.0
        %v3551 = vadd.f32 %v3549, %v3550
        %v3552 = vsel %vm3493, %v3474, 0.0
        %v3553 = vadd.f32 %v3551, %v3552
        %v3554 = vsel %vm3493, %v3475, 0.0
        %v3555 = vadd.f32 %v3553, %v3554
        %v3556 = vsel %vm3493, %v3476, 0.0
        %v3557 = vadd.f32 %v3555, %v3556
        %v3558 = vsel %vm3493, %v3477, 0.0
        %v3559 = vadd.f32 %v3557, %v3558
        %v3560 = vsel %vm3493, %v3478, 0.0
        %v3561 = vadd.f32 %v3559, %v3560
        %v3562 = vsel %vm3493, %v3479, 0.0
        %v3563 = vadd.f32 %v3561, %v3562
        %v3564 = vsel %vm3493, %v3480, 0.0
        %v3565 = vadd.f32 %v3563, %v3564
        %v3566 = vsel %vm3493, %v3481, 0.0
        %v3567 = vadd.f32 %v3565, %v3566
        %v3568 = vsel %vm3493, %v3482, 0.0
        %v3569 = vadd.f32 %v3567, %v3568
        %v3570 = vsel %vm3493, %v3483, 0.0
        %v3571 = vadd.f32 %v3569, %v3570
        %v3572 = vsel %vm3493, %v3484, 0.0
        %v3573 = vadd.f32 %v3571, %v3572
        %v3574 = vsel %vm3493, %v3485, 0.0
        %v3575 = vadd.f32 %v3573, %v3574
        %v3576 = vsel %vm3493, %v3486, 0.0
        %v3577 = vadd.f32 %v3575, %v3576
        %v3578 = vsel %vm3493, %v3487, 0.0
        %v3579 = vadd.f32 %v3577, %v3578
        %v3580 = vsel %vm3493, %v3488, 0.0
        %v3581 = vadd.f32 %v3579, %v3580
        %v3582 = vsel %vm3493, %v3489, 0.0
        %v3583 = vadd.f32 %v3581, %v3582
        %v3584 = vsel %vm3493, %v3490, 0.0
        %v3585 = vadd.f32 %v3583, %v3584
        %v3586 = vsel %vm3493, %v3491, 0.0
        %v3587 = vadd.f32 %v3585, %v3586
        %v3588 = vsel %vm3493, %v3492, 0.0
        %v3589 = vadd.f32 %v3587, %v3588
        %v3590 = vrot.slane %v3589, 4
        %v3591 = vadd.f32 %v3589, %v3590
        %v3592 = vrot.slane %v3591, 2
        %v3593 = vadd.f32 %v3591, %v3592
        %v3594 = vrot.slane %v3593, 1
        %v3595 = vadd.f32 %v3593, %v3594
        %v3596 = vadd.f32 %v3526, %v3595
        %vm3597 = vcmask 253952
        %3598 = vst.msk [vmem:[%s343] sm:$0x1] %vm3597, %v3596
        %v3599 = vld [vmem:[%s346] sm:$0x1]
        %v3600 = vmul.f32 %v3461, %v3461
        %v3601 = vmul.f32 %v3462, %v3462
        %v3602 = vmul.f32 %v3463, %v3463
        %v3603 = vmul.f32 %v3464, %v3464
        %v3604 = vmul.f32 %v3465, %v3465
        %v3605 = vmul.f32 %v3466, %v3466
        %v3606 = vmul.f32 %v3467, %v3467
        %v3607 = vmul.f32 %v3468, %v3468
        %v3608 = vmul.f32 %v3469, %v3469
        %v3609 = vmul.f32 %v3470, %v3470
        %v3610 = vmul.f32 %v3471, %v3471
        %v3611 = vmul.f32 %v3472, %v3472
        %v3612 = vmul.f32 %v3473, %v3473
        %v3613 = vmul.f32 %v3474, %v3474
        %v3614 = vmul.f32 %v3475, %v3475
        %v3615 = vmul.f32 %v3476, %v3476
        %v3616 = vmul.f32 %v3477, %v3477
        %v3617 = vmul.f32 %v3478, %v3478
        %v3618 = vmul.f32 %v3479, %v3479
        %v3619 = vmul.f32 %v3480, %v3480
        %v3620 = vmul.f32 %v3481, %v3481
        %v3621 = vmul.f32 %v3482, %v3482
        %v3622 = vmul.f32 %v3483, %v3483
        %v3623 = vmul.f32 %v3484, %v3484
        %v3624 = vmul.f32 %v3485, %v3485
        %v3625 = vmul.f32 %v3486, %v3486
        %v3626 = vmul.f32 %v3487, %v3487
        %v3627 = vmul.f32 %v3488, %v3488
        %v3628 = vmul.f32 %v3489, %v3489
        %v3629 = vmul.f32 %v3490, %v3490
        %v3630 = vmul.f32 %v3491, %v3491
        %v3631 = vmul.f32 %v3492, %v3492
        %v3632 = vsel %vm3493, %v3600, 0.0
        %v3633 = vsel %vm3493, %v3601, 0.0
        %v3634 = vadd.f32 %v3632, %v3633
        %v3635 = vsel %vm3493, %v3602, 0.0
        %v3636 = vadd.f32 %v3634, %v3635
        %v3637 = vsel %vm3493, %v3603, 0.0
        %v3638 = vadd.f32 %v3636, %v3637
        %v3639 = vsel %vm3493, %v3604, 0.0
        %v3640 = vadd.f32 %v3638, %v3639
        %v3641 = vsel %vm3493, %v3605, 0.0
        %v3642 = vadd.f32 %v3640, %v3641
        %v3643 = vsel %vm3493, %v3606, 0.0
        %v3644 = vadd.f32 %v3642, %v3643
        %v3645 = vsel %vm3493, %v3607, 0.0
        %v3646 = vadd.f32 %v3644, %v3645
        %v3647 = vsel %vm3493, %v3608, 0.0
        %v3648 = vadd.f32 %v3646, %v3647
        %v3649 = vsel %vm3493, %v3609, 0.0
        %v3650 = vadd.f32 %v3648, %v3649
        %v3651 = vsel %vm3493, %v3610, 0.0
        %v3652 = vadd.f32 %v3650, %v3651
        %v3653 = vsel %vm3493, %v3611, 0.0
        %v3654 = vadd.f32 %v3652, %v3653
        %v3655 = vsel %vm3493, %v3612, 0.0
        %v3656 = vadd.f32 %v3654, %v3655
        %v3657 = vsel %vm3493, %v3613, 0.0
        %v3658 = vadd.f32 %v3656, %v3657
        %v3659 = vsel %vm3493, %v3614, 0.0
        %v3660 = vadd.f32 %v3658, %v3659
        %v3661 = vsel %vm3493, %v3615, 0.0
        %v3662 = vadd.f32 %v3660, %v3661
        %v3663 = vsel %vm3493, %v3616, 0.0
        %v3664 = vadd.f32 %v3662, %v3663
        %v3665 = vsel %vm3493, %v3617, 0.0
        %v3666 = vadd.f32 %v3664, %v3665
        %v3667 = vsel %vm3493, %v3618, 0.0
        %v3668 = vadd.f32 %v3666, %v3667
        %v3669 = vsel %vm3493, %v3619, 0.0
        %v3670 = vadd.f32 %v3668, %v3669
        %v3671 = vsel %vm3493, %v3620, 0.0
        %v3672 = vadd.f32 %v3670, %v3671
        %v3673 = vsel %vm3493, %v3621, 0.0
        %v3674 = vadd.f32 %v3672, %v3673
        %v3675 = vsel %vm3493, %v3622, 0.0
        %v3676 = vadd.f32 %v3674, %v3675
        %v3677 = vsel %vm3493, %v3623, 0.0
        %v3678 = vadd.f32 %v3676, %v3677
        %v3679 = vsel %vm3493, %v3624, 0.0
        %v3680 = vadd.f32 %v3678, %v3679
        %v3681 = vsel %vm3493, %v3625, 0.0
        %v3682 = vadd.f32 %v3680, %v3681
        %v3683 = vsel %vm3493, %v3626, 0.0
        %v3684 = vadd.f32 %v3682, %v3683
        %v3685 = vsel %vm3493, %v3627, 0.0
        %v3686 = vadd.f32 %v3684, %v3685
        %v3687 = vsel %vm3493, %v3628, 0.0
        %v3688 = vadd.f32 %v3686, %v3687
        %v3689 = vsel %vm3493, %v3629, 0.0
        %v3690 = vadd.f32 %v3688, %v3689
        %v3691 = vsel %vm3493, %v3630, 0.0
        %v3692 = vadd.f32 %v3690, %v3691
        %v3693 = vsel %vm3493, %v3631, 0.0
        %v3694 = vadd.f32 %v3692, %v3693
        %v3695 = vrot.slane %v3694, 4
        %v3696 = vadd.f32 %v3694, %v3695
        %v3697 = vrot.slane %v3696, 2
        %v3698 = vadd.f32 %v3696, %v3697
        %v3699 = vrot.slane %v3698, 1
        %v3700 = vadd.f32 %v3698, %v3699
        %v3701 = vadd.f32 %v3599, %v3700
        %3702 = vst.msk [vmem:[%s346] sm:$0x1] %vm3597, %v3701
      $region48: #{doubleconv_forward.6} parent=31 // pred_fallthru
        _
      %p3703 = scmp.lt.s32.totalorder %s22, 1
      %s3704 = scalar_select %p3703, %s22, 1
      %p3705 = scmp.lt.s32.totalorder %s23, 15
      %s3706 = scalar_select %p3705, %s23, 15
      %s3707 = smul.addr %s3706, 32
      %s3708 = smul.addr %s3704, 512
      %s3709 = sadd.s32 %s3707, %s3708
      %s3710 = smul.addr %s3709, 8
      %s3711 = scalar_lea.vmem %s3, %s3710
      %p3712 = scmp.lt.s32.totalorder %s22, 1
      %s3713 = scalar_select %p3712, %s22, 1
      %s3714 = scalar_lea.vmem %s4, %s3713
      %p3715 = scmp.lt.s32.totalorder %s22, 1
      %s3716 = scalar_select %p3715, %s22, 1
      %s3717 = scalar_lea.vmem %s5, %s3716
      // Predicated region
      $region49: #{doubleconv_forward.6} parent=31 // pred_check
        %p3718 = pneg %p143
      $region50: #{doubleconv_forward.6} parent=31 // pred_check_branch
        %3720 = sbr.rel (%p3718) target = $region52
      $region51: #{doubleconv_forward.6} parent=31 // pred_region
        _
      $region52: #{doubleconv_forward.6} parent=31 // pred_fallthru
        _
      // Predicated region
      $region53: #{doubleconv_forward.6} parent=31 // pred_check
        %p3721 = pneg %p169
      $region54: #{doubleconv_forward.6} parent=31 // pred_check_branch
        %3723 = sbr.rel (%p3721) target = $region56
      $region55: #{doubleconv_forward.6} parent=31 // pred_region
        _
      $region56: #{doubleconv_forward.6} parent=31 // pred_fallthru
        _
      // Predicated region
      $region57: #{doubleconv_forward.6} parent=31 // pred_check
        %p3724 = pneg %p195
      $region58: #{doubleconv_forward.6} parent=31 // pred_check_branch
        %3726 = sbr.rel (%p3724) target = $region60
      $region59: #{doubleconv_forward.6} parent=31 // pred_region
        _
      $region60: #{doubleconv_forward.6} parent=31 // pred_fallthru
        _
    $region32: #{doubleconv_forward.6} parent=5 // pred_fallthru
      _
    %p3727 = scmp.le.s32.totalorder 2, %s12
    // Predicated region
    $region61: #{doubleconv_forward.6} parent=5 // pred_check
      %p3728 = pneg %p3727
    $region62: #{doubleconv_forward.6} parent=5 // pred_check_branch
      %3730 = sbr.rel (%p3728) target = $region64
    $region63: #{doubleconv_forward.6} parent=5 // pred_region
      %s3731 = ssub.s32 %s12, 2
      // Predicated region
      $region65: #{doubleconv_forward.6} parent=63 // pred_check
        %p3732 = pneg %p149
      $region66: #{doubleconv_forward.6} parent=63 // pred_check_branch
        %3734 = sbr.rel (%p3732) target = $region68
      $region67: #{doubleconv_forward.6} parent=63 // pred_region
        %p3735 = scmp.lt.s32.totalorder %s25, 1
        %s3736 = scalar_select %p3735, %s25, 1
        %p3737 = scmp.lt.s32.totalorder %s26, 15
        %s3738 = scalar_select %p3737, %s26, 15
        %s3739 = smul.addr %s3738, 32
        %s3740 = smul.addr %s3736, 512
        %s3741 = sadd.s32 %s3739, %s3740
        %s3742 = smul.addr %s3741, 8
        %s3743 = scalar_lea.vmem %s3, %s3742
      $region68: #{doubleconv_forward.6} parent=63 // pred_fallthru
        _
      // Predicated region
      $region69: #{doubleconv_forward.6} parent=63 // pred_check
        %p3744 = pneg %p175
      $region70: #{doubleconv_forward.6} parent=63 // pred_check_branch
        %3746 = sbr.rel (%p3744) target = $region72
      $region71: #{doubleconv_forward.6} parent=63 // pred_region
        %p3747 = scmp.lt.s32.totalorder %s25, 1
        %s3748 = scalar_select %p3747, %s25, 1
        %s3749 = scalar_lea.vmem %s4, %s3748
      $region72: #{doubleconv_forward.6} parent=63 // pred_fallthru
        _
      // Predicated region
      $region73: #{doubleconv_forward.6} parent=63 // pred_check
        %p3750 = pneg %p201
      $region74: #{doubleconv_forward.6} parent=63 // pred_check_branch
        %3752 = sbr.rel (%p3750) target = $region76
      $region75: #{doubleconv_forward.6} parent=63 // pred_region
        %p3753 = scmp.lt.s32.totalorder %s25, 1
        %s3754 = scalar_select %p3753, %s25, 1
        %s3755 = scalar_lea.vmem %s5, %s3754
      $region76: #{doubleconv_forward.6} parent=63 // pred_fallthru
        _
    $region64: #{doubleconv_forward.6} parent=5 // pred_fallthru
      _
  $region6: #{doubleconv_forward.6} parent=0 // loop_footer
    %s16 = sadd.s32 1, %s12
  $region7: #{doubleconv_forward.6} parent=0 // loop_footer_branch
    %11 = sbr.rel target = $region3
  $region8: #{doubleconv_forward.6} parent=0 // loop_exit
    _

// kernel: doubleconv_forward.7
$region0: #{doubleconv_forward.7}
  #allocation0 [shape = 'u32[]', space=smem, size = 0x4, offset = 0x4, fixed_abs, tag = 'smem constant byte address 0x4 - core index']
  #allocation1 [shape = 'u32[144,128]{1,0:T(1,128)}', space=vmem, size = 0x12000, scoped, tag = 'internal scratch']
  %s0 = inlined_call_operand.vmem [shape: f32[2,4096,32], index: 0, kind: input, shape index: {}]
  %s1 = inlined_call_operand.vmem [shape: f32[2,1,32], index: 1, kind: input, shape index: {}]
  %s2 = inlined_call_operand.vmem [shape: f32[2,1,32], index: 2, kind: input, shape index: {}]
  %s3 = inlined_call_operand.hbm [shape: f32[2,4096,32], index: 3, kind: output, shape index: {}]
  %s4 = sld [smem:[#allocation0]]
  $region45: #{doubleconv_forward.7} parent=0
    _
  %s6 = ssub.s32 1, %s4
  %s7 = scalar_select 0, %s6, %s4
  $region1: #{doubleconv_forward.7} parent=0
    #allocation2 [shape = 'u8[2097152]{0}', space=vmem, size = 0x200000, scoped, tag = 'output window, operand 0']
    #allocation3 [shape = 's32[2]{0}', space=sflag, size = 0x8, scoped, tag = 'scoped memory for doubleconv_forward.7']
    %8 = vsyncpa [#allocation3], 0
    %s9 = scalar_lea.sflag [#allocation3], 1
    %10 = vsyncpa %s9, 0
    loop: start=0, step=1, limit=6
    $region2: #{doubleconv_forward.7} parent=1 // loop_pre_header
      _
    $region3: #{doubleconv_forward.7} parent=1 // loop_header
      %s12 = sphi 0, %s16
      %p13 = scmp.ge.s32.totalorder %s12, 6
      %s19 = sphi 0, %s31
      %s20 = sphi 0, %s27
      %s21 = sphi 0, %s19
      %s22 = sphi 0, %s20
      %s23 = sphi 0, %s21
      %s24 = sphi 0, %s22
      %s36 = sphi 0, %s38
      %s39 = sphi 0, %s36
      %s40 = sphi 0, %s39
      %s56 = sphi 0, %s40
      %s62 = sphi 0, %s64
      %s65 = sphi 0, %s62
      %s66 = sphi 0, %s65
      %s82 = sphi 0, %s66
      %s88 = sphi 0, %s90
      %s91 = sphi 0, %s88
      %s92 = sphi 0, %s91
      %s108 = sphi 0, %s92
      %s116 = sphi 0, %s118
      %s119 = sphi 0, %s116
      %s120 = sphi 0, %s119
      %s136 = sphi 0, %s120
    $region4: #{doubleconv_forward.7} parent=1 // loop_header_branch
      %15 = sbr.rel (%p13) target = $region8
    $region5: #{doubleconv_forward.7} parent=1 // loop_body
      %s17 = ssub.s32 %s12, 1
      %s18 = ssub.s32 %s12, 2
      %s25 = sadd.s32 1, %s20
      %p26 = scmp.ge.s32.totalorder %s25, 2
      %s27 = scalar_select %p26, 0, %s25
      %s28 = sadd.s32 1, %s19
      %s29 = scalar_select %p26, %s28, %s19
      %p30 = scmp.ge.s32.totalorder %s29, 2
      %s31 = scalar_select %p30, 0, %s29
      %s32 = ssub.s32 %s19, %s31
      %s33 = ssub.s32 %s20, %s27
      %s34 = sor.u32 %s32, %s33
      %p35 = scmp.eq.s32.totalorder %s34, 0
      %s37 = sadd.s32 %s36, 1
      %s38 = scalar_select %p35, %s36, %s37
      %p41 = pneg %p35
      %p42 = scmp.eq.s32.totalorder %s12, 3
      %p43 = por %p41, %p42
      %p44 = scmp.ne.s32.totalorder %s36, %s39
      %p45 = scmp.eq.s32.totalorder %s12, 0
      %p46 = por %p44, %p45
      %p47 = scmp.ne.s32.totalorder %s36, %s39
      %p48 = scmp.eq.s32.totalorder %s17, 3
      %p49 = por %p47, %p48
      %p50 = scmp.ne.s32.totalorder %s39, %s40
      %p51 = scmp.eq.s32.totalorder %s17, 0
      %p52 = por %p50, %p51
      %p53 = scmp.ne.s32.totalorder %s39, %s40
      %p54 = scmp.eq.s32.totalorder %s18, 3
      %p55 = por %p53, %p54
      %p57 = scmp.ne.s32.totalorder %s40, %s56
      %p58 = scmp.eq.s32.totalorder %s18, 0
      %p59 = por %p57, %p58
      %s60 = ssub.s32 %s19, %s31
      %p61 = scmp.eq.s32.totalorder %s60, 0
      %s63 = sadd.s32 %s62, 1
      %s64 = scalar_select %p61, %s62, %s63
      %p67 = pneg %p61
      %p68 = scmp.eq.s32.totalorder %s12, 3
      %p69 = por %p67, %p68
      %p70 = scmp.ne.s32.totalorder %s62, %s65
      %p71 = scmp.eq.s32.totalorder %s12, 0
      %p72 = por %p70, %p71
      %p73 = scmp.ne.s32.totalorder %s62, %s65
      %p74 = scmp.eq.s32.totalorder %s17, 3
      %p75 = por %p73, %p74
      %p76 = scmp.ne.s32.totalorder %s65, %s66
      %p77 = scmp.eq.s32.totalorder %s17, 0
      %p78 = por %p76, %p77
      %p79 = scmp.ne.s32.totalorder %s65, %s66
      %p80 = scmp.eq.s32.totalorder %s18, 3
      %p81 = por %p79, %p80
      %p83 = scmp.ne.s32.totalorder %s66, %s82
      %p84 = scmp.eq.s32.totalorder %s18, 0
      %p85 = por %p83, %p84
      %s86 = ssub.s32 %s19, %s31
      %p87 = scmp.eq.s32.totalorder %s86, 0
      %s89 = sadd.s32 %s88, 1
      %s90 = scalar_select %p87, %s88, %s89
      %p93 = pneg %p87
      %p94 = scmp.eq.s32.totalorder %s12, 3
      %p95 = por %p93, %p94
      %p96 = scmp.ne.s32.totalorder %s88, %s91
      %p97 = scmp.eq.s32.totalorder %s12, 0
      %p98 = por %p96, %p97
      %p99 = scmp.ne.s32.totalorder %s88, %s91
      %p100 = scmp.eq.s32.totalorder %s17, 3
      %p101 = por %p99, %p100
      %p102 = scmp.ne.s32.totalorder %s91, %s92
      %p103 = scmp.eq.s32.totalorder %s17, 0
      %p104 = por %p102, %p103
      %p105 = scmp.ne.s32.totalorder %s91, %s92
      %p106 = scmp.eq.s32.totalorder %s18, 3
      %p107 = por %p105, %p106
      %p109 = scmp.ne.s32.totalorder %s92, %s108
      %p110 = scmp.eq.s32.totalorder %s18, 0
      %p111 = por %p109, %p110
      %s112 = ssub.s32 %s19, %s31
      %s113 = ssub.s32 %s20, %s27
      %s114 = sor.u32 %s112, %s113
      %p115 = scmp.eq.s32.totalorder %s114, 0
      %s117 = sadd.s32 %s116, 1
      %s118 = scalar_select %p115, %s116, %s117
      %p121 = pneg %p115
      %p122 = scmp.eq.s32.totalorder %s12, 3
      %p123 = por %p121, %p122
      %p124 = scmp.ne.s32.totalorder %s116, %s119
      %p125 = scmp.eq.s32.totalorder %s12, 0
      %p126 = por %p124, %p125
      %p127 = scmp.ne.s32.totalorder %s116, %s119
      %p128 = scmp.eq.s32.totalorder %s17, 3
      %p129 = por %p127, %p128
      %p130 = scmp.ne.s32.totalorder %s119, %s120
      %p131 = scmp.eq.s32.totalorder %s17, 0
      %p132 = por %p130, %p131
      %p133 = scmp.ne.s32.totalorder %s119, %s120
      %p134 = scmp.eq.s32.totalorder %s18, 3
      %p135 = por %p133, %p134
      %p137 = scmp.ne.s32.totalorder %s120, %s136
      %p138 = scmp.eq.s32.totalorder %s18, 0
      %p139 = por %p137, %p138
      %p140 = scmp.le.s32.totalorder 1, %s12
      %p141 = scmp.lt.s32.totalorder %s12, 5
      %p142 = pnand %p140, %p141
      %p143 = pneg %p142
      // Predicated region
      $region9: #{doubleconv_forward.7} parent=5 // pred_check
        _
      $region10: #{doubleconv_forward.7} parent=5 // pred_check_branch
        %145 = sbr.rel (%p142) target = $region12
      $region11: #{doubleconv_forward.7} parent=5 // pred_region
        %s146 = ssub.s32 %s12, 1
      $region12: #{doubleconv_forward.7} parent=5 // pred_fallthru
        _
      %p147 = scmp.lt.s32.totalorder %s12, 4
      // Predicated region
      $region13: #{doubleconv_forward.7} parent=5 // pred_check
        %p148 = pneg %p147
      $region14: #{doubleconv_forward.7} parent=5 // pred_check_branch
        %150 = sbr.rel (%p148) target = $region16
      $region15: #{doubleconv_forward.7} parent=5 // pred_region
        // Predicated region
        $region17: #{doubleconv_forward.7} parent=15 // pred_check
          %p151 = pneg %p46
        $region18: #{doubleconv_forward.7} parent=15 // pred_check_branch
          %153 = sbr.rel (%p151) target = $region20
        $region19: #{doubleconv_forward.7} parent=15 // pred_region
          %s154 = smul.u32 256, %s20
          %p155 = scmp.lt.s32.totalorder %s19, 1
          %s156 = scalar_select %p155, %s19, 1
          %p157 = scmp.lt.s32.totalorder %s154, 511
          %s158 = scalar_select %p157, %s154, 511
          %s159 = smul.addr %s156, 512
          %s160 = sadd.s32 %s158, %s159
          %s161 = smul.addr %s160, 8
          %s162 = scalar_lea.vmem %s0, %s161
          %s163 = smul.u32 256, %s20
        $region20: #{doubleconv_forward.7} parent=15 // pred_fallthru
          _
        // Predicated region
        $region21: #{doubleconv_forward.7} parent=15 // pred_check
          %p164 = pneg %p72
        $region22: #{doubleconv_forward.7} parent=15 // pred_check_branch
          %166 = sbr.rel (%p164) target = $region24
        $region23: #{doubleconv_forward.7} parent=15 // pred_region
          %p167 = scmp.lt.s32.totalorder %s19, 1
          %s168 = scalar_select %p167, %s19, 1
          %s169 = scalar_lea.vmem %s1, %s168
        $region24: #{doubleconv_forward.7} parent=15 // pred_fallthru
          _
        // Predicated region
        $region25: #{doubleconv_forward.7} parent=15 // pred_check
          %p170 = pneg %p98
        $region26: #{doubleconv_forward.7} parent=15 // pred_check_branch
          %172 = sbr.rel (%p170) target = $region28
        $region27: #{doubleconv_forward.7} parent=15 // pred_region
          %p173 = scmp.lt.s32.totalorder %s19, 1
          %s174 = scalar_select %p173, %s19, 1
          %s175 = scalar_lea.vmem %s2, %s174
        $region28: #{doubleconv_forward.7} parent=15 // pred_fallthru
          _
      $region16: #{doubleconv_forward.7} parent=5 // pred_fallthru
        _
      %p176 = scmp.le.s32.totalorder 1, %s12
      %p177 = scmp.lt.s32.totalorder %s12, 5
      %p178 = pnand %p176, %p177
      %p179 = pneg %p178
      // Predicated region
      $region29: #{doubleconv_forward.7} parent=5 // pred_check
        _
      $region30: #{doubleconv_forward.7} parent=5 // pred_check_branch
        %181 = sbr.rel (%p178) target = $region32
      $region31: #{doubleconv_forward.7} parent=5 // pred_region
        %s182 = ssub.s32 %s12, 1
        %s183 = smul.u32 256, %s22
        %p184 = scmp.lt.s32.totalorder %s21, 1
        %s185 = scalar_select %p184, %s21, 1
        %p186 = scmp.lt.s32.totalorder %s183, 511
        %s187 = scalar_select %p186, %s183, 511
        %s188 = smul.addr %s185, 512
        %s189 = sadd.s32 %s187, %s188
        %s190 = smul.addr %s189, 8
        %s191 = scalar_lea.vmem %s0, %s190
        %p192 = pneg %p52
        %p193 = pneg %p49
        %p194 = scmp.lt.s32.totalorder %s21, 1
        %s195 = scalar_select %p194, %s21, 1
        %s196 = scalar_lea.vmem %s1, %s195
        %p197 = pneg %p78
        %p198 = pneg %p75
        %p199 = scmp.lt.s32.totalorder %s21, 1
        %s200 = scalar_select %p199, %s21, 1
        %s201 = scalar_lea.vmem %s2, %s200
        %p202 = pneg %p104
        %p203 = pneg %p101
        %p204 = pneg %p132
        %p205 = pneg %p129
        %s206 = sand.u32 %s119, 1
        %s207 = scalar_lea.sflag [#allocation3], %s206
        %s208 = sand.u32 %s119, 1
        %s209 = smul.addr %s208, 2048
        %s210 = scalar_lea.vmem [#allocation2], %s209
        %s211 = smul.u32 256, %s22
        %p212 = scmp.lt.s32.totalorder %s21, 1
        %s213 = scalar_select %p212, %s21, 1
        %p214 = scmp.lt.s32.totalorder %s211, 511
        %s215 = scalar_select %p214, %s211, 511
        %s216 = smul.addr %s213, 512
        %s217 = sadd.s32 %s215, %s216
        %s218 = smul.addr %s217, 8
        %s219 = scalar_lea.vmem %s0, %s218
        %s220 = smul.u32 256, %s22
        %p221 = scmp.lt.s32.totalorder %s21, 1
        %s222 = scalar_select %p221, %s21, 1
        %s223 = scalar_lea.vmem %s1, %s222
        %p224 = scmp.lt.s32.totalorder %s21, 1
        %s225 = scalar_select %p224, %s21, 1
        %s226 = scalar_lea.vmem %s2, %s225
        %s227 = smul.u32 256, %s22
        %v228 = vld [vmem:[%s223] sm:$0x1]
        %v229 = vmul.f32 %v228, 0.00024414063
        %v230 = vld [vmem:[%s226] sm:$0x1]
        %v231 = vmul.f32 %v230, 0.00024414063
        %v232 = vmul.f32 %v229, %v229
        %v233 = vsub.f32 %v231, %v232
        %v234 = vmax.f32 %v233, 0.0
        %v235 = vadd.f32 %v234, 1e-05
        %v236 = vrsqrt.pop %v235
        %v237 = vld [vmem:[%s219] sm:$0xff]
        %v238 = vld [vmem:[%s219 + $0x8] sm:$0xff]
        %v239 = vld [vmem:[%s219 + $0x10] sm:$0xff]
        %v240 = vld [vmem:[%s219 + $0x18] sm:$0xff]
        %v241 = vld [vmem:[%s219 + $0x20] sm:$0xff]
        %v242 = vld [vmem:[%s219 + $0x28] sm:$0xff]
        %v243 = vld [vmem:[%s219 + $0x30] sm:$0xff]
        %v244 = vld [vmem:[%s219 + $0x38] sm:$0xff]
        %v245 = vld [vmem:[%s219 + $0x40] sm:$0xff]
        %v246 = vld [vmem:[%s219 + $0x48] sm:$0xff]
        %v247 = vld [vmem:[%s219 + $0x50] sm:$0xff]
        %v248 = vld [vmem:[%s219 + $0x58] sm:$0xff]
        %v249 = vld [vmem:[%s219 + $0x60] sm:$0xff]
        %v250 = vld [vmem:[%s219 + $0x68] sm:$0xff]
        %v251 = vld [vmem:[%s219 + $0x70] sm:$0xff]
        %v252 = vld [vmem:[%s219 + $0x78] sm:$0xff]
        %v253 = vld [vmem:[%s219 + $0x80] sm:$0xff]
        %v254 = vld [vmem:[%s219 + $0x88] sm:$0xff]
        %v255 = vld [vmem:[%s219 + $0x90] sm:$0xff]
        %v256 = vld [vmem:[%s219 + $0x98] sm:$0xff]
        %v257 = vld [vmem:[%s219 + $0xa0] sm:$0xff]
        %v258 = vld [vmem:[%s219 + $0xa8] sm:$0xff]
        %v259 = vld [vmem:[%s219 + $0xb0] sm:$0xff]
        %v260 = vld [vmem:[%s219 + $0xb8] sm:$0xff]
        %v261 = vld [vmem:[%s219 + $0xc0] sm:$0xff]
        %v262 = vld [vmem:[%s219 + $0xc8] sm:$0xff]
        %v263 = vld [vmem:[%s219 + $0xd0] sm:$0xff]
        %v264 = vld [vmem:[%s219 + $0xd8] sm:$0xff]
        %v265 = vld [vmem:[%s219 + $0xe0] sm:$0xff]
        %v266 = vld [vmem:[%s219 + $0xe8] sm:$0xff]
        %v267 = vld [vmem:[%s219 + $0xf0] sm:$0xff]
        %v268 = vld [vmem:[%s219 + $0xf8] sm:$0xff]
        %v269 = vld [vmem:[%s219 + $0x100] sm:$0xff]
        %v270 = vld [vmem:[%s219 + $0x108] sm:$0xff]
        %v271 = vld [vmem:[%s219 + $0x110] sm:$0xff]
        %v272 = vld [vmem:[%s219 + $0x118] sm:$0xff]
        %v273 = vld [vmem:[%s219 + $0x120] sm:$0xff]
        %v274 = vld [vmem:[%s219 + $0x128] sm:$0xff]
        %v275 = vld [vmem:[%s219 + $0x130] sm:$0xff]
        %v276 = vld [vmem:[%s219 + $0x138] sm:$0xff]
        %v277 = vld [vmem:[%s219 + $0x140] sm:$0xff]
        %v278 = vld [vmem:[%s219 + $0x148] sm:$0xff]
        %v279 = vld [vmem:[%s219 + $0x150] sm:$0xff]
        %v280 = vld [vmem:[%s219 + $0x158] sm:$0xff]
        %v281 = vld [vmem:[%s219 + $0x160] sm:$0xff]
        %v282 = vld [vmem:[%s219 + $0x168] sm:$0xff]
        %v283 = vld [vmem:[%s219 + $0x170] sm:$0xff]
        %v284 = vld [vmem:[%s219 + $0x178] sm:$0xff]
        %v285 = vld [vmem:[%s219 + $0x180] sm:$0xff]
        %v286 = vld [vmem:[%s219 + $0x188] sm:$0xff]
        %v287 = vld [vmem:[%s219 + $0x190] sm:$0xff]
        %v288 = vld [vmem:[%s219 + $0x198] sm:$0xff]
        %v289 = vld [vmem:[%s219 + $0x1a0] sm:$0xff]
        %v290 = vld [vmem:[%s219 + $0x1a8] sm:$0xff]
        %v291 = vld [vmem:[%s219 + $0x1b0] sm:$0xff]
        %v292 = vld [vmem:[%s219 + $0x1b8] sm:$0xff]
        %v293 = vld [vmem:[%s219 + $0x1c0] sm:$0xff]
        %v294 = vld [vmem:[%s219 + $0x1c8] sm:$0xff]
        %v295 = vld [vmem:[%s219 + $0x1d0] sm:$0xff]
        %v296 = vld [vmem:[%s219 + $0x1d8] sm:$0xff]
        %v297 = vld [vmem:[%s219 + $0x1e0] sm:$0xff]
        %v298 = vld [vmem:[%s219 + $0x1e8] sm:$0xff]
        %v299 = vld [vmem:[%s219 + $0x1f0] sm:$0xff]
        %v300 = vld [vmem:[%s219 + $0x1f8] sm:$0xff]
        %v301 = vld [vmem:[%s219 + $0x200] sm:$0xff]
        %v302 = vld [vmem:[%s219 + $0x208] sm:$0xff]
        %v303 = vld [vmem:[%s219 + $0x210] sm:$0xff]
        %v304 = vld [vmem:[%s219 + $0x218] sm:$0xff]
        %v305 = vld [vmem:[%s219 + $0x220] sm:$0xff]
        %v306 = vld [vmem:[%s219 + $0x228] sm:$0xff]
        %v307 = vld [vmem:[%s219 + $0x230] sm:$0xff]
        %v308 = vld [vmem:[%s219 + $0x238] sm:$0xff]
        %v309 = vld [vmem:[%s219 + $0x240] sm:$0xff]
        %v310 = vld [vmem:[%s219 + $0x248] sm:$0xff]
        %v311 = vld [vmem:[%s219 + $0x250] sm:$0xff]
        %v312 = vld [vmem:[%s219 + $0x258] sm:$0xff]
        %v313 = vld [vmem:[%s219 + $0x260] sm:$0xff]
        %v314 = vld [vmem:[%s219 + $0x268] sm:$0xff]
        %v315 = vld [vmem:[%s219 + $0x270] sm:$0xff]
        %v316 = vld [vmem:[%s219 + $0x278] sm:$0xff]
        %v317 = vld [vmem:[%s219 + $0x280] sm:$0xff]
        %v318 = vld [vmem:[%s219 + $0x288] sm:$0xff]
        %v319 = vld [vmem:[%s219 + $0x290] sm:$0xff]
        %v320 = vld [vmem:[%s219 + $0x298] sm:$0xff]
        %v321 = vld [vmem:[%s219 + $0x2a0] sm:$0xff]
        %v322 = vld [vmem:[%s219 + $0x2a8] sm:$0xff]
        %v323 = vld [vmem:[%s219 + $0x2b0] sm:$0xff]
        %v324 = vld [vmem:[%s219 + $0x2b8] sm:$0xff]
        %v325 = vld [vmem:[%s219 + $0x2c0] sm:$0xff]
        %v326 = vld [vmem:[%s219 + $0x2c8] sm:$0xff]
        %v327 = vld [vmem:[%s219 + $0x2d0] sm:$0xff]
        %v328 = vld [vmem:[%s219 + $0x2d8] sm:$0xff]
        %v329 = vld [vmem:[%s219 + $0x2e0] sm:$0xff]
        %v330 = vld [vmem:[%s219 + $0x2e8] sm:$0xff]
        %v331 = vld [vmem:[%s219 + $0x2f0] sm:$0xff]
        %v332 = vld [vmem:[%s219 + $0x2f8] sm:$0xff]
        %v333 = vld [vmem:[%s219 + $0x300] sm:$0xff]
        %v334 = vld [vmem:[%s219 + $0x308] sm:$0xff]
        %v335 = vld [vmem:[%s219 + $0x310] sm:$0xff]
        %v336 = vld [vmem:[%s219 + $0x318] sm:$0xff]
        %v337 = vld [vmem:[%s219 + $0x320] sm:$0xff]
        %v338 = vld [vmem:[%s219 + $0x328] sm:$0xff]
        %v339 = vld [vmem:[%s219 + $0x330] sm:$0xff]
        %v340 = vld [vmem:[%s219 + $0x338] sm:$0xff]
        %v341 = vld [vmem:[%s219 + $0x340] sm:$0xff]
        %v342 = vld [vmem:[%s219 + $0x348] sm:$0xff]
        %v343 = vld [vmem:[%s219 + $0x350] sm:$0xff]
        %v344 = vld [vmem:[%s219 + $0x358] sm:$0xff]
        %v345 = vld [vmem:[%s219 + $0x360] sm:$0xff]
        %v346 = vld [vmem:[%s219 + $0x368] sm:$0xff]
        %v347 = vld [vmem:[%s219 + $0x370] sm:$0xff]
        %v348 = vld [vmem:[%s219 + $0x378] sm:$0xff]
        %v349 = vld [vmem:[%s219 + $0x380] sm:$0xff]
        %v350 = vld [vmem:[%s219 + $0x388] sm:$0xff]
        %v351 = vld [vmem:[%s219 + $0x390] sm:$0xff]
        %v352 = vld [vmem:[%s219 + $0x398] sm:$0xff]
        %v353 = vld [vmem:[%s219 + $0x3a0] sm:$0xff]
        %v354 = vld [vmem:[%s219 + $0x3a8] sm:$0xff]
        %v355 = vld [vmem:[%s219 + $0x3b0] sm:$0xff]
        %v356 = vld [vmem:[%s219 + $0x3b8] sm:$0xff]
        %v357 = vld [vmem:[%s219 + $0x3c0] sm:$0xff]
        %v358 = vld [vmem:[%s219 + $0x3c8] sm:$0xff]
        %v359 = vld [vmem:[%s219 + $0x3d0] sm:$0xff]
        %v360 = vld [vmem:[%s219 + $0x3d8] sm:$0xff]
        %v361 = vld [vmem:[%s219 + $0x3e0] sm:$0xff]
        %v362 = vld [vmem:[%s219 + $0x3e8] sm:$0xff]
        %v363 = vld [vmem:[%s219 + $0x3f0] sm:$0xff]
        %v364 = vld [vmem:[%s219 + $0x3f8] sm:$0xff]
        %v365 = vld [vmem:[%s219 + $0x400] sm:$0xff]
        %v366 = vld [vmem:[%s219 + $0x408] sm:$0xff]
        %v367 = vld [vmem:[%s219 + $0x410] sm:$0xff]
        %v368 = vld [vmem:[%s219 + $0x418] sm:$0xff]
        %v369 = vld [vmem:[%s219 + $0x420] sm:$0xff]
        %v370 = vld [vmem:[%s219 + $0x428] sm:$0xff]
        %v371 = vld [vmem:[%s219 + $0x430] sm:$0xff]
        %v372 = vld [vmem:[%s219 + $0x438] sm:$0xff]
        %v373 = vld [vmem:[%s219 + $0x440] sm:$0xff]
        %v374 = vld [vmem:[%s219 + $0x448] sm:$0xff]
        %v375 = vld [vmem:[%s219 + $0x450] sm:$0xff]
        %v376 = vld [vmem:[%s219 + $0x458] sm:$0xff]
        %v377 = vld [vmem:[%s219 + $0x460] sm:$0xff]
        %v378 = vld [vmem:[%s219 + $0x468] sm:$0xff]
        %v379 = vld [vmem:[%s219 + $0x470] sm:$0xff]
        %v380 = vld [vmem:[%s219 + $0x478] sm:$0xff]
        %v381 = vld [vmem:[%s219 + $0x480] sm:$0xff]
        %v382 = vld [vmem:[%s219 + $0x488] sm:$0xff]
        %v383 = vld [vmem:[%s219 + $0x490] sm:$0xff]
        %v384 = vld [vmem:[%s219 + $0x498] sm:$0xff]
        %v385 = vld [vmem:[%s219 + $0x4a0] sm:$0xff]
        %v386 = vld [vmem:[%s219 + $0x4a8] sm:$0xff]
        %v387 = vld [vmem:[%s219 + $0x4b0] sm:$0xff]
        %v388 = vld [vmem:[%s219 + $0x4b8] sm:$0xff]
        %v389 = vld [vmem:[%s219 + $0x4c0] sm:$0xff]
        %v390 = vld [vmem:[%s219 + $0x4c8] sm:$0xff]
        %v391 = vld [vmem:[%s219 + $0x4d0] sm:$0xff]
        %v392 = vld [vmem:[%s219 + $0x4d8] sm:$0xff]
        %v393 = vld [vmem:[%s219 + $0x4e0] sm:$0xff]
        %v394 = vld [vmem:[%s219 + $0x4e8] sm:$0xff]
        %v395 = vld [vmem:[%s219 + $0x4f0] sm:$0xff]
        %v396 = vld [vmem:[%s219 + $0x4f8] sm:$0xff]
        %v397 = vld [vmem:[%s219 + $0x500] sm:$0xff]
        %v398 = vld [vmem:[%s219 + $0x508] sm:$0xff]
        %v399 = vld [vmem:[%s219 + $0x510] sm:$0xff]
        %v400 = vld [vmem:[%s219 + $0x518] sm:$0xff]
        %v401 = vld [vmem:[%s219 + $0x520] sm:$0xff]
        %v402 = vld [vmem:[%s219 + $0x528] sm:$0xff]
        %v403 = vld [vmem:[%s219 + $0x530] sm:$0xff]
        %v404 = vld [vmem:[%s219 + $0x538] sm:$0xff]
        %v405 = vld [vmem:[%s219 + $0x540] sm:$0xff]
        %v406 = vld [vmem:[%s219 + $0x548] sm:$0xff]
        %v407 = vld [vmem:[%s219 + $0x550] sm:$0xff]
        %v408 = vld [vmem:[%s219 + $0x558] sm:$0xff]
        %v409 = vld [vmem:[%s219 + $0x560] sm:$0xff]
        %v410 = vld [vmem:[%s219 + $0x568] sm:$0xff]
        %v411 = vld [vmem:[%s219 + $0x570] sm:$0xff]
        %v412 = vld [vmem:[%s219 + $0x578] sm:$0xff]
        %v413 = vld [vmem:[%s219 + $0x580] sm:$0xff]
        %v414 = vld [vmem:[%s219 + $0x588] sm:$0xff]
        %v415 = vld [vmem:[%s219 + $0x590] sm:$0xff]
        %v416 = vld [vmem:[%s219 + $0x598] sm:$0xff]
        %v417 = vld [vmem:[%s219 + $0x5a0] sm:$0xff]
        %v418 = vld [vmem:[%s219 + $0x5a8] sm:$0xff]
        %v419 = vld [vmem:[%s219 + $0x5b0] sm:$0xff]
        %v420 = vld [vmem:[%s219 + $0x5b8] sm:$0xff]
        %v421 = vld [vmem:[%s219 + $0x5c0] sm:$0xff]
        %v422 = vld [vmem:[%s219 + $0x5c8] sm:$0xff]
        %v423 = vld [vmem:[%s219 + $0x5d0] sm:$0xff]
        %v424 = vld [vmem:[%s219 + $0x5d8] sm:$0xff]
        %v425 = vld [vmem:[%s219 + $0x5e0] sm:$0xff]
        %v426 = vld [vmem:[%s219 + $0x5e8] sm:$0xff]
        %v427 = vld [vmem:[%s219 + $0x5f0] sm:$0xff]
        %v428 = vld [vmem:[%s219 + $0x5f8] sm:$0xff]
        %v429 = vld [vmem:[%s219 + $0x600] sm:$0xff]
        %v430 = vld [vmem:[%s219 + $0x608] sm:$0xff]
        %v431 = vld [vmem:[%s219 + $0x610] sm:$0xff]
        %v432 = vld [vmem:[%s219 + $0x618] sm:$0xff]
        %v433 = vld [vmem:[%s219 + $0x620] sm:$0xff]
        %v434 = vld [vmem:[%s219 + $0x628] sm:$0xff]
        %v435 = vld [vmem:[%s219 + $0x630] sm:$0xff]
        %v436 = vld [vmem:[%s219 + $0x638] sm:$0xff]
        %v437 = vld [vmem:[%s219 + $0x640] sm:$0xff]
        %v438 = vld [vmem:[%s219 + $0x648] sm:$0xff]
        %v439 = vld [vmem:[%s219 + $0x650] sm:$0xff]
        %v440 = vld [vmem:[%s219 + $0x658] sm:$0xff]
        %v441 = vld [vmem:[%s219 + $0x660] sm:$0xff]
        %v442 = vld [vmem:[%s219 + $0x668] sm:$0xff]
        %v443 = vld [vmem:[%s219 + $0x670] sm:$0xff]
        %v444 = vld [vmem:[%s219 + $0x678] sm:$0xff]
        %v445 = vld [vmem:[%s219 + $0x680] sm:$0xff]
        %v446 = vld [vmem:[%s219 + $0x688] sm:$0xff]
        %v447 = vld [vmem:[%s219 + $0x690] sm:$0xff]
        %v448 = vld [vmem:[%s219 + $0x698] sm:$0xff]
        %v449 = vld [vmem:[%s219 + $0x6a0] sm:$0xff]
        %v450 = vld [vmem:[%s219 + $0x6a8] sm:$0xff]
        %v451 = vld [vmem:[%s219 + $0x6b0] sm:$0xff]
        %v452 = vld [vmem:[%s219 + $0x6b8] sm:$0xff]
        %v453 = vld [vmem:[%s219 + $0x6c0] sm:$0xff]
        %v454 = vld [vmem:[%s219 + $0x6c8] sm:$0xff]
        %v455 = vld [vmem:[%s219 + $0x6d0] sm:$0xff]
        %v456 = vld [vmem:[%s219 + $0x6d8] sm:$0xff]
        %v457 = vld [vmem:[%s219 + $0x6e0] sm:$0xff]
        %v458 = vld [vmem:[%s219 + $0x6e8] sm:$0xff]
        %v459 = vld [vmem:[%s219 + $0x6f0] sm:$0xff]
        %v460 = vld [vmem:[%s219 + $0x6f8] sm:$0xff]
        %v461 = vld [vmem:[%s219 + $0x700] sm:$0xff]
        %v462 = vld [vmem:[%s219 + $0x708] sm:$0xff]
        %v463 = vld [vmem:[%s219 + $0x710] sm:$0xff]
        %v464 = vld [vmem:[%s219 + $0x718] sm:$0xff]
        %v465 = vld [vmem:[%s219 + $0x720] sm:$0xff]
        %v466 = vld [vmem:[%s219 + $0x728] sm:$0xff]
        %v467 = vld [vmem:[%s219 + $0x730] sm:$0xff]
        %v468 = vld [vmem:[%s219 + $0x738] sm:$0xff]
        %v469 = vld [vmem:[%s219 + $0x740] sm:$0xff]
        %v470 = vld [vmem:[%s219 + $0x748] sm:$0xff]
        %v471 = vld [vmem:[%s219 + $0x750] sm:$0xff]
        %v472 = vld [vmem:[%s219 + $0x758] sm:$0xff]
        %v473 = vld [vmem:[%s219 + $0x760] sm:$0xff]
        %v474 = vld [vmem:[%s219 + $0x768] sm:$0xff]
        %v475 = vld [vmem:[%s219 + $0x770] sm:$0xff]
        %v476 = vld [vmem:[%s219 + $0x778] sm:$0xff]
        %v477 = vld [vmem:[%s219 + $0x780] sm:$0xff]
        %v478 = vld [vmem:[%s219 + $0x788] sm:$0xff]
        %v479 = vld [vmem:[%s219 + $0x790] sm:$0xff]
        %v480 = vld [vmem:[%s219 + $0x798] sm:$0xff]
        %v481 = vld [vmem:[%s219 + $0x7a0] sm:$0xff]
        %v482 = vld [vmem:[%s219 + $0x7a8] sm:$0xff]
        %v483 = vld [vmem:[%s219 + $0x7b0] sm:$0xff]
        %v484 = vld [vmem:[%s219 + $0x7b8] sm:$0xff]
        %v485 = vld [vmem:[%s219 + $0x7c0] sm:$0xff]
        %v486 = vld [vmem:[%s219 + $0x7c8] sm:$0xff]
        %v487 = vld [vmem:[%s219 + $0x7d0] sm:$0xff]
        %v488 = vld [vmem:[%s219 + $0x7d8] sm:$0xff]
        %v489 = vld [vmem:[%s219 + $0x7e0] sm:$0xff]
        %v490 = vld [vmem:[%s219 + $0x7e8] sm:$0xff]
        %v491 = vld [vmem:[%s219 + $0x7f0] sm:$0xff]
        %v492 = vld [vmem:[%s219 + $0x7f8] sm:$0xff]
        %v494 = vlaneseq
        %v495 = vshrl.u32 %v494, 7
        %v496 = vsub.s32 0, %v495
        %v497 = vrot.slane %v229, %v496
        %v499 = vsub.f32 %v237, %v497
        %v500 = vsub.f32 %v238, %v497
        %v501 = vsub.f32 %v239, %v497
        %v502 = vsub.f32 %v240, %v497
        %v503 = vsub.f32 %v241, %v497
        %v504 = vsub.f32 %v242, %v497
        %v505 = vsub.f32 %v243, %v497
        %v506 = vsub.f32 %v244, %v497
        %v507 = vsub.f32 %v245, %v497
        %v508 = vsub.f32 %v246, %v497
        %v509 = vsub.f32 %v247, %v497
        %v510 = vsub.f32 %v248, %v497
        %v511 = vsub.f32 %v249, %v497
        %v512 = vsub.f32 %v250, %v497
        %v513 = vsub.f32 %v251, %v497
        %v514 = vsub.f32 %v252, %v497
        %v515 = vsub.f32 %v253, %v497
        %v516 = vsub.f32 %v254, %v497
        %v517 = vsub.f32 %v255, %v497
        %v518 = vsub.f32 %v256, %v497
        %v519 = vsub.f32 %v257, %v497
        %v520 = vsub.f32 %v258, %v497
        %v521 = vsub.f32 %v259, %v497
        %v522 = vsub.f32 %v260, %v497
        %v523 = vsub.f32 %v261, %v497
        %v524 = vsub.f32 %v262, %v497
        %v525 = vsub.f32 %v263, %v497
        %v526 = vsub.f32 %v264, %v497
        %v527 = vsub.f32 %v265, %v497
        %v528 = vsub.f32 %v266, %v497
        %v529 = vsub.f32 %v267, %v497
        %v530 = vsub.f32 %v268, %v497
        %v531 = vsub.f32 %v269, %v497
        %v532 = vsub.f32 %v270, %v497
        %v533 = vsub.f32 %v271, %v497
        %v534 = vsub.f32 %v272, %v497
        %v535 = vsub.f32 %v273, %v497
        %v536 = vsub.f32 %v274, %v497
        %v537 = vsub.f32 %v275, %v497
        %v538 = vsub.f32 %v276, %v497
        %v539 = vsub.f32 %v277, %v497
        %v540 = vsub.f32 %v278, %v497
        %v541 = vsub.f32 %v279, %v497
        %v542 = vsub.f32 %v280, %v497
        %v543 = vsub.f32 %v281, %v497
        %v544 = vsub.f32 %v282, %v497
        %v545 = vsub.f32 %v283, %v497
        %v546 = vsub.f32 %v284, %v497
        %v547 = vsub.f32 %v285, %v497
        %v548 = vsub.f32 %v286, %v497
        %v549 = vsub.f32 %v287, %v497
        %v550 = vsub.f32 %v288, %v497
        %v551 = vsub.f32 %v289, %v497
        %v552 = vsub.f32 %v290, %v497
        %v553 = vsub.f32 %v291, %v497
        %v554 = vsub.f32 %v292, %v497
        %v555 = vsub.f32 %v293, %v497
        %v556 = vsub.f32 %v294, %v497
        %v557 = vsub.f32 %v295, %v497
        %v558 = vsub.f32 %v296, %v497
        %v559 = vsub.f32 %v297, %v497
        %v560 = vsub.f32 %v298, %v497
        %v561 = vsub.f32 %v299, %v497
        %v562 = vsub.f32 %v300, %v497
        %v563 = vsub.f32 %v301, %v497
        %v564 = vsub.f32 %v302, %v497
        %v565 = vsub.f32 %v303, %v497
        %v566 = vsub.f32 %v304, %v497
        %v567 = vsub.f32 %v305, %v497
        %v568 = vsub.f32 %v306, %v497
        %v569 = vsub.f32 %v307, %v497
        %v570 = vsub.f32 %v308, %v497
        %v571 = vsub.f32 %v309, %v497
        %v572 = vsub.f32 %v310, %v497
        %v573 = vsub.f32 %v311, %v497
        %v574 = vsub.f32 %v312, %v497
        %v575 = vsub.f32 %v313, %v497
        %v576 = vsub.f32 %v314, %v497
        %v577 = vsub.f32 %v315, %v497
        %v578 = vsub.f32 %v316, %v497
        %v579 = vsub.f32 %v317, %v497
        %v580 = vsub.f32 %v318, %v497
        %v581 = vsub.f32 %v319, %v497
        %v582 = vsub.f32 %v320, %v497
        %v583 = vsub.f32 %v321, %v497
        %v584 = vsub.f32 %v322, %v497
        %v585 = vsub.f32 %v323, %v497
        %v586 = vsub.f32 %v324, %v497
        %v587 = vsub.f32 %v325, %v497
        %v588 = vsub.f32 %v326, %v497
        %v589 = vsub.f32 %v327, %v497
        %v590 = vsub.f32 %v328, %v497
        %v591 = vsub.f32 %v329, %v497
        %v592 = vsub.f32 %v330, %v497
        %v593 = vsub.f32 %v331, %v497
        %v594 = vsub.f32 %v332, %v497
        %v595 = vsub.f32 %v333, %v497
        %v596 = vsub.f32 %v334, %v497
        %v597 = vsub.f32 %v335, %v497
        %v598 = vsub.f32 %v336, %v497
        %v599 = vsub.f32 %v337, %v497
        %v600 = vsub.f32 %v338, %v497
        %v601 = vsub.f32 %v339, %v497
        %v602 = vsub.f32 %v340, %v497
        %v603 = vsub.f32 %v341, %v497
        %v604 = vsub.f32 %v342, %v497
        %v605 = vsub.f32 %v343, %v497
        %v606 = vsub.f32 %v344, %v497
        %v607 = vsub.f32 %v345, %v497
        %v608 = vsub.f32 %v346, %v497
        %v609 = vsub.f32 %v347, %v497
        %v610 = vsub.f32 %v348, %v497
        %v611 = vsub.f32 %v349, %v497
        %v612 = vsub.f32 %v350, %v497
        %v613 = vsub.f32 %v351, %v497
        %v614 = vsub.f32 %v352, %v497
        %v615 = vsub.f32 %v353, %v497
        %v616 = vsub.f32 %v354, %v497
        %v617 = vsub.f32 %v355, %v497
        %v618 = vsub.f32 %v356, %v497
        %v619 = vsub.f32 %v357, %v497
        %v620 = vsub.f32 %v358, %v497
        %v621 = vsub.f32 %v359, %v497
        %v622 = vsub.f32 %v360, %v497
        %v623 = vsub.f32 %v361, %v497
        %v624 = vsub.f32 %v362, %v497
        %v625 = vsub.f32 %v363, %v497
        %v626 = vsub.f32 %v364, %v497
        %v627 = vsub.f32 %v365, %v497
        %v628 = vsub.f32 %v366, %v497
        %v629 = vsub.f32 %v367, %v497
        %v630 = vsub.f32 %v368, %v497
        %v631 = vsub.f32 %v369, %v497
        %v632 = vsub.f32 %v370, %v497
        %v633 = vsub.f32 %v371, %v497
        %v634 = vsub.f32 %v372, %v497
        %v635 = vsub.f32 %v373, %v497
        %v636 = vsub.f32 %v374, %v497
        %v637 = vsub.f32 %v375, %v497
        %v638 = vsub.f32 %v376, %v497
        %v639 = vsub.f32 %v377, %v497
        %v640 = vsub.f32 %v378, %v497
        %v641 = vsub.f32 %v379, %v497
        %v642 = vsub.f32 %v380, %v497
        %v643 = vsub.f32 %v381, %v497
        %v644 = vsub.f32 %v382, %v497
        %v645 = vsub.f32 %v383, %v497
        %v646 = vsub.f32 %v384, %v497
        %v647 = vsub.f32 %v385, %v497
        %v648 = vsub.f32 %v386, %v497
        %v649 = vsub.f32 %v387, %v497
        %v650 = vsub.f32 %v388, %v497
        %v651 = vsub.f32 %v389, %v497
        %v652 = vsub.f32 %v390, %v497
        %v653 = vsub.f32 %v391, %v497
        %v654 = vsub.f32 %v392, %v497
        %v655 = vsub.f32 %v393, %v497
        %v656 = vsub.f32 %v394, %v497
        %v657 = vsub.f32 %v395, %v497
        %v658 = vsub.f32 %v396, %v497
        %v659 = vsub.f32 %v397, %v497
        %v660 = vsub.f32 %v398, %v497
        %v661 = vsub.f32 %v399, %v497
        %v662 = vsub.f32 %v400, %v497
        %v663 = vsub.f32 %v401, %v497
        %v664 = vsub.f32 %v402, %v497
        %v665 = vsub.f32 %v403, %v497
        %v666 = vsub.f32 %v404, %v497
        %v667 = vsub.f32 %v405, %v497
        %v668 = vsub.f32 %v406, %v497
        %v669 = vsub.f32 %v407, %v497
        %v670 = vsub.f32 %v408, %v497
        %v671 = vsub.f32 %v409, %v497
        %v672 = vsub.f32 %v410, %v497
        %v673 = vsub.f32 %v411, %v497
        %v674 = vsub.f32 %v412, %v497
        %v675 = vsub.f32 %v413, %v497
        %v676 = vsub.f32 %v414, %v497
        %v677 = vsub.f32 %v415, %v497
        %v678 = vsub.f32 %v416, %v497
        %v679 = vsub.f32 %v417, %v497
        %v680 = vsub.f32 %v418, %v497
        %v681 = vsub.f32 %v419, %v497
        %v682 = vsub.f32 %v420, %v497
        %v683 = vsub.f32 %v421, %v497
        %v684 = vsub.f32 %v422, %v497
        %v685 = vsub.f32 %v423, %v497
        %v686 = vsub.f32 %v424, %v497
        %v687 = vsub.f32 %v425, %v497
        %v688 = vsub.f32 %v426, %v497
        %v689 = vsub.f32 %v427, %v497
        %v690 = vsub.f32 %v428, %v497
        %v691 = vsub.f32 %v429, %v497
        %v692 = vsub.f32 %v430, %v497
        %v693 = vsub.f32 %v431, %v497
        %v694 = vsub.f32 %v432, %v497
        %v695 = vsub.f32 %v433, %v497
        %v696 = vsub.f32 %v434, %v497
        %v697 = vsub.f32 %v435, %v497
        %v698 = vsub.f32 %v436, %v497
        %v699 = vsub.f32 %v437, %v497
        %v700 = vsub.f32 %v438, %v497
        %v701 = vsub.f32 %v439, %v497
        %v702 = vsub.f32 %v440, %v497
        %v703 = vsub.f32 %v441, %v497
        %v704 = vsub.f32 %v442, %v497
        %v705 = vsub.f32 %v443, %v497
        %v706 = vsub.f32 %v444, %v497
        %v707 = vsub.f32 %v445, %v497
        %v708 = vsub.f32 %v446, %v497
        %v709 = vsub.f32 %v447, %v497
        %v710 = vsub.f32 %v448, %v497
        %v711 = vsub.f32 %v449, %v497
        %v712 = vsub.f32 %v450, %v497
        %v713 = vsub.f32 %v451, %v497
        %v714 = vsub.f32 %v452, %v497
        %v715 = vsub.f32 %v453, %v497
        %v716 = vsub.f32 %v454, %v497
        %v717 = vsub.f32 %v455, %v497
        %v718 = vsub.f32 %v456, %v497
        %v719 = vsub.f32 %v457, %v497
        %v720 = vsub.f32 %v458, %v497
        %v721 = vsub.f32 %v459, %v497
        %v722 = vsub.f32 %v460, %v497
        %v723 = vsub.f32 %v461, %v497
        %v724 = vsub.f32 %v462, %v497
        %v725 = vsub.f32 %v463, %v497
        %v726 = vsub.f32 %v464, %v497
        %v727 = vsub.f32 %v465, %v497
        %v728 = vsub.f32 %v466, %v497
        %v729 = vsub.f32 %v467, %v497
        %v730 = vsub.f32 %v468, %v497
        %v731 = vsub.f32 %v469, %v497
        %v732 = vsub.f32 %v470, %v497
        %v733 = vsub.f32 %v471, %v497
        %v734 = vsub.f32 %v472, %v497
        %v735 = vsub.f32 %v473, %v497
        %v736 = vsub.f32 %v474, %v497
        %v737 = vsub.f32 %v475, %v497
        %v738 = vsub.f32 %v476, %v497
        %v739 = vsub.f32 %v477, %v497
        %v740 = vsub.f32 %v478, %v497
        %v741 = vsub.f32 %v479, %v497
        %v742 = vsub.f32 %v480, %v497
        %v743 = vsub.f32 %v481, %v497
        %v744 = vsub.f32 %v482, %v497
        %v745 = vsub.f32 %v483, %v497
        %v746 = vsub.f32 %v484, %v497
        %v747 = vsub.f32 %v485, %v497
        %v748 = vsub.f32 %v486, %v497
        %v749 = vsub.f32 %v487, %v497
        %v750 = vsub.f32 %v488, %v497
        %v751 = vsub.f32 %v489, %v497
        %v752 = vsub.f32 %v490, %v497
        %v753 = vsub.f32 %v491, %v497
        %v754 = vsub.f32 %v492, %v497
        %v756 = vlaneseq
        %v757 = vshrl.u32 %v756, 7
        %v758 = vsub.s32 0, %v757
        %v759 = vrot.slane %v236, %v758
        %v761 = vmul.f32 %v499, %v759
        %v762 = vmul.f32 %v500, %v759
        %v763 = vmul.f32 %v501, %v759
        %v764 = vmul.f32 %v502, %v759
        %v765 = vmul.f32 %v503, %v759
        %v766 = vmul.f32 %v504, %v759
        %v767 = vmul.f32 %v505, %v759
        %v768 = vmul.f32 %v506, %v759
        %v769 = vmul.f32 %v507, %v759
        %v770 = vmul.f32 %v508, %v759
        %v771 = vmul.f32 %v509, %v759
        %v772 = vmul.f32 %v510, %v759
        %v773 = vmul.f32 %v511, %v759
        %v774 = vmul.f32 %v512, %v759
        %v775 = vmul.f32 %v513, %v759
        %v776 = vmul.f32 %v514, %v759
        %v777 = vmul.f32 %v515, %v759
        %v778 = vmul.f32 %v516, %v759
        %v779 = vmul.f32 %v517, %v759
        %v780 = vmul.f32 %v518, %v759
        %v781 = vmul.f32 %v519, %v759
        %v782 = vmul.f32 %v520, %v759
        %v783 = vmul.f32 %v521, %v759
        %v784 = vmul.f32 %v522, %v759
        %v785 = vmul.f32 %v523, %v759
        %v786 = vmul.f32 %v524, %v759
        %v787 = vmul.f32 %v525, %v759
        %v788 = vmul.f32 %v526, %v759
        %v789 = vmul.f32 %v527, %v759
        %v790 = vmul.f32 %v528, %v759
        %v791 = vmul.f32 %v529, %v759
        %v792 = vmul.f32 %v530, %v759
        %v793 = vmul.f32 %v531, %v759
        %v794 = vmul.f32 %v532, %v759
        %v795 = vmul.f32 %v533, %v759
        %v796 = vmul.f32 %v534, %v759
        %v797 = vmul.f32 %v535, %v759
        %v798 = vmul.f32 %v536, %v759
        %v799 = vmul.f32 %v537, %v759
        %v800 = vmul.f32 %v538, %v759
        %v801 = vmul.f32 %v539, %v759
        %v802 = vmul.f32 %v540, %v759
        %v803 = vmul.f32 %v541, %v759
        %v804 = vmul.f32 %v542, %v759
        %v805 = vmul.f32 %v543, %v759
        %v806 = vmul.f32 %v544, %v759
        %v807 = vmul.f32 %v545, %v759
        %v808 = vmul.f32 %v546, %v759
        %v809 = vmul.f32 %v547, %v759
        %v810 = vmul.f32 %v548, %v759
        %v811 = vmul.f32 %v549, %v759
        %v812 = vmul.f32 %v550, %v759
        %v813 = vmul.f32 %v551, %v759
        %v814 = vmul.f32 %v552, %v759
        %v815 = vmul.f32 %v553, %v759
        %v816 = vmul.f32 %v554, %v759
        %v817 = vmul.f32 %v555, %v759
        %v818 = vmul.f32 %v556, %v759
        %v819 = vmul.f32 %v557, %v759
        %v820 = vmul.f32 %v558, %v759
        %v821 = vmul.f32 %v559, %v759
        %v822 = vmul.f32 %v560, %v759
        %v823 = vmul.f32 %v561, %v759
        %v824 = vmul.f32 %v562, %v759
        %v825 = vmul.f32 %v563, %v759
        %v826 = vmul.f32 %v564, %v759
        %v827 = vmul.f32 %v565, %v759
        %v828 = vmul.f32 %v566, %v759
        %v829 = vmul.f32 %v567, %v759
        %v830 = vmul.f32 %v568, %v759
        %v831 = vmul.f32 %v569, %v759
        %v832 = vmul.f32 %v570, %v759
        %v833 = vmul.f32 %v571, %v759
        %v834 = vmul.f32 %v572, %v759
        %v835 = vmul.f32 %v573, %v759
        %v836 = vmul.f32 %v574, %v759
        %v837 = vmul.f32 %v575, %v759
        %v838 = vmul.f32 %v576, %v759
        %v839 = vmul.f32 %v577, %v759
        %v840 = vmul.f32 %v578, %v759
        %v841 = vmul.f32 %v579, %v759
        %v842 = vmul.f32 %v580, %v759
        %v843 = vmul.f32 %v581, %v759
        %v844 = vmul.f32 %v582, %v759
        %v845 = vmul.f32 %v583, %v759
        %v846 = vmul.f32 %v584, %v759
        %v847 = vmul.f32 %v585, %v759
        %v848 = vmul.f32 %v586, %v759
        %v849 = vmul.f32 %v587, %v759
        %v850 = vmul.f32 %v588, %v759
        %v851 = vmul.f32 %v589, %v759
        %v852 = vmul.f32 %v590, %v759
        %v853 = vmul.f32 %v591, %v759
        %v854 = vmul.f32 %v592, %v759
        %v855 = vmul.f32 %v593, %v759
        %v856 = vmul.f32 %v594, %v759
        %v857 = vmul.f32 %v595, %v759
        %v858 = vmul.f32 %v596, %v759
        %v859 = vmul.f32 %v597, %v759
        %v860 = vmul.f32 %v598, %v759
        %v861 = vmul.f32 %v599, %v759
        %v862 = vmul.f32 %v600, %v759
        %v863 = vmul.f32 %v601, %v759
        %v864 = vmul.f32 %v602, %v759
        %v865 = vmul.f32 %v603, %v759
        %v866 = vmul.f32 %v604, %v759
        %v867 = vmul.f32 %v605, %v759
        %v868 = vmul.f32 %v606, %v759
        %v869 = vmul.f32 %v607, %v759
        %v870 = vmul.f32 %v608, %v759
        %v871 = vmul.f32 %v609, %v759
        %v872 = vmul.f32 %v610, %v759
        %v873 = vmul.f32 %v611, %v759
        %v874 = vmul.f32 %v612, %v759
        %v875 = vmul.f32 %v613, %v759
        %v876 = vmul.f32 %v614, %v759
        %v877 = vmul.f32 %v615, %v759
        %v878 = vmul.f32 %v616, %v759
        %v879 = vmul.f32 %v617, %v759
        %v880 = vmul.f32 %v618, %v759
        %v881 = vmul.f32 %v619, %v759
        %v882 = vmul.f32 %v620, %v759
        %v883 = vmul.f32 %v621, %v759
        %v884 = vmul.f32 %v622, %v759
        %v885 = vmul.f32 %v623, %v759
        %v886 = vmul.f32 %v624, %v759
        %v887 = vmul.f32 %v625, %v759
        %v888 = vmul.f32 %v626, %v759
        %v889 = vmul.f32 %v627, %v759
        %v890 = vmul.f32 %v628, %v759
        %v891 = vmul.f32 %v629, %v759
        %v892 = vmul.f32 %v630, %v759
        %v893 = vmul.f32 %v631, %v759
        %v894 = vmul.f32 %v632, %v759
        %v895 = vmul.f32 %v633, %v759
        %v896 = vmul.f32 %v634, %v759
        %v897 = vmul.f32 %v635, %v759
        %v898 = vmul.f32 %v636, %v759
        %v899 = vmul.f32 %v637, %v759
        %v900 = vmul.f32 %v638, %v759
        %v901 = vmul.f32 %v639, %v759
        %v902 = vmul.f32 %v640, %v759
        %v903 = vmul.f32 %v641, %v759
        %v904 = vmul.f32 %v642, %v759
        %v905 = vmul.f32 %v643, %v759
        %v906 = vmul.f32 %v644, %v759
        %v907 = vmul.f32 %v645, %v759
        %v908 = vmul.f32 %v646, %v759
        %v909 = vmul.f32 %v647, %v759
        %v910 = vmul.f32 %v648, %v759
        %v911 = vmul.f32 %v649, %v759
        %v912 = vmul.f32 %v650, %v759
        %v913 = vmul.f32 %v651, %v759
        %v914 = vmul.f32 %v652, %v759
        %v915 = vmul.f32 %v653, %v759
        %v916 = vmul.f32 %v654, %v759
        %v917 = vmul.f32 %v655, %v759
        %v918 = vmul.f32 %v656, %v759
        %v919 = vmul.f32 %v657, %v759
        %v920 = vmul.f32 %v658, %v759
        %v921 = vmul.f32 %v659, %v759
        %v922 = vmul.f32 %v660, %v759
        %v923 = vmul.f32 %v661, %v759
        %v924 = vmul.f32 %v662, %v759
        %v925 = vmul.f32 %v663, %v759
        %v926 = vmul.f32 %v664, %v759
        %v927 = vmul.f32 %v665, %v759
        %v928 = vmul.f32 %v666, %v759
        %v929 = vmul.f32 %v667, %v759
        %v930 = vmul.f32 %v668, %v759
        %v931 = vmul.f32 %v669, %v759
        %v932 = vmul.f32 %v670, %v759
        %v933 = vmul.f32 %v671, %v759
        %v934 = vmul.f32 %v672, %v759
        %v935 = vmul.f32 %v673, %v759
        %v936 = vmul.f32 %v674, %v759
        %v937 = vmul.f32 %v675, %v759
        %v938 = vmul.f32 %v676, %v759
        %v939 = vmul.f32 %v677, %v759
        %v940 = vmul.f32 %v678, %v759
        %v941 = vmul.f32 %v679, %v759
        %v942 = vmul.f32 %v680, %v759
        %v943 = vmul.f32 %v681, %v759
        %v944 = vmul.f32 %v682, %v759
        %v945 = vmul.f32 %v683, %v759
        %v946 = vmul.f32 %v684, %v759
        %v947 = vmul.f32 %v685, %v759
        %v948 = vmul.f32 %v686, %v759
        %v949 = vmul.f32 %v687, %v759
        %v950 = vmul.f32 %v688, %v759
        %v951 = vmul.f32 %v689, %v759
        %v952 = vmul.f32 %v690, %v759
        %v953 = vmul.f32 %v691, %v759
        %v954 = vmul.f32 %v692, %v759
        %v955 = vmul.f32 %v693, %v759
        %v956 = vmul.f32 %v694, %v759
        %v957 = vmul.f32 %v695, %v759
        %v958 = vmul.f32 %v696, %v759
        %v959 = vmul.f32 %v697, %v759
        %v960 = vmul.f32 %v698, %v759
        %v961 = vmul.f32 %v699, %v759
        %v962 = vmul.f32 %v700, %v759
        %v963 = vmul.f32 %v701, %v759
        %v964 = vmul.f32 %v702, %v759
        %v965 = vmul.f32 %v703, %v759
        %v966 = vmul.f32 %v704, %v759
        %v967 = vmul.f32 %v705, %v759
        %v968 = vmul.f32 %v706, %v759
        %v969 = vmul.f32 %v707, %v759
        %v970 = vmul.f32 %v708, %v759
        %v971 = vmul.f32 %v709, %v759
        %v972 = vmul.f32 %v710, %v759
        %v973 = vmul.f32 %v711, %v759
        %v974 = vmul.f32 %v712, %v759
        %v975 = vmul.f32 %v713, %v759
        %v976 = vmul.f32 %v714, %v759
        %v977 = vmul.f32 %v715, %v759
        %v978 = vmul.f32 %v716, %v759
        %v979 = vmul.f32 %v717, %v759
        %v980 = vmul.f32 %v718, %v759
        %v981 = vmul.f32 %v719, %v759
        %v982 = vmul.f32 %v720, %v759
        %v983 = vmul.f32 %v721, %v759
        %v984 = vmul.f32 %v722, %v759
        %v985 = vmul.f32 %v723, %v759
        %v986 = vmul.f32 %v724, %v759
        %v987 = vmul.f32 %v725, %v759
        %v988 = vmul.f32 %v726, %v759
        %v989 = vmul.f32 %v727, %v759
        %v990 = vmul.f32 %v728, %v759
        %v991 = vmul.f32 %v729, %v759
        %v992 = vmul.f32 %v730, %v759
        %v993 = vmul.f32 %v731, %v759
        %v994 = vmul.f32 %v732, %v759
        %v995 = vmul.f32 %v733, %v759
        %v996 = vmul.f32 %v734, %v759
        %v997 = vmul.f32 %v735, %v759
        %v998 = vmul.f32 %v736, %v759
        %v999 = vmul.f32 %v737, %v759
        %v1000 = vmul.f32 %v738, %v759
        %v1001 = vmul.f32 %v739, %v759
        %v1002 = vmul.f32 %v740, %v759
        %v1003 = vmul.f32 %v741, %v759
        %v1004 = vmul.f32 %v742, %v759
        %v1005 = vmul.f32 %v743, %v759
        %v1006 = vmul.f32 %v744, %v759
        %v1007 = vmul.f32 %v745, %v759
        %v1008 = vmul.f32 %v746, %v759
        %v1009 = vmul.f32 %v747, %v759
        %v1010 = vmul.f32 %v748, %v759
        %v1011 = vmul.f32 %v749, %v759
        %v1012 = vmul.f32 %v750, %v759
        %v1013 = vmul.f32 %v751, %v759
        %v1014 = vmul.f32 %v752, %v759
        %v1015 = vmul.f32 %v753, %v759
        %v1016 = vmul.f32 %v754, %v759
        %v1017 = vmax.f32 %v761, 0.0
        %v1018 = vmax.f32 %v762, 0.0
        %v1019 = vmax.f32 %v763, 0.0
        %v1020 = vmax.f32 %v764, 0.0
        %v1021 = vmax.f32 %v765, 0.0
        %v1022 = vmax.f32 %v766, 0.0
        %v1023 = vmax.f32 %v767, 0.0
        %v1024 = vmax.f32 %v768, 0.0
        %v1025 = vmax.f32 %v769, 0.0
        %v1026 = vmax.f32 %v770, 0.0
        %v1027 = vmax.f32 %v771, 0.0
        %v1028 = vmax.f32 %v772, 0.0
        %v1029 = vmax.f32 %v773, 0.0
        %v1030 = vmax.f32 %v774, 0.0
        %v1031 = vmax.f32 %v775, 0.0
        %v1032 = vmax.f32 %v776, 0.0
        %v1033 = vmax.f32 %v777, 0.0
        %v1034 = vmax.f32 %v778, 0.0
        %v1035 = vmax.f32 %v779, 0.0
        %v1036 = vmax.f32 %v780, 0.0
        %v1037 = vmax.f32 %v781, 0.0
        %v1038 = vmax.f32 %v782, 0.0
        %v1039 = vmax.f32 %v783, 0.0
        %v1040 = vmax.f32 %v784, 0.0
        %v1041 = vmax.f32 %v785, 0.0
        %v1042 = vmax.f32 %v786, 0.0
        %v1043 = vmax.f32 %v787, 0.0
        %v1044 = vmax.f32 %v788, 0.0
        %v1045 = vmax.f32 %v789, 0.0
        %v1046 = vmax.f32 %v790, 0.0
        %v1047 = vmax.f32 %v791, 0.0
        %v1048 = vmax.f32 %v792, 0.0
        %v1049 = vmax.f32 %v793, 0.0
        %v1050 = vmax.f32 %v794, 0.0
        %v1051 = vmax.f32 %v795, 0.0
        %v1052 = vmax.f32 %v796, 0.0
        %v1053 = vmax.f32 %v797, 0.0
        %v1054 = vmax.f32 %v798, 0.0
        %v1055 = vmax.f32 %v799, 0.0
        %v1056 = vmax.f32 %v800, 0.0
        %v1057 = vmax.f32 %v801, 0.0
        %v1058 = vmax.f32 %v802, 0.0
        %v1059 = vmax.f32 %v803, 0.0
        %v1060 = vmax.f32 %v804, 0.0
        %v1061 = vmax.f32 %v805, 0.0
        %v1062 = vmax.f32 %v806, 0.0
        %v1063 = vmax.f32 %v807, 0.0
        %v1064 = vmax.f32 %v808, 0.0
        %v1065 = vmax.f32 %v809, 0.0
        %v1066 = vmax.f32 %v810, 0.0
        %v1067 = vmax.f32 %v811, 0.0
        %v1068 = vmax.f32 %v812, 0.0
        %v1069 = vmax.f32 %v813, 0.0
        %v1070 = vmax.f32 %v814, 0.0
        %v1071 = vmax.f32 %v815, 0.0
        %v1072 = vmax.f32 %v816, 0.0
        %v1073 = vmax.f32 %v817, 0.0
        %v1074 = vmax.f32 %v818, 0.0
        %v1075 = vmax.f32 %v819, 0.0
        %v1076 = vmax.f32 %v820, 0.0
        %v1077 = vmax.f32 %v821, 0.0
        %v1078 = vmax.f32 %v822, 0.0
        %v1079 = vmax.f32 %v823, 0.0
        %v1080 = vmax.f32 %v824, 0.0
        %v1081 = vmax.f32 %v825, 0.0
        %v1082 = vmax.f32 %v826, 0.0
        %v1083 = vmax.f32 %v827, 0.0
        %v1084 = vmax.f32 %v828, 0.0
        %v1085 = vmax.f32 %v829, 0.0
        %v1086 = vmax.f32 %v830, 0.0
        %v1087 = vmax.f32 %v831, 0.0
        %v1088 = vmax.f32 %v832, 0.0
        %v1089 = vmax.f32 %v833, 0.0
        %v1090 = vmax.f32 %v834, 0.0
        %v1091 = vmax.f32 %v835, 0.0
        %v1092 = vmax.f32 %v836, 0.0
        %v1093 = vmax.f32 %v837, 0.0
        %v1094 = vmax.f32 %v838, 0.0
        %v1095 = vmax.f32 %v839, 0.0
        %v1096 = vmax.f32 %v840, 0.0
        %v1097 = vmax.f32 %v841, 0.0
        %v1098 = vmax.f32 %v842, 0.0
        %v1099 = vmax.f32 %v843, 0.0
        %v1100 = vmax.f32 %v844, 0.0
        %v1101 = vmax.f32 %v845, 0.0
        %v1102 = vmax.f32 %v846, 0.0
        %v1103 = vmax.f32 %v847, 0.0
        %v1104 = vmax.f32 %v848, 0.0
        %v1105 = vmax.f32 %v849, 0.0
        %v1106 = vmax.f32 %v850, 0.0
        %v1107 = vmax.f32 %v851, 0.0
        %v1108 = vmax.f32 %v852, 0.0
        %v1109 = vmax.f32 %v853, 0.0
        %v1110 = vmax.f32 %v854, 0.0
        %v1111 = vmax.f32 %v855, 0.0
        %v1112 = vmax.f32 %v856, 0.0
        %v1113 = vmax.f32 %v857, 0.0
        %v1114 = vmax.f32 %v858, 0.0
        %v1115 = vmax.f32 %v859, 0.0
        %v1116 = vmax.f32 %v860, 0.0
        %v1117 = vmax.f32 %v861, 0.0
        %v1118 = vmax.f32 %v862, 0.0
        %v1119 = vmax.f32 %v863, 0.0
        %v1120 = vmax.f32 %v864, 0.0
        %v1121 = vmax.f32 %v865, 0.0
        %v1122 = vmax.f32 %v866, 0.0
        %v1123 = vmax.f32 %v867, 0.0
        %v1124 = vmax.f32 %v868, 0.0
        %v1125 = vmax.f32 %v869, 0.0
        %v1126 = vmax.f32 %v870, 0.0
        %v1127 = vmax.f32 %v871, 0.0
        %v1128 = vmax.f32 %v872, 0.0
        %v1129 = vmax.f32 %v873, 0.0
        %v1130 = vmax.f32 %v874, 0.0
        %v1131 = vmax.f32 %v875, 0.0
        %v1132 = vmax.f32 %v876, 0.0
        %v1133 = vmax.f32 %v877, 0.0
        %v1134 = vmax.f32 %v878, 0.0
        %v1135 = vmax.f32 %v879, 0.0
        %v1136 = vmax.f32 %v880, 0.0
        %v1137 = vmax.f32 %v881, 0.0
        %v1138 = vmax.f32 %v882, 0.0
        %v1139 = vmax.f32 %v883, 0.0
        %v1140 = vmax.f32 %v884, 0.0
        %v1141 = vmax.f32 %v885, 0.0
        %v1142 = vmax.f32 %v886, 0.0
        %v1143 = vmax.f32 %v887, 0.0
        %v1144 = vmax.f32 %v888, 0.0
        %v1145 = vmax.f32 %v889, 0.0
        %v1146 = vmax.f32 %v890, 0.0
        %v1147 = vmax.f32 %v891, 0.0
        %v1148 = vmax.f32 %v892, 0.0
        %v1149 = vmax.f32 %v893, 0.0
        %v1150 = vmax.f32 %v894, 0.0
        %v1151 = vmax.f32 %v895, 0.0
        %v1152 = vmax.f32 %v896, 0.0
        %v1153 = vmax.f32 %v897, 0.0
        %v1154 = vmax.f32 %v898, 0.0
        %v1155 = vmax.f32 %v899, 0.0
        %v1156 = vmax.f32 %v900, 0.0
        %v1157 = vmax.f32 %v901, 0.0
        %v1158 = vmax.f32 %v902, 0.0
        %v1159 = vmax.f32 %v903, 0.0
        %v1160 = vmax.f32 %v904, 0.0
        %v1161 = vmax.f32 %v905, 0.0
        %v1162 = vmax.f32 %v906, 0.0
        %v1163 = vmax.f32 %v907, 0.0
        %v1164 = vmax.f32 %v908, 0.0
        %v1165 = vmax.f32 %v909, 0.0
        %v1166 = vmax.f32 %v910, 0.0
        %v1167 = vmax.f32 %v911, 0.0
        %v1168 = vmax.f32 %v912, 0.0
        %v1169 = vmax.f32 %v913, 0.0
        %v1170 = vmax.f32 %v914, 0.0
        %v1171 = vmax.f32 %v915, 0.0
        %v1172 = vmax.f32 %v916, 0.0
        %v1173 = vmax.f32 %v917, 0.0
        %v1174 = vmax.f32 %v918, 0.0
        %v1175 = vmax.f32 %v919, 0.0
        %v1176 = vmax.f32 %v920, 0.0
        %v1177 = vmax.f32 %v921, 0.0
        %v1178 = vmax.f32 %v922, 0.0
        %v1179 = vmax.f32 %v923, 0.0
        %v1180 = vmax.f32 %v924, 0.0
        %v1181 = vmax.f32 %v925, 0.0
        %v1182 = vmax.f32 %v926, 0.0
        %v1183 = vmax.f32 %v927, 0.0
        %v1184 = vmax.f32 %v928, 0.0
        %v1185 = vmax.f32 %v929, 0.0
        %v1186 = vmax.f32 %v930, 0.0
        %v1187 = vmax.f32 %v931, 0.0
        %v1188 = vmax.f32 %v932, 0.0
        %v1189 = vmax.f32 %v933, 0.0
        %v1190 = vmax.f32 %v934, 0.0
        %v1191 = vmax.f32 %v935, 0.0
        %v1192 = vmax.f32 %v936, 0.0
        %v1193 = vmax.f32 %v937, 0.0
        %v1194 = vmax.f32 %v938, 0.0
        %v1195 = vmax.f32 %v939, 0.0
        %v1196 = vmax.f32 %v940, 0.0
        %v1197 = vmax.f32 %v941, 0.0
        %v1198 = vmax.f32 %v942, 0.0
        %v1199 = vmax.f32 %v943, 0.0
        %v1200 = vmax.f32 %v944, 0.0
        %v1201 = vmax.f32 %v945, 0.0
        %v1202 = vmax.f32 %v946, 0.0
        %v1203 = vmax.f32 %v947, 0.0
        %v1204 = vmax.f32 %v948, 0.0
        %v1205 = vmax.f32 %v949, 0.0
        %v1206 = vmax.f32 %v950, 0.0
        %v1207 = vmax.f32 %v951, 0.0
        %v1208 = vmax.f32 %v952, 0.0
        %v1209 = vmax.f32 %v953, 0.0
        %v1210 = vmax.f32 %v954, 0.0
        %v1211 = vmax.f32 %v955, 0.0
        %v1212 = vmax.f32 %v956, 0.0
        %v1213 = vmax.f32 %v957, 0.0
        %v1214 = vmax.f32 %v958, 0.0
        %v1215 = vmax.f32 %v959, 0.0
        %v1216 = vmax.f32 %v960, 0.0
        %v1217 = vmax.f32 %v961, 0.0
        %v1218 = vmax.f32 %v962, 0.0
        %v1219 = vmax.f32 %v963, 0.0
        %v1220 = vmax.f32 %v964, 0.0
        %v1221 = vmax.f32 %v965, 0.0
        %v1222 = vmax.f32 %v966, 0.0
        %v1223 = vmax.f32 %v967, 0.0
        %v1224 = vmax.f32 %v968, 0.0
        %v1225 = vmax.f32 %v969, 0.0
        %v1226 = vmax.f32 %v970, 0.0
        %v1227 = vmax.f32 %v971, 0.0
        %v1228 = vmax.f32 %v972, 0.0
        %v1229 = vmax.f32 %v973, 0.0
        %v1230 = vmax.f32 %v974, 0.0
        %v1231 = vmax.f32 %v975, 0.0
        %v1232 = vmax.f32 %v976, 0.0
        %v1233 = vmax.f32 %v977, 0.0
        %v1234 = vmax.f32 %v978, 0.0
        %v1235 = vmax.f32 %v979, 0.0
        %v1236 = vmax.f32 %v980, 0.0
        %v1237 = vmax.f32 %v981, 0.0
        %v1238 = vmax.f32 %v982, 0.0
        %v1239 = vmax.f32 %v983, 0.0
        %v1240 = vmax.f32 %v984, 0.0
        %v1241 = vmax.f32 %v985, 0.0
        %v1242 = vmax.f32 %v986, 0.0
        %v1243 = vmax.f32 %v987, 0.0
        %v1244 = vmax.f32 %v988, 0.0
        %v1245 = vmax.f32 %v989, 0.0
        %v1246 = vmax.f32 %v990, 0.0
        %v1247 = vmax.f32 %v991, 0.0
        %v1248 = vmax.f32 %v992, 0.0
        %v1249 = vmax.f32 %v993, 0.0
        %v1250 = vmax.f32 %v994, 0.0
        %v1251 = vmax.f32 %v995, 0.0
        %v1252 = vmax.f32 %v996, 0.0
        %v1253 = vmax.f32 %v997, 0.0
        %v1254 = vmax.f32 %v998, 0.0
        %v1255 = vmax.f32 %v999, 0.0
        %v1256 = vmax.f32 %v1000, 0.0
        %v1257 = vmax.f32 %v1001, 0.0
        %v1258 = vmax.f32 %v1002, 0.0
        %v1259 = vmax.f32 %v1003, 0.0
        %v1260 = vmax.f32 %v1004, 0.0
        %v1261 = vmax.f32 %v1005, 0.0
        %v1262 = vmax.f32 %v1006, 0.0
        %v1263 = vmax.f32 %v1007, 0.0
        %v1264 = vmax.f32 %v1008, 0.0
        %v1265 = vmax.f32 %v1009, 0.0
        %v1266 = vmax.f32 %v1010, 0.0
        %v1267 = vmax.f32 %v1011, 0.0
        %v1268 = vmax.f32 %v1012, 0.0
        %v1269 = vmax.f32 %v1013, 0.0
        %v1270 = vmax.f32 %v1014, 0.0
        %v1271 = vmax.f32 %v1015, 0.0
        %v1272 = vmax.f32 %v1016, 0.0
        %vm1273 = vcmask 261120
        %1274 = vst.msk [vmem:[%s210] sm:$0xff] %vm1273, %v1017
        %1275 = vst.msk [vmem:[%s210 + $0x8] sm:$0xff] %vm1273, %v1018
        %1276 = vst.msk [vmem:[%s210 + $0x10] sm:$0xff] %vm1273, %v1019
        %1277 = vst.msk [vmem:[%s210 + $0x18] sm:$0xff] %vm1273, %v1020
        %1278 = vst.msk [vmem:[%s210 + $0x20] sm:$0xff] %vm1273, %v1021
        %1279 = vst.msk [vmem:[%s210 + $0x28] sm:$0xff] %vm1273, %v1022
        %1280 = vst.msk [vmem:[%s210 + $0x30] sm:$0xff] %vm1273, %v1023
        %1281 = vst.msk [vmem:[%s210 + $0x38] sm:$0xff] %vm1273, %v1024
        %1282 = vst.msk [vmem:[%s210 + $0x40] sm:$0xff] %vm1273, %v1025
        %1283 = vst.msk [vmem:[%s210 + $0x48] sm:$0xff] %vm1273, %v1026
        %1284 = vst.msk [vmem:[%s210 + $0x50] sm:$0xff] %vm1273, %v1027
        %1285 = vst.msk [vmem:[%s210 + $0x58] sm:$0xff] %vm1273, %v1028
        %1286 = vst.msk [vmem:[%s210 + $0x60] sm:$0xff] %vm1273, %v1029
        %1287 = vst.msk [vmem:[%s210 + $0x68] sm:$0xff] %vm1273, %v1030
        %1288 = vst.msk [vmem:[%s210 + $0x70] sm:$0xff] %vm1273, %v1031
        %1289 = vst.msk [vmem:[%s210 + $0x78] sm:$0xff] %vm1273, %v1032
        %1290 = vst.msk [vmem:[%s210 + $0x80] sm:$0xff] %vm1273, %v1033
        %1291 = vst.msk [vmem:[%s210 + $0x88] sm:$0xff] %vm1273, %v1034
        %1292 = vst.msk [vmem:[%s210 + $0x90] sm:$0xff] %vm1273, %v1035
        %1293 = vst.msk [vmem:[%s210 + $0x98] sm:$0xff] %vm1273, %v1036
        %1294 = vst.msk [vmem:[%s210 + $0xa0] sm:$0xff] %vm1273, %v1037
        %1295 = vst.msk [vmem:[%s210 + $0xa8] sm:$0xff] %vm1273, %v1038
        %1296 = vst.msk [vmem:[%s210 + $0xb0] sm:$0xff] %vm1273, %v1039
        %1297 = vst.msk [vmem:[%s210 + $0xb8] sm:$0xff] %vm1273, %v1040
        %1298 = vst.msk [vmem:[%s210 + $0xc0] sm:$0xff] %vm1273, %v1041
        %1299 = vst.msk [vmem:[%s210 + $0xc8] sm:$0xff] %vm1273, %v1042
        %1300 = vst.msk [vmem:[%s210 + $0xd0] sm:$0xff] %vm1273, %v1043
        %1301 = vst.msk [vmem:[%s210 + $0xd8] sm:$0xff] %vm1273, %v1044
        %1302 = vst.msk [vmem:[%s210 + $0xe0] sm:$0xff] %vm1273, %v1045
        %1303 = vst.msk [vmem:[%s210 + $0xe8] sm:$0xff] %vm1273, %v1046
        %1304 = vst.msk [vmem:[%s210 + $0xf0] sm:$0xff] %vm1273, %v1047
        %1305 = vst.msk [vmem:[%s210 + $0xf8] sm:$0xff] %vm1273, %v1048
        %1306 = vst.msk [vmem:[%s210 + $0x100] sm:$0xff] %vm1273, %v1049
        %1307 = vst.msk [vmem:[%s210 + $0x108] sm:$0xff] %vm1273, %v1050
        %1308 = vst.msk [vmem:[%s210 + $0x110] sm:$0xff] %vm1273, %v1051
        %1309 = vst.msk [vmem:[%s210 + $0x118] sm:$0xff] %vm1273, %v1052
        %1310 = vst.msk [vmem:[%s210 + $0x120] sm:$0xff] %vm1273, %v1053
        %1311 = vst.msk [vmem:[%s210 + $0x128] sm:$0xff] %vm1273, %v1054
        %1312 = vst.msk [vmem:[%s210 + $0x130] sm:$0xff] %vm1273, %v1055
        %1313 = vst.msk [vmem:[%s210 + $0x138] sm:$0xff] %vm1273, %v1056
        %1314 = vst.msk [vmem:[%s210 + $0x140] sm:$0xff] %vm1273, %v1057
        %1315 = vst.msk [vmem:[%s210 + $0x148] sm:$0xff] %vm1273, %v1058
        %1316 = vst.msk [vmem:[%s210 + $0x150] sm:$0xff] %vm1273, %v1059
        %1317 = vst.msk [vmem:[%s210 + $0x158] sm:$0xff] %vm1273, %v1060
        %1318 = vst.msk [vmem:[%s210 + $0x160] sm:$0xff] %vm1273, %v1061
        %1319 = vst.msk [vmem:[%s210 + $0x168] sm:$0xff] %vm1273, %v1062
        %1320 = vst.msk [vmem:[%s210 + $0x170] sm:$0xff] %vm1273, %v1063
        %1321 = vst.msk [vmem:[%s210 + $0x178] sm:$0xff] %vm1273, %v1064
        %1322 = vst.msk [vmem:[%s210 + $0x180] sm:$0xff] %vm1273, %v1065
        %1323 = vst.msk [vmem:[%s210 + $0x188] sm:$0xff] %vm1273, %v1066
        %1324 = vst.msk [vmem:[%s210 + $0x190] sm:$0xff] %vm1273, %v1067
        %1325 = vst.msk [vmem:[%s210 + $0x198] sm:$0xff] %vm1273, %v1068
        %1326 = vst.msk [vmem:[%s210 + $0x1a0] sm:$0xff] %vm1273, %v1069
        %1327 = vst.msk [vmem:[%s210 + $0x1a8] sm:$0xff] %vm1273, %v1070
        %1328 = vst.msk [vmem:[%s210 + $0x1b0] sm:$0xff] %vm1273, %v1071
        %1329 = vst.msk [vmem:[%s210 + $0x1b8] sm:$0xff] %vm1273, %v1072
        %1330 = vst.msk [vmem:[%s210 + $0x1c0] sm:$0xff] %vm1273, %v1073
        %1331 = vst.msk [vmem:[%s210 + $0x1c8] sm:$0xff] %vm1273, %v1074
        %1332 = vst.msk [vmem:[%s210 + $0x1d0] sm:$0xff] %vm1273, %v1075
        %1333 = vst.msk [vmem:[%s210 + $0x1d8] sm:$0xff] %vm1273, %v1076
        %1334 = vst.msk [vmem:[%s210 + $0x1e0] sm:$0xff] %vm1273, %v1077
        %1335 = vst.msk [vmem:[%s210 + $0x1e8] sm:$0xff] %vm1273, %v1078
        %1336 = vst.msk [vmem:[%s210 + $0x1f0] sm:$0xff] %vm1273, %v1079
        %1337 = vst.msk [vmem:[%s210 + $0x1f8] sm:$0xff] %vm1273, %v1080
        %1338 = vst.msk [vmem:[%s210 + $0x200] sm:$0xff] %vm1273, %v1081
        %1339 = vst.msk [vmem:[%s210 + $0x208] sm:$0xff] %vm1273, %v1082
        %1340 = vst.msk [vmem:[%s210 + $0x210] sm:$0xff] %vm1273, %v1083
        %1341 = vst.msk [vmem:[%s210 + $0x218] sm:$0xff] %vm1273, %v1084
        %1342 = vst.msk [vmem:[%s210 + $0x220] sm:$0xff] %vm1273, %v1085
        %1343 = vst.msk [vmem:[%s210 + $0x228] sm:$0xff] %vm1273, %v1086
        %1344 = vst.msk [vmem:[%s210 + $0x230] sm:$0xff] %vm1273, %v1087
        %1345 = vst.msk [vmem:[%s210 + $0x238] sm:$0xff] %vm1273, %v1088
        %1346 = vst.msk [vmem:[%s210 + $0x240] sm:$0xff] %vm1273, %v1089
        %1347 = vst.msk [vmem:[%s210 + $0x248] sm:$0xff] %vm1273, %v1090
        %1348 = vst.msk [vmem:[%s210 + $0x250] sm:$0xff] %vm1273, %v1091
        %1349 = vst.msk [vmem:[%s210 + $0x258] sm:$0xff] %vm1273, %v1092
        %1350 = vst.msk [vmem:[%s210 + $0x260] sm:$0xff] %vm1273, %v1093
        %1351 = vst.msk [vmem:[%s210 + $0x268] sm:$0xff] %vm1273, %v1094
        %1352 = vst.msk [vmem:[%s210 + $0x270] sm:$0xff] %vm1273, %v1095
        %1353 = vst.msk [vmem:[%s210 + $0x278] sm:$0xff] %vm1273, %v1096
        %1354 = vst.msk [vmem:[%s210 + $0x280] sm:$0xff] %vm1273, %v1097
        %1355 = vst.msk [vmem:[%s210 + $0x288] sm:$0xff] %vm1273, %v1098
        %1356 = vst.msk [vmem:[%s210 + $0x290] sm:$0xff] %vm1273, %v1099
        %1357 = vst.msk [vmem:[%s210 + $0x298] sm:$0xff] %vm1273, %v1100
        %1358 = vst.msk [vmem:[%s210 + $0x2a0] sm:$0xff] %vm1273, %v1101
        %1359 = vst.msk [vmem:[%s210 + $0x2a8] sm:$0xff] %vm1273, %v1102
        %1360 = vst.msk [vmem:[%s210 + $0x2b0] sm:$0xff] %vm1273, %v1103
        %1361 = vst.msk [vmem:[%s210 + $0x2b8] sm:$0xff] %vm1273, %v1104
        %1362 = vst.msk [vmem:[%s210 + $0x2c0] sm:$0xff] %vm1273, %v1105
        %1363 = vst.msk [vmem:[%s210 + $0x2c8] sm:$0xff] %vm1273, %v1106
        %1364 = vst.msk [vmem:[%s210 + $0x2d0] sm:$0xff] %vm1273, %v1107
        %1365 = vst.msk [vmem:[%s210 + $0x2d8] sm:$0xff] %vm1273, %v1108
        %1366 = vst.msk [vmem:[%s210 + $0x2e0] sm:$0xff] %vm1273, %v1109
        %1367 = vst.msk [vmem:[%s210 + $0x2e8] sm:$0xff] %vm1273, %v1110
        %1368 = vst.msk [vmem:[%s210 + $0x2f0] sm:$0xff] %vm1273, %v1111
        %1369 = vst.msk [vmem:[%s210 + $0x2f8] sm:$0xff] %vm1273, %v1112
        %1370 = vst.msk [vmem:[%s210 + $0x300] sm:$0xff] %vm1273, %v1113
        %1371 = vst.msk [vmem:[%s210 + $0x308] sm:$0xff] %vm1273, %v1114
        %1372 = vst.msk [vmem:[%s210 + $0x310] sm:$0xff] %vm1273, %v1115
        %1373 = vst.msk [vmem:[%s210 + $0x318] sm:$0xff] %vm1273, %v1116
        %1374 = vst.msk [vmem:[%s210 + $0x320] sm:$0xff] %vm1273, %v1117
        %1375 = vst.msk [vmem:[%s210 + $0x328] sm:$0xff] %vm1273, %v1118
        %1376 = vst.msk [vmem:[%s210 + $0x330] sm:$0xff] %vm1273, %v1119
        %1377 = vst.msk [vmem:[%s210 + $0x338] sm:$0xff] %vm1273, %v1120
        %1378 = vst.msk [vmem:[%s210 + $0x340] sm:$0xff] %vm1273, %v1121
        %1379 = vst.msk [vmem:[%s210 + $0x348] sm:$0xff] %vm1273, %v1122
        %1380 = vst.msk [vmem:[%s210 + $0x350] sm:$0xff] %vm1273, %v1123
        %1381 = vst.msk [vmem:[%s210 + $0x358] sm:$0xff] %vm1273, %v1124
        %1382 = vst.msk [vmem:[%s210 + $0x360] sm:$0xff] %vm1273, %v1125
        %1383 = vst.msk [vmem:[%s210 + $0x368] sm:$0xff] %vm1273, %v1126
        %1384 = vst.msk [vmem:[%s210 + $0x370] sm:$0xff] %vm1273, %v1127
        %1385 = vst.msk [vmem:[%s210 + $0x378] sm:$0xff] %vm1273, %v1128
        %1386 = vst.msk [vmem:[%s210 + $0x380] sm:$0xff] %vm1273, %v1129
        %1387 = vst.msk [vmem:[%s210 + $0x388] sm:$0xff] %vm1273, %v1130
        %1388 = vst.msk [vmem:[%s210 + $0x390] sm:$0xff] %vm1273, %v1131
        %1389 = vst.msk [vmem:[%s210 + $0x398] sm:$0xff] %vm1273, %v1132
        %1390 = vst.msk [vmem:[%s210 + $0x3a0] sm:$0xff] %vm1273, %v1133
        %1391 = vst.msk [vmem:[%s210 + $0x3a8] sm:$0xff] %vm1273, %v1134
        %1392 = vst.msk [vmem:[%s210 + $0x3b0] sm:$0xff] %vm1273, %v1135
        %1393 = vst.msk [vmem:[%s210 + $0x3b8] sm:$0xff] %vm1273, %v1136
        %1394 = vst.msk [vmem:[%s210 + $0x3c0] sm:$0xff] %vm1273, %v1137
        %1395 = vst.msk [vmem:[%s210 + $0x3c8] sm:$0xff] %vm1273, %v1138
        %1396 = vst.msk [vmem:[%s210 + $0x3d0] sm:$0xff] %vm1273, %v1139
        %1397 = vst.msk [vmem:[%s210 + $0x3d8] sm:$0xff] %vm1273, %v1140
        %1398 = vst.msk [vmem:[%s210 + $0x3e0] sm:$0xff] %vm1273, %v1141
        %1399 = vst.msk [vmem:[%s210 + $0x3e8] sm:$0xff] %vm1273, %v1142
        %1400 = vst.msk [vmem:[%s210 + $0x3f0] sm:$0xff] %vm1273, %v1143
        %1401 = vst.msk [vmem:[%s210 + $0x3f8] sm:$0xff] %vm1273, %v1144
        %1402 = vst.msk [vmem:[%s210 + $0x400] sm:$0xff] %vm1273, %v1145
        %1403 = vst.msk [vmem:[%s210 + $0x408] sm:$0xff] %vm1273, %v1146
        %1404 = vst.msk [vmem:[%s210 + $0x410] sm:$0xff] %vm1273, %v1147
        %1405 = vst.msk [vmem:[%s210 + $0x418] sm:$0xff] %vm1273, %v1148
        %1406 = vst.msk [vmem:[%s210 + $0x420] sm:$0xff] %vm1273, %v1149
        %1407 = vst.msk [vmem:[%s210 + $0x428] sm:$0xff] %vm1273, %v1150
        %1408 = vst.msk [vmem:[%s210 + $0x430] sm:$0xff] %vm1273, %v1151
        %1409 = vst.msk [vmem:[%s210 + $0x438] sm:$0xff] %vm1273, %v1152
        %1410 = vst.msk [vmem:[%s210 + $0x440] sm:$0xff] %vm1273, %v1153
        %1411 = vst.msk [vmem:[%s210 + $0x448] sm:$0xff] %vm1273, %v1154
        %1412 = vst.msk [vmem:[%s210 + $0x450] sm:$0xff] %vm1273, %v1155
        %1413 = vst.msk [vmem:[%s210 + $0x458] sm:$0xff] %vm1273, %v1156
        %1414 = vst.msk [vmem:[%s210 + $0x460] sm:$0xff] %vm1273, %v1157
        %1415 = vst.msk [vmem:[%s210 + $0x468] sm:$0xff] %vm1273, %v1158
        %1416 = vst.msk [vmem:[%s210 + $0x470] sm:$0xff] %vm1273, %v1159
        %1417 = vst.msk [vmem:[%s210 + $0x478] sm:$0xff] %vm1273, %v1160
        %1418 = vst.msk [vmem:[%s210 + $0x480] sm:$0xff] %vm1273, %v1161
        %1419 = vst.msk [vmem:[%s210 + $0x488] sm:$0xff] %vm1273, %v1162
        %1420 = vst.msk [vmem:[%s210 + $0x490] sm:$0xff] %vm1273, %v1163
        %1421 = vst.msk [vmem:[%s210 + $0x498] sm:$0xff] %vm1273, %v1164
        %1422 = vst.msk [vmem:[%s210 + $0x4a0] sm:$0xff] %vm1273, %v1165
        %1423 = vst.msk [vmem:[%s210 + $0x4a8] sm:$0xff] %vm1273, %v1166
        %1424 = vst.msk [vmem:[%s210 + $0x4b0] sm:$0xff] %vm1273, %v1167
        %1425 = vst.msk [vmem:[%s210 + $0x4b8] sm:$0xff] %vm1273, %v1168
        %1426 = vst.msk [vmem:[%s210 + $0x4c0] sm:$0xff] %vm1273, %v1169
        %1427 = vst.msk [vmem:[%s210 + $0x4c8] sm:$0xff] %vm1273, %v1170
        %1428 = vst.msk [vmem:[%s210 + $0x4d0] sm:$0xff] %vm1273, %v1171
        %1429 = vst.msk [vmem:[%s210 + $0x4d8] sm:$0xff] %vm1273, %v1172
        %1430 = vst.msk [vmem:[%s210 + $0x4e0] sm:$0xff] %vm1273, %v1173
        %1431 = vst.msk [vmem:[%s210 + $0x4e8] sm:$0xff] %vm1273, %v1174
        %1432 = vst.msk [vmem:[%s210 + $0x4f0] sm:$0xff] %vm1273, %v1175
        %1433 = vst.msk [vmem:[%s210 + $0x4f8] sm:$0xff] %vm1273, %v1176
        %1434 = vst.msk [vmem:[%s210 + $0x500] sm:$0xff] %vm1273, %v1177
        %1435 = vst.msk [vmem:[%s210 + $0x508] sm:$0xff] %vm1273, %v1178
        %1436 = vst.msk [vmem:[%s210 + $0x510] sm:$0xff] %vm1273, %v1179
        %1437 = vst.msk [vmem:[%s210 + $0x518] sm:$0xff] %vm1273, %v1180
        %1438 = vst.msk [vmem:[%s210 + $0x520] sm:$0xff] %vm1273, %v1181
        %1439 = vst.msk [vmem:[%s210 + $0x528] sm:$0xff] %vm1273, %v1182
        %1440 = vst.msk [vmem:[%s210 + $0x530] sm:$0xff] %vm1273, %v1183
        %1441 = vst.msk [vmem:[%s210 + $0x538] sm:$0xff] %vm1273, %v1184
        %1442 = vst.msk [vmem:[%s210 + $0x540] sm:$0xff] %vm1273, %v1185
        %1443 = vst.msk [vmem:[%s210 + $0x548] sm:$0xff] %vm1273, %v1186
        %1444 = vst.msk [vmem:[%s210 + $0x550] sm:$0xff] %vm1273, %v1187
        %1445 = vst.msk [vmem:[%s210 + $0x558] sm:$0xff] %vm1273, %v1188
        %1446 = vst.msk [vmem:[%s210 + $0x560] sm:$0xff] %vm1273, %v1189
        %1447 = vst.msk [vmem:[%s210 + $0x568] sm:$0xff] %vm1273, %v1190
        %1448 = vst.msk [vmem:[%s210 + $0x570] sm:$0xff] %vm1273, %v1191
        %1449 = vst.msk [vmem:[%s210 + $0x578] sm:$0xff] %vm1273, %v1192
        %1450 = vst.msk [vmem:[%s210 + $0x580] sm:$0xff] %vm1273, %v1193
        %1451 = vst.msk [vmem:[%s210 + $0x588] sm:$0xff] %vm1273, %v1194
        %1452 = vst.msk [vmem:[%s210 + $0x590] sm:$0xff] %vm1273, %v1195
        %1453 = vst.msk [vmem:[%s210 + $0x598] sm:$0xff] %vm1273, %v1196
        %1454 = vst.msk [vmem:[%s210 + $0x5a0] sm:$0xff] %vm1273, %v1197
        %1455 = vst.msk [vmem:[%s210 + $0x5a8] sm:$0xff] %vm1273, %v1198
        %1456 = vst.msk [vmem:[%s210 + $0x5b0] sm:$0xff] %vm1273, %v1199
        %1457 = vst.msk [vmem:[%s210 + $0x5b8] sm:$0xff] %vm1273, %v1200
        %1458 = vst.msk [vmem:[%s210 + $0x5c0] sm:$0xff] %vm1273, %v1201
        %1459 = vst.msk [vmem:[%s210 + $0x5c8] sm:$0xff] %vm1273, %v1202
        %1460 = vst.msk [vmem:[%s210 + $0x5d0] sm:$0xff] %vm1273, %v1203
        %1461 = vst.msk [vmem:[%s210 + $0x5d8] sm:$0xff] %vm1273, %v1204
        %1462 = vst.msk [vmem:[%s210 + $0x5e0] sm:$0xff] %vm1273, %v1205
        %1463 = vst.msk [vmem:[%s210 + $0x5e8] sm:$0xff] %vm1273, %v1206
        %1464 = vst.msk [vmem:[%s210 + $0x5f0] sm:$0xff] %vm1273, %v1207
        %1465 = vst.msk [vmem:[%s210 + $0x5f8] sm:$0xff] %vm1273, %v1208
        %1466 = vst.msk [vmem:[%s210 + $0x600] sm:$0xff] %vm1273, %v1209
        %1467 = vst.msk [vmem:[%s210 + $0x608] sm:$0xff] %vm1273, %v1210
        %1468 = vst.msk [vmem:[%s210 + $0x610] sm:$0xff] %vm1273, %v1211
        %1469 = vst.msk [vmem:[%s210 + $0x618] sm:$0xff] %vm1273, %v1212
        %1470 = vst.msk [vmem:[%s210 + $0x620] sm:$0xff] %vm1273, %v1213
        %1471 = vst.msk [vmem:[%s210 + $0x628] sm:$0xff] %vm1273, %v1214
        %1472 = vst.msk [vmem:[%s210 + $0x630] sm:$0xff] %vm1273, %v1215
        %1473 = vst.msk [vmem:[%s210 + $0x638] sm:$0xff] %vm1273, %v1216
        %1474 = vst.msk [vmem:[%s210 + $0x640] sm:$0xff] %vm1273, %v1217
        %1475 = vst.msk [vmem:[%s210 + $0x648] sm:$0xff] %vm1273, %v1218
        %1476 = vst.msk [vmem:[%s210 + $0x650] sm:$0xff] %vm1273, %v1219
        %1477 = vst.msk [vmem:[%s210 + $0x658] sm:$0xff] %vm1273, %v1220
        %1478 = vst.msk [vmem:[%s210 + $0x660] sm:$0xff] %vm1273, %v1221
        %1479 = vst.msk [vmem:[%s210 + $0x668] sm:$0xff] %vm1273, %v1222
        %1480 = vst.msk [vmem:[%s210 + $0x670] sm:$0xff] %vm1273, %v1223
        %1481 = vst.msk [vmem:[%s210 + $0x678] sm:$0xff] %vm1273, %v1224
        %1482 = vst.msk [vmem:[%s210 + $0x680] sm:$0xff] %vm1273, %v1225
        %1483 = vst.msk [vmem:[%s210 + $0x688] sm:$0xff] %vm1273, %v1226
        %1484 = vst.msk [vmem:[%s210 + $0x690] sm:$0xff] %vm1273, %v1227
        %1485 = vst.msk [vmem:[%s210 + $0x698] sm:$0xff] %vm1273, %v1228
        %1486 = vst.msk [vmem:[%s210 + $0x6a0] sm:$0xff] %vm1273, %v1229
        %1487 = vst.msk [vmem:[%s210 + $0x6a8] sm:$0xff] %vm1273, %v1230
        %1488 = vst.msk [vmem:[%s210 + $0x6b0] sm:$0xff] %vm1273, %v1231
        %1489 = vst.msk [vmem:[%s210 + $0x6b8] sm:$0xff] %vm1273, %v1232
        %1490 = vst.msk [vmem:[%s210 + $0x6c0] sm:$0xff] %vm1273, %v1233
        %1491 = vst.msk [vmem:[%s210 + $0x6c8] sm:$0xff] %vm1273, %v1234
        %1492 = vst.msk [vmem:[%s210 + $0x6d0] sm:$0xff] %vm1273, %v1235
        %1493 = vst.msk [vmem:[%s210 + $0x6d8] sm:$0xff] %vm1273, %v1236
        %1494 = vst.msk [vmem:[%s210 + $0x6e0] sm:$0xff] %vm1273, %v1237
        %1495 = vst.msk [vmem:[%s210 + $0x6e8] sm:$0xff] %vm1273, %v1238
        %1496 = vst.msk [vmem:[%s210 + $0x6f0] sm:$0xff] %vm1273, %v1239
        %1497 = vst.msk [vmem:[%s210 + $0x6f8] sm:$0xff] %vm1273, %v1240
        %1498 = vst.msk [vmem:[%s210 + $0x700] sm:$0xff] %vm1273, %v1241
        %1499 = vst.msk [vmem:[%s210 + $0x708] sm:$0xff] %vm1273, %v1242
        %1500 = vst.msk [vmem:[%s210 + $0x710] sm:$0xff] %vm1273, %v1243
        %1501 = vst.msk [vmem:[%s210 + $0x718] sm:$0xff] %vm1273, %v1244
        %1502 = vst.msk [vmem:[%s210 + $0x720] sm:$0xff] %vm1273, %v1245
        %1503 = vst.msk [vmem:[%s210 + $0x728] sm:$0xff] %vm1273, %v1246
        %1504 = vst.msk [vmem:[%s210 + $0x730] sm:$0xff] %vm1273, %v1247
        %1505 = vst.msk [vmem:[%s210 + $0x738] sm:$0xff] %vm1273, %v1248
        %1506 = vst.msk [vmem:[%s210 + $0x740] sm:$0xff] %vm1273, %v1249
        %1507 = vst.msk [vmem:[%s210 + $0x748] sm:$0xff] %vm1273, %v1250
        %1508 = vst.msk [vmem:[%s210 + $0x750] sm:$0xff] %vm1273, %v1251
        %1509 = vst.msk [vmem:[%s210 + $0x758] sm:$0xff] %vm1273, %v1252
        %1510 = vst.msk [vmem:[%s210 + $0x760] sm:$0xff] %vm1273, %v1253
        %1511 = vst.msk [vmem:[%s210 + $0x768] sm:$0xff] %vm1273, %v1254
        %1512 = vst.msk [vmem:[%s210 + $0x770] sm:$0xff] %vm1273, %v1255
        %1513 = vst.msk [vmem:[%s210 + $0x778] sm:$0xff] %vm1273, %v1256
        %1514 = vst.msk [vmem:[%s210 + $0x780] sm:$0xff] %vm1273, %v1257
        %1515 = vst.msk [vmem:[%s210 + $0x788] sm:$0xff] %vm1273, %v1258
        %1516 = vst.msk [vmem:[%s210 + $0x790] sm:$0xff] %vm1273, %v1259
        %1517 = vst.msk [vmem:[%s210 + $0x798] sm:$0xff] %vm1273, %v1260
        %1518 = vst.msk [vmem:[%s210 + $0x7a0] sm:$0xff] %vm1273, %v1261
        %1519 = vst.msk [vmem:[%s210 + $0x7a8] sm:$0xff] %vm1273, %v1262
        %1520 = vst.msk [vmem:[%s210 + $0x7b0] sm:$0xff] %vm1273, %v1263
        %1521 = vst.msk [vmem:[%s210 + $0x7b8] sm:$0xff] %vm1273, %v1264
        %1522 = vst.msk [vmem:[%s210 + $0x7c0] sm:$0xff] %vm1273, %v1265
        %1523 = vst.msk [vmem:[%s210 + $0x7c8] sm:$0xff] %vm1273, %v1266
        %1524 = vst.msk [vmem:[%s210 + $0x7d0] sm:$0xff] %vm1273, %v1267
        %1525 = vst.msk [vmem:[%s210 + $0x7d8] sm:$0xff] %vm1273, %v1268
        %1526 = vst.msk [vmem:[%s210 + $0x7e0] sm:$0xff] %vm1273, %v1269
        %1527 = vst.msk [vmem:[%s210 + $0x7e8] sm:$0xff] %vm1273, %v1270
        %1528 = vst.msk [vmem:[%s210 + $0x7f0] sm:$0xff] %vm1273, %v1271
        %1529 = vst.msk [vmem:[%s210 + $0x7f8] sm:$0xff] %vm1273, %v1272
        %s1530 = sand.u32 %s119, 1
        %s1531 = scalar_lea.sflag [#allocation3], %s1530
        %s1532 = sand.u32 %s119, 1
        %s1533 = smul.addr %s1532, 2048
        %s1534 = scalar_lea.vmem [#allocation2], %s1533
        // Predicated region
        $region33: #{doubleconv_forward.7} parent=31 // pred_check
          %p1535 = pneg %p129
        $region34: #{doubleconv_forward.7} parent=31 // pred_check_branch
          %1537 = sbr.rel (%p1535) target = $region36
        $region35: #{doubleconv_forward.7} parent=31 // pred_region
          %s1538 = smul.u32 256, %s22
          %s1540 = ssub.s32 32768, 32768
          %1541 = vsyncadd %s1531, %s1540
          %s1542 = smul.addr %s21, 512
          %s1543 = sadd.s32 %s1538, %s1542
          %s1544 = smul.addr %s1543, 128
          %s1545 = scalar_lea.hbm %s3, %s1544
          %s1546 = sshll.u32 %s1534, 4
          %s1547 = int_to_ptr.vmem [resolvable:$true] %s1546
          %1552 = dma.vmem_to_hbm [thread:$0]  %s1547, 32768, %s1545, %s1531, 128, 128, 8
        $region36: #{doubleconv_forward.7} parent=31 // pred_fallthru
          _
      $region32: #{doubleconv_forward.7} parent=5 // pred_fallthru
        _
      %p1553 = scmp.le.s32.totalorder 2, %s12
      // Predicated region
      $region37: #{doubleconv_forward.7} parent=5 // pred_check
        %p1554 = pneg %p1553
      $region38: #{doubleconv_forward.7} parent=5 // pred_check_branch
        %1556 = sbr.rel (%p1554) target = $region40
      $region39: #{doubleconv_forward.7} parent=5 // pred_region
        %s1557 = ssub.s32 %s12, 2
        // Predicated region
        $region41: #{doubleconv_forward.7} parent=39 // pred_check
          %p1558 = pneg %p135
        $region42: #{doubleconv_forward.7} parent=39 // pred_check_branch
          %1560 = sbr.rel (%p1558) target = $region44
        $region43: #{doubleconv_forward.7} parent=39 // pred_region
          %s1561 = sand.u32 %s120, 1
          %s1562 = scalar_lea.sflag [#allocation3], %s1561
          %s1563 = sand.u32 %s120, 1
          %s1564 = smul.addr %s1563, 2048
          %s1565 = scalar_lea.vmem [#allocation2], %s1564
          %1566 = dma.done %s1562, 32768
        $region44: #{doubleconv_forward.7} parent=39 // pred_fallthru
          _
      $region40: #{doubleconv_forward.7} parent=5 // pred_fallthru
        _
    $region6: #{doubleconv_forward.7} parent=1 // loop_footer
      %s16 = sadd.s32 1, %s12
    $region7: #{doubleconv_forward.7} parent=1 // loop_footer_branch
      %11 = sbr.rel target = $region3
    $region8: #{doubleconv_forward.7} parent=1 // loop_exit
      _
    %1567 = vsyncpa [#allocation3], 1
    %s1568 = scalar_lea.sflag [#allocation3], 1
    %1569 = vsyncpa %s1568, 1

</llo_original>
